<compile_context>
chip_gen: v7x
topology: tpu7x:2x2x1
jax: 0.10.0
libtpu: 0.0.40
codegen_flags: <defaults>
</compile_context>

<pallas_src>
import functools

import jax
import jax.numpy as jnp
from jax.experimental import pallas as pl
from jax.experimental.pallas import tpu as pltpu


# ------------------------------ tiling helpers ------------------------------

def _pick_tile(dim, target, align):
    """Tile for a lane/sublane axis: full dim if small, else the largest
    multiple of `align` <= target that divides dim (fallback: full dim, which
    is always legal because block == full array dim)."""
    if dim <= target:
        return dim
    t = (target // align) * align
    while t >= align:
        if dim % t == 0:
            return t
        t -= align
    return dim


def _pick_divisor(dim, target):
    """Largest divisor of dim that is <= target (for leading batch axes)."""
    t = min(dim, target)
    while dim % t:
        t -= 1
    return t


# ---------------------- tiled GEMM with fused epilogue ----------------------

def pallas_linear(a, w, b, *, residual=None, activation=None,
                  out_dtype=jnp.float32):
    """out = act((a @ w) + b [+ residual]).

    a: [M, K] (f32 or bf16; cast to bf16 for the MXU), w: [K, N] (bf16),
    b: [N] f32, residual: optional [M, N] added in the epilogue.
    Tiled over (M, N, K) with a f32 VMEM accumulator; bias / residual / GELU
    are applied only on the last K step.
    """
    M, K = a.shape
    K2, N = w.shape
    assert K == K2
    tm = _pick_tile(M, 256, 16)
    tk = _pick_tile(K, 512, 128)
    tn = _pick_tile(N, 256, 128)
    nk = K // tk
    has_res = residual is not None

    def kernel(*refs):
        if has_res:
            a_ref, w_ref, b_ref, r_ref, o_ref, acc_ref = refs
        else:
            a_ref, w_ref, b_ref, o_ref, acc_ref = refs
            r_ref = None
        k = pl.program_id(2)

        @pl.when(k == 0)
        def _init():
            acc_ref[...] = jnp.zeros_like(acc_ref)

        acc_ref[...] += jnp.dot(a_ref[...].astype(jnp.bfloat16),
                                w_ref[...].astype(jnp.bfloat16),
                                preferred_element_type=jnp.float32)

        @pl.when(k == nk - 1)
        def _epilogue():
            out = acc_ref[...] + b_ref[...]
            if r_ref is not None:
                out = out + r_ref[...].astype(jnp.float32)
            if activation == "gelu":
                # TODO(synk): nn.GELU() is exact-erf; tanh approximation is used
                # in-kernel (erf lowering in Mosaic is not guaranteed).
                out = jax.nn.gelu(out, approximate=True)
            o_ref[...] = out.astype(o_ref.dtype)

    in_specs = [
        pl.BlockSpec((tm, tk), lambda i, j, k: (i, k)),
        pl.BlockSpec((tk, tn), lambda i, j, k: (k, j)),
        pl.BlockSpec((1, tn), lambda i, j, k: (0, j)),
    ]
    args = [a, w, b.reshape(1, N)]
    if has_res:
        in_specs.append(pl.BlockSpec((tm, tn), lambda i, j, k: (i, j)))
        args.append(residual)

    return pl.pallas_call(
        kernel,
        grid=(M // tm, N // tn, nk),
        out_shape=jax.ShapeDtypeStruct((M, N), out_dtype),
        in_specs=in_specs,
        out_specs=pl.BlockSpec((tm, tn), lambda i, j, k: (i, j)),
        scratch_shapes=[pltpu.VMEM((tm, tn), jnp.float32)],
        compiler_params=pltpu.CompilerParams(
            dimension_semantics=("parallel", "parallel", "arbitrary"),
            vmem_limit_bytes=32 * 1024 * 1024,
        ),
    )(*args)


# ------------------- batched multi-head residual attention -------------------

def _attn_kernel(qkv_ref, prev_ref, o_ref, s_ref, *, n_heads, scale):
    x = qkv_ref[...]                       # (bt, P, 3*D) bf16
    prev = prev_ref[...]                   # (bt, P, H*P) f32 (raw scores)
    P = x.shape[1]
    d_model = x.shape[2] // 3
    d_k = d_model // n_heads
    outs, scores_all = [], []
    for h in range(n_heads):
        q = x[..., h * d_k:(h + 1) * d_k]
        k = x[..., d_model + h * d_k:d_model + (h + 1) * d_k]
        v = x[..., 2 * d_model + h * d_k:2 * d_model + (h + 1) * d_k]
        s = jnp.einsum("bqd,bkd->bqk", q, k,
                       preferred_element_type=jnp.float32) * scale
        s = s + prev[..., h * P:(h + 1) * P]          # residual attention
        scores_all.append(s)
        m = jnp.max(s, axis=-1, keepdims=True)
        e = jnp.exp(s - m)
        p = e * pl.reciprocal(jnp.sum(e, axis=-1, keepdims=True), approx=True)
        outs.append(jnp.einsum("bqk,bkd->bqd", p.astype(jnp.bfloat16), v,
                               preferred_element_type=jnp.float32))
    o_ref[...] = jnp.concatenate(outs, axis=-1).astype(o_ref.dtype)
    s_ref[...] = jnp.concatenate(scores_all, axis=-1)


def pallas_attention(qkv, prev, *, n_heads, scale):
    """qkv: [BN, P, 3*D] bf16; prev: [BN, P, H*P] f32 (head-packed raw scores).
    Returns (out [BN, P, D] bf16, scores [BN, P, H*P] f32)."""
    BN, P, threeD = qkv.shape
    D = threeD // 3
    HP = prev.shape[-1]
    bt = _pick_divisor(BN, 16)
    return pl.pallas_call(
        functools.partial(_attn_kernel, n_heads=n_heads, scale=scale),
        grid=(BN // bt,),
        out_shape=(jax.ShapeDtypeStruct((BN, P, D), jnp.bfloat16),
                   jax.ShapeDtypeStruct((BN, P, HP), jnp.float32)),
        in_specs=[pl.BlockSpec((bt, P, threeD), lambda i: (i, 0, 0)),
                  pl.BlockSpec((bt, P, HP), lambda i: (i, 0, 0))],
        out_specs=(pl.BlockSpec((bt, P, D), lambda i: (i, 0, 0)),
                   pl.BlockSpec((bt, P, HP), lambda i: (i, 0, 0))),
        compiler_params=pltpu.CompilerParams(
            dimension_semantics=("parallel",)),
    )(qkv, prev)


# --------------------- tiled two-pass BatchNorm (training) ---------------------

def _bn_stats_kernel(x_ref, s_ref):
    @pl.when(pl.program_id(0) == 0)
    def _init():
        s_ref[...] = jnp.zeros_like(s_ref)
    x = x_ref[...]
    s_ref[...] += jnp.concatenate(
        [jnp.sum(x, axis=0, keepdims=True),
         jnp.sum(x * x, axis=0, keepdims=True)], axis=0)


def _bn_apply_kernel(x_ref, s_ref, g_ref, b_ref, o_ref, *, eps, inv_m):
    stats = s_ref[...]
    mean = stats[0:1, :] * inv_m
    var = stats[1:2, :] * inv_m - mean * mean        # biased variance
    o_ref[...] = ((x_ref[...] - mean) * jax.lax.rsqrt(var + eps)
                  * g_ref[...] + b_ref[...])


def pallas_batchnorm(x2d, gamma, beta, eps=1e-5):
    """BatchNorm1d over channel dim D of x2d: [M, D], batch statistics."""
    M, D = x2d.shape
    tm = _pick_tile(M, 512, 8)
    stats = pl.pallas_call(
        _bn_stats_kernel,
        grid=(M // tm,),
        out_shape=jax.ShapeDtypeStruct((2, D), jnp.float32),
        in_specs=[pl.BlockSpec((tm, D), lambda i: (i, 0))],
        out_specs=pl.BlockSpec((2, D), lambda i: (0, 0)),
        compiler_params=pltpu.CompilerParams(
            dimension_semantics=("arbitrary",)),
    )(x2d)
    return pl.pallas_call(
        functools.partial(_bn_apply_kernel, eps=eps, inv_m=1.0 / M),
        grid=(M // tm,),
        out_shape=jax.ShapeDtypeStruct((M, D), jnp.float32),
        in_specs=[pl.BlockSpec((tm, D), lambda i: (i, 0)),
                  pl.BlockSpec((2, D), lambda i: (0, 0)),
                  pl.BlockSpec((1, D), lambda i: (0, 0)),
                  pl.BlockSpec((1, D), lambda i: (0, 0))],
        out_specs=pl.BlockSpec((tm, D), lambda i: (i, 0)),
        compiler_params=pltpu.CompilerParams(
            dimension_semantics=("parallel",)),
    )(x2d, stats, gamma.reshape(1, D), beta.reshape(1, D))


# --------------------------- parameters (synthetic) ---------------------------

def init_params(key, c_in, target_dim, patch_len, num_patch, e_layers,
                d_model, n_heads, d_ff):
    keys = jax.random.split(key, 3 + e_layers)

    def w(k, shape, s=0.02):
        return jax.random.normal(k, shape, jnp.float32) * s

    params = {
        "W_P": w(keys[0], (patch_len, d_model)),
        "b_P": jnp.zeros((d_model,), jnp.float32),
        # pe='zeros', learn_pe=True -> uniform(-0.02, 0.02) init
        "W_pos": jax.random.uniform(keys[1], (num_patch, d_model),
                                    jnp.float32, -0.02, 0.02),
        "W_head": w(keys[2], (d_model * num_patch, target_dim)),
        "b_head": jnp.zeros((target_dim,), jnp.float32),
        "layers": [],
    }
    for l in range(e_layers):
        lk = jax.random.split(keys[3 + l], 6)
        params["layers"].append(dict(
            Wq=w(lk[0], (d_model, d_model)), bq=jnp.zeros((d_model,), jnp.float32),
            Wk=w(lk[1], (d_model, d_model)), bk=jnp.zeros((d_model,), jnp.float32),
            Wv=w(lk[2], (d_model, d_model)), bv=jnp.zeros((d_model,), jnp.float32),
            Wo=w(lk[3], (d_model, d_model)), bo=jnp.zeros((d_model,), jnp.float32),
            bn1_g=jnp.ones((d_model,), jnp.float32), bn1_b=jnp.zeros((d_model,), jnp.float32),
            W1=w(lk[4], (d_model, d_ff)), b1=jnp.zeros((d_ff,), jnp.float32),
            W2=w(lk[5], (d_ff, d_model)), b2=jnp.zeros((d_model,), jnp.float32),
            bn2_g=jnp.ones((d_model,), jnp.float32), bn2_b=jnp.zeros((d_model,), jnp.float32),
        ))
    return params


def prepare_params(params):
    """Kernel-friendly form: bf16 weights, fused QKV weight, head weight with
    the backbone z-transpose folded into its row order."""
    d_model = params["W_P"].shape[1]
    num_patch = params["W_pos"].shape[0]
    W_head = params["W_head"]           # rows indexed by dm*num_patch + p (torch)
    W_head_perm = (W_head.reshape(d_model, num_patch, -1)
                   .transpose(1, 0, 2)          # rows -> p*d_model + dm (ours)
                   .reshape(W_head.shape[0], -1))
    prep = {
        "W_P": params["W_P"].astype(jnp.bfloat16),
        "b_P": params["b_P"],
        "W_pos": params["W_pos"],
        "W_head": W_head_perm.astype(jnp.bfloat16),
        "b_head": params["b_head"],
        "layers": [],
    }
    for lp in params["layers"]:
        prep["layers"].append(dict(
            Wqkv=jnp.concatenate([lp["Wq"], lp["Wk"], lp["Wv"]],
                                 axis=1).astype(jnp.bfloat16),
            bqkv=jnp.concatenate([lp["bq"], lp["bk"], lp["bv"]]),
            Wo=lp["Wo"].astype(jnp.bfloat16), bo=lp["bo"],
            W1=lp["W1"].astype(jnp.bfloat16), b1=lp["b1"],
            W2=lp["W2"].astype(jnp.bfloat16), b2=lp["b2"],
            bn1_g=lp["bn1_g"], bn1_b=lp["bn1_b"],
            bn2_g=lp["bn2_g"], bn2_b=lp["bn2_b"],
        ))
    return prep


# ------------------------------- forward pass -------------------------------

def forward(params, x, n_heads):
    """x: [bs x num_patch x n_vars x patch_len] -> [bs x target_dim x n_vars]."""
    bs, num_patch, n_vars, patch_len = x.shape
    d_model = params["W_P"].shape[1]
    d_k = d_model // n_heads
    P = num_patch
    BN = bs * n_vars
    scale = float(d_k) ** -0.5

    # Single small transpose of the raw input; every later layout change is a
    # free reshape (no HBM transposes inside the layer loop).
    xt = jnp.transpose(x, (0, 2, 1, 3)).reshape(BN * P, patch_len)

    # Patch embedding (shared) + learned positional encoding (dropout p=0).
    e = pallas_linear(xt, params["W_P"], params["b_P"])
    src = (e.reshape(BN, P, d_model) + params["W_pos"][None]).reshape(BN * P,
                                                                      d_model)

    prev = jnp.zeros((BN, P, n_heads * P), jnp.float32)   # residual attn scores

    for lp in params["layers"]:
        # Fused QKV projection (bf16 output feeds the attention MXU ops only).
        qkv = pallas_linear(src, lp["Wqkv"], lp["bqkv"],
                            out_dtype=jnp.bfloat16)
        attn_out, prev = pallas_attention(qkv.reshape(BN, P, 3 * d_model),
                                          prev, n_heads=n_heads, scale=scale)
        # Output projection with the residual add fused into the epilogue.
        src_plus = pallas_linear(attn_out.reshape(BN * P, d_model),
                                 lp["Wo"], lp["bo"], residual=src)
        src_bn = pallas_batchnorm(src_plus, lp["bn1_g"], lp["bn1_b"])
        # Position-wise FFN: bias+GELU fused into W1, residual fused into W2.
        h = pallas_linear(src_bn, lp["W1"], lp["b1"], activation="gelu",
                          out_dtype=jnp.bfloat16)
        ff_plus = pallas_linear(h, lp["W2"], lp["b2"], residual=src_bn)
        src = pallas_batchnorm(ff_plus, lp["bn2_g"], lp["bn2_b"])

    # Prediction head: z-transpose folded into W_head's row order, so the
    # flatten is a free reshape.
    flat = src.reshape(BN, P * d_model)
    pred = pallas_linear(flat, params["W_head"], params["b_head"])
    pred = pred.reshape(bs, n_vars, -1)
    return jnp.transpose(pred, (0, 2, 1))                  # [bs x target x nvars]


# ----------------------------------- main -----------------------------------

if __name__ == "__main__":
    bs, num_patch, n_vars, patch_len = 2, 8, 4, 12
    target_dim, e_layers, d_model, n_heads, d_ff = 16, 2, 32, 4, 64

    key = jax.random.PRNGKey(0)
    kx, kp = jax.random.split(key)
    x = jax.random.normal(kx, (bs, num_patch, n_vars, patch_len), jnp.float32)
    raw_params = init_params(kp, n_vars, target_dim, patch_len, num_patch,
                             e_layers, d_model, n_heads, d_ff)
    params = prepare_params(raw_params)

    fwd = jax.jit(lambda p, xx: forward(p, xx, n_heads))
    out = fwd(params, x)
    jax.block_until_ready(out)
    assert out.shape == (bs, target_dim, n_vars), out.shape
    print("KERNEL_OK")
</pallas_src>

<mosaic_0001>
module attributes {stable_mosaic.version = 11 : i64} {
  func.func @kernel(%arg0: i32, %arg1: i32, %arg2: i32, %arg3: memref<64x12xf32, #tpu.memory_space<vmem>>, %arg4: memref<12x32xbf16, #tpu.memory_space<vmem>>, %arg5: memref<1x32xf32, #tpu.memory_space<vmem>>, %arg6: memref<64x32xf32, #tpu.memory_space<vmem>>, %arg7: memref<64x32xf32, #tpu.memory_space<vmem>>) attributes {dimension_semantics = [#tpu.dimension_semantics<parallel>, #tpu.dimension_semantics<parallel>, #tpu.dimension_semantics<arbitrary>], iteration_bounds = array<i64: 1, 1, 1>, scalar_prefetch = 0 : i64, scratch_operands = 1 : i64, tpu.core_type = #tpu.core_type<tc>, window_params = [{transform_indices = @transform_0, window_bounds = array<i64: 64, 12>}, {transform_indices = @transform_1, window_bounds = array<i64: 12, 32>}, {transform_indices = @transform_2, window_bounds = array<i64: 1, 32>}, {transform_indices = @transform_3, window_bounds = array<i64: 64, 32>}]} {
    %c0_i32 = arith.constant 0 : i32
    %0 = arith.cmpi eq, %arg2, %c0_i32 : i32
    %1 = arith.extui %0 : i1 to i32
    %c0_i32_0 = arith.constant 0 : i32
    %2 = arith.cmpi ne, %1, %c0_i32_0 : i32
    scf.if %2 {
      %cst_10 = arith.constant 0.000000e+00 : f32
      %13 = vector.broadcast %cst_10 : f32 to vector<64x32xf32>
      %c0_11 = arith.constant 0 : index
      %c0_12 = arith.constant 0 : index
      %14 = vector.load %arg7[%c0_11, %c0_12] : memref<64x32xf32, #tpu.memory_space<vmem>>, vector<64x32xf32>
      tpu.vector_store %arg7[%c0_11, %c0_12], %13 {strides = array<i32>} : memref<64x32xf32, #tpu.memory_space<vmem>>, vector<64x32xf32>,
    } else {
    }
    %c0 = arith.constant 0 : index
    %c0_1 = arith.constant 0 : index
    %3 = vector.load %arg7[%c0, %c0_1] : memref<64x32xf32, #tpu.memory_space<vmem>>, vector<64x32xf32>
    %c0_2 = arith.constant 0 : index
    %c0_3 = arith.constant 0 : index
    %4 = vector.load %arg3[%c0_2, %c0_3] : memref<64x12xf32, #tpu.memory_space<vmem>>, vector<64x12xf32>
    %5 = arith.truncf %4 : vector<64x12xf32> to vector<64x12xbf16>
    %c0_4 = arith.constant 0 : index
    %c0_5 = arith.constant 0 : index
    %6 = vector.load %arg4[%c0_4, %c0_5] : memref<12x32xbf16, #tpu.memory_space<vmem>>, vector<12x32xbf16>
    %cst = arith.constant dense<0.000000e+00> : vector<64x32xf32>
    %7 = tpu.matmul %5, %6, %cst {dimension_numbers = #tpu.dot_dimension_numbers<[1], [0], [0], [1], [0, 0, 1, 1], [], []>} : vector<64x12xbf16>, vector<12x32xbf16>, vector<64x32xf32> -> vector<64x32xf32>
    %8 = arith.addf %3, %7 : vector<64x32xf32>
    %c0_6 = arith.constant 0 : index
    %c0_7 = arith.constant 0 : index
    %9 = vector.load %arg7[%c0_6, %c0_7] : memref<64x32xf32, #tpu.memory_space<vmem>>, vector<64x32xf32>
    tpu.vector_store %arg7[%c0_6, %c0_7], %8 {strides = array<i32>} : memref<64x32xf32, #tpu.memory_space<vmem>>, vector<64x32xf32>,
    %c0_i32_8 = arith.constant 0 : i32
    %10 = arith.cmpi eq, %arg2, %c0_i32_8 : i32
    %11 = arith.extui %10 : i1 to i32
    %c0_i32_9 = arith.constant 0 : i32
    %12 = arith.cmpi ne, %11, %c0_i32_9 : i32
    scf.if %12 {
      %c0_10 = arith.constant 0 : index
      %c0_11 = arith.constant 0 : index
      %13 = vector.load %arg7[%c0_10, %c0_11] : memref<64x32xf32, #tpu.memory_space<vmem>>, vector<64x32xf32>
      %c0_12 = arith.constant 0 : index
      %c0_13 = arith.constant 0 : index
      %14 = vector.load %arg5[%c0_12, %c0_13] : memref<1x32xf32, #tpu.memory_space<vmem>>, vector<1x32xf32>
      %15 = vector.broadcast %14 : vector<1x32xf32> to vector<64x32xf32>
      %16 = arith.addf %13, %15 : vector<64x32xf32>
      %c0_14 = arith.constant 0 : index
      %c0_15 = arith.constant 0 : index
      %17 = vector.load %arg6[%c0_14, %c0_15] : memref<64x32xf32, #tpu.memory_space<vmem>>, vector<64x32xf32>
      tpu.vector_store %arg6[%c0_14, %c0_15], %16 {strides = array<i32>} : memref<64x32xf32, #tpu.memory_space<vmem>>, vector<64x32xf32>,
    } else {
    }
    return
  }
  func.func @transform_0(%arg0: i32, %arg1: i32, %arg2: i32) -> (i32, i32) {
    %c0_i32 = arith.constant 0 : i32
    return %arg0, %arg2 : i32, i32
  }
  func.func @transform_1(%arg0: i32, %arg1: i32, %arg2: i32) -> (i32, i32) {
    %c0_i32 = arith.constant 0 : i32
    return %arg2, %arg1 : i32, i32
  }
  func.func @transform_2(%arg0: i32, %arg1: i32, %arg2: i32) -> (i32, i32) {
    %c0_i32 = arith.constant 0 : i32
    %c0_i32_0 = arith.constant 0 : i32
    return %c0_i32, %arg1 : i32, i32
  }
  func.func @transform_3(%arg0: i32, %arg1: i32, %arg2: i32) -> (i32, i32) {
    %c0_i32 = arith.constant 0 : i32
    return %arg0, %arg1 : i32, i32
  }
}

module attributes {stable_mosaic.version = 11 : i64} {
  func.func @kernel(%arg0: i32, %arg1: i32, %arg2: i32, %arg3: memref<64x32xf32, #tpu.memory_space<vmem>>, %arg4: memref<32x96xbf16, #tpu.memory_space<vmem>>, %arg5: memref<1x96xf32, #tpu.memory_space<vmem>>, %arg6: memref<64x96xbf16, #tpu.memory_space<vmem>>, %arg7: memref<64x96xf32, #tpu.memory_space<vmem>>) attributes {dimension_semantics = [#tpu.dimension_semantics<parallel>, #tpu.dimension_semantics<parallel>, #tpu.dimension_semantics<arbitrary>], iteration_bounds = array<i64: 1, 1, 1>, scalar_prefetch = 0 : i64, scratch_operands = 1 : i64, tpu.core_type = #tpu.core_type<tc>, window_params = [{transform_indices = @transform_0, window_bounds = array<i64: 64, 32>}, {transform_indices = @transform_1, window_bounds = array<i64: 32, 96>}, {transform_indices = @transform_2, window_bounds = array<i64: 1, 96>}, {transform_indices = @transform_3, window_bounds = array<i64: 64, 96>}]} {
    %c0_i32 = arith.constant 0 : i32
    %0 = arith.cmpi eq, %arg2, %c0_i32 : i32
    %1 = arith.extui %0 : i1 to i32
    %c0_i32_0 = arith.constant 0 : i32
    %2 = arith.cmpi ne, %1, %c0_i32_0 : i32
    scf.if %2 {
      %cst_10 = arith.constant 0.000000e+00 : f32
      %13 = vector.broadcast %cst_10 : f32 to vector<64x96xf32>
      %c0_11 = arith.constant 0 : index
      %c0_12 = arith.constant 0 : index
      %14 = vector.load %arg7[%c0_11, %c0_12] : memref<64x96xf32, #tpu.memory_space<vmem>>, vector<64x96xf32>
      tpu.vector_store %arg7[%c0_11, %c0_12], %13 {strides = array<i32>} : memref<64x96xf32, #tpu.memory_space<vmem>>, vector<64x96xf32>,
    } else {
    }
    %c0 = arith.constant 0 : index
    %c0_1 = arith.constant 0 : index
    %3 = vector.load %arg7[%c0, %c0_1] : memref<64x96xf32, #tpu.memory_space<vmem>>, vector<64x96xf32>
    %c0_2 = arith.constant 0 : index
    %c0_3 = arith.constant 0 : index
    %4 = vector.load %arg3[%c0_2, %c0_3] : memref<64x32xf32, #tpu.memory_space<vmem>>, vector<64x32xf32>
    %5 = arith.truncf %4 : vector<64x32xf32> to vector<64x32xbf16>
    %c0_4 = arith.constant 0 : index
    %c0_5 = arith.constant 0 : index
    %6 = vector.load %arg4[%c0_4, %c0_5] : memref<32x96xbf16, #tpu.memory_space<vmem>>, vector<32x96xbf16>
    %cst = arith.constant dense<0.000000e+00> : vector<64x96xf32>
    %7 = tpu.matmul %5, %6, %cst {dimension_numbers = #tpu.dot_dimension_numbers<[1], [0], [0], [1], [0, 0, 1, 1], [], []>} : vector<64x32xbf16>, vector<32x96xbf16>, vector<64x96xf32> -> vector<64x96xf32>
    %8 = arith.addf %3, %7 : vector<64x96xf32>
    %c0_6 = arith.constant 0 : index
    %c0_7 = arith.constant 0 : index
    %9 = vector.load %arg7[%c0_6, %c0_7] : memref<64x96xf32, #tpu.memory_space<vmem>>, vector<64x96xf32>
    tpu.vector_store %arg7[%c0_6, %c0_7], %8 {strides = array<i32>} : memref<64x96xf32, #tpu.memory_space<vmem>>, vector<64x96xf32>,
    %c0_i32_8 = arith.constant 0 : i32
    %10 = arith.cmpi eq, %arg2, %c0_i32_8 : i32
    %11 = arith.extui %10 : i1 to i32
    %c0_i32_9 = arith.constant 0 : i32
    %12 = arith.cmpi ne, %11, %c0_i32_9 : i32
    scf.if %12 {
      %c0_10 = arith.constant 0 : index
      %c0_11 = arith.constant 0 : index
      %13 = vector.load %arg7[%c0_10, %c0_11] : memref<64x96xf32, #tpu.memory_space<vmem>>, vector<64x96xf32>
      %c0_12 = arith.constant 0 : index
      %c0_13 = arith.constant 0 : index
      %14 = vector.load %arg5[%c0_12, %c0_13] : memref<1x96xf32, #tpu.memory_space<vmem>>, vector<1x96xf32>
      %15 = vector.broadcast %14 : vector<1x96xf32> to vector<64x96xf32>
      %16 = arith.addf %13, %15 : vector<64x96xf32>
      %17 = arith.truncf %16 : vector<64x96xf32> to vector<64x96xbf16>
      %c0_14 = arith.constant 0 : index
      %c0_15 = arith.constant 0 : index
      %18 = vector.load %arg6[%c0_14, %c0_15] : memref<64x96xbf16, #tpu.memory_space<vmem>>, vector<64x96xbf16>
      tpu.vector_store %arg6[%c0_14, %c0_15], %17 {strides = array<i32>} : memref<64x96xbf16, #tpu.memory_space<vmem>>, vector<64x96xbf16>,
    } else {
    }
    return
  }
  func.func @transform_0(%arg0: i32, %arg1: i32, %arg2: i32) -> (i32, i32) {
    %c0_i32 = arith.constant 0 : i32
    return %arg0, %arg2 : i32, i32
  }
  func.func @transform_1(%arg0: i32, %arg1: i32, %arg2: i32) -> (i32, i32) {
    %c0_i32 = arith.constant 0 : i32
    return %arg2, %arg1 : i32, i32
  }
  func.func @transform_2(%arg0: i32, %arg1: i32, %arg2: i32) -> (i32, i32) {
    %c0_i32 = arith.constant 0 : i32
    %c0_i32_0 = arith.constant 0 : i32
    return %c0_i32, %arg1 : i32, i32
  }
  func.func @transform_3(%arg0: i32, %arg1: i32, %arg2: i32) -> (i32, i32) {
    %c0_i32 = arith.constant 0 : i32
    return %arg0, %arg1 : i32, i32
  }
}

module attributes {stable_mosaic.version = 11 : i64} {
  func.func @_attn_kernel(%arg0: i32, %arg1: memref<8x8x96xbf16, #tpu.memory_space<vmem>>, %arg2: memref<8x8x32xf32, #tpu.memory_space<vmem>>, %arg3: memref<8x8x32xbf16, #tpu.memory_space<vmem>>, %arg4: memref<8x8x32xf32, #tpu.memory_space<vmem>>) attributes {dimension_semantics = [#tpu.dimension_semantics<parallel>], iteration_bounds = array<i64: 1>, scalar_prefetch = 0 : i64, scratch_operands = 0 : i64, tpu.core_type = #tpu.core_type<tc>, window_params = [{transform_indices = @transform_0, window_bounds = array<i64: 8, 8, 96>}, {transform_indices = @transform_1, window_bounds = array<i64: 8, 8, 32>}, {transform_indices = @transform_2, window_bounds = array<i64: 8, 8, 32>}, {transform_indices = @transform_3, window_bounds = array<i64: 8, 8, 32>}]} {
    %c0 = arith.constant 0 : index
    %c0_0 = arith.constant 0 : index
    %c0_1 = arith.constant 0 : index
    %0 = vector.load %arg1[%c0, %c0_0, %c0_1] : memref<8x8x96xbf16, #tpu.memory_space<vmem>>, vector<8x8x96xbf16>
    %c0_2 = arith.constant 0 : index
    %c0_3 = arith.constant 0 : index
    %c0_4 = arith.constant 0 : index
    %1 = vector.load %arg2[%c0_2, %c0_3, %c0_4] : memref<8x8x32xf32, #tpu.memory_space<vmem>>, vector<8x8x32xf32>
    %2 = vector.extract_strided_slice %0 {offsets = [0, 0, 0], sizes = [8, 8, 8], strides = [1, 1, 1]} : vector<8x8x96xbf16> to vector<8x8x8xbf16>
    %3 = vector.extract_strided_slice %0 {offsets = [0, 0, 32], sizes = [8, 8, 8], strides = [1, 1, 1]} : vector<8x8x96xbf16> to vector<8x8x8xbf16>
    %4 = vector.extract_strided_slice %0 {offsets = [0, 0, 64], sizes = [8, 8, 8], strides = [1, 1, 1]} : vector<8x8x96xbf16> to vector<8x8x8xbf16>
    "tpu.trace_start"() <{level = 10 : i32, message = "bqd,bkd->bqk"}> : () -> ()
    %cst = arith.constant dense<0.000000e+00> : vector<8x8x8xf32>
    %5 = tpu.matmul %2, %3, %cst {dimension_numbers = #tpu.dot_dimension_numbers<[2], [2], [1], [1], [0, 0, 0, 1, 1, 1], [0], [0]>} : vector<8x8x8xbf16>, vector<8x8x8xbf16>, vector<8x8x8xf32> -> vector<8x8x8xf32>
    "tpu.trace_stop"() : () -> ()
    %cst_5 = arith.constant 0.353553385 : f32
    %6 = vector.broadcast %cst_5 : f32 to vector<8x8x8xf32>
    %7 = arith.mulf %5, %6 : vector<8x8x8xf32>
    %8 = vector.extract_strided_slice %1 {offsets = [0, 0, 0], sizes = [8, 8, 8], strides = [1, 1, 1]} : vector<8x8x32xf32> to vector<8x8x8xf32>
    %9 = arith.addf %7, %8 : vector<8x8x8xf32>
    %cst_6 = arith.constant dense<0xFF800000> : vector<8x8xf32>
    %10 = vector.multi_reduction <maximumf>, %9, %cst_6 [2] : vector<8x8x8xf32> to vector<8x8xf32>
    %11 = vector.shape_cast %10 : vector<8x8xf32> to vector<8x8x1xf32>
    %12 = vector.broadcast %11 : vector<8x8x1xf32> to vector<8x8x8xf32>
    %13 = arith.subf %9, %12 : vector<8x8x8xf32>
    %14 = math.exp %13 : vector<8x8x8xf32>
    %cst_7 = arith.constant dense<0.000000e+00> : vector<8x8xf32>
    %15 = vector.multi_reduction <add>, %14, %cst_7 [2] : vector<8x8x8xf32> to vector<8x8xf32>
    %16 = vector.shape_cast %15 : vector<8x8xf32> to vector<8x8x1xf32>
    %17 = tpu.reciprocal %16 {approx = true} : vector<8x8x1xf32> -> vector<8x8x1xf32>
    %18 = vector.broadcast %17 : vector<8x8x1xf32> to vector<8x8x8xf32>
    %19 = arith.mulf %14, %18 : vector<8x8x8xf32>
    %20 = arith.truncf %19 : vector<8x8x8xf32> to vector<8x8x8xbf16>
    "tpu.trace_start"() <{level = 10 : i32, message = "bqk,bkd->bqd"}> : () -> ()
    %cst_8 = arith.constant dense<0.000000e+00> : vector<8x8x8xf32>
    %21 = tpu.matmul %20, %4, %cst_8 {dimension_numbers = #tpu.dot_dimension_numbers<[2], [1], [1], [2], [0, 0, 0, 1, 1, 2], [0], [0]>} : vector<8x8x8xbf16>, vector<8x8x8xbf16>, vector<8x8x8xf32> -> vector<8x8x8xf32>
    "tpu.trace_stop"() : () -> ()
    %22 = vector.extract_strided_slice %0 {offsets = [0, 0, 8], sizes = [8, 8, 8], strides = [1, 1, 1]} : vector<8x8x96xbf16> to vector<8x8x8xbf16>
    %23 = vector.extract_strided_slice %0 {offsets = [0, 0, 40], sizes = [8, 8, 8], strides = [1, 1, 1]} : vector<8x8x96xbf16> to vector<8x8x8xbf16>
    %24 = vector.extract_strided_slice %0 {offsets = [0, 0, 72], sizes = [8, 8, 8], strides = [1, 1, 1]} : vector<8x8x96xbf16> to vector<8x8x8xbf16>
    "tpu.trace_start"() <{level = 10 : i32, message = "bqd,bkd->bqk"}> : () -> ()
    %cst_9 = arith.constant dense<0.000000e+00> : vector<8x8x8xf32>
    %25 = tpu.matmul %22, %23, %cst_9 {dimension_numbers = #tpu.dot_dimension_numbers<[2], [2], [1], [1], [0, 0, 0, 1, 1, 1], [0], [0]>} : vector<8x8x8xbf16>, vector<8x8x8xbf16>, vector<8x8x8xf32> -> vector<8x8x8xf32>
    "tpu.trace_stop"() : () -> ()
    %cst_10 = arith.constant 0.353553385 : f32
    %26 = vector.broadcast %cst_10 : f32 to vector<8x8x8xf32>
    %27 = arith.mulf %25, %26 : vector<8x8x8xf32>
    %28 = vector.extract_strided_slice %1 {offsets = [0, 0, 8], sizes = [8, 8, 8], strides = [1, 1, 1]} : vector<8x8x32xf32> to vector<8x8x8xf32>
    %29 = arith.addf %27, %28 : vector<8x8x8xf32>
    %cst_11 = arith.constant dense<0xFF800000> : vector<8x8xf32>
    %30 = vector.multi_reduction <maximumf>, %29, %cst_11 [2] : vector<8x8x8xf32> to vector<8x8xf32>
    %31 = vector.shape_cast %30 : vector<8x8xf32> to vector<8x8x1xf32>
    %32 = vector.broadcast %31 : vector<8x8x1xf32> to vector<8x8x8xf32>
    %33 = arith.subf %29, %32 : vector<8x8x8xf32>
    %34 = math.exp %33 : vector<8x8x8xf32>
    %cst_12 = arith.constant dense<0.000000e+00> : vector<8x8xf32>
    %35 = vector.multi_reduction <add>, %34, %cst_12 [2] : vector<8x8x8xf32> to vector<8x8xf32>
    %36 = vector.shape_cast %35 : vector<8x8xf32> to vector<8x8x1xf32>
    %37 = tpu.reciprocal %36 {approx = true} : vector<8x8x1xf32> -> vector<8x8x1xf32>
    %38 = vector.broadcast %37 : vector<8x8x1xf32> to vector<8x8x8xf32>
    %39 = arith.mulf %34, %38 : vector<8x8x8xf32>
    %40 = arith.truncf %39 : vector<8x8x8xf32> to vector<8x8x8xbf16>
    "tpu.trace_start"() <{level = 10 : i32, message = "bqk,bkd->bqd"}> : () -> ()
    %cst_13 = arith.constant dense<0.000000e+00> : vector<8x8x8xf32>
    %41 = tpu.matmul %40, %24, %cst_13 {dimension_numbers = #tpu.dot_dimension_numbers<[2], [1], [1], [2], [0, 0, 0, 1, 1, 2], [0], [0]>} : vector<8x8x8xbf16>, vector<8x8x8xbf16>, vector<8x8x8xf32> -> vector<8x8x8xf32>
    "tpu.trace_stop"() : () -> ()
    %42 = vector.extract_strided_slice %0 {offsets = [0, 0, 16], sizes = [8, 8, 8], strides = [1, 1, 1]} : vector<8x8x96xbf16> to vector<8x8x8xbf16>
    %43 = vector.extract_strided_slice %0 {offsets = [0, 0, 48], sizes = [8, 8, 8], strides = [1, 1, 1]} : vector<8x8x96xbf16> to vector<8x8x8xbf16>
    %44 = vector.extract_strided_slice %0 {offsets = [0, 0, 80], sizes = [8, 8, 8], strides = [1, 1, 1]} : vector<8x8x96xbf16> to vector<8x8x8xbf16>
    "tpu.trace_start"() <{level = 10 : i32, message = "bqd,bkd->bqk"}> : () -> ()
    %cst_14 = arith.constant dense<0.000000e+00> : vector<8x8x8xf32>
    %45 = tpu.matmul %42, %43, %cst_14 {dimension_numbers = #tpu.dot_dimension_numbers<[2], [2], [1], [1], [0, 0, 0, 1, 1, 1], [0], [0]>} : vector<8x8x8xbf16>, vector<8x8x8xbf16>, vector<8x8x8xf32> -> vector<8x8x8xf32>
    "tpu.trace_stop"() : () -> ()
    %cst_15 = arith.constant 0.353553385 : f32
    %46 = vector.broadcast %cst_15 : f32 to vector<8x8x8xf32>
    %47 = arith.mulf %45, %46 : vector<8x8x8xf32>
    %48 = vector.extract_strided_slice %1 {offsets = [0, 0, 16], sizes = [8, 8, 8], strides = [1, 1, 1]} : vector<8x8x32xf32> to vector<8x8x8xf32>
    %49 = arith.addf %47, %48 : vector<8x8x8xf32>
    %cst_16 = arith.constant dense<0xFF800000> : vector<8x8xf32>
    %50 = vector.multi_reduction <maximumf>, %49, %cst_16 [2] : vector<8x8x8xf32> to vector<8x8xf32>
    %51 = vector.shape_cast %50 : vector<8x8xf32> to vector<8x8x1xf32>
    %52 = vector.broadcast %51 : vector<8x8x1xf32> to vector<8x8x8xf32>
    %53 = arith.subf %49, %52 : vector<8x8x8xf32>
    %54 = math.exp %53 : vector<8x8x8xf32>
    %cst_17 = arith.constant dense<0.000000e+00> : vector<8x8xf32>
    %55 = vector.multi_reduction <add>, %54, %cst_17 [2] : vector<8x8x8xf32> to vector<8x8xf32>
    %56 = vector.shape_cast %55 : vector<8x8xf32> to vector<8x8x1xf32>
    %57 = tpu.reciprocal %56 {approx = true} : vector<8x8x1xf32> -> vector<8x8x1xf32>
    %58 = vector.broadcast %57 : vector<8x8x1xf32> to vector<8x8x8xf32>
    %59 = arith.mulf %54, %58 : vector<8x8x8xf32>
    %60 = arith.truncf %59 : vector<8x8x8xf32> to vector<8x8x8xbf16>
    "tpu.trace_start"() <{level = 10 : i32, message = "bqk,bkd->bqd"}> : () -> ()
    %cst_18 = arith.constant dense<0.000000e+00> : vector<8x8x8xf32>
    %61 = tpu.matmul %60, %44, %cst_18 {dimension_numbers = #tpu.dot_dimension_numbers<[2], [1], [1], [2], [0, 0, 0, 1, 1, 2], [0], [0]>} : vector<8x8x8xbf16>, vector<8x8x8xbf16>, vector<8x8x8xf32> -> vector<8x8x8xf32>
    "tpu.trace_stop"() : () -> ()
    %62 = vector.extract_strided_slice %0 {offsets = [0, 0, 24], sizes = [8, 8, 8], strides = [1, 1, 1]} : vector<8x8x96xbf16> to vector<8x8x8xbf16>
    %63 = vector.extract_strided_slice %0 {offsets = [0, 0, 56], sizes = [8, 8, 8], strides = [1, 1, 1]} : vector<8x8x96xbf16> to vector<8x8x8xbf16>
    %64 = vector.extract_strided_slice %0 {offsets = [0, 0, 88], sizes = [8, 8, 8], strides = [1, 1, 1]} : vector<8x8x96xbf16> to vector<8x8x8xbf16>
    "tpu.trace_start"() <{level = 10 : i32, message = "bqd,bkd->bqk"}> : () -> ()
    %cst_19 = arith.constant dense<0.000000e+00> : vector<8x8x8xf32>
    %65 = tpu.matmul %62, %63, %cst_19 {dimension_numbers = #tpu.dot_dimension_numbers<[2], [2], [1], [1], [0, 0, 0, 1, 1, 1], [0], [0]>} : vector<8x8x8xbf16>, vector<8x8x8xbf16>, vector<8x8x8xf32> -> vector<8x8x8xf32>
    "tpu.trace_stop"() : () -> ()
    %cst_20 = arith.constant 0.353553385 : f32
    %66 = vector.broadcast %cst_20 : f32 to vector<8x8x8xf32>
    %67 = arith.mulf %65, %66 : vector<8x8x8xf32>
    %68 = vector.extract_strided_slice %1 {offsets = [0, 0, 24], sizes = [8, 8, 8], strides = [1, 1, 1]} : vector<8x8x32xf32> to vector<8x8x8xf32>
    %69 = arith.addf %67, %68 : vector<8x8x8xf32>
    %cst_21 = arith.constant dense<0xFF800000> : vector<8x8xf32>
    %70 = vector.multi_reduction <maximumf>, %69, %cst_21 [2] : vector<8x8x8xf32> to vector<8x8xf32>
    %71 = vector.shape_cast %70 : vector<8x8xf32> to vector<8x8x1xf32>
    %72 = vector.broadcast %71 : vector<8x8x1xf32> to vector<8x8x8xf32>
    %73 = arith.subf %69, %72 : vector<8x8x8xf32>
    %74 = math.exp %73 : vector<8x8x8xf32>
    %cst_22 = arith.constant dense<0.000000e+00> : vector<8x8xf32>
    %75 = vector.multi_reduction <add>, %74, %cst_22 [2] : vector<8x8x8xf32> to vector<8x8xf32>
    %76 = vector.shape_cast %75 : vector<8x8xf32> to vector<8x8x1xf32>
    %77 = tpu.reciprocal %76 {approx = true} : vector<8x8x1xf32> -> vector<8x8x1xf32>
    %78 = vector.broadcast %77 : vector<8x8x1xf32> to vector<8x8x8xf32>
    %79 = arith.mulf %74, %78 : vector<8x8x8xf32>
    %80 = arith.truncf %79 : vector<8x8x8xf32> to vector<8x8x8xbf16>
    "tpu.trace_start"() <{level = 10 : i32, message = "bqk,bkd->bqd"}> : () -> ()
    %cst_23 = arith.constant dense<0.000000e+00> : vector<8x8x8xf32>
    %81 = tpu.matmul %80, %64, %cst_23 {dimension_numbers = #tpu.dot_dimension_numbers<[2], [1], [1], [2], [0, 0, 0, 1, 1, 2], [0], [0]>} : vector<8x8x8xbf16>, vector<8x8x8xbf16>, vector<8x8x8xf32> -> vector<8x8x8xf32>
    "tpu.trace_stop"() : () -> ()
    %82 = tpu.concatenate %21, %41, %61, %81 in 2 : vector<8x8x8xf32>, vector<8x8x8xf32>, vector<8x8x8xf32>, vector<8x8x8xf32> -> vector<8x8x32xf32>
    %83 = arith.truncf %82 : vector<8x8x32xf32> to vector<8x8x32xbf16>
    %c0_24 = arith.constant 0 : index
    %c0_25 = arith.constant 0 : index
    %c0_26 = arith.constant 0 : index
    %84 = vector.load %arg3[%c0_24, %c0_25, %c0_26] : memref<8x8x32xbf16, #tpu.memory_space<vmem>>, vector<8x8x32xbf16>
    tpu.vector_store %arg3[%c0_24, %c0_25, %c0_26], %83 {strides = array<i32>} : memref<8x8x32xbf16, #tpu.memory_space<vmem>>, vector<8x8x32xbf16>,
    %85 = tpu.concatenate %9, %29, %49, %69 in 2 : vector<8x8x8xf32>, vector<8x8x8xf32>, vector<8x8x8xf32>, vector<8x8x8xf32> -> vector<8x8x32xf32>
    %c0_27 = arith.constant 0 : index
    %c0_28 = arith.constant 0 : index
    %c0_29 = arith.constant 0 : index
    %86 = vector.load %arg4[%c0_27, %c0_28, %c0_29] : memref<8x8x32xf32, #tpu.memory_space<vmem>>, vector<8x8x32xf32>
    tpu.vector_store %arg4[%c0_27, %c0_28, %c0_29], %85 {strides = array<i32>} : memref<8x8x32xf32, #tpu.memory_space<vmem>>, vector<8x8x32xf32>,
    return
  }
  func.func @transform_0(%arg0: i32) -> (i32, i32, i32) {
    %c0_i32 = arith.constant 0 : i32
    %c0_i32_0 = arith.constant 0 : i32
    %c0_i32_1 = arith.constant 0 : i32
    return %arg0, %c0_i32, %c0_i32_0 : i32, i32, i32
  }
  func.func @transform_1(%arg0: i32) -> (i32, i32, i32) {
    %c0_i32 = arith.constant 0 : i32
    %c0_i32_0 = arith.constant 0 : i32
    %c0_i32_1 = arith.constant 0 : i32
    return %arg0, %c0_i32, %c0_i32_0 : i32, i32, i32
  }
  func.func @transform_2(%arg0: i32) -> (i32, i32, i32) {
    %c0_i32 = arith.constant 0 : i32
    %c0_i32_0 = arith.constant 0 : i32
    %c0_i32_1 = arith.constant 0 : i32
    return %arg0, %c0_i32, %c0_i32_0 : i32, i32, i32
  }
  func.func @transform_3(%arg0: i32) -> (i32, i32, i32) {
    %c0_i32 = arith.constant 0 : i32
    %c0_i32_0 = arith.constant 0 : i32
    %c0_i32_1 = arith.constant 0 : i32
    return %arg0, %c0_i32, %c0_i32_0 : i32, i32, i32
  }
}

module attributes {stable_mosaic.version = 11 : i64} {
  func.func @kernel(%arg0: i32, %arg1: i32, %arg2: i32, %arg3: memref<64x32xbf16, #tpu.memory_space<vmem>>, %arg4: memref<32x32xbf16, #tpu.memory_space<vmem>>, %arg5: memref<1x32xf32, #tpu.memory_space<vmem>>, %arg6: memref<64x32xf32, #tpu.memory_space<vmem>>, %arg7: memref<64x32xf32, #tpu.memory_space<vmem>>, %arg8: memref<64x32xf32, #tpu.memory_space<vmem>>) attributes {dimension_semantics = [#tpu.dimension_semantics<parallel>, #tpu.dimension_semantics<parallel>, #tpu.dimension_semantics<arbitrary>], iteration_bounds = array<i64: 1, 1, 1>, scalar_prefetch = 0 : i64, scratch_operands = 1 : i64, tpu.core_type = #tpu.core_type<tc>, window_params = [{transform_indices = @transform_0, window_bounds = array<i64: 64, 32>}, {transform_indices = @transform_1, window_bounds = array<i64: 32, 32>}, {transform_indices = @transform_2, window_bounds = array<i64: 1, 32>}, {transform_indices = @transform_3, window_bounds = array<i64: 64, 32>}, {transform_indices = @transform_4, window_bounds = array<i64: 64, 32>}]} {
    %c0_i32 = arith.constant 0 : i32
    %0 = arith.cmpi eq, %arg2, %c0_i32 : i32
    %1 = arith.extui %0 : i1 to i32
    %c0_i32_0 = arith.constant 0 : i32
    %2 = arith.cmpi ne, %1, %c0_i32_0 : i32
    scf.if %2 {
      %cst_10 = arith.constant 0.000000e+00 : f32
      %12 = vector.broadcast %cst_10 : f32 to vector<64x32xf32>
      %c0_11 = arith.constant 0 : index
      %c0_12 = arith.constant 0 : index
      %13 = vector.load %arg8[%c0_11, %c0_12] : memref<64x32xf32, #tpu.memory_space<vmem>>, vector<64x32xf32>
      tpu.vector_store %arg8[%c0_11, %c0_12], %12 {strides = array<i32>} : memref<64x32xf32, #tpu.memory_space<vmem>>, vector<64x32xf32>,
    } else {
    }
    %c0 = arith.constant 0 : index
    %c0_1 = arith.constant 0 : index
    %3 = vector.load %arg8[%c0, %c0_1] : memref<64x32xf32, #tpu.memory_space<vmem>>, vector<64x32xf32>
    %c0_2 = arith.constant 0 : index
    %c0_3 = arith.constant 0 : index
    %4 = vector.load %arg3[%c0_2, %c0_3] : memref<64x32xbf16, #tpu.memory_space<vmem>>, vector<64x32xbf16>
    %c0_4 = arith.constant 0 : index
    %c0_5 = arith.constant 0 : index
    %5 = vector.load %arg4[%c0_4, %c0_5] : memref<32x32xbf16, #tpu.memory_space<vmem>>, vector<32x32xbf16>
    %cst = arith.constant dense<0.000000e+00> : vector<64x32xf32>
    %6 = tpu.matmul %4, %5, %cst {dimension_numbers = #tpu.dot_dimension_numbers<[1], [0], [0], [1], [0, 0, 1, 1], [], []>} : vector<64x32xbf16>, vector<32x32xbf16>, vector<64x32xf32> -> vector<64x32xf32>
    %7 = arith.addf %3, %6 : vector<64x32xf32>
    %c0_6 = arith.constant 0 : index
    %c0_7 = arith.constant 0 : index
    %8 = vector.load %arg8[%c0_6, %c0_7] : memref<64x32xf32, #tpu.memory_space<vmem>>, vector<64x32xf32>
    tpu.vector_store %arg8[%c0_6, %c0_7], %7 {strides = array<i32>} : memref<64x32xf32, #tpu.memory_space<vmem>>, vector<64x32xf32>,
    %c0_i32_8 = arith.constant 0 : i32
    %9 = arith.cmpi eq, %arg2, %c0_i32_8 : i32
    %10 = arith.extui %9 : i1 to i32
    %c0_i32_9 = arith.constant 0 : i32
    %11 = arith.cmpi ne, %10, %c0_i32_9 : i32
    scf.if %11 {
      %c0_10 = arith.constant 0 : index
      %c0_11 = arith.constant 0 : index
      %12 = vector.load %arg8[%c0_10, %c0_11] : memref<64x32xf32, #tpu.memory_space<vmem>>, vector<64x32xf32>
      %c0_12 = arith.constant 0 : index
      %c0_13 = arith.constant 0 : index
      %13 = vector.load %arg5[%c0_12, %c0_13] : memref<1x32xf32, #tpu.memory_space<vmem>>, vector<1x32xf32>
      %14 = vector.broadcast %13 : vector<1x32xf32> to vector<64x32xf32>
      %15 = arith.addf %12, %14 : vector<64x32xf32>
      %c0_14 = arith.constant 0 : index
      %c0_15 = arith.constant 0 : index
      %16 = vector.load %arg6[%c0_14, %c0_15] : memref<64x32xf32, #tpu.memory_space<vmem>>, vector<64x32xf32>
      %17 = arith.addf %15, %16 : vector<64x32xf32>
      %c0_16 = arith.constant 0 : index
      %c0_17 = arith.constant 0 : index
      %18 = vector.load %arg7[%c0_16, %c0_17] : memref<64x32xf32, #tpu.memory_space<vmem>>, vector<64x32xf32>
      tpu.vector_store %arg7[%c0_16, %c0_17], %17 {strides = array<i32>} : memref<64x32xf32, #tpu.memory_space<vmem>>, vector<64x32xf32>,
    } else {
    }
    return
  }
  func.func @transform_0(%arg0: i32, %arg1: i32, %arg2: i32) -> (i32, i32) {
    %c0_i32 = arith.constant 0 : i32
    return %arg0, %arg2 : i32, i32
  }
  func.func @transform_1(%arg0: i32, %arg1: i32, %arg2: i32) -> (i32, i32) {
    %c0_i32 = arith.constant 0 : i32
    return %arg2, %arg1 : i32, i32
  }
  func.func @transform_2(%arg0: i32, %arg1: i32, %arg2: i32) -> (i32, i32) {
    %c0_i32 = arith.constant 0 : i32
    %c0_i32_0 = arith.constant 0 : i32
    return %c0_i32, %arg1 : i32, i32
  }
  func.func @transform_3(%arg0: i32, %arg1: i32, %arg2: i32) -> (i32, i32) {
    %c0_i32 = arith.constant 0 : i32
    return %arg0, %arg1 : i32, i32
  }
  func.func @transform_4(%arg0: i32, %arg1: i32, %arg2: i32) -> (i32, i32) {
    %c0_i32 = arith.constant 0 : i32
    return %arg0, %arg1 : i32, i32
  }
}

module attributes {stable_mosaic.version = 11 : i64} {
  func.func @_bn_stats_kernel(%arg0: i32, %arg1: memref<64x32xf32, #tpu.memory_space<vmem>>, %arg2: memref<2x32xf32, #tpu.memory_space<vmem>>) attributes {dimension_semantics = [#tpu.dimension_semantics<arbitrary>], iteration_bounds = array<i64: 1>, scalar_prefetch = 0 : i64, scratch_operands = 0 : i64, tpu.core_type = #tpu.core_type<tc>, window_params = [{transform_indices = @transform_0, window_bounds = array<i64: 64, 32>}, {pipeline_mode = #tpu.pipeline_mode<synchronous>, transform_indices = @transform_1, window_bounds = array<i64: 2, 32>}]} {
    %c0_i32 = arith.constant 0 : i32
    %0 = arith.cmpi eq, %arg0, %c0_i32 : i32
    %1 = arith.extui %0 : i1 to i32
    %c0_i32_0 = arith.constant 0 : i32
    %2 = arith.cmpi ne, %1, %c0_i32_0 : i32
    scf.if %2 {
      %cst_7 = arith.constant 0.000000e+00 : f32
      %13 = vector.broadcast %cst_7 : f32 to vector<2x32xf32>
      %c0_8 = arith.constant 0 : index
      %c0_9 = arith.constant 0 : index
      %14 = vector.load %arg2[%c0_8, %c0_9] : memref<2x32xf32, #tpu.memory_space<vmem>>, vector<2x32xf32>
      tpu.vector_store %arg2[%c0_8, %c0_9], %13 {strides = array<i32>} : memref<2x32xf32, #tpu.memory_space<vmem>>, vector<2x32xf32>,
    } else {
    }
    %c0 = arith.constant 0 : index
    %c0_1 = arith.constant 0 : index
    %3 = vector.load %arg1[%c0, %c0_1] : memref<64x32xf32, #tpu.memory_space<vmem>>, vector<64x32xf32>
    %c0_2 = arith.constant 0 : index
    %c0_3 = arith.constant 0 : index
    %4 = vector.load %arg2[%c0_2, %c0_3] : memref<2x32xf32, #tpu.memory_space<vmem>>, vector<2x32xf32>
    %cst = arith.constant dense<0.000000e+00> : vector<32xf32>
    %5 = vector.multi_reduction <add>, %3, %cst [0] : vector<64x32xf32> to vector<32xf32>
    %6 = vector.shape_cast %5 : vector<32xf32> to vector<1x32xf32>
    %7 = arith.mulf %3, %3 : vector<64x32xf32>
    %cst_4 = arith.constant dense<0.000000e+00> : vector<32xf32>
    %8 = vector.multi_reduction <add>, %7, %cst_4 [0] : vector<64x32xf32> to vector<32xf32>
    %9 = vector.shape_cast %8 : vector<32xf32> to vector<1x32xf32>
    %10 = tpu.concatenate %6, %9 in 0 : vector<1x32xf32>, vector<1x32xf32> -> vector<2x32xf32>
    %11 = arith.addf %4, %10 : vector<2x32xf32>
    %c0_5 = arith.constant 0 : index
    %c0_6 = arith.constant 0 : index
    %12 = vector.load %arg2[%c0_5, %c0_6] : memref<2x32xf32, #tpu.memory_space<vmem>>, vector<2x32xf32>
    tpu.vector_store %arg2[%c0_5, %c0_6], %11 {strides = array<i32>} : memref<2x32xf32, #tpu.memory_space<vmem>>, vector<2x32xf32>,
    return
  }
  func.func @transform_0(%arg0: i32) -> (i32, i32) {
    %c0_i32 = arith.constant 0 : i32
    %c0_i32_0 = arith.constant 0 : i32
    return %arg0, %c0_i32 : i32, i32
  }
  func.func @transform_1(%arg0: i32) -> (i32, i32) {
    %c0_i32 = arith.constant 0 : i32
    %c0_i32_0 = arith.constant 0 : i32
    %c0_i32_1 = arith.constant 0 : i32
    return %c0_i32, %c0_i32_0 : i32, i32
  }
}

module attributes {stable_mosaic.version = 11 : i64} {
  func.func @_bn_apply_kernel(%arg0: i32, %arg1: memref<64x32xf32, #tpu.memory_space<vmem>>, %arg2: memref<2x32xf32, #tpu.memory_space<vmem>>, %arg3: memref<1x32xf32, #tpu.memory_space<vmem>>, %arg4: memref<1x32xf32, #tpu.memory_space<vmem>>, %arg5: memref<64x32xf32, #tpu.memory_space<vmem>>) attributes {dimension_semantics = [#tpu.dimension_semantics<parallel>], iteration_bounds = array<i64: 1>, scalar_prefetch = 0 : i64, scratch_operands = 0 : i64, tpu.core_type = #tpu.core_type<tc>, window_params = [{transform_indices = @transform_0, window_bounds = array<i64: 64, 32>}, {pipeline_mode = #tpu.pipeline_mode<synchronous>, transform_indices = @transform_1, window_bounds = array<i64: 2, 32>}, {pipeline_mode = #tpu.pipeline_mode<synchronous>, transform_indices = @transform_2, window_bounds = array<i64: 1, 32>}, {pipeline_mode = #tpu.pipeline_mode<synchronous>, transform_indices = @transform_3, window_bounds = array<i64: 1, 32>}, {transform_indices = @transform_4, window_bounds = array<i64: 64, 32>}]} {
    %c0 = arith.constant 0 : index
    %c0_0 = arith.constant 0 : index
    %0 = vector.load %arg2[%c0, %c0_0] : memref<2x32xf32, #tpu.memory_space<vmem>>, vector<2x32xf32>
    %1 = vector.extract_strided_slice %0 {offsets = [0, 0], sizes = [1, 32], strides = [1, 1]} : vector<2x32xf32> to vector<1x32xf32>
    %cst = arith.constant 1.562500e-02 : f32
    %2 = vector.broadcast %cst : f32 to vector<1x32xf32>
    %3 = arith.mulf %1, %2 : vector<1x32xf32>
    %4 = vector.extract_strided_slice %0 {offsets = [1, 0], sizes = [1, 32], strides = [1, 1]} : vector<2x32xf32> to vector<1x32xf32>
    %cst_1 = arith.constant 1.562500e-02 : f32
    %5 = vector.broadcast %cst_1 : f32 to vector<1x32xf32>
    %6 = arith.mulf %4, %5 : vector<1x32xf32>
    %7 = arith.mulf %3, %3 : vector<1x32xf32>
    %8 = arith.subf %6, %7 : vector<1x32xf32>
    %c0_2 = arith.constant 0 : index
    %c0_3 = arith.constant 0 : index
    %9 = vector.load %arg1[%c0_2, %c0_3] : memref<64x32xf32, #tpu.memory_space<vmem>>, vector<64x32xf32>
    %10 = vector.broadcast %3 : vector<1x32xf32> to vector<64x32xf32>
    %11 = arith.subf %9, %10 : vector<64x32xf32>
    %cst_4 = arith.constant 9.99999974E-6 : f32
    %12 = vector.broadcast %cst_4 : f32 to vector<1x32xf32>
    %13 = arith.addf %8, %12 : vector<1x32xf32>
    %14 = math.rsqrt %13 : vector<1x32xf32>
    %15 = vector.broadcast %14 : vector<1x32xf32> to vector<64x32xf32>
    %16 = arith.mulf %11, %15 : vector<64x32xf32>
    %c0_5 = arith.constant 0 : index
    %c0_6 = arith.constant 0 : index
    %17 = vector.load %arg3[%c0_5, %c0_6] : memref<1x32xf32, #tpu.memory_space<vmem>>, vector<1x32xf32>
    %18 = vector.broadcast %17 : vector<1x32xf32> to vector<64x32xf32>
    %19 = arith.mulf %16, %18 : vector<64x32xf32>
    %c0_7 = arith.constant 0 : index
    %c0_8 = arith.constant 0 : index
    %20 = vector.load %arg4[%c0_7, %c0_8] : memref<1x32xf32, #tpu.memory_space<vmem>>, vector<1x32xf32>
    %21 = vector.broadcast %20 : vector<1x32xf32> to vector<64x32xf32>
    %22 = arith.addf %19, %21 : vector<64x32xf32>
    %c0_9 = arith.constant 0 : index
    %c0_10 = arith.constant 0 : index
    %23 = vector.load %arg5[%c0_9, %c0_10] : memref<64x32xf32, #tpu.memory_space<vmem>>, vector<64x32xf32>
    tpu.vector_store %arg5[%c0_9, %c0_10], %22 {strides = array<i32>} : memref<64x32xf32, #tpu.memory_space<vmem>>, vector<64x32xf32>,
    return
  }
  func.func @transform_0(%arg0: i32) -> (i32, i32) {
    %c0_i32 = arith.constant 0 : i32
    %c0_i32_0 = arith.constant 0 : i32
    return %arg0, %c0_i32 : i32, i32
  }
  func.func @transform_1(%arg0: i32) -> (i32, i32) {
    %c0_i32 = arith.constant 0 : i32
    %c0_i32_0 = arith.constant 0 : i32
    %c0_i32_1 = arith.constant 0 : i32
    return %c0_i32, %c0_i32_0 : i32, i32
  }
  func.func @transform_2(%arg0: i32) -> (i32, i32) {
    %c0_i32 = arith.constant 0 : i32
    %c0_i32_0 = arith.constant 0 : i32
    %c0_i32_1 = arith.constant 0 : i32
    return %c0_i32, %c0_i32_0 : i32, i32
  }
  func.func @transform_3(%arg0: i32) -> (i32, i32) {
    %c0_i32 = arith.constant 0 : i32
    %c0_i32_0 = arith.constant 0 : i32
    %c0_i32_1 = arith.constant 0 : i32
    return %c0_i32, %c0_i32_0 : i32, i32
  }
  func.func @transform_4(%arg0: i32) -> (i32, i32) {
    %c0_i32 = arith.constant 0 : i32
    %c0_i32_0 = arith.constant 0 : i32
    return %arg0, %c0_i32 : i32, i32
  }
}

module attributes {stable_mosaic.version = 11 : i64} {
  func.func @kernel(%arg0: i32, %arg1: i32, %arg2: i32, %arg3: memref<64x32xf32, #tpu.memory_space<vmem>>, %arg4: memref<32x64xbf16, #tpu.memory_space<vmem>>, %arg5: memref<1x64xf32, #tpu.memory_space<vmem>>, %arg6: memref<64x64xbf16, #tpu.memory_space<vmem>>, %arg7: memref<64x64xf32, #tpu.memory_space<vmem>>) attributes {dimension_semantics = [#tpu.dimension_semantics<parallel>, #tpu.dimension_semantics<parallel>, #tpu.dimension_semantics<arbitrary>], iteration_bounds = array<i64: 1, 1, 1>, scalar_prefetch = 0 : i64, scratch_operands = 1 : i64, tpu.core_type = #tpu.core_type<tc>, window_params = [{transform_indices = @transform_0, window_bounds = array<i64: 64, 32>}, {transform_indices = @transform_1, window_bounds = array<i64: 32, 64>}, {transform_indices = @transform_2, window_bounds = array<i64: 1, 64>}, {transform_indices = @transform_3, window_bounds = array<i64: 64, 64>}]} {
    %c0_i32 = arith.constant 0 : i32
    %0 = arith.cmpi eq, %arg2, %c0_i32 : i32
    %1 = arith.extui %0 : i1 to i32
    %c0_i32_0 = arith.constant 0 : i32
    %2 = arith.cmpi ne, %1, %c0_i32_0 : i32
    scf.if %2 {
      %cst_10 = arith.constant 0.000000e+00 : f32
      %13 = vector.broadcast %cst_10 : f32 to vector<64x64xf32>
      %c0_11 = arith.constant 0 : index
      %c0_12 = arith.constant 0 : index
      %14 = vector.load %arg7[%c0_11, %c0_12] : memref<64x64xf32, #tpu.memory_space<vmem>>, vector<64x64xf32>
      tpu.vector_store %arg7[%c0_11, %c0_12], %13 {strides = array<i32>} : memref<64x64xf32, #tpu.memory_space<vmem>>, vector<64x64xf32>,
    } else {
    }
    %c0 = arith.constant 0 : index
    %c0_1 = arith.constant 0 : index
    %3 = vector.load %arg7[%c0, %c0_1] : memref<64x64xf32, #tpu.memory_space<vmem>>, vector<64x64xf32>
    %c0_2 = arith.constant 0 : index
    %c0_3 = arith.constant 0 : index
    %4 = vector.load %arg3[%c0_2, %c0_3] : memref<64x32xf32, #tpu.memory_space<vmem>>, vector<64x32xf32>
    %5 = arith.truncf %4 : vector<64x32xf32> to vector<64x32xbf16>
    %c0_4 = arith.constant 0 : index
    %c0_5 = arith.constant 0 : index
    %6 = vector.load %arg4[%c0_4, %c0_5] : memref<32x64xbf16, #tpu.memory_space<vmem>>, vector<32x64xbf16>
    %cst = arith.constant dense<0.000000e+00> : vector<64x64xf32>
    %7 = tpu.matmul %5, %6, %cst {dimension_numbers = #tpu.dot_dimension_numbers<[1], [0], [0], [1], [0, 0, 1, 1], [], []>} : vector<64x32xbf16>, vector<32x64xbf16>, vector<64x64xf32> -> vector<64x64xf32>
    %8 = arith.addf %3, %7 : vector<64x64xf32>
    %c0_6 = arith.constant 0 : index
    %c0_7 = arith.constant 0 : index
    %9 = vector.load %arg7[%c0_6, %c0_7] : memref<64x64xf32, #tpu.memory_space<vmem>>, vector<64x64xf32>
    tpu.vector_store %arg7[%c0_6, %c0_7], %8 {strides = array<i32>} : memref<64x64xf32, #tpu.memory_space<vmem>>, vector<64x64xf32>,
    %c0_i32_8 = arith.constant 0 : i32
    %10 = arith.cmpi eq, %arg2, %c0_i32_8 : i32
    %11 = arith.extui %10 : i1 to i32
    %c0_i32_9 = arith.constant 0 : i32
    %12 = arith.cmpi ne, %11, %c0_i32_9 : i32
    scf.if %12 {
      %c0_10 = arith.constant 0 : index
      %c0_11 = arith.constant 0 : index
      %13 = vector.load %arg7[%c0_10, %c0_11] : memref<64x64xf32, #tpu.memory_space<vmem>>, vector<64x64xf32>
      %c0_12 = arith.constant 0 : index
      %c0_13 = arith.constant 0 : index
      %14 = vector.load %arg5[%c0_12, %c0_13] : memref<1x64xf32, #tpu.memory_space<vmem>>, vector<1x64xf32>
      %15 = vector.broadcast %14 : vector<1x64xf32> to vector<64x64xf32>
      %16 = arith.addf %13, %15 : vector<64x64xf32>
      %17 = arith.mulf %16, %16 : vector<64x64xf32>
      %18 = arith.mulf %16, %17 : vector<64x64xf32>
      %cst_14 = arith.constant 4.471500e-02 : f32
      %19 = vector.broadcast %cst_14 : f32 to vector<64x64xf32>
      %20 = arith.mulf %19, %18 : vector<64x64xf32>
      %21 = arith.addf %16, %20 : vector<64x64xf32>
      %cst_15 = arith.constant 0.797884583 : f32
      %22 = vector.broadcast %cst_15 : f32 to vector<64x64xf32>
      %23 = arith.mulf %22, %21 : vector<64x64xf32>
      %24 = math.tanh %23 : vector<64x64xf32>
      %cst_16 = arith.constant 1.000000e+00 : f32
      %25 = vector.broadcast %cst_16 : f32 to vector<64x64xf32>
      %26 = arith.addf %25, %24 : vector<64x64xf32>
      %cst_17 = arith.constant 5.000000e-01 : f32
      %27 = vector.broadcast %cst_17 : f32 to vector<64x64xf32>
      %28 = arith.mulf %27, %26 : vector<64x64xf32>
      %29 = arith.mulf %16, %28 : vector<64x64xf32>
      %30 = arith.truncf %29 : vector<64x64xf32> to vector<64x64xbf16>
      %c0_18 = arith.constant 0 : index
      %c0_19 = arith.constant 0 : index
      %31 = vector.load %arg6[%c0_18, %c0_19] : memref<64x64xbf16, #tpu.memory_space<vmem>>, vector<64x64xbf16>
      tpu.vector_store %arg6[%c0_18, %c0_19], %30 {strides = array<i32>} : memref<64x64xbf16, #tpu.memory_space<vmem>>, vector<64x64xbf16>,
    } else {
    }
    return
  }
  func.func @transform_0(%arg0: i32, %arg1: i32, %arg2: i32) -> (i32, i32) {
    %c0_i32 = arith.constant 0 : i32
    return %arg0, %arg2 : i32, i32
  }
  func.func @transform_1(%arg0: i32, %arg1: i32, %arg2: i32) -> (i32, i32) {
    %c0_i32 = arith.constant 0 : i32
    return %arg2, %arg1 : i32, i32
  }
  func.func @transform_2(%arg0: i32, %arg1: i32, %arg2: i32) -> (i32, i32) {
    %c0_i32 = arith.constant 0 : i32
    %c0_i32_0 = arith.constant 0 : i32
    return %c0_i32, %arg1 : i32, i32
  }
  func.func @transform_3(%arg0: i32, %arg1: i32, %arg2: i32) -> (i32, i32) {
    %c0_i32 = arith.constant 0 : i32
    return %arg0, %arg1 : i32, i32
  }
}

module attributes {stable_mosaic.version = 11 : i64} {
  func.func @_attn_kernel(%arg0: i32, %arg1: memref<8x8x96xbf16, #tpu.memory_space<vmem>>, %arg2: memref<8x8x32xf32, #tpu.memory_space<vmem>>, %arg3: memref<8x8x32xbf16, #tpu.memory_space<vmem>>, %arg4: memref<8x8x32xf32, #tpu.memory_space<vmem>>) attributes {dimension_semantics = [#tpu.dimension_semantics<parallel>], iteration_bounds = array<i64: 1>, scalar_prefetch = 0 : i64, scratch_operands = 0 : i64, tpu.core_type = #tpu.core_type<tc>, window_params = [{transform_indices = @transform_0, window_bounds = array<i64: 8, 8, 96>}, {transform_indices = @transform_1, window_bounds = array<i64: 8, 8, 32>}, {transform_indices = @transform_2, window_bounds = array<i64: 8, 8, 32>}, {transform_indices = @transform_3, window_bounds = array<i64: 8, 8, 32>}]} {
    %c0 = arith.constant 0 : index
    %c0_0 = arith.constant 0 : index
    %c0_1 = arith.constant 0 : index
    %0 = vector.load %arg1[%c0, %c0_0, %c0_1] : memref<8x8x96xbf16, #tpu.memory_space<vmem>>, vector<8x8x96xbf16>
    %c0_2 = arith.constant 0 : index
    %c0_3 = arith.constant 0 : index
    %c0_4 = arith.constant 0 : index
    %1 = vector.load %arg2[%c0_2, %c0_3, %c0_4] : memref<8x8x32xf32, #tpu.memory_space<vmem>>, vector<8x8x32xf32>
    %2 = vector.extract_strided_slice %0 {offsets = [0, 0, 0], sizes = [8, 8, 8], strides = [1, 1, 1]} : vector<8x8x96xbf16> to vector<8x8x8xbf16>
    %3 = vector.extract_strided_slice %0 {offsets = [0, 0, 32], sizes = [8, 8, 8], strides = [1, 1, 1]} : vector<8x8x96xbf16> to vector<8x8x8xbf16>
    %4 = vector.extract_strided_slice %0 {offsets = [0, 0, 64], sizes = [8, 8, 8], strides = [1, 1, 1]} : vector<8x8x96xbf16> to vector<8x8x8xbf16>
    "tpu.trace_start"() <{level = 10 : i32, message = "bqd,bkd->bqk"}> : () -> ()
    %cst = arith.constant dense<0.000000e+00> : vector<8x8x8xf32>
    %5 = tpu.matmul %2, %3, %cst {dimension_numbers = #tpu.dot_dimension_numbers<[2], [2], [1], [1], [0, 0, 0, 1, 1, 1], [0], [0]>} : vector<8x8x8xbf16>, vector<8x8x8xbf16>, vector<8x8x8xf32> -> vector<8x8x8xf32>
    "tpu.trace_stop"() : () -> ()
    %cst_5 = arith.constant 0.353553385 : f32
    %6 = vector.broadcast %cst_5 : f32 to vector<8x8x8xf32>
    %7 = arith.mulf %5, %6 : vector<8x8x8xf32>
    %8 = vector.extract_strided_slice %1 {offsets = [0, 0, 0], sizes = [8, 8, 8], strides = [1, 1, 1]} : vector<8x8x32xf32> to vector<8x8x8xf32>
    %9 = arith.addf %7, %8 : vector<8x8x8xf32>
    %cst_6 = arith.constant dense<0xFF800000> : vector<8x8xf32>
    %10 = vector.multi_reduction <maximumf>, %9, %cst_6 [2] : vector<8x8x8xf32> to vector<8x8xf32>
    %11 = vector.shape_cast %10 : vector<8x8xf32> to vector<8x8x1xf32>
    %12 = vector.broadcast %11 : vector<8x8x1xf32> to vector<8x8x8xf32>
    %13 = arith.subf %9, %12 : vector<8x8x8xf32>
    %14 = math.exp %13 : vector<8x8x8xf32>
    %cst_7 = arith.constant dense<0.000000e+00> : vector<8x8xf32>
    %15 = vector.multi_reduction <add>, %14, %cst_7 [2] : vector<8x8x8xf32> to vector<8x8xf32>
    %16 = vector.shape_cast %15 : vector<8x8xf32> to vector<8x8x1xf32>
    %17 = tpu.reciprocal %16 {approx = true} : vector<8x8x1xf32> -> vector<8x8x1xf32>
    %18 = vector.broadcast %17 : vector<8x8x1xf32> to vector<8x8x8xf32>
    %19 = arith.mulf %14, %18 : vector<8x8x8xf32>
    %20 = arith.truncf %19 : vector<8x8x8xf32> to vector<8x8x8xbf16>
    "tpu.trace_start"() <{level = 10 : i32, message = "bqk,bkd->bqd"}> : () -> ()
    %cst_8 = arith.constant dense<0.000000e+00> : vector<8x8x8xf32>
    %21 = tpu.matmul %20, %4, %cst_8 {dimension_numbers = #tpu.dot_dimension_numbers<[2], [1], [1], [2], [0, 0, 0, 1, 1, 2], [0], [0]>} : vector<8x8x8xbf16>, vector<8x8x8xbf16>, vector<8x8x8xf32> -> vector<8x8x8xf32>
    "tpu.trace_stop"() : () -> ()
    %22 = vector.extract_strided_slice %0 {offsets = [0, 0, 8], sizes = [8, 8, 8], strides = [1, 1, 1]} : vector<8x8x96xbf16> to vector<8x8x8xbf16>
    %23 = vector.extract_strided_slice %0 {offsets = [0, 0, 40], sizes = [8, 8, 8], strides = [1, 1, 1]} : vector<8x8x96xbf16> to vector<8x8x8xbf16>
    %24 = vector.extract_strided_slice %0 {offsets = [0, 0, 72], sizes = [8, 8, 8], strides = [1, 1, 1]} : vector<8x8x96xbf16> to vector<8x8x8xbf16>
    "tpu.trace_start"() <{level = 10 : i32, message = "bqd,bkd->bqk"}> : () -> ()
    %cst_9 = arith.constant dense<0.000000e+00> : vector<8x8x8xf32>
    %25 = tpu.matmul %22, %23, %cst_9 {dimension_numbers = #tpu.dot_dimension_numbers<[2], [2], [1], [1], [0, 0, 0, 1, 1, 1], [0], [0]>} : vector<8x8x8xbf16>, vector<8x8x8xbf16>, vector<8x8x8xf32> -> vector<8x8x8xf32>
    "tpu.trace_stop"() : () -> ()
    %cst_10 = arith.constant 0.353553385 : f32
    %26 = vector.broadcast %cst_10 : f32 to vector<8x8x8xf32>
    %27 = arith.mulf %25, %26 : vector<8x8x8xf32>
    %28 = vector.extract_strided_slice %1 {offsets = [0, 0, 8], sizes = [8, 8, 8], strides = [1, 1, 1]} : vector<8x8x32xf32> to vector<8x8x8xf32>
    %29 = arith.addf %27, %28 : vector<8x8x8xf32>
    %cst_11 = arith.constant dense<0xFF800000> : vector<8x8xf32>
    %30 = vector.multi_reduction <maximumf>, %29, %cst_11 [2] : vector<8x8x8xf32> to vector<8x8xf32>
    %31 = vector.shape_cast %30 : vector<8x8xf32> to vector<8x8x1xf32>
    %32 = vector.broadcast %31 : vector<8x8x1xf32> to vector<8x8x8xf32>
    %33 = arith.subf %29, %32 : vector<8x8x8xf32>
    %34 = math.exp %33 : vector<8x8x8xf32>
    %cst_12 = arith.constant dense<0.000000e+00> : vector<8x8xf32>
    %35 = vector.multi_reduction <add>, %34, %cst_12 [2] : vector<8x8x8xf32> to vector<8x8xf32>
    %36 = vector.shape_cast %35 : vector<8x8xf32> to vector<8x8x1xf32>
    %37 = tpu.reciprocal %36 {approx = true} : vector<8x8x1xf32> -> vector<8x8x1xf32>
    %38 = vector.broadcast %37 : vector<8x8x1xf32> to vector<8x8x8xf32>
    %39 = arith.mulf %34, %38 : vector<8x8x8xf32>
    %40 = arith.truncf %39 : vector<8x8x8xf32> to vector<8x8x8xbf16>
    "tpu.trace_start"() <{level = 10 : i32, message = "bqk,bkd->bqd"}> : () -> ()
    %cst_13 = arith.constant dense<0.000000e+00> : vector<8x8x8xf32>
    %41 = tpu.matmul %40, %24, %cst_13 {dimension_numbers = #tpu.dot_dimension_numbers<[2], [1], [1], [2], [0, 0, 0, 1, 1, 2], [0], [0]>} : vector<8x8x8xbf16>, vector<8x8x8xbf16>, vector<8x8x8xf32> -> vector<8x8x8xf32>
    "tpu.trace_stop"() : () -> ()
    %42 = vector.extract_strided_slice %0 {offsets = [0, 0, 16], sizes = [8, 8, 8], strides = [1, 1, 1]} : vector<8x8x96xbf16> to vector<8x8x8xbf16>
    %43 = vector.extract_strided_slice %0 {offsets = [0, 0, 48], sizes = [8, 8, 8], strides = [1, 1, 1]} : vector<8x8x96xbf16> to vector<8x8x8xbf16>
    %44 = vector.extract_strided_slice %0 {offsets = [0, 0, 80], sizes = [8, 8, 8], strides = [1, 1, 1]} : vector<8x8x96xbf16> to vector<8x8x8xbf16>
    "tpu.trace_start"() <{level = 10 : i32, message = "bqd,bkd->bqk"}> : () -> ()
    %cst_14 = arith.constant dense<0.000000e+00> : vector<8x8x8xf32>
    %45 = tpu.matmul %42, %43, %cst_14 {dimension_numbers = #tpu.dot_dimension_numbers<[2], [2], [1], [1], [0, 0, 0, 1, 1, 1], [0], [0]>} : vector<8x8x8xbf16>, vector<8x8x8xbf16>, vector<8x8x8xf32> -> vector<8x8x8xf32>
    "tpu.trace_stop"() : () -> ()
    %cst_15 = arith.constant 0.353553385 : f32
    %46 = vector.broadcast %cst_15 : f32 to vector<8x8x8xf32>
    %47 = arith.mulf %45, %46 : vector<8x8x8xf32>
    %48 = vector.extract_strided_slice %1 {offsets = [0, 0, 16], sizes = [8, 8, 8], strides = [1, 1, 1]} : vector<8x8x32xf32> to vector<8x8x8xf32>
    %49 = arith.addf %47, %48 : vector<8x8x8xf32>
    %cst_16 = arith.constant dense<0xFF800000> : vector<8x8xf32>
    %50 = vector.multi_reduction <maximumf>, %49, %cst_16 [2] : vector<8x8x8xf32> to vector<8x8xf32>
    %51 = vector.shape_cast %50 : vector<8x8xf32> to vector<8x8x1xf32>
    %52 = vector.broadcast %51 : vector<8x8x1xf32> to vector<8x8x8xf32>
    %53 = arith.subf %49, %52 : vector<8x8x8xf32>
    %54 = math.exp %53 : vector<8x8x8xf32>
    %cst_17 = arith.constant dense<0.000000e+00> : vector<8x8xf32>
    %55 = vector.multi_reduction <add>, %54, %cst_17 [2] : vector<8x8x8xf32> to vector<8x8xf32>
    %56 = vector.shape_cast %55 : vector<8x8xf32> to vector<8x8x1xf32>
    %57 = tpu.reciprocal %56 {approx = true} : vector<8x8x1xf32> -> vector<8x8x1xf32>
    %58 = vector.broadcast %57 : vector<8x8x1xf32> to vector<8x8x8xf32>
    %59 = arith.mulf %54, %58 : vector<8x8x8xf32>
    %60 = arith.truncf %59 : vector<8x8x8xf32> to vector<8x8x8xbf16>
    "tpu.trace_start"() <{level = 10 : i32, message = "bqk,bkd->bqd"}> : () -> ()
    %cst_18 = arith.constant dense<0.000000e+00> : vector<8x8x8xf32>
    %61 = tpu.matmul %60, %44, %cst_18 {dimension_numbers = #tpu.dot_dimension_numbers<[2], [1], [1], [2], [0, 0, 0, 1, 1, 2], [0], [0]>} : vector<8x8x8xbf16>, vector<8x8x8xbf16>, vector<8x8x8xf32> -> vector<8x8x8xf32>
    "tpu.trace_stop"() : () -> ()
    %62 = vector.extract_strided_slice %0 {offsets = [0, 0, 24], sizes = [8, 8, 8], strides = [1, 1, 1]} : vector<8x8x96xbf16> to vector<8x8x8xbf16>
    %63 = vector.extract_strided_slice %0 {offsets = [0, 0, 56], sizes = [8, 8, 8], strides = [1, 1, 1]} : vector<8x8x96xbf16> to vector<8x8x8xbf16>
    %64 = vector.extract_strided_slice %0 {offsets = [0, 0, 88], sizes = [8, 8, 8], strides = [1, 1, 1]} : vector<8x8x96xbf16> to vector<8x8x8xbf16>
    "tpu.trace_start"() <{level = 10 : i32, message = "bqd,bkd->bqk"}> : () -> ()
    %cst_19 = arith.constant dense<0.000000e+00> : vector<8x8x8xf32>
    %65 = tpu.matmul %62, %63, %cst_19 {dimension_numbers = #tpu.dot_dimension_numbers<[2], [2], [1], [1], [0, 0, 0, 1, 1, 1], [0], [0]>} : vector<8x8x8xbf16>, vector<8x8x8xbf16>, vector<8x8x8xf32> -> vector<8x8x8xf32>
    "tpu.trace_stop"() : () -> ()
    %cst_20 = arith.constant 0.353553385 : f32
    %66 = vector.broadcast %cst_20 : f32 to vector<8x8x8xf32>
    %67 = arith.mulf %65, %66 : vector<8x8x8xf32>
    %68 = vector.extract_strided_slice %1 {offsets = [0, 0, 24], sizes = [8, 8, 8], strides = [1, 1, 1]} : vector<8x8x32xf32> to vector<8x8x8xf32>
    %69 = arith.addf %67, %68 : vector<8x8x8xf32>
    %cst_21 = arith.constant dense<0xFF800000> : vector<8x8xf32>
    %70 = vector.multi_reduction <maximumf>, %69, %cst_21 [2] : vector<8x8x8xf32> to vector<8x8xf32>
    %71 = vector.shape_cast %70 : vector<8x8xf32> to vector<8x8x1xf32>
    %72 = vector.broadcast %71 : vector<8x8x1xf32> to vector<8x8x8xf32>
    %73 = arith.subf %69, %72 : vector<8x8x8xf32>
    %74 = math.exp %73 : vector<8x8x8xf32>
    %cst_22 = arith.constant dense<0.000000e+00> : vector<8x8xf32>
    %75 = vector.multi_reduction <add>, %74, %cst_22 [2] : vector<8x8x8xf32> to vector<8x8xf32>
    %76 = vector.shape_cast %75 : vector<8x8xf32> to vector<8x8x1xf32>
    %77 = tpu.reciprocal %76 {approx = true} : vector<8x8x1xf32> -> vector<8x8x1xf32>
    %78 = vector.broadcast %77 : vector<8x8x1xf32> to vector<8x8x8xf32>
    %79 = arith.mulf %74, %78 : vector<8x8x8xf32>
    %80 = arith.truncf %79 : vector<8x8x8xf32> to vector<8x8x8xbf16>
    "tpu.trace_start"() <{level = 10 : i32, message = "bqk,bkd->bqd"}> : () -> ()
    %cst_23 = arith.constant dense<0.000000e+00> : vector<8x8x8xf32>
    %81 = tpu.matmul %80, %64, %cst_23 {dimension_numbers = #tpu.dot_dimension_numbers<[2], [1], [1], [2], [0, 0, 0, 1, 1, 2], [0], [0]>} : vector<8x8x8xbf16>, vector<8x8x8xbf16>, vector<8x8x8xf32> -> vector<8x8x8xf32>
    "tpu.trace_stop"() : () -> ()
    %82 = tpu.concatenate %21, %41, %61, %81 in 2 : vector<8x8x8xf32>, vector<8x8x8xf32>, vector<8x8x8xf32>, vector<8x8x8xf32> -> vector<8x8x32xf32>
    %83 = arith.truncf %82 : vector<8x8x32xf32> to vector<8x8x32xbf16>
    %c0_24 = arith.constant 0 : index
    %c0_25 = arith.constant 0 : index
    %c0_26 = arith.constant 0 : index
    %84 = vector.load %arg3[%c0_24, %c0_25, %c0_26] : memref<8x8x32xbf16, #tpu.memory_space<vmem>>, vector<8x8x32xbf16>
    tpu.vector_store %arg3[%c0_24, %c0_25, %c0_26], %83 {strides = array<i32>} : memref<8x8x32xbf16, #tpu.memory_space<vmem>>, vector<8x8x32xbf16>,
    %85 = tpu.concatenate %9, %29, %49, %69 in 2 : vector<8x8x8xf32>, vector<8x8x8xf32>, vector<8x8x8xf32>, vector<8x8x8xf32> -> vector<8x8x32xf32>
    %c0_27 = arith.constant 0 : index
    %c0_28 = arith.constant 0 : index
    %c0_29 = arith.constant 0 : index
    %86 = vector.load %arg4[%c0_27, %c0_28, %c0_29] : memref<8x8x32xf32, #tpu.memory_space<vmem>>, vector<8x8x32xf32>
    tpu.vector_store %arg4[%c0_27, %c0_28, %c0_29], %85 {strides = array<i32>} : memref<8x8x32xf32, #tpu.memory_space<vmem>>, vector<8x8x32xf32>,
    return
  }
  func.func @transform_0(%arg0: i32) -> (i32, i32, i32) {
    %c0_i32 = arith.constant 0 : i32
    %c0_i32_0 = arith.constant 0 : i32
    %c0_i32_1 = arith.constant 0 : i32
    return %arg0, %c0_i32, %c0_i32_0 : i32, i32, i32
  }
  func.func @transform_1(%arg0: i32) -> (i32, i32, i32) {
    %c0_i32 = arith.constant 0 : i32
    %c0_i32_0 = arith.constant 0 : i32
    %c0_i32_1 = arith.constant 0 : i32
    return %arg0, %c0_i32, %c0_i32_0 : i32, i32, i32
  }
  func.func @transform_2(%arg0: i32) -> (i32, i32, i32) {
    %c0_i32 = arith.constant 0 : i32
    %c0_i32_0 = arith.constant 0 : i32
    %c0_i32_1 = arith.constant 0 : i32
    return %arg0, %c0_i32, %c0_i32_0 : i32, i32, i32
  }
  func.func @transform_3(%arg0: i32) -> (i32, i32, i32) {
    %c0_i32 = arith.constant 0 : i32
    %c0_i32_0 = arith.constant 0 : i32
    %c0_i32_1 = arith.constant 0 : i32
    return %arg0, %c0_i32, %c0_i32_0 : i32, i32, i32
  }
}

module attributes {stable_mosaic.version = 11 : i64} {
  func.func @kernel(%arg0: i32, %arg1: i32, %arg2: i32, %arg3: memref<64x64xbf16, #tpu.memory_space<vmem>>, %arg4: memref<64x32xbf16, #tpu.memory_space<vmem>>, %arg5: memref<1x32xf32, #tpu.memory_space<vmem>>, %arg6: memref<64x32xf32, #tpu.memory_space<vmem>>, %arg7: memref<64x32xf32, #tpu.memory_space<vmem>>, %arg8: memref<64x32xf32, #tpu.memory_space<vmem>>) attributes {dimension_semantics = [#tpu.dimension_semantics<parallel>, #tpu.dimension_semantics<parallel>, #tpu.dimension_semantics<arbitrary>], iteration_bounds = array<i64: 1, 1, 1>, scalar_prefetch = 0 : i64, scratch_operands = 1 : i64, tpu.core_type = #tpu.core_type<tc>, window_params = [{transform_indices = @transform_0, window_bounds = array<i64: 64, 64>}, {transform_indices = @transform_1, window_bounds = array<i64: 64, 32>}, {transform_indices = @transform_2, window_bounds = array<i64: 1, 32>}, {transform_indices = @transform_3, window_bounds = array<i64: 64, 32>}, {transform_indices = @transform_4, window_bounds = array<i64: 64, 32>}]} {
    %c0_i32 = arith.constant 0 : i32
    %0 = arith.cmpi eq, %arg2, %c0_i32 : i32
    %1 = arith.extui %0 : i1 to i32
    %c0_i32_0 = arith.constant 0 : i32
    %2 = arith.cmpi ne, %1, %c0_i32_0 : i32
    scf.if %2 {
      %cst_10 = arith.constant 0.000000e+00 : f32
      %12 = vector.broadcast %cst_10 : f32 to vector<64x32xf32>
      %c0_11 = arith.constant 0 : index
      %c0_12 = arith.constant 0 : index
      %13 = vector.load %arg8[%c0_11, %c0_12] : memref<64x32xf32, #tpu.memory_space<vmem>>, vector<64x32xf32>
      tpu.vector_store %arg8[%c0_11, %c0_12], %12 {strides = array<i32>} : memref<64x32xf32, #tpu.memory_space<vmem>>, vector<64x32xf32>,
    } else {
    }
    %c0 = arith.constant 0 : index
    %c0_1 = arith.constant 0 : index
    %3 = vector.load %arg8[%c0, %c0_1] : memref<64x32xf32, #tpu.memory_space<vmem>>, vector<64x32xf32>
    %c0_2 = arith.constant 0 : index
    %c0_3 = arith.constant 0 : index
    %4 = vector.load %arg3[%c0_2, %c0_3] : memref<64x64xbf16, #tpu.memory_space<vmem>>, vector<64x64xbf16>
    %c0_4 = arith.constant 0 : index
    %c0_5 = arith.constant 0 : index
    %5 = vector.load %arg4[%c0_4, %c0_5] : memref<64x32xbf16, #tpu.memory_space<vmem>>, vector<64x32xbf16>
    %cst = arith.constant dense<0.000000e+00> : vector<64x32xf32>
    %6 = tpu.matmul %4, %5, %cst {dimension_numbers = #tpu.dot_dimension_numbers<[1], [0], [0], [1], [0, 0, 1, 1], [], []>} : vector<64x64xbf16>, vector<64x32xbf16>, vector<64x32xf32> -> vector<64x32xf32>
    %7 = arith.addf %3, %6 : vector<64x32xf32>
    %c0_6 = arith.constant 0 : index
    %c0_7 = arith.constant 0 : index
    %8 = vector.load %arg8[%c0_6, %c0_7] : memref<64x32xf32, #tpu.memory_space<vmem>>, vector<64x32xf32>
    tpu.vector_store %arg8[%c0_6, %c0_7], %7 {strides = array<i32>} : memref<64x32xf32, #tpu.memory_space<vmem>>, vector<64x32xf32>,
    %c0_i32_8 = arith.constant 0 : i32
    %9 = arith.cmpi eq, %arg2, %c0_i32_8 : i32
    %10 = arith.extui %9 : i1 to i32
    %c0_i32_9 = arith.constant 0 : i32
    %11 = arith.cmpi ne, %10, %c0_i32_9 : i32
    scf.if %11 {
      %c0_10 = arith.constant 0 : index
      %c0_11 = arith.constant 0 : index
      %12 = vector.load %arg8[%c0_10, %c0_11] : memref<64x32xf32, #tpu.memory_space<vmem>>, vector<64x32xf32>
      %c0_12 = arith.constant 0 : index
      %c0_13 = arith.constant 0 : index
      %13 = vector.load %arg5[%c0_12, %c0_13] : memref<1x32xf32, #tpu.memory_space<vmem>>, vector<1x32xf32>
      %14 = vector.broadcast %13 : vector<1x32xf32> to vector<64x32xf32>
      %15 = arith.addf %12, %14 : vector<64x32xf32>
      %c0_14 = arith.constant 0 : index
      %c0_15 = arith.constant 0 : index
      %16 = vector.load %arg6[%c0_14, %c0_15] : memref<64x32xf32, #tpu.memory_space<vmem>>, vector<64x32xf32>
      %17 = arith.addf %15, %16 : vector<64x32xf32>
      %c0_16 = arith.constant 0 : index
      %c0_17 = arith.constant 0 : index
      %18 = vector.load %arg7[%c0_16, %c0_17] : memref<64x32xf32, #tpu.memory_space<vmem>>, vector<64x32xf32>
      tpu.vector_store %arg7[%c0_16, %c0_17], %17 {strides = array<i32>} : memref<64x32xf32, #tpu.memory_space<vmem>>, vector<64x32xf32>,
    } else {
    }
    return
  }
  func.func @transform_0(%arg0: i32, %arg1: i32, %arg2: i32) -> (i32, i32) {
    %c0_i32 = arith.constant 0 : i32
    return %arg0, %arg2 : i32, i32
  }
  func.func @transform_1(%arg0: i32, %arg1: i32, %arg2: i32) -> (i32, i32) {
    %c0_i32 = arith.constant 0 : i32
    return %arg2, %arg1 : i32, i32
  }
  func.func @transform_2(%arg0: i32, %arg1: i32, %arg2: i32) -> (i32, i32) {
    %c0_i32 = arith.constant 0 : i32
    %c0_i32_0 = arith.constant 0 : i32
    return %c0_i32, %arg1 : i32, i32
  }
  func.func @transform_3(%arg0: i32, %arg1: i32, %arg2: i32) -> (i32, i32) {
    %c0_i32 = arith.constant 0 : i32
    return %arg0, %arg1 : i32, i32
  }
  func.func @transform_4(%arg0: i32, %arg1: i32, %arg2: i32) -> (i32, i32) {
    %c0_i32 = arith.constant 0 : i32
    return %arg0, %arg1 : i32, i32
  }
}

module attributes {stable_mosaic.version = 11 : i64} {
  func.func @kernel(%arg0: i32, %arg1: i32, %arg2: i32, %arg3: memref<8x256xf32, #tpu.memory_space<vmem>>, %arg4: memref<256x16xbf16, #tpu.memory_space<vmem>>, %arg5: memref<1x16xf32, #tpu.memory_space<vmem>>, %arg6: memref<8x16xf32, #tpu.memory_space<vmem>>, %arg7: memref<8x16xf32, #tpu.memory_space<vmem>>) attributes {dimension_semantics = [#tpu.dimension_semantics<parallel>, #tpu.dimension_semantics<parallel>, #tpu.dimension_semantics<arbitrary>], iteration_bounds = array<i64: 1, 1, 1>, scalar_prefetch = 0 : i64, scratch_operands = 1 : i64, tpu.core_type = #tpu.core_type<tc>, window_params = [{transform_indices = @transform_0, window_bounds = array<i64: 8, 256>}, {transform_indices = @transform_1, window_bounds = array<i64: 256, 16>}, {transform_indices = @transform_2, window_bounds = array<i64: 1, 16>}, {transform_indices = @transform_3, window_bounds = array<i64: 8, 16>}]} {
    %c0_i32 = arith.constant 0 : i32
    %0 = arith.cmpi eq, %arg2, %c0_i32 : i32
    %1 = arith.extui %0 : i1 to i32
    %c0_i32_0 = arith.constant 0 : i32
    %2 = arith.cmpi ne, %1, %c0_i32_0 : i32
    scf.if %2 {
      %cst_10 = arith.constant 0.000000e+00 : f32
      %13 = vector.broadcast %cst_10 : f32 to vector<8x16xf32>
      %c0_11 = arith.constant 0 : index
      %c0_12 = arith.constant 0 : index
      %14 = vector.load %arg7[%c0_11, %c0_12] : memref<8x16xf32, #tpu.memory_space<vmem>>, vector<8x16xf32>
      tpu.vector_store %arg7[%c0_11, %c0_12], %13 {strides = array<i32>} : memref<8x16xf32, #tpu.memory_space<vmem>>, vector<8x16xf32>,
    } else {
    }
    %c0 = arith.constant 0 : index
    %c0_1 = arith.constant 0 : index
    %3 = vector.load %arg7[%c0, %c0_1] : memref<8x16xf32, #tpu.memory_space<vmem>>, vector<8x16xf32>
    %c0_2 = arith.constant 0 : index
    %c0_3 = arith.constant 0 : index
    %4 = vector.load %arg3[%c0_2, %c0_3] : memref<8x256xf32, #tpu.memory_space<vmem>>, vector<8x256xf32>
    %5 = arith.truncf %4 : vector<8x256xf32> to vector<8x256xbf16>
    %c0_4 = arith.constant 0 : index
    %c0_5 = arith.constant 0 : index
    %6 = vector.load %arg4[%c0_4, %c0_5] : memref<256x16xbf16, #tpu.memory_space<vmem>>, vector<256x16xbf16>
    %cst = arith.constant dense<0.000000e+00> : vector<8x16xf32>
    %7 = tpu.matmul %5, %6, %cst {dimension_numbers = #tpu.dot_dimension_numbers<[1], [0], [0], [1], [0, 0, 1, 1], [], []>} : vector<8x256xbf16>, vector<256x16xbf16>, vector<8x16xf32> -> vector<8x16xf32>
    %8 = arith.addf %3, %7 : vector<8x16xf32>
    %c0_6 = arith.constant 0 : index
    %c0_7 = arith.constant 0 : index
    %9 = vector.load %arg7[%c0_6, %c0_7] : memref<8x16xf32, #tpu.memory_space<vmem>>, vector<8x16xf32>
    tpu.vector_store %arg7[%c0_6, %c0_7], %8 {strides = array<i32>} : memref<8x16xf32, #tpu.memory_space<vmem>>, vector<8x16xf32>,
    %c0_i32_8 = arith.constant 0 : i32
    %10 = arith.cmpi eq, %arg2, %c0_i32_8 : i32
    %11 = arith.extui %10 : i1 to i32
    %c0_i32_9 = arith.constant 0 : i32
    %12 = arith.cmpi ne, %11, %c0_i32_9 : i32
    scf.if %12 {
      %c0_10 = arith.constant 0 : index
      %c0_11 = arith.constant 0 : index
      %13 = vector.load %arg7[%c0_10, %c0_11] : memref<8x16xf32, #tpu.memory_space<vmem>>, vector<8x16xf32>
      %c0_12 = arith.constant 0 : index
      %c0_13 = arith.constant 0 : index
      %14 = vector.load %arg5[%c0_12, %c0_13] : memref<1x16xf32, #tpu.memory_space<vmem>>, vector<1x16xf32>
      %15 = vector.broadcast %14 : vector<1x16xf32> to vector<8x16xf32>
      %16 = arith.addf %13, %15 : vector<8x16xf32>
      %c0_14 = arith.constant 0 : index
      %c0_15 = arith.constant 0 : index
      %17 = vector.load %arg6[%c0_14, %c0_15] : memref<8x16xf32, #tpu.memory_space<vmem>>, vector<8x16xf32>
      tpu.vector_store %arg6[%c0_14, %c0_15], %16 {strides = array<i32>} : memref<8x16xf32, #tpu.memory_space<vmem>>, vector<8x16xf32>,
    } else {
    }
    return
  }
  func.func @transform_0(%arg0: i32, %arg1: i32, %arg2: i32) -> (i32, i32) {
    %c0_i32 = arith.constant 0 : i32
    return %arg0, %arg2 : i32, i32
  }
  func.func @transform_1(%arg0: i32, %arg1: i32, %arg2: i32) -> (i32, i32) {
    %c0_i32 = arith.constant 0 : i32
    return %arg2, %arg1 : i32, i32
  }
  func.func @transform_2(%arg0: i32, %arg1: i32, %arg2: i32) -> (i32, i32) {
    %c0_i32 = arith.constant 0 : i32
    %c0_i32_0 = arith.constant 0 : i32
    return %c0_i32, %arg1 : i32, i32
  }
  func.func @transform_3(%arg0: i32, %arg1: i32, %arg2: i32) -> (i32, i32) {
    %c0_i32 = arith.constant 0 : i32
    return %arg0, %arg1 : i32, i32
  }
}

</mosaic_0001>

<llo_original>
// kernel: _lambda_.20
$region0: #{_lambda_.20}
  #allocation0 [shape = 'u32[]', space=smem, size = 0x4, offset = 0x4, fixed_abs, tag = 'smem constant byte address 0x4 - core index']
  #allocation1 [shape = 'u32[144,128]{1,0:T(1,128)}', space=vmem, size = 0x12000, scoped, tag = 'internal scratch']
  #allocation2 [shape = 'f32[64,32]{1,0:T(8,128)}', space=vmem, size = 0x8000, scoped, tag = 'scratch operand']
  %s0 = inlined_call_operand.vmem [shape: f32[64,12], index: 0, kind: input, shape index: {}]
  %s1 = inlined_call_operand.vmem [shape: bf16[12,32], index: 1, kind: input, shape index: {}]
  %s2 = inlined_call_operand.vmem [shape: f32[1,32], index: 2, kind: input, shape index: {}]
  %s3 = inlined_call_operand.vmem [shape: f32[64,32], index: 3, kind: output, shape index: {}]
  %s4 = sld [smem:[#allocation0]]
  $region30: #{_lambda_.20} parent=0
    _
  %s6 = ssub.s32 1, %s4
  %s7 = scalar_select 0, %s6, %s4
  // Predicated region
  $region2: #{_lambda_.20} parent=0 // pred_check
    _
  $region3: #{_lambda_.20} parent=0 // pred_check_branch
    %9 = sbr.rel (0) target = $region5
  $region4: #{_lambda_.20} parent=0 // pred_region
    _
  $region5: #{_lambda_.20} parent=0 // pred_fallthru
    _
  // Predicated region
  $region6: #{_lambda_.20} parent=0 // pred_check
    _
  $region7: #{_lambda_.20} parent=0 // pred_check_branch
    %11 = sbr.rel (0) target = $region9
  $region8: #{_lambda_.20} parent=0 // pred_region
    _
  $region9: #{_lambda_.20} parent=0 // pred_fallthru
    _
  // Predicated region
  $region10: #{_lambda_.20} parent=0 // pred_check
    _
  $region11: #{_lambda_.20} parent=0 // pred_check_branch
    %13 = sbr.rel (0) target = $region13
  $region12: #{_lambda_.20} parent=0 // pred_region
    _
  $region13: #{_lambda_.20} parent=0 // pred_fallthru
    _
  %p15 = scmp.eq.s32.totalorder 0, 0
  // Predicated region
  $region14: #{_lambda_.20} parent=0 // pred_check
    %p16 = pneg %p15
  $region15: #{_lambda_.20} parent=0 // pred_check_branch
    %18 = sbr.rel (%p16) target = $region17
  $region16: #{_lambda_.20} parent=0 // pred_region
    %vm19 = vcmask 261120
    %20 = vst.msk [vmem:[#allocation2] sm:$0xff] %vm19, 0.0
    %21 = vst.msk [vmem:[#allocation2 + $0x8] sm:$0xff] %vm19, 0.0
    %22 = vst.msk [vmem:[#allocation2 + $0x10] sm:$0xff] %vm19, 0.0
    %23 = vst.msk [vmem:[#allocation2 + $0x18] sm:$0xff] %vm19, 0.0
    %24 = vst.msk [vmem:[#allocation2 + $0x20] sm:$0xff] %vm19, 0.0
    %25 = vst.msk [vmem:[#allocation2 + $0x28] sm:$0xff] %vm19, 0.0
    %26 = vst.msk [vmem:[#allocation2 + $0x30] sm:$0xff] %vm19, 0.0
    %27 = vst.msk [vmem:[#allocation2 + $0x38] sm:$0xff] %vm19, 0.0
  $region17: #{_lambda_.20} parent=0 // pred_fallthru
    _
  %v28 = vld [vmem:[#allocation2] sm:$0xff]
  %v29 = vld [vmem:[#allocation2 + $0x8] sm:$0xff]
  %v30 = vld [vmem:[#allocation2 + $0x10] sm:$0xff]
  %v31 = vld [vmem:[#allocation2 + $0x18] sm:$0xff]
  %v32 = vld [vmem:[#allocation2 + $0x20] sm:$0xff]
  %v33 = vld [vmem:[#allocation2 + $0x28] sm:$0xff]
  %v34 = vld [vmem:[#allocation2 + $0x30] sm:$0xff]
  %v35 = vld [vmem:[#allocation2 + $0x38] sm:$0xff]
  %v36 = vld [vmem:[%s0] sm:$0xff]
  %v37 = vld [vmem:[%s0 + $0x8] sm:$0xff]
  %v38 = vld [vmem:[%s0 + $0x10] sm:$0xff]
  %v39 = vld [vmem:[%s0 + $0x18] sm:$0xff]
  %v40 = vld [vmem:[%s0 + $0x20] sm:$0xff]
  %v41 = vld [vmem:[%s0 + $0x28] sm:$0xff]
  %v42 = vld [vmem:[%s0 + $0x30] sm:$0xff]
  %v43 = vld [vmem:[%s0 + $0x38] sm:$0xff]
  %v44 = vpack.c.bf16 %v37, %v36
  %v45 = vpack.c.bf16 %v39, %v38
  %v46 = vpack.c.bf16 %v41, %v40
  %v47 = vpack.c.bf16 %v43, %v42
  %v48 = vld [vmem:[%s1] sm:$0xf]
  %v49 = vld [vmem:[%s1 + $0x4] sm:$0x3]
  %v52 = vunpack.c.l.b16 %v48
  %v53 = vunpack.c.l.b16 %v49
  %v54 = vpack.c.b16 %v53, %v52
  %vm55 = vcmask 97280
  %v57 = vsel %vm55, %v44, 0
  %v60 = vsel %vm55, %v45, 0
  %v63 = vsel %vm55, %v46, 0
  %v66 = vsel %vm55, %v47, 0
  %vm68 = vcmask 1045504
  %v70 = vsel %vm68, %v54, 0
  %72 = vmatprep.subr.bf16.mxu0 0
  %73 = vmatpush1.bf16.msra.mxu0 %v70
  %74 = vmatprep.subr.bf16.mxu0 0
  %75 = vmatpush1.bf16.msra.mxu0 0
  %76 = vmatprep.subr.bf16.mxu0 0
  %77 = vmatpush1.bf16.msra.mxu0 0
  %78 = vmatprep.subr.bf16.mxu0 0
  %79 = vmatpush1.bf16.msra.mxu0 0
  %80 = vmatprep.subr.bf16.mxu0 0
  %81 = vmatpush1.bf16.msra.mxu0 0
  %82 = vmatprep.subr.bf16.mxu0 0
  %83 = vmatpush1.bf16.msra.mxu0 0
  %84 = vmatprep.subr.bf16.mxu0 0
  %85 = vmatpush1.bf16.msra.mxu0 0
  %86 = vmatprep.subr.bf16.mxu0 0
  %87 = vmatpush1.bf16.msra.mxu0 0
  %88 = vmatprep.subr.bf16.mxu0 0
  %89 = vmatpush1.bf16.msra.mxu0 0
  %90 = vmatprep.subr.bf16.mxu0 0
  %91 = vmatpush1.bf16.msra.mxu0 0
  %92 = vmatprep.subr.bf16.mxu0 0
  %93 = vmatpush1.bf16.msra.mxu0 0
  %94 = vmatprep.subr.bf16.mxu0 0
  %95 = vmatpush1.bf16.msra.mxu0 0
  %96 = vmatprep.subr.bf16.mxu0 0
  %97 = vmatpush1.bf16.msra.mxu0 0
  %98 = vmatprep.subr.bf16.mxu0 0
  %99 = vmatpush1.bf16.msra.mxu0 0
  %100 = vmatprep.subr.bf16.mxu0 0
  %101 = vmatpush1.bf16.msra.mxu0 0
  %102 = vmatprep.subr.bf16.mxu0 0
  %103 = vmatpush1.bf16.msra.mxu0 0
  %104 = vmatprep.mubr.bf16.mxu0 0
  %105 = vmatmul.mubr.bf16.gmra.mrb[0].mxu0 %v57
  %v106 = vpop.f32.mrb[0].mxu0
  %v107 = vadd.f32 0.0, %v106
  %v108 = vpop.f32.mrb[0].mxu0
  %v109 = vpop.f32.mrb[0].mxu0
  %v110 = vadd.f32 0.0, %v109
  %v111 = vpop.f32.mrb[0].mxu0
  %112 = vmatprep.mubr.bf16.mxu0 0
  %113 = vmatmul.mubr.bf16.gmra.mrb[0].mxu0 %v60
  %v114 = vpop.f32.mrb[0].mxu0
  %v115 = vadd.f32 0.0, %v114
  %v116 = vpop.f32.mrb[0].mxu0
  %v117 = vpop.f32.mrb[0].mxu0
  %v118 = vadd.f32 0.0, %v117
  %v119 = vpop.f32.mrb[0].mxu0
  %120 = vmatprep.mubr.bf16.mxu0 0
  %121 = vmatmul.mubr.bf16.gmra.mrb[0].mxu0 %v63
  %v122 = vpop.f32.mrb[0].mxu0
  %v123 = vadd.f32 0.0, %v122
  %v124 = vpop.f32.mrb[0].mxu0
  %v125 = vpop.f32.mrb[0].mxu0
  %v126 = vadd.f32 0.0, %v125
  %v127 = vpop.f32.mrb[0].mxu0
  %128 = vmatprep.mubr.bf16.mxu0 0
  %129 = vmatmul.mubr.bf16.gmra.mrb[0].mxu0 %v66
  %v130 = vpop.f32.mrb[0].mxu0
  %v131 = vadd.f32 0.0, %v130
  %v132 = vpop.f32.mrb[0].mxu0
  %v133 = vpop.f32.mrb[0].mxu0
  %v134 = vadd.f32 0.0, %v133
  %v135 = vpop.f32.mrb[0].mxu0
  %136 = vdwg.mxu0
  %v137 = vadd.f32 %v28, %v107
  %v138 = vadd.f32 %v29, %v110
  %v139 = vadd.f32 %v30, %v115
  %v140 = vadd.f32 %v31, %v118
  %v141 = vadd.f32 %v32, %v123
  %v142 = vadd.f32 %v33, %v126
  %v143 = vadd.f32 %v34, %v131
  %v144 = vadd.f32 %v35, %v134
  %vm145 = vcmask 261120
  %146 = vst.msk [vmem:[#allocation2] sm:$0xff] %vm145, %v137
  %147 = vst.msk [vmem:[#allocation2 + $0x8] sm:$0xff] %vm145, %v138
  %148 = vst.msk [vmem:[#allocation2 + $0x10] sm:$0xff] %vm145, %v139
  %149 = vst.msk [vmem:[#allocation2 + $0x18] sm:$0xff] %vm145, %v140
  %150 = vst.msk [vmem:[#allocation2 + $0x20] sm:$0xff] %vm145, %v141
  %151 = vst.msk [vmem:[#allocation2 + $0x28] sm:$0xff] %vm145, %v142
  %152 = vst.msk [vmem:[#allocation2 + $0x30] sm:$0xff] %vm145, %v143
  %153 = vst.msk [vmem:[#allocation2 + $0x38] sm:$0xff] %vm145, %v144
  // Predicated region
  $region18: #{_lambda_.20} parent=0 // pred_check
    %p154 = pneg %p15
  $region19: #{_lambda_.20} parent=0 // pred_check_branch
    %156 = sbr.rel (%p154) target = $region21
  $region20: #{_lambda_.20} parent=0 // pred_region
    %v157 = vld [vmem:[#allocation2] sm:$0xff]
    %v158 = vld [vmem:[#allocation2 + $0x8] sm:$0xff]
    %v159 = vld [vmem:[#allocation2 + $0x10] sm:$0xff]
    %v160 = vld [vmem:[#allocation2 + $0x18] sm:$0xff]
    %v161 = vld [vmem:[#allocation2 + $0x20] sm:$0xff]
    %v162 = vld [vmem:[#allocation2 + $0x28] sm:$0xff]
    %v163 = vld [vmem:[#allocation2 + $0x30] sm:$0xff]
    %v164 = vld [vmem:[#allocation2 + $0x38] sm:$0xff]
    %v165 = vld [vmem:[%s2] sm:$0x1]
    %v167 = vlaneseq
    %v168 = vshrl.u32 %v167, 7
    %v169 = vsub.s32 0, %v168
    %v170 = vrot.slane %v165, %v169
    %v172 = vadd.f32 %v157, %v170
    %v173 = vadd.f32 %v158, %v170
    %v174 = vadd.f32 %v159, %v170
    %v175 = vadd.f32 %v160, %v170
    %v176 = vadd.f32 %v161, %v170
    %v177 = vadd.f32 %v162, %v170
    %v178 = vadd.f32 %v163, %v170
    %v179 = vadd.f32 %v164, %v170
    %180 = vst.msk [vmem:[%s3] sm:$0xff] %vm145, %v172
    %181 = vst.msk [vmem:[%s3 + $0x8] sm:$0xff] %vm145, %v173
    %182 = vst.msk [vmem:[%s3 + $0x10] sm:$0xff] %vm145, %v174
    %183 = vst.msk [vmem:[%s3 + $0x18] sm:$0xff] %vm145, %v175
    %184 = vst.msk [vmem:[%s3 + $0x20] sm:$0xff] %vm145, %v176
    %185 = vst.msk [vmem:[%s3 + $0x28] sm:$0xff] %vm145, %v177
    %186 = vst.msk [vmem:[%s3 + $0x30] sm:$0xff] %vm145, %v178
    %187 = vst.msk [vmem:[%s3 + $0x38] sm:$0xff] %vm145, %v179
  $region21: #{_lambda_.20} parent=0 // pred_fallthru
    _
  // Predicated region
  $region22: #{_lambda_.20} parent=0 // pred_check
    _
  $region23: #{_lambda_.20} parent=0 // pred_check_branch
    %189 = sbr.rel (0) target = $region25
  $region24: #{_lambda_.20} parent=0 // pred_region
    _
  $region25: #{_lambda_.20} parent=0 // pred_fallthru
    _
  // Predicated region
  $region26: #{_lambda_.20} parent=0 // pred_check
    _
  $region27: #{_lambda_.20} parent=0 // pred_check_branch
    %191 = sbr.rel (0) target = $region29
  $region28: #{_lambda_.20} parent=0 // pred_region
    _
  $region29: #{_lambda_.20} parent=0 // pred_fallthru
    _

// kernel: _lambda_.21
$region0: #{_lambda_.21}
  #allocation0 [shape = 'u32[]', space=smem, size = 0x4, offset = 0x4, fixed_abs, tag = 'smem constant byte address 0x4 - core index']
  #allocation1 [shape = 'u32[144,128]{1,0:T(1,128)}', space=vmem, size = 0x12000, scoped, tag = 'internal scratch']
  #allocation2 [shape = 'f32[64,96]{1,0:T(8,128)}', space=vmem, size = 0x8000, scoped, tag = 'scratch operand']
  %s0 = inlined_call_operand.vmem [shape: f32[64,32], index: 0, kind: input, shape index: {}]
  %s1 = inlined_call_operand.vmem [shape: bf16[32,96], index: 1, kind: input, shape index: {}]
  %s2 = inlined_call_operand.vmem [shape: f32[1,96], index: 2, kind: input, shape index: {}]
  %s3 = inlined_call_operand.vmem [shape: bf16[64,96], index: 3, kind: output, shape index: {}]
  %s4 = sld [smem:[#allocation0]]
  $region30: #{_lambda_.21} parent=0
    _
  %s6 = ssub.s32 1, %s4
  %s7 = scalar_select 0, %s6, %s4
  // Predicated region
  $region2: #{_lambda_.21} parent=0 // pred_check
    _
  $region3: #{_lambda_.21} parent=0 // pred_check_branch
    %9 = sbr.rel (0) target = $region5
  $region4: #{_lambda_.21} parent=0 // pred_region
    _
  $region5: #{_lambda_.21} parent=0 // pred_fallthru
    _
  // Predicated region
  $region6: #{_lambda_.21} parent=0 // pred_check
    _
  $region7: #{_lambda_.21} parent=0 // pred_check_branch
    %11 = sbr.rel (0) target = $region9
  $region8: #{_lambda_.21} parent=0 // pred_region
    _
  $region9: #{_lambda_.21} parent=0 // pred_fallthru
    _
  // Predicated region
  $region10: #{_lambda_.21} parent=0 // pred_check
    _
  $region11: #{_lambda_.21} parent=0 // pred_check_branch
    %13 = sbr.rel (0) target = $region13
  $region12: #{_lambda_.21} parent=0 // pred_region
    _
  $region13: #{_lambda_.21} parent=0 // pred_fallthru
    _
  %p15 = scmp.eq.s32.totalorder 0, 0
  // Predicated region
  $region14: #{_lambda_.21} parent=0 // pred_check
    %p16 = pneg %p15
  $region15: #{_lambda_.21} parent=0 // pred_check_branch
    %18 = sbr.rel (%p16) target = $region17
  $region16: #{_lambda_.21} parent=0 // pred_region
    %vm19 = vcmask 785408
    %20 = vst.msk [vmem:[#allocation2] sm:$0xff] %vm19, 0.0
    %21 = vst.msk [vmem:[#allocation2 + $0x8] sm:$0xff] %vm19, 0.0
    %22 = vst.msk [vmem:[#allocation2 + $0x10] sm:$0xff] %vm19, 0.0
    %23 = vst.msk [vmem:[#allocation2 + $0x18] sm:$0xff] %vm19, 0.0
    %24 = vst.msk [vmem:[#allocation2 + $0x20] sm:$0xff] %vm19, 0.0
    %25 = vst.msk [vmem:[#allocation2 + $0x28] sm:$0xff] %vm19, 0.0
    %26 = vst.msk [vmem:[#allocation2 + $0x30] sm:$0xff] %vm19, 0.0
    %27 = vst.msk [vmem:[#allocation2 + $0x38] sm:$0xff] %vm19, 0.0
  $region17: #{_lambda_.21} parent=0 // pred_fallthru
    _
  %v28 = vld [vmem:[#allocation2] sm:$0xff]
  %v29 = vld [vmem:[#allocation2 + $0x8] sm:$0xff]
  %v30 = vld [vmem:[#allocation2 + $0x10] sm:$0xff]
  %v31 = vld [vmem:[#allocation2 + $0x18] sm:$0xff]
  %v32 = vld [vmem:[#allocation2 + $0x20] sm:$0xff]
  %v33 = vld [vmem:[#allocation2 + $0x28] sm:$0xff]
  %v34 = vld [vmem:[#allocation2 + $0x30] sm:$0xff]
  %v35 = vld [vmem:[#allocation2 + $0x38] sm:$0xff]
  %v36 = vld [vmem:[%s0] sm:$0xff]
  %v37 = vld [vmem:[%s0 + $0x8] sm:$0xff]
  %v38 = vld [vmem:[%s0 + $0x10] sm:$0xff]
  %v39 = vld [vmem:[%s0 + $0x18] sm:$0xff]
  %v40 = vld [vmem:[%s0 + $0x20] sm:$0xff]
  %v41 = vld [vmem:[%s0 + $0x28] sm:$0xff]
  %v42 = vld [vmem:[%s0 + $0x30] sm:$0xff]
  %v43 = vld [vmem:[%s0 + $0x38] sm:$0xff]
  %v44 = vpack.c.bf16 %v37, %v36
  %v45 = vpack.c.bf16 %v39, %v38
  %v46 = vpack.c.bf16 %v41, %v40
  %v47 = vpack.c.bf16 %v43, %v42
  %v48 = vld [vmem:[%s1] sm:$0xf]
  %v49 = vld [vmem:[%s1 + $0x4] sm:$0xf]
  %v50 = vld [vmem:[%s1 + $0x8] sm:$0xf]
  %v51 = vld [vmem:[%s1 + $0xc] sm:$0xf]
  %v56 = vunpack.c.l.b16 %v48
  %v57 = vunpack.c.l.b16 %v49
  %v58 = vunpack.c.l.b16 %v50
  %v59 = vunpack.c.l.b16 %v51
  %v60 = vpack.c.b16 %v57, %v56
  %v61 = vpack.c.b16 %v59, %v58
  %vm64 = vcmask 261120
  %v66 = vsel %vm64, %v44, 0
  %v69 = vsel %vm64, %v45, 0
  %v72 = vsel %vm64, %v46, 0
  %v75 = vsel %vm64, %v47, 0
  %77 = vmatprep.subr.bf16.mxu0 0
  %78 = vmatpush1.bf16.msra.mxu0 %v60
  %79 = vmatprep.subr.bf16.mxu0 0
  %80 = vmatpush1.bf16.msra.mxu0 %v61
  %81 = vmatprep.subr.bf16.mxu0 0
  %82 = vmatpush1.bf16.msra.mxu0 0
  %83 = vmatprep.subr.bf16.mxu0 0
  %84 = vmatpush1.bf16.msra.mxu0 0
  %85 = vmatprep.subr.bf16.mxu0 0
  %86 = vmatpush1.bf16.msra.mxu0 0
  %87 = vmatprep.subr.bf16.mxu0 0
  %88 = vmatpush1.bf16.msra.mxu0 0
  %89 = vmatprep.subr.bf16.mxu0 0
  %90 = vmatpush1.bf16.msra.mxu0 0
  %91 = vmatprep.subr.bf16.mxu0 0
  %92 = vmatpush1.bf16.msra.mxu0 0
  %93 = vmatprep.subr.bf16.mxu0 0
  %94 = vmatpush1.bf16.msra.mxu0 0
  %95 = vmatprep.subr.bf16.mxu0 0
  %96 = vmatpush1.bf16.msra.mxu0 0
  %97 = vmatprep.subr.bf16.mxu0 0
  %98 = vmatpush1.bf16.msra.mxu0 0
  %99 = vmatprep.subr.bf16.mxu0 0
  %100 = vmatpush1.bf16.msra.mxu0 0
  %101 = vmatprep.subr.bf16.mxu0 0
  %102 = vmatpush1.bf16.msra.mxu0 0
  %103 = vmatprep.subr.bf16.mxu0 0
  %104 = vmatpush1.bf16.msra.mxu0 0
  %105 = vmatprep.subr.bf16.mxu0 0
  %106 = vmatpush1.bf16.msra.mxu0 0
  %107 = vmatprep.subr.bf16.mxu0 0
  %108 = vmatpush1.bf16.msra.mxu0 0
  %109 = vmatprep.mubr.bf16.mxu0 0
  %110 = vmatmul.mubr.bf16.gmra.mrb[0].mxu0 %v66
  %v111 = vpop.f32.mrb[0].mxu0
  %v112 = vadd.f32 0.0, %v111
  %v113 = vpop.f32.mrb[0].mxu0
  %v114 = vpop.f32.mrb[0].mxu0
  %v115 = vadd.f32 0.0, %v114
  %v116 = vpop.f32.mrb[0].mxu0
  %117 = vmatprep.mubr.bf16.mxu0 0
  %118 = vmatmul.mubr.bf16.gmra.mrb[0].mxu0 %v69
  %v119 = vpop.f32.mrb[0].mxu0
  %v120 = vadd.f32 0.0, %v119
  %v121 = vpop.f32.mrb[0].mxu0
  %v122 = vpop.f32.mrb[0].mxu0
  %v123 = vadd.f32 0.0, %v122
  %v124 = vpop.f32.mrb[0].mxu0
  %125 = vmatprep.mubr.bf16.mxu0 0
  %126 = vmatmul.mubr.bf16.gmra.mrb[0].mxu0 %v72
  %v127 = vpop.f32.mrb[0].mxu0
  %v128 = vadd.f32 0.0, %v127
  %v129 = vpop.f32.mrb[0].mxu0
  %v130 = vpop.f32.mrb[0].mxu0
  %v131 = vadd.f32 0.0, %v130
  %v132 = vpop.f32.mrb[0].mxu0
  %133 = vmatprep.mubr.bf16.mxu0 0
  %134 = vmatmul.mubr.bf16.gmra.mrb[0].mxu0 %v75
  %v135 = vpop.f32.mrb[0].mxu0
  %v136 = vadd.f32 0.0, %v135
  %v137 = vpop.f32.mrb[0].mxu0
  %v138 = vpop.f32.mrb[0].mxu0
  %v139 = vadd.f32 0.0, %v138
  %v140 = vpop.f32.mrb[0].mxu0
  %141 = vdwg.mxu0
  %v142 = vadd.f32 %v28, %v112
  %v143 = vadd.f32 %v29, %v115
  %v144 = vadd.f32 %v30, %v120
  %v145 = vadd.f32 %v31, %v123
  %v146 = vadd.f32 %v32, %v128
  %v147 = vadd.f32 %v33, %v131
  %v148 = vadd.f32 %v34, %v136
  %v149 = vadd.f32 %v35, %v139
  %vm150 = vcmask 785408
  %151 = vst.msk [vmem:[#allocation2] sm:$0xff] %vm150, %v142
  %152 = vst.msk [vmem:[#allocation2 + $0x8] sm:$0xff] %vm150, %v143
  %153 = vst.msk [vmem:[#allocation2 + $0x10] sm:$0xff] %vm150, %v144
  %154 = vst.msk [vmem:[#allocation2 + $0x18] sm:$0xff] %vm150, %v145
  %155 = vst.msk [vmem:[#allocation2 + $0x20] sm:$0xff] %vm150, %v146
  %156 = vst.msk [vmem:[#allocation2 + $0x28] sm:$0xff] %vm150, %v147
  %157 = vst.msk [vmem:[#allocation2 + $0x30] sm:$0xff] %vm150, %v148
  %158 = vst.msk [vmem:[#allocation2 + $0x38] sm:$0xff] %vm150, %v149
  // Predicated region
  $region18: #{_lambda_.21} parent=0 // pred_check
    %p159 = pneg %p15
  $region19: #{_lambda_.21} parent=0 // pred_check_branch
    %161 = sbr.rel (%p159) target = $region21
  $region20: #{_lambda_.21} parent=0 // pred_region
    %v162 = vld [vmem:[#allocation2] sm:$0xff]
    %v163 = vld [vmem:[#allocation2 + $0x8] sm:$0xff]
    %v164 = vld [vmem:[#allocation2 + $0x10] sm:$0xff]
    %v165 = vld [vmem:[#allocation2 + $0x18] sm:$0xff]
    %v166 = vld [vmem:[#allocation2 + $0x20] sm:$0xff]
    %v167 = vld [vmem:[#allocation2 + $0x28] sm:$0xff]
    %v168 = vld [vmem:[#allocation2 + $0x30] sm:$0xff]
    %v169 = vld [vmem:[#allocation2 + $0x38] sm:$0xff]
    %v170 = vld [vmem:[%s2] sm:$0x1]
    %v172 = vlaneseq
    %v173 = vshrl.u32 %v172, 7
    %v174 = vsub.s32 0, %v173
    %v175 = vrot.slane %v170, %v174
    %v177 = vadd.f32 %v162, %v175
    %v178 = vadd.f32 %v163, %v175
    %v179 = vadd.f32 %v164, %v175
    %v180 = vadd.f32 %v165, %v175
    %v181 = vadd.f32 %v166, %v175
    %v182 = vadd.f32 %v167, %v175
    %v183 = vadd.f32 %v168, %v175
    %v184 = vadd.f32 %v169, %v175
    %v185 = vpack.c.bf16 %v178, %v177
    %v186 = vpack.c.bf16 %v180, %v179
    %v187 = vpack.c.bf16 %v182, %v181
    %v188 = vpack.c.bf16 %v184, %v183
    %v193 = vunpack.c.l.b16 %v185
    %v194 = vunpack.c.h.b16 %v185
    %v195 = vunpack.c.l.b16 %v186
    %v196 = vunpack.c.h.b16 %v186
    %v197 = vunpack.c.l.b16 %v187
    %v198 = vunpack.c.h.b16 %v187
    %v199 = vunpack.c.l.b16 %v188
    %v200 = vunpack.c.h.b16 %v188
    %v201 = vpack.c.b16 %v193, %v193
    %v202 = vpack.c.b16 %v194, %v194
    %v203 = vpack.c.b16 %v195, %v195
    %v204 = vpack.c.b16 %v196, %v196
    %v205 = vpack.c.b16 %v197, %v197
    %v206 = vpack.c.b16 %v198, %v198
    %v207 = vpack.c.b16 %v199, %v199
    %v208 = vpack.c.b16 %v200, %v200
    %vm217 = vcmask 781312
    %218 = vst.msk [vmem:[%s3] sm:$0xf] %vm217, %v201
    %219 = vst.msk [vmem:[%s3 + $0x4] sm:$0xf] %vm217, %v202
    %220 = vst.msk [vmem:[%s3 + $0x8] sm:$0xf] %vm217, %v203
    %221 = vst.msk [vmem:[%s3 + $0xc] sm:$0xf] %vm217, %v204
    %222 = vst.msk [vmem:[%s3 + $0x10] sm:$0xf] %vm217, %v205
    %223 = vst.msk [vmem:[%s3 + $0x14] sm:$0xf] %vm217, %v206
    %224 = vst.msk [vmem:[%s3 + $0x18] sm:$0xf] %vm217, %v207
    %225 = vst.msk [vmem:[%s3 + $0x1c] sm:$0xf] %vm217, %v208
  $region21: #{_lambda_.21} parent=0 // pred_fallthru
    _
  // Predicated region
  $region22: #{_lambda_.21} parent=0 // pred_check
    _
  $region23: #{_lambda_.21} parent=0 // pred_check_branch
    %227 = sbr.rel (0) target = $region25
  $region24: #{_lambda_.21} parent=0 // pred_region
    _
  $region25: #{_lambda_.21} parent=0 // pred_fallthru
    _
  // Predicated region
  $region26: #{_lambda_.21} parent=0 // pred_check
    _
  $region27: #{_lambda_.21} parent=0 // pred_check_branch
    %229 = sbr.rel (0) target = $region29
  $region28: #{_lambda_.21} parent=0 // pred_region
    _
  $region29: #{_lambda_.21} parent=0 // pred_fallthru
    _

// kernel: _lambda_.23
$region0: #{_lambda_.23}
  #allocation0 [shape = 'u32[]', space=smem, size = 0x4, offset = 0x4, fixed_abs, tag = 'smem constant byte address 0x4 - core index']
  #allocation1 [shape = 'u32[144,128]{1,0:T(1,128)}', space=vmem, size = 0x12000, scoped, tag = 'internal scratch']
  #allocation2 [shape = 'f32[64,32]{1,0:T(8,128)}', space=vmem, size = 0x8000, scoped, tag = 'scratch operand']
  %s0 = inlined_call_operand.vmem [shape: bf16[64,32], index: 0, kind: input, shape index: {}]
  %s1 = inlined_call_operand.vmem [shape: bf16[32,32], index: 1, kind: input, shape index: {}]
  %s2 = inlined_call_operand.vmem [shape: f32[1,32], index: 2, kind: input, shape index: {}]
  %s3 = inlined_call_operand.vmem [shape: f32[64,32], index: 3, kind: input, shape index: {}]
  %s4 = inlined_call_operand.vmem [shape: f32[64,32], index: 4, kind: output, shape index: {}]
  %s5 = sld [smem:[#allocation0]]
  $region34: #{_lambda_.23} parent=0
    _
  %s7 = ssub.s32 1, %s5
  %s8 = scalar_select 0, %s7, %s5
  // Predicated region
  $region2: #{_lambda_.23} parent=0 // pred_check
    _
  $region3: #{_lambda_.23} parent=0 // pred_check_branch
    %10 = sbr.rel (0) target = $region5
  $region4: #{_lambda_.23} parent=0 // pred_region
    _
  $region5: #{_lambda_.23} parent=0 // pred_fallthru
    _
  // Predicated region
  $region6: #{_lambda_.23} parent=0 // pred_check
    _
  $region7: #{_lambda_.23} parent=0 // pred_check_branch
    %12 = sbr.rel (0) target = $region9
  $region8: #{_lambda_.23} parent=0 // pred_region
    _
  $region9: #{_lambda_.23} parent=0 // pred_fallthru
    _
  // Predicated region
  $region10: #{_lambda_.23} parent=0 // pred_check
    _
  $region11: #{_lambda_.23} parent=0 // pred_check_branch
    %14 = sbr.rel (0) target = $region13
  $region12: #{_lambda_.23} parent=0 // pred_region
    _
  $region13: #{_lambda_.23} parent=0 // pred_fallthru
    _
  // Predicated region
  $region14: #{_lambda_.23} parent=0 // pred_check
    _
  $region15: #{_lambda_.23} parent=0 // pred_check_branch
    %16 = sbr.rel (0) target = $region17
  $region16: #{_lambda_.23} parent=0 // pred_region
    _
  $region17: #{_lambda_.23} parent=0 // pred_fallthru
    _
  %p18 = scmp.eq.s32.totalorder 0, 0
  // Predicated region
  $region18: #{_lambda_.23} parent=0 // pred_check
    %p19 = pneg %p18
  $region19: #{_lambda_.23} parent=0 // pred_check_branch
    %21 = sbr.rel (%p19) target = $region21
  $region20: #{_lambda_.23} parent=0 // pred_region
    %vm22 = vcmask 261120
    %23 = vst.msk [vmem:[#allocation2] sm:$0xff] %vm22, 0.0
    %24 = vst.msk [vmem:[#allocation2 + $0x8] sm:$0xff] %vm22, 0.0
    %25 = vst.msk [vmem:[#allocation2 + $0x10] sm:$0xff] %vm22, 0.0
    %26 = vst.msk [vmem:[#allocation2 + $0x18] sm:$0xff] %vm22, 0.0
    %27 = vst.msk [vmem:[#allocation2 + $0x20] sm:$0xff] %vm22, 0.0
    %28 = vst.msk [vmem:[#allocation2 + $0x28] sm:$0xff] %vm22, 0.0
    %29 = vst.msk [vmem:[#allocation2 + $0x30] sm:$0xff] %vm22, 0.0
    %30 = vst.msk [vmem:[#allocation2 + $0x38] sm:$0xff] %vm22, 0.0
  $region21: #{_lambda_.23} parent=0 // pred_fallthru
    _
  %v31 = vld [vmem:[#allocation2] sm:$0xff]
  %v32 = vld [vmem:[#allocation2 + $0x8] sm:$0xff]
  %v33 = vld [vmem:[#allocation2 + $0x10] sm:$0xff]
  %v34 = vld [vmem:[#allocation2 + $0x18] sm:$0xff]
  %v35 = vld [vmem:[#allocation2 + $0x20] sm:$0xff]
  %v36 = vld [vmem:[#allocation2 + $0x28] sm:$0xff]
  %v37 = vld [vmem:[#allocation2 + $0x30] sm:$0xff]
  %v38 = vld [vmem:[#allocation2 + $0x38] sm:$0xff]
  %v39 = vld [vmem:[%s0] sm:$0xf]
  %v40 = vld [vmem:[%s0 + $0x4] sm:$0xf]
  %v41 = vld [vmem:[%s0 + $0x8] sm:$0xf]
  %v42 = vld [vmem:[%s0 + $0xc] sm:$0xf]
  %v43 = vld [vmem:[%s0 + $0x10] sm:$0xf]
  %v44 = vld [vmem:[%s0 + $0x14] sm:$0xf]
  %v45 = vld [vmem:[%s0 + $0x18] sm:$0xf]
  %v46 = vld [vmem:[%s0 + $0x1c] sm:$0xf]
  %v47 = vld [vmem:[%s1] sm:$0xf]
  %v48 = vld [vmem:[%s1 + $0x4] sm:$0xf]
  %v49 = vld [vmem:[%s1 + $0x8] sm:$0xf]
  %v50 = vld [vmem:[%s1 + $0xc] sm:$0xf]
  %v59 = vunpack.c.l.b16 %v39
  %v60 = vunpack.c.l.b16 %v40
  %v61 = vunpack.c.l.b16 %v41
  %v62 = vunpack.c.l.b16 %v42
  %v63 = vunpack.c.l.b16 %v43
  %v64 = vunpack.c.l.b16 %v44
  %v65 = vunpack.c.l.b16 %v45
  %v66 = vunpack.c.l.b16 %v46
  %v67 = vpack.c.b16 %v60, %v59
  %v68 = vpack.c.b16 %v62, %v61
  %v69 = vpack.c.b16 %v64, %v63
  %v70 = vpack.c.b16 %v66, %v65
  %v75 = vunpack.c.l.b16 %v47
  %v76 = vunpack.c.l.b16 %v48
  %v77 = vunpack.c.l.b16 %v49
  %v78 = vunpack.c.l.b16 %v50
  %v79 = vpack.c.b16 %v76, %v75
  %v80 = vpack.c.b16 %v78, %v77
  %vm83 = vcmask 261120
  %v85 = vsel %vm83, %v67, 0
  %v88 = vsel %vm83, %v68, 0
  %v91 = vsel %vm83, %v69, 0
  %v94 = vsel %vm83, %v70, 0
  %96 = vmatprep.subr.bf16.mxu0 0
  %97 = vmatpush1.bf16.msra.mxu0 %v79
  %98 = vmatprep.subr.bf16.mxu0 0
  %99 = vmatpush1.bf16.msra.mxu0 %v80
  %100 = vmatprep.subr.bf16.mxu0 0
  %101 = vmatpush1.bf16.msra.mxu0 0
  %102 = vmatprep.subr.bf16.mxu0 0
  %103 = vmatpush1.bf16.msra.mxu0 0
  %104 = vmatprep.subr.bf16.mxu0 0
  %105 = vmatpush1.bf16.msra.mxu0 0
  %106 = vmatprep.subr.bf16.mxu0 0
  %107 = vmatpush1.bf16.msra.mxu0 0
  %108 = vmatprep.subr.bf16.mxu0 0
  %109 = vmatpush1.bf16.msra.mxu0 0
  %110 = vmatprep.subr.bf16.mxu0 0
  %111 = vmatpush1.bf16.msra.mxu0 0
  %112 = vmatprep.subr.bf16.mxu0 0
  %113 = vmatpush1.bf16.msra.mxu0 0
  %114 = vmatprep.subr.bf16.mxu0 0
  %115 = vmatpush1.bf16.msra.mxu0 0
  %116 = vmatprep.subr.bf16.mxu0 0
  %117 = vmatpush1.bf16.msra.mxu0 0
  %118 = vmatprep.subr.bf16.mxu0 0
  %119 = vmatpush1.bf16.msra.mxu0 0
  %120 = vmatprep.subr.bf16.mxu0 0
  %121 = vmatpush1.bf16.msra.mxu0 0
  %122 = vmatprep.subr.bf16.mxu0 0
  %123 = vmatpush1.bf16.msra.mxu0 0
  %124 = vmatprep.subr.bf16.mxu0 0
  %125 = vmatpush1.bf16.msra.mxu0 0
  %126 = vmatprep.subr.bf16.mxu0 0
  %127 = vmatpush1.bf16.msra.mxu0 0
  %128 = vmatprep.mubr.bf16.mxu0 0
  %129 = vmatmul.mubr.bf16.gmra.mrb[0].mxu0 %v85
  %v130 = vpop.f32.mrb[0].mxu0
  %v131 = vadd.f32 0.0, %v130
  %v132 = vpop.f32.mrb[0].mxu0
  %v133 = vpop.f32.mrb[0].mxu0
  %v134 = vadd.f32 0.0, %v133
  %v135 = vpop.f32.mrb[0].mxu0
  %136 = vmatprep.mubr.bf16.mxu0 0
  %137 = vmatmul.mubr.bf16.gmra.mrb[0].mxu0 %v88
  %v138 = vpop.f32.mrb[0].mxu0
  %v139 = vadd.f32 0.0, %v138
  %v140 = vpop.f32.mrb[0].mxu0
  %v141 = vpop.f32.mrb[0].mxu0
  %v142 = vadd.f32 0.0, %v141
  %v143 = vpop.f32.mrb[0].mxu0
  %144 = vmatprep.mubr.bf16.mxu0 0
  %145 = vmatmul.mubr.bf16.gmra.mrb[0].mxu0 %v91
  %v146 = vpop.f32.mrb[0].mxu0
  %v147 = vadd.f32 0.0, %v146
  %v148 = vpop.f32.mrb[0].mxu0
  %v149 = vpop.f32.mrb[0].mxu0
  %v150 = vadd.f32 0.0, %v149
  %v151 = vpop.f32.mrb[0].mxu0
  %152 = vmatprep.mubr.bf16.mxu0 0
  %153 = vmatmul.mubr.bf16.gmra.mrb[0].mxu0 %v94
  %v154 = vpop.f32.mrb[0].mxu0
  %v155 = vadd.f32 0.0, %v154
  %v156 = vpop.f32.mrb[0].mxu0
  %v157 = vpop.f32.mrb[0].mxu0
  %v158 = vadd.f32 0.0, %v157
  %v159 = vpop.f32.mrb[0].mxu0
  %160 = vdwg.mxu0
  %v161 = vadd.f32 %v31, %v131
  %v162 = vadd.f32 %v32, %v134
  %v163 = vadd.f32 %v33, %v139
  %v164 = vadd.f32 %v34, %v142
  %v165 = vadd.f32 %v35, %v147
  %v166 = vadd.f32 %v36, %v150
  %v167 = vadd.f32 %v37, %v155
  %v168 = vadd.f32 %v38, %v158
  %169 = vst.msk [vmem:[#allocation2] sm:$0xff] %vm83, %v161
  %170 = vst.msk [vmem:[#allocation2 + $0x8] sm:$0xff] %vm83, %v162
  %171 = vst.msk [vmem:[#allocation2 + $0x10] sm:$0xff] %vm83, %v163
  %172 = vst.msk [vmem:[#allocation2 + $0x18] sm:$0xff] %vm83, %v164
  %173 = vst.msk [vmem:[#allocation2 + $0x20] sm:$0xff] %vm83, %v165
  %174 = vst.msk [vmem:[#allocation2 + $0x28] sm:$0xff] %vm83, %v166
  %175 = vst.msk [vmem:[#allocation2 + $0x30] sm:$0xff] %vm83, %v167
  %176 = vst.msk [vmem:[#allocation2 + $0x38] sm:$0xff] %vm83, %v168
  // Predicated region
  $region22: #{_lambda_.23} parent=0 // pred_check
    %p177 = pneg %p18
  $region23: #{_lambda_.23} parent=0 // pred_check_branch
    %179 = sbr.rel (%p177) target = $region25
  $region24: #{_lambda_.23} parent=0 // pred_region
    %v180 = vld [vmem:[#allocation2] sm:$0xff]
    %v181 = vld [vmem:[#allocation2 + $0x8] sm:$0xff]
    %v182 = vld [vmem:[#allocation2 + $0x10] sm:$0xff]
    %v183 = vld [vmem:[#allocation2 + $0x18] sm:$0xff]
    %v184 = vld [vmem:[#allocation2 + $0x20] sm:$0xff]
    %v185 = vld [vmem:[#allocation2 + $0x28] sm:$0xff]
    %v186 = vld [vmem:[#allocation2 + $0x30] sm:$0xff]
    %v187 = vld [vmem:[#allocation2 + $0x38] sm:$0xff]
    %v188 = vld [vmem:[%s2] sm:$0x1]
    %v190 = vlaneseq
    %v191 = vshrl.u32 %v190, 7
    %v192 = vsub.s32 0, %v191
    %v193 = vrot.slane %v188, %v192
    %v195 = vadd.f32 %v180, %v193
    %v196 = vadd.f32 %v181, %v193
    %v197 = vadd.f32 %v182, %v193
    %v198 = vadd.f32 %v183, %v193
    %v199 = vadd.f32 %v184, %v193
    %v200 = vadd.f32 %v185, %v193
    %v201 = vadd.f32 %v186, %v193
    %v202 = vadd.f32 %v187, %v193
    %v203 = vld [vmem:[%s3] sm:$0xff]
    %v204 = vld [vmem:[%s3 + $0x8] sm:$0xff]
    %v205 = vld [vmem:[%s3 + $0x10] sm:$0xff]
    %v206 = vld [vmem:[%s3 + $0x18] sm:$0xff]
    %v207 = vld [vmem:[%s3 + $0x20] sm:$0xff]
    %v208 = vld [vmem:[%s3 + $0x28] sm:$0xff]
    %v209 = vld [vmem:[%s3 + $0x30] sm:$0xff]
    %v210 = vld [vmem:[%s3 + $0x38] sm:$0xff]
    %v211 = vadd.f32 %v195, %v203
    %v212 = vadd.f32 %v196, %v204
    %v213 = vadd.f32 %v197, %v205
    %v214 = vadd.f32 %v198, %v206
    %v215 = vadd.f32 %v199, %v207
    %v216 = vadd.f32 %v200, %v208
    %v217 = vadd.f32 %v201, %v209
    %v218 = vadd.f32 %v202, %v210
    %219 = vst.msk [vmem:[%s4] sm:$0xff] %vm83, %v211
    %220 = vst.msk [vmem:[%s4 + $0x8] sm:$0xff] %vm83, %v212
    %221 = vst.msk [vmem:[%s4 + $0x10] sm:$0xff] %vm83, %v213
    %222 = vst.msk [vmem:[%s4 + $0x18] sm:$0xff] %vm83, %v214
    %223 = vst.msk [vmem:[%s4 + $0x20] sm:$0xff] %vm83, %v215
    %224 = vst.msk [vmem:[%s4 + $0x28] sm:$0xff] %vm83, %v216
    %225 = vst.msk [vmem:[%s4 + $0x30] sm:$0xff] %vm83, %v217
    %226 = vst.msk [vmem:[%s4 + $0x38] sm:$0xff] %vm83, %v218
  $region25: #{_lambda_.23} parent=0 // pred_fallthru
    _
  // Predicated region
  $region26: #{_lambda_.23} parent=0 // pred_check
    _
  $region27: #{_lambda_.23} parent=0 // pred_check_branch
    %228 = sbr.rel (0) target = $region29
  $region28: #{_lambda_.23} parent=0 // pred_region
    _
  $region29: #{_lambda_.23} parent=0 // pred_fallthru
    _
  // Predicated region
  $region30: #{_lambda_.23} parent=0 // pred_check
    _
  $region31: #{_lambda_.23} parent=0 // pred_check_branch
    %230 = sbr.rel (0) target = $region33
  $region32: #{_lambda_.23} parent=0 // pred_region
    _
  $region33: #{_lambda_.23} parent=0 // pred_fallthru
    _

// kernel: _lambda_.24
$region0: #{_lambda_.24}
  #allocation0 [shape = 'u32[]', space=smem, size = 0x4, offset = 0x4, fixed_abs, tag = 'smem constant byte address 0x4 - core index']
  #allocation1 [shape = 'u32[144,128]{1,0:T(1,128)}', space=vmem, size = 0x12000, scoped, tag = 'internal scratch']
  %s0 = inlined_call_operand.vmem [shape: f32[64,32], index: 0, kind: input, shape index: {}]
  %s1 = inlined_call_operand.vmem [shape: f32[2,32], index: 1, kind: output, shape index: {}]
  %s2 = sld [smem:[#allocation0]]
  $region18: #{_lambda_.24} parent=0
    _
  %s4 = ssub.s32 1, %s2
  %s5 = scalar_select 0, %s4, %s2
  // Predicated region
  $region2: #{_lambda_.24} parent=0 // pred_check
    _
  $region3: #{_lambda_.24} parent=0 // pred_check_branch
    %7 = sbr.rel (0) target = $region5
  $region4: #{_lambda_.24} parent=0 // pred_region
    _
  $region5: #{_lambda_.24} parent=0 // pred_fallthru
    _
  %p8 = scmp.eq.s32.totalorder 0, 0
  // Predicated region
  $region6: #{_lambda_.24} parent=0 // pred_check
    %p9 = pneg %p8
  $region7: #{_lambda_.24} parent=0 // pred_check_branch
    %11 = sbr.rel (%p9) target = $region9
  $region8: #{_lambda_.24} parent=0 // pred_region
    %vm12 = vcmask 254976
    %13 = vst.msk [vmem:[%s1] sm:$0x3] %vm12, 0.0
  $region9: #{_lambda_.24} parent=0 // pred_fallthru
    _
  %v14 = vld [vmem:[%s0] sm:$0xff]
  %v15 = vld [vmem:[%s0 + $0x8] sm:$0xff]
  %v16 = vld [vmem:[%s0 + $0x10] sm:$0xff]
  %v17 = vld [vmem:[%s0 + $0x18] sm:$0xff]
  %v18 = vld [vmem:[%s0 + $0x20] sm:$0xff]
  %v19 = vld [vmem:[%s0 + $0x28] sm:$0xff]
  %v20 = vld [vmem:[%s0 + $0x30] sm:$0xff]
  %v21 = vld [vmem:[%s0 + $0x38] sm:$0xff]
  %v22 = vld [vmem:[%s1] sm:$0x3]
  %vm23 = vcmask 261120
  %v24 = vsel %vm23, %v14, 0.0
  %v25 = vsel %vm23, %v15, 0.0
  %v26 = vadd.f32 %v24, %v25
  %v27 = vsel %vm23, %v16, 0.0
  %v28 = vadd.f32 %v26, %v27
  %v29 = vsel %vm23, %v17, 0.0
  %v30 = vadd.f32 %v28, %v29
  %v31 = vsel %vm23, %v18, 0.0
  %v32 = vadd.f32 %v30, %v31
  %v33 = vsel %vm23, %v19, 0.0
  %v34 = vadd.f32 %v32, %v33
  %v35 = vsel %vm23, %v20, 0.0
  %v36 = vadd.f32 %v34, %v35
  %v37 = vsel %vm23, %v21, 0.0
  %v38 = vadd.f32 %v36, %v37
  %v39 = vrot.slane %v38, 4
  %v40 = vadd.f32 %v38, %v39
  %v41 = vrot.slane %v40, 2
  %v42 = vadd.f32 %v40, %v41
  %v43 = vrot.slane %v42, 1
  %v44 = vadd.f32 %v42, %v43
  %v45 = vmul.f32 %v14, %v14
  %v46 = vmul.f32 %v15, %v15
  %v47 = vmul.f32 %v16, %v16
  %v48 = vmul.f32 %v17, %v17
  %v49 = vmul.f32 %v18, %v18
  %v50 = vmul.f32 %v19, %v19
  %v51 = vmul.f32 %v20, %v20
  %v52 = vmul.f32 %v21, %v21
  %v53 = vsel %vm23, %v45, 0.0
  %v54 = vsel %vm23, %v46, 0.0
  %v55 = vadd.f32 %v53, %v54
  %v56 = vsel %vm23, %v47, 0.0
  %v57 = vadd.f32 %v55, %v56
  %v58 = vsel %vm23, %v48, 0.0
  %v59 = vadd.f32 %v57, %v58
  %v60 = vsel %vm23, %v49, 0.0
  %v61 = vadd.f32 %v59, %v60
  %v62 = vsel %vm23, %v50, 0.0
  %v63 = vadd.f32 %v61, %v62
  %v64 = vsel %vm23, %v51, 0.0
  %v65 = vadd.f32 %v63, %v64
  %v66 = vsel %vm23, %v52, 0.0
  %v67 = vadd.f32 %v65, %v66
  %v68 = vrot.slane %v67, 4
  %v69 = vadd.f32 %v67, %v68
  %v70 = vrot.slane %v69, 2
  %v71 = vadd.f32 %v69, %v70
  %v72 = vrot.slane %v71, 1
  %v73 = vadd.f32 %v71, %v72
  %vm74 = vcmask 1040384
  %v75 = vsel %vm74, %v44, %v73
  %v76 = vadd.f32 %v22, %v75
  %vm77 = vcmask 254976
  %78 = vst.msk [vmem:[%s1] sm:$0x3] %vm77, %v76
  // Predicated region
  $region10: #{_lambda_.24} parent=0 // pred_check
    _
  $region11: #{_lambda_.24} parent=0 // pred_check_branch
    %80 = sbr.rel (0) target = $region13
  $region12: #{_lambda_.24} parent=0 // pred_region
    _
  $region13: #{_lambda_.24} parent=0 // pred_fallthru
    _
  // Predicated region
  $region14: #{_lambda_.24} parent=0 // pred_check
    _
  $region15: #{_lambda_.24} parent=0 // pred_check_branch
    %82 = sbr.rel (0) target = $region17
  $region16: #{_lambda_.24} parent=0 // pred_region
    _
  $region17: #{_lambda_.24} parent=0 // pred_fallthru
    _

// kernel: _lambda_.25
$region0: #{_lambda_.25}
  #allocation0 [shape = 'u32[]', space=smem, size = 0x4, offset = 0x4, fixed_abs, tag = 'smem constant byte address 0x4 - core index']
  #allocation1 [shape = 'u32[144,128]{1,0:T(1,128)}', space=vmem, size = 0x12000, scoped, tag = 'internal scratch']
  %s0 = inlined_call_operand.vmem [shape: f32[64,32], index: 0, kind: input, shape index: {}]
  %s1 = inlined_call_operand.vmem [shape: f32[2,32], index: 1, kind: input, shape index: {}]
  %s2 = inlined_call_operand.vmem [shape: f32[1,32], index: 2, kind: input, shape index: {}]
  %s3 = inlined_call_operand.vmem [shape: f32[1,32], index: 3, kind: input, shape index: {}]
  %s4 = inlined_call_operand.vmem [shape: f32[64,32], index: 4, kind: output, shape index: {}]
  %s5 = sld [smem:[#allocation0]]
  $region26: #{_lambda_.25} parent=0
    _
  %s7 = ssub.s32 1, %s5
  %s8 = scalar_select 0, %s7, %s5
  // Predicated region
  $region2: #{_lambda_.25} parent=0 // pred_check
    _
  $region3: #{_lambda_.25} parent=0 // pred_check_branch
    %10 = sbr.rel (0) target = $region5
  $region4: #{_lambda_.25} parent=0 // pred_region
    _
  $region5: #{_lambda_.25} parent=0 // pred_fallthru
    _
  // Predicated region
  $region6: #{_lambda_.25} parent=0 // pred_check
    _
  $region7: #{_lambda_.25} parent=0 // pred_check_branch
    %12 = sbr.rel (0) target = $region9
  $region8: #{_lambda_.25} parent=0 // pred_region
    _
  $region9: #{_lambda_.25} parent=0 // pred_fallthru
    _
  // Predicated region
  $region10: #{_lambda_.25} parent=0 // pred_check
    _
  $region11: #{_lambda_.25} parent=0 // pred_check_branch
    %14 = sbr.rel (0) target = $region13
  $region12: #{_lambda_.25} parent=0 // pred_region
    _
  $region13: #{_lambda_.25} parent=0 // pred_fallthru
    _
  // Predicated region
  $region14: #{_lambda_.25} parent=0 // pred_check
    _
  $region15: #{_lambda_.25} parent=0 // pred_check_branch
    %16 = sbr.rel (0) target = $region17
  $region16: #{_lambda_.25} parent=0 // pred_region
    _
  $region17: #{_lambda_.25} parent=0 // pred_fallthru
    _
  %v17 = vld [vmem:[%s1] sm:$0x3]
  %v18 = vmul.f32 %v17, 0.015625
  %v19 = vmul.f32 %v18, %v18
  %v21 = vrot.slane %v19, 7
  %v23 = vsub.f32 %v18, %v21
  %v24 = vld [vmem:[%s0] sm:$0xff]
  %v25 = vld [vmem:[%s0 + $0x8] sm:$0xff]
  %v26 = vld [vmem:[%s0 + $0x10] sm:$0xff]
  %v27 = vld [vmem:[%s0 + $0x18] sm:$0xff]
  %v28 = vld [vmem:[%s0 + $0x20] sm:$0xff]
  %v29 = vld [vmem:[%s0 + $0x28] sm:$0xff]
  %v30 = vld [vmem:[%s0 + $0x30] sm:$0xff]
  %v31 = vld [vmem:[%s0 + $0x38] sm:$0xff]
  %v32 = vlaneseq
  %v33 = vshrl.u32 %v32, 7
  %v34 = vsub.s32 0, %v33
  %v35 = vrot.slane %v18, %v34
  %v36 = vsub.f32 %v24, %v35
  %v37 = vsub.f32 %v25, %v35
  %v38 = vsub.f32 %v26, %v35
  %v39 = vsub.f32 %v27, %v35
  %v40 = vsub.f32 %v28, %v35
  %v41 = vsub.f32 %v29, %v35
  %v42 = vsub.f32 %v30, %v35
  %v43 = vsub.f32 %v31, %v35
  %v44 = vadd.f32 %v23, 1e-05
  %v45 = vrsqrt.pop %v44
  %v46 = vlaneseq
  %v47 = vshrl.u32 %v46, 7
  %v48 = vsub.s32 1, %v47
  %v49 = vrot.slane %v45, %v48
  %v50 = vmul.f32 %v36, %v49
  %v51 = vmul.f32 %v37, %v49
  %v52 = vmul.f32 %v38, %v49
  %v53 = vmul.f32 %v39, %v49
  %v54 = vmul.f32 %v40, %v49
  %v55 = vmul.f32 %v41, %v49
  %v56 = vmul.f32 %v42, %v49
  %v57 = vmul.f32 %v43, %v49
  %v58 = vld [vmem:[%s2] sm:$0x1]
  %v60 = vlaneseq
  %v61 = vshrl.u32 %v60, 7
  %v62 = vsub.s32 0, %v61
  %v63 = vrot.slane %v58, %v62
  %v65 = vmul.f32 %v50, %v63
  %v66 = vmul.f32 %v51, %v63
  %v67 = vmul.f32 %v52, %v63
  %v68 = vmul.f32 %v53, %v63
  %v69 = vmul.f32 %v54, %v63
  %v70 = vmul.f32 %v55, %v63
  %v71 = vmul.f32 %v56, %v63
  %v72 = vmul.f32 %v57, %v63
  %v73 = vld [vmem:[%s3] sm:$0x1]
  %v75 = vlaneseq
  %v76 = vshrl.u32 %v75, 7
  %v77 = vsub.s32 0, %v76
  %v78 = vrot.slane %v73, %v77
  %v80 = vadd.f32 %v65, %v78
  %v81 = vadd.f32 %v66, %v78
  %v82 = vadd.f32 %v67, %v78
  %v83 = vadd.f32 %v68, %v78
  %v84 = vadd.f32 %v69, %v78
  %v85 = vadd.f32 %v70, %v78
  %v86 = vadd.f32 %v71, %v78
  %v87 = vadd.f32 %v72, %v78
  %vm88 = vcmask 261120
  %89 = vst.msk [vmem:[%s4] sm:$0xff] %vm88, %v80
  %90 = vst.msk [vmem:[%s4 + $0x8] sm:$0xff] %vm88, %v81
  %91 = vst.msk [vmem:[%s4 + $0x10] sm:$0xff] %vm88, %v82
  %92 = vst.msk [vmem:[%s4 + $0x18] sm:$0xff] %vm88, %v83
  %93 = vst.msk [vmem:[%s4 + $0x20] sm:$0xff] %vm88, %v84
  %94 = vst.msk [vmem:[%s4 + $0x28] sm:$0xff] %vm88, %v85
  %95 = vst.msk [vmem:[%s4 + $0x30] sm:$0xff] %vm88, %v86
  %96 = vst.msk [vmem:[%s4 + $0x38] sm:$0xff] %vm88, %v87
  // Predicated region
  $region18: #{_lambda_.25} parent=0 // pred_check
    _
  $region19: #{_lambda_.25} parent=0 // pred_check_branch
    %98 = sbr.rel (0) target = $region21
  $region20: #{_lambda_.25} parent=0 // pred_region
    _
  $region21: #{_lambda_.25} parent=0 // pred_fallthru
    _
  // Predicated region
  $region22: #{_lambda_.25} parent=0 // pred_check
    _
  $region23: #{_lambda_.25} parent=0 // pred_check_branch
    %100 = sbr.rel (0) target = $region25
  $region24: #{_lambda_.25} parent=0 // pred_region
    _
  $region25: #{_lambda_.25} parent=0 // pred_fallthru
    _

// kernel: _lambda_.26
$region0: #{_lambda_.26}
  #allocation0 [shape = 'u32[]', space=smem, size = 0x4, offset = 0x4, fixed_abs, tag = 'smem constant byte address 0x4 - core index']
  #allocation1 [shape = 'u32[144,128]{1,0:T(1,128)}', space=vmem, size = 0x12000, scoped, tag = 'internal scratch']
  #allocation2 [shape = 'f32[64,64]{1,0:T(8,128)}', space=vmem, size = 0x8000, scoped, tag = 'scratch operand']
  %s0 = inlined_call_operand.vmem [shape: f32[64,32], index: 0, kind: input, shape index: {}]
  %s1 = inlined_call_operand.vmem [shape: bf16[32,64], index: 1, kind: input, shape index: {}]
  %s2 = inlined_call_operand.vmem [shape: f32[1,64], index: 2, kind: input, shape index: {}]
  %s3 = inlined_call_operand.vmem [shape: bf16[64,64], index: 3, kind: output, shape index: {}]
  %s4 = sld [smem:[#allocation0]]
  $region30: #{_lambda_.26} parent=0
    _
  %s6 = ssub.s32 1, %s4
  %s7 = scalar_select 0, %s6, %s4
  // Predicated region
  $region2: #{_lambda_.26} parent=0 // pred_check
    _
  $region3: #{_lambda_.26} parent=0 // pred_check_branch
    %9 = sbr.rel (0) target = $region5
  $region4: #{_lambda_.26} parent=0 // pred_region
    _
  $region5: #{_lambda_.26} parent=0 // pred_fallthru
    _
  // Predicated region
  $region6: #{_lambda_.26} parent=0 // pred_check
    _
  $region7: #{_lambda_.26} parent=0 // pred_check_branch
    %11 = sbr.rel (0) target = $region9
  $region8: #{_lambda_.26} parent=0 // pred_region
    _
  $region9: #{_lambda_.26} parent=0 // pred_fallthru
    _
  // Predicated region
  $region10: #{_lambda_.26} parent=0 // pred_check
    _
  $region11: #{_lambda_.26} parent=0 // pred_check_branch
    %13 = sbr.rel (0) target = $region13
  $region12: #{_lambda_.26} parent=0 // pred_region
    _
  $region13: #{_lambda_.26} parent=0 // pred_fallthru
    _
  %p15 = scmp.eq.s32.totalorder 0, 0
  // Predicated region
  $region14: #{_lambda_.26} parent=0 // pred_check
    %p16 = pneg %p15
  $region15: #{_lambda_.26} parent=0 // pred_check_branch
    %18 = sbr.rel (%p16) target = $region17
  $region16: #{_lambda_.26} parent=0 // pred_region
    %vm19 = vcmask 523264
    %20 = vst.msk [vmem:[#allocation2] sm:$0xff] %vm19, 0.0
    %21 = vst.msk [vmem:[#allocation2 + $0x8] sm:$0xff] %vm19, 0.0
    %22 = vst.msk [vmem:[#allocation2 + $0x10] sm:$0xff] %vm19, 0.0
    %23 = vst.msk [vmem:[#allocation2 + $0x18] sm:$0xff] %vm19, 0.0
    %24 = vst.msk [vmem:[#allocation2 + $0x20] sm:$0xff] %vm19, 0.0
    %25 = vst.msk [vmem:[#allocation2 + $0x28] sm:$0xff] %vm19, 0.0
    %26 = vst.msk [vmem:[#allocation2 + $0x30] sm:$0xff] %vm19, 0.0
    %27 = vst.msk [vmem:[#allocation2 + $0x38] sm:$0xff] %vm19, 0.0
  $region17: #{_lambda_.26} parent=0 // pred_fallthru
    _
  %v28 = vld [vmem:[#allocation2] sm:$0xff]
  %v29 = vld [vmem:[#allocation2 + $0x8] sm:$0xff]
  %v30 = vld [vmem:[#allocation2 + $0x10] sm:$0xff]
  %v31 = vld [vmem:[#allocation2 + $0x18] sm:$0xff]
  %v32 = vld [vmem:[#allocation2 + $0x20] sm:$0xff]
  %v33 = vld [vmem:[#allocation2 + $0x28] sm:$0xff]
  %v34 = vld [vmem:[#allocation2 + $0x30] sm:$0xff]
  %v35 = vld [vmem:[#allocation2 + $0x38] sm:$0xff]
  %v36 = vld [vmem:[%s0] sm:$0xff]
  %v37 = vld [vmem:[%s0 + $0x8] sm:$0xff]
  %v38 = vld [vmem:[%s0 + $0x10] sm:$0xff]
  %v39 = vld [vmem:[%s0 + $0x18] sm:$0xff]
  %v40 = vld [vmem:[%s0 + $0x20] sm:$0xff]
  %v41 = vld [vmem:[%s0 + $0x28] sm:$0xff]
  %v42 = vld [vmem:[%s0 + $0x30] sm:$0xff]
  %v43 = vld [vmem:[%s0 + $0x38] sm:$0xff]
  %v44 = vpack.c.bf16 %v37, %v36
  %v45 = vpack.c.bf16 %v39, %v38
  %v46 = vpack.c.bf16 %v41, %v40
  %v47 = vpack.c.bf16 %v43, %v42
  %v48 = vld [vmem:[%s1] sm:$0xf]
  %v49 = vld [vmem:[%s1 + $0x4] sm:$0xf]
  %v50 = vld [vmem:[%s1 + $0x8] sm:$0xf]
  %v51 = vld [vmem:[%s1 + $0xc] sm:$0xf]
  %v56 = vunpack.c.l.b16 %v48
  %v57 = vunpack.c.l.b16 %v49
  %v58 = vunpack.c.l.b16 %v50
  %v59 = vunpack.c.l.b16 %v51
  %v60 = vpack.c.b16 %v57, %v56
  %v61 = vpack.c.b16 %v59, %v58
  %vm64 = vcmask 261120
  %v66 = vsel %vm64, %v44, 0
  %v69 = vsel %vm64, %v45, 0
  %v72 = vsel %vm64, %v46, 0
  %v75 = vsel %vm64, %v47, 0
  %77 = vmatprep.subr.bf16.mxu0 0
  %78 = vmatpush1.bf16.msra.mxu0 %v60
  %79 = vmatprep.subr.bf16.mxu0 0
  %80 = vmatpush1.bf16.msra.mxu0 %v61
  %81 = vmatprep.subr.bf16.mxu0 0
  %82 = vmatpush1.bf16.msra.mxu0 0
  %83 = vmatprep.subr.bf16.mxu0 0
  %84 = vmatpush1.bf16.msra.mxu0 0
  %85 = vmatprep.subr.bf16.mxu0 0
  %86 = vmatpush1.bf16.msra.mxu0 0
  %87 = vmatprep.subr.bf16.mxu0 0
  %88 = vmatpush1.bf16.msra.mxu0 0
  %89 = vmatprep.subr.bf16.mxu0 0
  %90 = vmatpush1.bf16.msra.mxu0 0
  %91 = vmatprep.subr.bf16.mxu0 0
  %92 = vmatpush1.bf16.msra.mxu0 0
  %93 = vmatprep.subr.bf16.mxu0 0
  %94 = vmatpush1.bf16.msra.mxu0 0
  %95 = vmatprep.subr.bf16.mxu0 0
  %96 = vmatpush1.bf16.msra.mxu0 0
  %97 = vmatprep.subr.bf16.mxu0 0
  %98 = vmatpush1.bf16.msra.mxu0 0
  %99 = vmatprep.subr.bf16.mxu0 0
  %100 = vmatpush1.bf16.msra.mxu0 0
  %101 = vmatprep.subr.bf16.mxu0 0
  %102 = vmatpush1.bf16.msra.mxu0 0
  %103 = vmatprep.subr.bf16.mxu0 0
  %104 = vmatpush1.bf16.msra.mxu0 0
  %105 = vmatprep.subr.bf16.mxu0 0
  %106 = vmatpush1.bf16.msra.mxu0 0
  %107 = vmatprep.subr.bf16.mxu0 0
  %108 = vmatpush1.bf16.msra.mxu0 0
  %109 = vmatprep.mubr.bf16.mxu0 0
  %110 = vmatmul.mubr.bf16.gmra.mrb[0].mxu0 %v66
  %v111 = vpop.f32.mrb[0].mxu0
  %v112 = vadd.f32 0.0, %v111
  %v113 = vpop.f32.mrb[0].mxu0
  %v114 = vpop.f32.mrb[0].mxu0
  %v115 = vadd.f32 0.0, %v114
  %v116 = vpop.f32.mrb[0].mxu0
  %117 = vmatprep.mubr.bf16.mxu0 0
  %118 = vmatmul.mubr.bf16.gmra.mrb[0].mxu0 %v69
  %v119 = vpop.f32.mrb[0].mxu0
  %v120 = vadd.f32 0.0, %v119
  %v121 = vpop.f32.mrb[0].mxu0
  %v122 = vpop.f32.mrb[0].mxu0
  %v123 = vadd.f32 0.0, %v122
  %v124 = vpop.f32.mrb[0].mxu0
  %125 = vmatprep.mubr.bf16.mxu0 0
  %126 = vmatmul.mubr.bf16.gmra.mrb[0].mxu0 %v72
  %v127 = vpop.f32.mrb[0].mxu0
  %v128 = vadd.f32 0.0, %v127
  %v129 = vpop.f32.mrb[0].mxu0
  %v130 = vpop.f32.mrb[0].mxu0
  %v131 = vadd.f32 0.0, %v130
  %v132 = vpop.f32.mrb[0].mxu0
  %133 = vmatprep.mubr.bf16.mxu0 0
  %134 = vmatmul.mubr.bf16.gmra.mrb[0].mxu0 %v75
  %v135 = vpop.f32.mrb[0].mxu0
  %v136 = vadd.f32 0.0, %v135
  %v137 = vpop.f32.mrb[0].mxu0
  %v138 = vpop.f32.mrb[0].mxu0
  %v139 = vadd.f32 0.0, %v138
  %v140 = vpop.f32.mrb[0].mxu0
  %141 = vdwg.mxu0
  %v142 = vadd.f32 %v28, %v112
  %v143 = vadd.f32 %v29, %v115
  %v144 = vadd.f32 %v30, %v120
  %v145 = vadd.f32 %v31, %v123
  %v146 = vadd.f32 %v32, %v128
  %v147 = vadd.f32 %v33, %v131
  %v148 = vadd.f32 %v34, %v136
  %v149 = vadd.f32 %v35, %v139
  %vm150 = vcmask 523264
  %151 = vst.msk [vmem:[#allocation2] sm:$0xff] %vm150, %v142
  %152 = vst.msk [vmem:[#allocation2 + $0x8] sm:$0xff] %vm150, %v143
  %153 = vst.msk [vmem:[#allocation2 + $0x10] sm:$0xff] %vm150, %v144
  %154 = vst.msk [vmem:[#allocation2 + $0x18] sm:$0xff] %vm150, %v145
  %155 = vst.msk [vmem:[#allocation2 + $0x20] sm:$0xff] %vm150, %v146
  %156 = vst.msk [vmem:[#allocation2 + $0x28] sm:$0xff] %vm150, %v147
  %157 = vst.msk [vmem:[#allocation2 + $0x30] sm:$0xff] %vm150, %v148
  %158 = vst.msk [vmem:[#allocation2 + $0x38] sm:$0xff] %vm150, %v149
  // Predicated region
  $region18: #{_lambda_.26} parent=0 // pred_check
    %p159 = pneg %p15
  $region19: #{_lambda_.26} parent=0 // pred_check_branch
    %161 = sbr.rel (%p159) target = $region21
  $region20: #{_lambda_.26} parent=0 // pred_region
    %v162 = vld [vmem:[#allocation2] sm:$0xff]
    %v163 = vld [vmem:[#allocation2 + $0x8] sm:$0xff]
    %v164 = vld [vmem:[#allocation2 + $0x10] sm:$0xff]
    %v165 = vld [vmem:[#allocation2 + $0x18] sm:$0xff]
    %v166 = vld [vmem:[#allocation2 + $0x20] sm:$0xff]
    %v167 = vld [vmem:[#allocation2 + $0x28] sm:$0xff]
    %v168 = vld [vmem:[#allocation2 + $0x30] sm:$0xff]
    %v169 = vld [vmem:[#allocation2 + $0x38] sm:$0xff]
    %v170 = vld [vmem:[%s2] sm:$0x1]
    %v172 = vlaneseq
    %v173 = vshrl.u32 %v172, 7
    %v174 = vsub.s32 0, %v173
    %v175 = vrot.slane %v170, %v174
    %v177 = vadd.f32 %v162, %v175
    %v178 = vadd.f32 %v163, %v175
    %v179 = vadd.f32 %v164, %v175
    %v180 = vadd.f32 %v165, %v175
    %v181 = vadd.f32 %v166, %v175
    %v182 = vadd.f32 %v167, %v175
    %v183 = vadd.f32 %v168, %v175
    %v184 = vadd.f32 %v169, %v175
    %v185 = vmul.f32 %v177, %v177
    %v186 = vmul.f32 %v178, %v178
    %v187 = vmul.f32 %v179, %v179
    %v188 = vmul.f32 %v180, %v180
    %v189 = vmul.f32 %v181, %v181
    %v190 = vmul.f32 %v182, %v182
    %v191 = vmul.f32 %v183, %v183
    %v192 = vmul.f32 %v184, %v184
    %v193 = vmul.f32 %v177, %v185
    %v194 = vmul.f32 %v178, %v186
    %v195 = vmul.f32 %v179, %v187
    %v196 = vmul.f32 %v180, %v188
    %v197 = vmul.f32 %v181, %v189
    %v198 = vmul.f32 %v182, %v190
    %v199 = vmul.f32 %v183, %v191
    %v200 = vmul.f32 %v184, %v192
    %v201 = vmul.f32 %v193, 0.044715
    %v202 = vmul.f32 %v194, 0.044715
    %v203 = vmul.f32 %v195, 0.044715
    %v204 = vmul.f32 %v196, 0.044715
    %v205 = vmul.f32 %v197, 0.044715
    %v206 = vmul.f32 %v198, 0.044715
    %v207 = vmul.f32 %v199, 0.044715
    %v208 = vmul.f32 %v200, 0.044715
    %v209 = vadd.f32 %v177, %v201
    %v210 = vadd.f32 %v178, %v202
    %v211 = vadd.f32 %v179, %v203
    %v212 = vadd.f32 %v180, %v204
    %v213 = vadd.f32 %v181, %v205
    %v214 = vadd.f32 %v182, %v206
    %v215 = vadd.f32 %v183, %v207
    %v216 = vadd.f32 %v184, %v208
    %v217 = vmul.f32 %v209, 0.7978846
    %v218 = vmul.f32 %v210, 0.7978846
    %v219 = vmul.f32 %v211, 0.7978846
    %v220 = vmul.f32 %v212, 0.7978846
    %v221 = vmul.f32 %v213, 0.7978846
    %v222 = vmul.f32 %v214, 0.7978846
    %v223 = vmul.f32 %v215, 0.7978846
    %v224 = vmul.f32 %v216, 0.7978846
    %v225 = vtanh.pop %v217
    %v226 = vtanh.pop %v218
    %v227 = vtanh.pop %v219
    %v228 = vtanh.pop %v220
    %v229 = vtanh.pop %v221
    %v230 = vtanh.pop %v222
    %v231 = vtanh.pop %v223
    %v232 = vtanh.pop %v224
    %v233 = vadd.f32 %v225, 1.0
    %v234 = vadd.f32 %v226, 1.0
    %v235 = vadd.f32 %v227, 1.0
    %v236 = vadd.f32 %v228, 1.0
    %v237 = vadd.f32 %v229, 1.0
    %v238 = vadd.f32 %v230, 1.0
    %v239 = vadd.f32 %v231, 1.0
    %v240 = vadd.f32 %v232, 1.0
    %v241 = vmul.f32 %v233, 0.5
    %v242 = vmul.f32 %v234, 0.5
    %v243 = vmul.f32 %v235, 0.5
    %v244 = vmul.f32 %v236, 0.5
    %v245 = vmul.f32 %v237, 0.5
    %v246 = vmul.f32 %v238, 0.5
    %v247 = vmul.f32 %v239, 0.5
    %v248 = vmul.f32 %v240, 0.5
    %v249 = vmul.f32 %v177, %v241
    %v250 = vmul.f32 %v178, %v242
    %v251 = vmul.f32 %v179, %v243
    %v252 = vmul.f32 %v180, %v244
    %v253 = vmul.f32 %v181, %v245
    %v254 = vmul.f32 %v182, %v246
    %v255 = vmul.f32 %v183, %v247
    %v256 = vmul.f32 %v184, %v248
    %v257 = vpack.c.bf16 %v250, %v249
    %v258 = vpack.c.bf16 %v252, %v251
    %v259 = vpack.c.bf16 %v254, %v253
    %v260 = vpack.c.bf16 %v256, %v255
    %v265 = vunpack.c.l.b16 %v257
    %v266 = vunpack.c.h.b16 %v257
    %v267 = vunpack.c.l.b16 %v258
    %v268 = vunpack.c.h.b16 %v258
    %v269 = vunpack.c.l.b16 %v259
    %v270 = vunpack.c.h.b16 %v259
    %v271 = vunpack.c.l.b16 %v260
    %v272 = vunpack.c.h.b16 %v260
    %v273 = vpack.c.b16 %v265, %v265
    %v274 = vpack.c.b16 %v266, %v266
    %v275 = vpack.c.b16 %v267, %v267
    %v276 = vpack.c.b16 %v268, %v268
    %v277 = vpack.c.b16 %v269, %v269
    %v278 = vpack.c.b16 %v270, %v270
    %v279 = vpack.c.b16 %v271, %v271
    %v280 = vpack.c.b16 %v272, %v272
    %vm289 = vcmask 519168
    %290 = vst.msk [vmem:[%s3] sm:$0xf] %vm289, %v273
    %291 = vst.msk [vmem:[%s3 + $0x4] sm:$0xf] %vm289, %v274
    %292 = vst.msk [vmem:[%s3 + $0x8] sm:$0xf] %vm289, %v275
    %293 = vst.msk [vmem:[%s3 + $0xc] sm:$0xf] %vm289, %v276
    %294 = vst.msk [vmem:[%s3 + $0x10] sm:$0xf] %vm289, %v277
    %295 = vst.msk [vmem:[%s3 + $0x14] sm:$0xf] %vm289, %v278
    %296 = vst.msk [vmem:[%s3 + $0x18] sm:$0xf] %vm289, %v279
    %297 = vst.msk [vmem:[%s3 + $0x1c] sm:$0xf] %vm289, %v280
  $region21: #{_lambda_.26} parent=0 // pred_fallthru
    _
  // Predicated region
  $region22: #{_lambda_.26} parent=0 // pred_check
    _
  $region23: #{_lambda_.26} parent=0 // pred_check_branch
    %299 = sbr.rel (0) target = $region25
  $region24: #{_lambda_.26} parent=0 // pred_region
    _
  $region25: #{_lambda_.26} parent=0 // pred_fallthru
    _
  // Predicated region
  $region26: #{_lambda_.26} parent=0 // pred_check
    _
  $region27: #{_lambda_.26} parent=0 // pred_check_branch
    %301 = sbr.rel (0) target = $region29
  $region28: #{_lambda_.26} parent=0 // pred_region
    _
  $region29: #{_lambda_.26} parent=0 // pred_fallthru
    _

// kernel: _lambda_.27
$region0: #{_lambda_.27}
  #allocation0 [shape = 'u32[]', space=smem, size = 0x4, offset = 0x4, fixed_abs, tag = 'smem constant byte address 0x4 - core index']
  #allocation1 [shape = 'u32[144,128]{1,0:T(1,128)}', space=vmem, size = 0x12000, scoped, tag = 'internal scratch']
  #allocation2 [shape = 'f32[64,32]{1,0:T(8,128)}', space=vmem, size = 0x8000, scoped, tag = 'scratch operand']
  %s0 = inlined_call_operand.vmem [shape: bf16[64,64], index: 0, kind: input, shape index: {}]
  %s1 = inlined_call_operand.vmem [shape: bf16[64,32], index: 1, kind: input, shape index: {}]
  %s2 = inlined_call_operand.vmem [shape: f32[1,32], index: 2, kind: input, shape index: {}]
  %s3 = inlined_call_operand.vmem [shape: f32[64,32], index: 3, kind: input, shape index: {}]
  %s4 = inlined_call_operand.vmem [shape: f32[64,32], index: 4, kind: output, shape index: {}]
  %s5 = sld [smem:[#allocation0]]
  $region34: #{_lambda_.27} parent=0
    _
  %s7 = ssub.s32 1, %s5
  %s8 = scalar_select 0, %s7, %s5
  // Predicated region
  $region2: #{_lambda_.27} parent=0 // pred_check
    _
  $region3: #{_lambda_.27} parent=0 // pred_check_branch
    %10 = sbr.rel (0) target = $region5
  $region4: #{_lambda_.27} parent=0 // pred_region
    _
  $region5: #{_lambda_.27} parent=0 // pred_fallthru
    _
  // Predicated region
  $region6: #{_lambda_.27} parent=0 // pred_check
    _
  $region7: #{_lambda_.27} parent=0 // pred_check_branch
    %12 = sbr.rel (0) target = $region9
  $region8: #{_lambda_.27} parent=0 // pred_region
    _
  $region9: #{_lambda_.27} parent=0 // pred_fallthru
    _
  // Predicated region
  $region10: #{_lambda_.27} parent=0 // pred_check
    _
  $region11: #{_lambda_.27} parent=0 // pred_check_branch
    %14 = sbr.rel (0) target = $region13
  $region12: #{_lambda_.27} parent=0 // pred_region
    _
  $region13: #{_lambda_.27} parent=0 // pred_fallthru
    _
  // Predicated region
  $region14: #{_lambda_.27} parent=0 // pred_check
    _
  $region15: #{_lambda_.27} parent=0 // pred_check_branch
    %16 = sbr.rel (0) target = $region17
  $region16: #{_lambda_.27} parent=0 // pred_region
    _
  $region17: #{_lambda_.27} parent=0 // pred_fallthru
    _
  %p18 = scmp.eq.s32.totalorder 0, 0
  // Predicated region
  $region18: #{_lambda_.27} parent=0 // pred_check
    %p19 = pneg %p18
  $region19: #{_lambda_.27} parent=0 // pred_check_branch
    %21 = sbr.rel (%p19) target = $region21
  $region20: #{_lambda_.27} parent=0 // pred_region
    %vm22 = vcmask 261120
    %23 = vst.msk [vmem:[#allocation2] sm:$0xff] %vm22, 0.0
    %24 = vst.msk [vmem:[#allocation2 + $0x8] sm:$0xff] %vm22, 0.0
    %25 = vst.msk [vmem:[#allocation2 + $0x10] sm:$0xff] %vm22, 0.0
    %26 = vst.msk [vmem:[#allocation2 + $0x18] sm:$0xff] %vm22, 0.0
    %27 = vst.msk [vmem:[#allocation2 + $0x20] sm:$0xff] %vm22, 0.0
    %28 = vst.msk [vmem:[#allocation2 + $0x28] sm:$0xff] %vm22, 0.0
    %29 = vst.msk [vmem:[#allocation2 + $0x30] sm:$0xff] %vm22, 0.0
    %30 = vst.msk [vmem:[#allocation2 + $0x38] sm:$0xff] %vm22, 0.0
  $region21: #{_lambda_.27} parent=0 // pred_fallthru
    _
  %v31 = vld [vmem:[#allocation2] sm:$0xff]
  %v32 = vld [vmem:[#allocation2 + $0x8] sm:$0xff]
  %v33 = vld [vmem:[#allocation2 + $0x10] sm:$0xff]
  %v34 = vld [vmem:[#allocation2 + $0x18] sm:$0xff]
  %v35 = vld [vmem:[#allocation2 + $0x20] sm:$0xff]
  %v36 = vld [vmem:[#allocation2 + $0x28] sm:$0xff]
  %v37 = vld [vmem:[#allocation2 + $0x30] sm:$0xff]
  %v38 = vld [vmem:[#allocation2 + $0x38] sm:$0xff]
  %v39 = vld [vmem:[%s0] sm:$0xf]
  %v40 = vld [vmem:[%s0 + $0x4] sm:$0xf]
  %v41 = vld [vmem:[%s0 + $0x8] sm:$0xf]
  %v42 = vld [vmem:[%s0 + $0xc] sm:$0xf]
  %v43 = vld [vmem:[%s0 + $0x10] sm:$0xf]
  %v44 = vld [vmem:[%s0 + $0x14] sm:$0xf]
  %v45 = vld [vmem:[%s0 + $0x18] sm:$0xf]
  %v46 = vld [vmem:[%s0 + $0x1c] sm:$0xf]
  %v47 = vld [vmem:[%s1] sm:$0xf]
  %v48 = vld [vmem:[%s1 + $0x4] sm:$0xf]
  %v49 = vld [vmem:[%s1 + $0x8] sm:$0xf]
  %v50 = vld [vmem:[%s1 + $0xc] sm:$0xf]
  %v51 = vld [vmem:[%s1 + $0x10] sm:$0xf]
  %v52 = vld [vmem:[%s1 + $0x14] sm:$0xf]
  %v53 = vld [vmem:[%s1 + $0x18] sm:$0xf]
  %v54 = vld [vmem:[%s1 + $0x1c] sm:$0xf]
  %v63 = vunpack.c.l.b16 %v39
  %v64 = vunpack.c.l.b16 %v40
  %v65 = vunpack.c.l.b16 %v41
  %v66 = vunpack.c.l.b16 %v42
  %v67 = vunpack.c.l.b16 %v43
  %v68 = vunpack.c.l.b16 %v44
  %v69 = vunpack.c.l.b16 %v45
  %v70 = vunpack.c.l.b16 %v46
  %v71 = vpack.c.b16 %v64, %v63
  %v72 = vpack.c.b16 %v66, %v65
  %v73 = vpack.c.b16 %v68, %v67
  %v74 = vpack.c.b16 %v70, %v69
  %v83 = vunpack.c.l.b16 %v47
  %v84 = vunpack.c.l.b16 %v48
  %v85 = vunpack.c.l.b16 %v49
  %v86 = vunpack.c.l.b16 %v50
  %v87 = vunpack.c.l.b16 %v51
  %v88 = vunpack.c.l.b16 %v52
  %v89 = vunpack.c.l.b16 %v53
  %v90 = vunpack.c.l.b16 %v54
  %v91 = vpack.c.b16 %v84, %v83
  %v92 = vpack.c.b16 %v86, %v85
  %v93 = vpack.c.b16 %v88, %v87
  %v94 = vpack.c.b16 %v90, %v89
  %vm99 = vcmask 523264
  %v101 = vsel %vm99, %v71, 0
  %v104 = vsel %vm99, %v72, 0
  %v107 = vsel %vm99, %v73, 0
  %v110 = vsel %vm99, %v74, 0
  %112 = vmatprep.subr.bf16.mxu0 0
  %113 = vmatpush1.bf16.msra.mxu0 %v91
  %114 = vmatprep.subr.bf16.mxu0 0
  %115 = vmatpush1.bf16.msra.mxu0 %v92
  %116 = vmatprep.subr.bf16.mxu0 0
  %117 = vmatpush1.bf16.msra.mxu0 %v93
  %118 = vmatprep.subr.bf16.mxu0 0
  %119 = vmatpush1.bf16.msra.mxu0 %v94
  %120 = vmatprep.subr.bf16.mxu0 0
  %121 = vmatpush1.bf16.msra.mxu0 0
  %122 = vmatprep.subr.bf16.mxu0 0
  %123 = vmatpush1.bf16.msra.mxu0 0
  %124 = vmatprep.subr.bf16.mxu0 0
  %125 = vmatpush1.bf16.msra.mxu0 0
  %126 = vmatprep.subr.bf16.mxu0 0
  %127 = vmatpush1.bf16.msra.mxu0 0
  %128 = vmatprep.subr.bf16.mxu0 0
  %129 = vmatpush1.bf16.msra.mxu0 0
  %130 = vmatprep.subr.bf16.mxu0 0
  %131 = vmatpush1.bf16.msra.mxu0 0
  %132 = vmatprep.subr.bf16.mxu0 0
  %133 = vmatpush1.bf16.msra.mxu0 0
  %134 = vmatprep.subr.bf16.mxu0 0
  %135 = vmatpush1.bf16.msra.mxu0 0
  %136 = vmatprep.subr.bf16.mxu0 0
  %137 = vmatpush1.bf16.msra.mxu0 0
  %138 = vmatprep.subr.bf16.mxu0 0
  %139 = vmatpush1.bf16.msra.mxu0 0
  %140 = vmatprep.subr.bf16.mxu0 0
  %141 = vmatpush1.bf16.msra.mxu0 0
  %142 = vmatprep.subr.bf16.mxu0 0
  %143 = vmatpush1.bf16.msra.mxu0 0
  %144 = vmatprep.mubr.bf16.mxu0 0
  %145 = vmatmul.mubr.bf16.gmra.mrb[0].mxu0 %v101
  %v146 = vpop.f32.mrb[0].mxu0
  %v147 = vadd.f32 0.0, %v146
  %v148 = vpop.f32.mrb[0].mxu0
  %v149 = vpop.f32.mrb[0].mxu0
  %v150 = vadd.f32 0.0, %v149
  %v151 = vpop.f32.mrb[0].mxu0
  %152 = vmatprep.mubr.bf16.mxu0 0
  %153 = vmatmul.mubr.bf16.gmra.mrb[0].mxu0 %v104
  %v154 = vpop.f32.mrb[0].mxu0
  %v155 = vadd.f32 0.0, %v154
  %v156 = vpop.f32.mrb[0].mxu0
  %v157 = vpop.f32.mrb[0].mxu0
  %v158 = vadd.f32 0.0, %v157
  %v159 = vpop.f32.mrb[0].mxu0
  %160 = vmatprep.mubr.bf16.mxu0 0
  %161 = vmatmul.mubr.bf16.gmra.mrb[0].mxu0 %v107
  %v162 = vpop.f32.mrb[0].mxu0
  %v163 = vadd.f32 0.0, %v162
  %v164 = vpop.f32.mrb[0].mxu0
  %v165 = vpop.f32.mrb[0].mxu0
  %v166 = vadd.f32 0.0, %v165
  %v167 = vpop.f32.mrb[0].mxu0
  %168 = vmatprep.mubr.bf16.mxu0 0
  %169 = vmatmul.mubr.bf16.gmra.mrb[0].mxu0 %v110
  %v170 = vpop.f32.mrb[0].mxu0
  %v171 = vadd.f32 0.0, %v170
  %v172 = vpop.f32.mrb[0].mxu0
  %v173 = vpop.f32.mrb[0].mxu0
  %v174 = vadd.f32 0.0, %v173
  %v175 = vpop.f32.mrb[0].mxu0
  %176 = vdwg.mxu0
  %v177 = vadd.f32 %v31, %v147
  %v178 = vadd.f32 %v32, %v150
  %v179 = vadd.f32 %v33, %v155
  %v180 = vadd.f32 %v34, %v158
  %v181 = vadd.f32 %v35, %v163
  %v182 = vadd.f32 %v36, %v166
  %v183 = vadd.f32 %v37, %v171
  %v184 = vadd.f32 %v38, %v174
  %vm185 = vcmask 261120
  %186 = vst.msk [vmem:[#allocation2] sm:$0xff] %vm185, %v177
  %187 = vst.msk [vmem:[#allocation2 + $0x8] sm:$0xff] %vm185, %v178
  %188 = vst.msk [vmem:[#allocation2 + $0x10] sm:$0xff] %vm185, %v179
  %189 = vst.msk [vmem:[#allocation2 + $0x18] sm:$0xff] %vm185, %v180
  %190 = vst.msk [vmem:[#allocation2 + $0x20] sm:$0xff] %vm185, %v181
  %191 = vst.msk [vmem:[#allocation2 + $0x28] sm:$0xff] %vm185, %v182
  %192 = vst.msk [vmem:[#allocation2 + $0x30] sm:$0xff] %vm185, %v183
  %193 = vst.msk [vmem:[#allocation2 + $0x38] sm:$0xff] %vm185, %v184
  // Predicated region
  $region22: #{_lambda_.27} parent=0 // pred_check
    %p194 = pneg %p18
  $region23: #{_lambda_.27} parent=0 // pred_check_branch
    %196 = sbr.rel (%p194) target = $region25
  $region24: #{_lambda_.27} parent=0 // pred_region
    %v197 = vld [vmem:[#allocation2] sm:$0xff]
    %v198 = vld [vmem:[#allocation2 + $0x8] sm:$0xff]
    %v199 = vld [vmem:[#allocation2 + $0x10] sm:$0xff]
    %v200 = vld [vmem:[#allocation2 + $0x18] sm:$0xff]
    %v201 = vld [vmem:[#allocation2 + $0x20] sm:$0xff]
    %v202 = vld [vmem:[#allocation2 + $0x28] sm:$0xff]
    %v203 = vld [vmem:[#allocation2 + $0x30] sm:$0xff]
    %v204 = vld [vmem:[#allocation2 + $0x38] sm:$0xff]
    %v205 = vld [vmem:[%s2] sm:$0x1]
    %v207 = vlaneseq
    %v208 = vshrl.u32 %v207, 7
    %v209 = vsub.s32 0, %v208
    %v210 = vrot.slane %v205, %v209
    %v212 = vadd.f32 %v197, %v210
    %v213 = vadd.f32 %v198, %v210
    %v214 = vadd.f32 %v199, %v210
    %v215 = vadd.f32 %v200, %v210
    %v216 = vadd.f32 %v201, %v210
    %v217 = vadd.f32 %v202, %v210
    %v218 = vadd.f32 %v203, %v210
    %v219 = vadd.f32 %v204, %v210
    %v220 = vld [vmem:[%s3] sm:$0xff]
    %v221 = vld [vmem:[%s3 + $0x8] sm:$0xff]
    %v222 = vld [vmem:[%s3 + $0x10] sm:$0xff]
    %v223 = vld [vmem:[%s3 + $0x18] sm:$0xff]
    %v224 = vld [vmem:[%s3 + $0x20] sm:$0xff]
    %v225 = vld [vmem:[%s3 + $0x28] sm:$0xff]
    %v226 = vld [vmem:[%s3 + $0x30] sm:$0xff]
    %v227 = vld [vmem:[%s3 + $0x38] sm:$0xff]
    %v228 = vadd.f32 %v212, %v220
    %v229 = vadd.f32 %v213, %v221
    %v230 = vadd.f32 %v214, %v222
    %v231 = vadd.f32 %v215, %v223
    %v232 = vadd.f32 %v216, %v224
    %v233 = vadd.f32 %v217, %v225
    %v234 = vadd.f32 %v218, %v226
    %v235 = vadd.f32 %v219, %v227
    %236 = vst.msk [vmem:[%s4] sm:$0xff] %vm185, %v228
    %237 = vst.msk [vmem:[%s4 + $0x8] sm:$0xff] %vm185, %v229
    %238 = vst.msk [vmem:[%s4 + $0x10] sm:$0xff] %vm185, %v230
    %239 = vst.msk [vmem:[%s4 + $0x18] sm:$0xff] %vm185, %v231
    %240 = vst.msk [vmem:[%s4 + $0x20] sm:$0xff] %vm185, %v232
    %241 = vst.msk [vmem:[%s4 + $0x28] sm:$0xff] %vm185, %v233
    %242 = vst.msk [vmem:[%s4 + $0x30] sm:$0xff] %vm185, %v234
    %243 = vst.msk [vmem:[%s4 + $0x38] sm:$0xff] %vm185, %v235
  $region25: #{_lambda_.27} parent=0 // pred_fallthru
    _
  // Predicated region
  $region26: #{_lambda_.27} parent=0 // pred_check
    _
  $region27: #{_lambda_.27} parent=0 // pred_check_branch
    %245 = sbr.rel (0) target = $region29
  $region28: #{_lambda_.27} parent=0 // pred_region
    _
  $region29: #{_lambda_.27} parent=0 // pred_fallthru
    _
  // Predicated region
  $region30: #{_lambda_.27} parent=0 // pred_check
    _
  $region31: #{_lambda_.27} parent=0 // pred_check_branch
    %247 = sbr.rel (0) target = $region33
  $region32: #{_lambda_.27} parent=0 // pred_region
    _
  $region33: #{_lambda_.27} parent=0 // pred_fallthru
    _

// kernel: _lambda_.22
$region0: #{_lambda_.22}
  #allocation0 [shape = 'u32[]', space=smem, size = 0x4, offset = 0x4, fixed_abs, tag = 'smem constant byte address 0x4 - core index']
  #allocation1 [shape = 'u32[144,128]{1,0:T(1,128)}', space=vmem, size = 0x12000, scoped, tag = 'internal scratch']
  %s0 = inlined_call_operand.vmem [shape: bf16[8,8,96], index: 0, kind: input, shape index: {}]
  %s1 = inlined_call_operand.vmem [shape: f32[8,8,32], index: 1, kind: input, shape index: {}]
  %s2 = inlined_call_operand.vmem [shape: bf16[8,8,32], index: 2, kind: output, shape index: {0}]
  %s3 = inlined_call_operand.vmem [shape: f32[8,8,32], index: 3, kind: output, shape index: {1}]
  %4 = xla_tuple %s2, %s3
  %s5 = sld [smem:[#allocation0]]
  $region26: #{_lambda_.22} parent=0
    _
  %s7 = ssub.s32 1, %s5
  %s8 = scalar_select 0, %s7, %s5
  // Predicated region
  $region2: #{_lambda_.22} parent=0 // pred_check
    _
  $region3: #{_lambda_.22} parent=0 // pred_check_branch
    %10 = sbr.rel (0) target = $region5
  $region4: #{_lambda_.22} parent=0 // pred_region
    _
  $region5: #{_lambda_.22} parent=0 // pred_fallthru
    _
  // Predicated region
  $region6: #{_lambda_.22} parent=0 // pred_check
    _
  $region7: #{_lambda_.22} parent=0 // pred_check_branch
    %12 = sbr.rel (0) target = $region9
  $region8: #{_lambda_.22} parent=0 // pred_region
    _
  $region9: #{_lambda_.22} parent=0 // pred_fallthru
    _
  %v14 = vld [vmem:[%s0] sm:$0xf]
  %v15 = vld [vmem:[%s0 + $0x4] sm:$0xf]
  %v16 = vld [vmem:[%s0 + $0x8] sm:$0xf]
  %v17 = vld [vmem:[%s0 + $0xc] sm:$0xf]
  %v18 = vld [vmem:[%s0 + $0x10] sm:$0xf]
  %v19 = vld [vmem:[%s0 + $0x14] sm:$0xf]
  %v20 = vld [vmem:[%s0 + $0x18] sm:$0xf]
  %v21 = vld [vmem:[%s0 + $0x1c] sm:$0xf]
  %v22 = vld [vmem:[%s1] sm:$0xff]
  %v23 = vld [vmem:[%s1 + $0x8] sm:$0xff]
  %v24 = vld [vmem:[%s1 + $0x10] sm:$0xff]
  %v25 = vld [vmem:[%s1 + $0x18] sm:$0xff]
  %v26 = vld [vmem:[%s1 + $0x20] sm:$0xff]
  %v27 = vld [vmem:[%s1 + $0x28] sm:$0xff]
  %v28 = vld [vmem:[%s1 + $0x30] sm:$0xff]
  %v29 = vld [vmem:[%s1 + $0x38] sm:$0xff]
  %v31 = vunpack.c.l.b16 %v14
  %v32 = vpack.c.b16 %v31, %v31
  %33 = vrot.lane.b32.xlu0 %v32, 96
  %v34 = vpop.permute.xlu0 %33
  %vm35 = vcmask 64512
  %v37 = vsel %vm35, %v14, 0
  %v40 = vsel %vm35, %v34, 0
  %42 = vmatprep.subr.bf16.mxu0 0
  %43 = vmatpush1.bf16.xpose.msra.mxu0 %v40
  %44 = vmatprep.subr.bf16.mxu0 0
  %45 = vmatpush1.bf16.xpose.msra.mxu0 0
  %46 = vmatprep.subr.bf16.mxu0 0
  %47 = vmatpush1.bf16.xpose.msra.mxu0 0
  %48 = vmatprep.subr.bf16.mxu0 0
  %49 = vmatpush1.bf16.xpose.msra.mxu0 0
  %50 = vmatprep.subr.bf16.mxu0 0
  %51 = vmatpush1.bf16.xpose.msra.mxu0 0
  %52 = vmatprep.subr.bf16.mxu0 0
  %53 = vmatpush1.bf16.xpose.msra.mxu0 0
  %54 = vmatprep.subr.bf16.mxu0 0
  %55 = vmatpush1.bf16.xpose.msra.mxu0 0
  %56 = vmatprep.subr.bf16.mxu0 0
  %57 = vmatpush1.bf16.xpose.msra.mxu0 0
  %58 = vmatprep.subr.bf16.mxu0 0
  %59 = vmatpush1.bf16.xpose.msra.mxu0 0
  %60 = vmatprep.subr.bf16.mxu0 0
  %61 = vmatpush1.bf16.xpose.msra.mxu0 0
  %62 = vmatprep.subr.bf16.mxu0 0
  %63 = vmatpush1.bf16.xpose.msra.mxu0 0
  %64 = vmatprep.subr.bf16.mxu0 0
  %65 = vmatpush1.bf16.xpose.msra.mxu0 0
  %66 = vmatprep.subr.bf16.mxu0 0
  %67 = vmatpush1.bf16.xpose.msra.mxu0 0
  %68 = vmatprep.subr.bf16.mxu0 0
  %69 = vmatpush1.bf16.xpose.msra.mxu0 0
  %70 = vmatprep.subr.bf16.mxu0 0
  %71 = vmatpush1.bf16.xpose.msra.mxu0 0
  %72 = vmatprep.subr.bf16.mxu0 0
  %73 = vmatpush1.bf16.xpose.msra.mxu0 0
  %74 = vmatprep.mubr.bf16.mxu0 0
  %75 = vmatmul.mubr.bf16.gmra.mrb[0].mxu0 %v37
  %v76 = vpop.f32.mrb[0].mxu0
  %v77 = vadd.f32 0.0, %v76
  %v78 = vpop.f32.mrb[0].mxu0
  %v79 = vpop.f32.mrb[0].mxu0
  %v80 = vpop.f32.mrb[0].mxu0
  %81 = vdwg.mxu0
  %v83 = vunpack.c.l.b16 %v15
  %v84 = vpack.c.b16 %v83, %v83
  %85 = vrot.lane.b32.xlu0 %v84, 96
  %v86 = vpop.permute.xlu0 %85
  %v88 = vsel %vm35, %v15, 0
  %v91 = vsel %vm35, %v86, 0
  %93 = vmatprep.subr.bf16.mxu0 0
  %94 = vmatpush1.bf16.xpose.msra.mxu0 %v91
  %95 = vmatprep.subr.bf16.mxu0 0
  %96 = vmatpush1.bf16.xpose.msra.mxu0 0
  %97 = vmatprep.subr.bf16.mxu0 0
  %98 = vmatpush1.bf16.xpose.msra.mxu0 0
  %99 = vmatprep.subr.bf16.mxu0 0
  %100 = vmatpush1.bf16.xpose.msra.mxu0 0
  %101 = vmatprep.subr.bf16.mxu0 0
  %102 = vmatpush1.bf16.xpose.msra.mxu0 0
  %103 = vmatprep.subr.bf16.mxu0 0
  %104 = vmatpush1.bf16.xpose.msra.mxu0 0
  %105 = vmatprep.subr.bf16.mxu0 0
  %106 = vmatpush1.bf16.xpose.msra.mxu0 0
  %107 = vmatprep.subr.bf16.mxu0 0
  %108 = vmatpush1.bf16.xpose.msra.mxu0 0
  %109 = vmatprep.subr.bf16.mxu0 0
  %110 = vmatpush1.bf16.xpose.msra.mxu0 0
  %111 = vmatprep.subr.bf16.mxu0 0
  %112 = vmatpush1.bf16.xpose.msra.mxu0 0
  %113 = vmatprep.subr.bf16.mxu0 0
  %114 = vmatpush1.bf16.xpose.msra.mxu0 0
  %115 = vmatprep.subr.bf16.mxu0 0
  %116 = vmatpush1.bf16.xpose.msra.mxu0 0
  %117 = vmatprep.subr.bf16.mxu0 0
  %118 = vmatpush1.bf16.xpose.msra.mxu0 0
  %119 = vmatprep.subr.bf16.mxu0 0
  %120 = vmatpush1.bf16.xpose.msra.mxu0 0
  %121 = vmatprep.subr.bf16.mxu0 0
  %122 = vmatpush1.bf16.xpose.msra.mxu0 0
  %123 = vmatprep.subr.bf16.mxu0 0
  %124 = vmatpush1.bf16.xpose.msra.mxu0 0
  %125 = vmatprep.mubr.bf16.mxu0 0
  %126 = vmatmul.mubr.bf16.gmra.mrb[0].mxu0 %v88
  %v127 = vpop.f32.mrb[0].mxu0
  %v128 = vadd.f32 0.0, %v127
  %v129 = vpop.f32.mrb[0].mxu0
  %v130 = vpop.f32.mrb[0].mxu0
  %v131 = vpop.f32.mrb[0].mxu0
  %132 = vdwg.mxu0
  %v134 = vunpack.c.l.b16 %v16
  %v135 = vpack.c.b16 %v134, %v134
  %136 = vrot.lane.b32.xlu0 %v135, 96
  %v137 = vpop.permute.xlu0 %136
  %v139 = vsel %vm35, %v16, 0
  %v142 = vsel %vm35, %v137, 0
  %144 = vmatprep.subr.bf16.mxu0 0
  %145 = vmatpush1.bf16.xpose.msra.mxu0 %v142
  %146 = vmatprep.subr.bf16.mxu0 0
  %147 = vmatpush1.bf16.xpose.msra.mxu0 0
  %148 = vmatprep.subr.bf16.mxu0 0
  %149 = vmatpush1.bf16.xpose.msra.mxu0 0
  %150 = vmatprep.subr.bf16.mxu0 0
  %151 = vmatpush1.bf16.xpose.msra.mxu0 0
  %152 = vmatprep.subr.bf16.mxu0 0
  %153 = vmatpush1.bf16.xpose.msra.mxu0 0
  %154 = vmatprep.subr.bf16.mxu0 0
  %155 = vmatpush1.bf16.xpose.msra.mxu0 0
  %156 = vmatprep.subr.bf16.mxu0 0
  %157 = vmatpush1.bf16.xpose.msra.mxu0 0
  %158 = vmatprep.subr.bf16.mxu0 0
  %159 = vmatpush1.bf16.xpose.msra.mxu0 0
  %160 = vmatprep.subr.bf16.mxu0 0
  %161 = vmatpush1.bf16.xpose.msra.mxu0 0
  %162 = vmatprep.subr.bf16.mxu0 0
  %163 = vmatpush1.bf16.xpose.msra.mxu0 0
  %164 = vmatprep.subr.bf16.mxu0 0
  %165 = vmatpush1.bf16.xpose.msra.mxu0 0
  %166 = vmatprep.subr.bf16.mxu0 0
  %167 = vmatpush1.bf16.xpose.msra.mxu0 0
  %168 = vmatprep.subr.bf16.mxu0 0
  %169 = vmatpush1.bf16.xpose.msra.mxu0 0
  %170 = vmatprep.subr.bf16.mxu0 0
  %171 = vmatpush1.bf16.xpose.msra.mxu0 0
  %172 = vmatprep.subr.bf16.mxu0 0
  %173 = vmatpush1.bf16.xpose.msra.mxu0 0
  %174 = vmatprep.subr.bf16.mxu0 0
  %175 = vmatpush1.bf16.xpose.msra.mxu0 0
  %176 = vmatprep.mubr.bf16.mxu0 0
  %177 = vmatmul.mubr.bf16.gmra.mrb[0].mxu0 %v139
  %v178 = vpop.f32.mrb[0].mxu0
  %v179 = vadd.f32 0.0, %v178
  %v180 = vpop.f32.mrb[0].mxu0
  %v181 = vpop.f32.mrb[0].mxu0
  %v182 = vpop.f32.mrb[0].mxu0
  %183 = vdwg.mxu0
  %v185 = vunpack.c.l.b16 %v17
  %v186 = vpack.c.b16 %v185, %v185
  %187 = vrot.lane.b32.xlu0 %v186, 96
  %v188 = vpop.permute.xlu0 %187
  %v190 = vsel %vm35, %v17, 0
  %v193 = vsel %vm35, %v188, 0
  %195 = vmatprep.subr.bf16.mxu0 0
  %196 = vmatpush1.bf16.xpose.msra.mxu0 %v193
  %197 = vmatprep.subr.bf16.mxu0 0
  %198 = vmatpush1.bf16.xpose.msra.mxu0 0
  %199 = vmatprep.subr.bf16.mxu0 0
  %200 = vmatpush1.bf16.xpose.msra.mxu0 0
  %201 = vmatprep.subr.bf16.mxu0 0
  %202 = vmatpush1.bf16.xpose.msra.mxu0 0
  %203 = vmatprep.subr.bf16.mxu0 0
  %204 = vmatpush1.bf16.xpose.msra.mxu0 0
  %205 = vmatprep.subr.bf16.mxu0 0
  %206 = vmatpush1.bf16.xpose.msra.mxu0 0
  %207 = vmatprep.subr.bf16.mxu0 0
  %208 = vmatpush1.bf16.xpose.msra.mxu0 0
  %209 = vmatprep.subr.bf16.mxu0 0
  %210 = vmatpush1.bf16.xpose.msra.mxu0 0
  %211 = vmatprep.subr.bf16.mxu0 0
  %212 = vmatpush1.bf16.xpose.msra.mxu0 0
  %213 = vmatprep.subr.bf16.mxu0 0
  %214 = vmatpush1.bf16.xpose.msra.mxu0 0
  %215 = vmatprep.subr.bf16.mxu0 0
  %216 = vmatpush1.bf16.xpose.msra.mxu0 0
  %217 = vmatprep.subr.bf16.mxu0 0
  %218 = vmatpush1.bf16.xpose.msra.mxu0 0
  %219 = vmatprep.subr.bf16.mxu0 0
  %220 = vmatpush1.bf16.xpose.msra.mxu0 0
  %221 = vmatprep.subr.bf16.mxu0 0
  %222 = vmatpush1.bf16.xpose.msra.mxu0 0
  %223 = vmatprep.subr.bf16.mxu0 0
  %224 = vmatpush1.bf16.xpose.msra.mxu0 0
  %225 = vmatprep.subr.bf16.mxu0 0
  %226 = vmatpush1.bf16.xpose.msra.mxu0 0
  %227 = vmatprep.mubr.bf16.mxu0 0
  %228 = vmatmul.mubr.bf16.gmra.mrb[0].mxu0 %v190
  %v229 = vpop.f32.mrb[0].mxu0
  %v230 = vadd.f32 0.0, %v229
  %v231 = vpop.f32.mrb[0].mxu0
  %v232 = vpop.f32.mrb[0].mxu0
  %v233 = vpop.f32.mrb[0].mxu0
  %234 = vdwg.mxu0
  %v236 = vunpack.c.l.b16 %v18
  %v237 = vpack.c.b16 %v236, %v236
  %238 = vrot.lane.b32.xlu0 %v237, 96
  %v239 = vpop.permute.xlu0 %238
  %v241 = vsel %vm35, %v18, 0
  %v244 = vsel %vm35, %v239, 0
  %246 = vmatprep.subr.bf16.mxu0 0
  %247 = vmatpush1.bf16.xpose.msra.mxu0 %v244
  %248 = vmatprep.subr.bf16.mxu0 0
  %249 = vmatpush1.bf16.xpose.msra.mxu0 0
  %250 = vmatprep.subr.bf16.mxu0 0
  %251 = vmatpush1.bf16.xpose.msra.mxu0 0
  %252 = vmatprep.subr.bf16.mxu0 0
  %253 = vmatpush1.bf16.xpose.msra.mxu0 0
  %254 = vmatprep.subr.bf16.mxu0 0
  %255 = vmatpush1.bf16.xpose.msra.mxu0 0
  %256 = vmatprep.subr.bf16.mxu0 0
  %257 = vmatpush1.bf16.xpose.msra.mxu0 0
  %258 = vmatprep.subr.bf16.mxu0 0
  %259 = vmatpush1.bf16.xpose.msra.mxu0 0
  %260 = vmatprep.subr.bf16.mxu0 0
  %261 = vmatpush1.bf16.xpose.msra.mxu0 0
  %262 = vmatprep.subr.bf16.mxu0 0
  %263 = vmatpush1.bf16.xpose.msra.mxu0 0
  %264 = vmatprep.subr.bf16.mxu0 0
  %265 = vmatpush1.bf16.xpose.msra.mxu0 0
  %266 = vmatprep.subr.bf16.mxu0 0
  %267 = vmatpush1.bf16.xpose.msra.mxu0 0
  %268 = vmatprep.subr.bf16.mxu0 0
  %269 = vmatpush1.bf16.xpose.msra.mxu0 0
  %270 = vmatprep.subr.bf16.mxu0 0
  %271 = vmatpush1.bf16.xpose.msra.mxu0 0
  %272 = vmatprep.subr.bf16.mxu0 0
  %273 = vmatpush1.bf16.xpose.msra.mxu0 0
  %274 = vmatprep.subr.bf16.mxu0 0
  %275 = vmatpush1.bf16.xpose.msra.mxu0 0
  %276 = vmatprep.subr.bf16.mxu0 0
  %277 = vmatpush1.bf16.xpose.msra.mxu0 0
  %278 = vmatprep.mubr.bf16.mxu0 0
  %279 = vmatmul.mubr.bf16.gmra.mrb[0].mxu0 %v241
  %v280 = vpop.f32.mrb[0].mxu0
  %v281 = vadd.f32 0.0, %v280
  %v282 = vpop.f32.mrb[0].mxu0
  %v283 = vpop.f32.mrb[0].mxu0
  %v284 = vpop.f32.mrb[0].mxu0
  %285 = vdwg.mxu0
  %v287 = vunpack.c.l.b16 %v19
  %v288 = vpack.c.b16 %v287, %v287
  %289 = vrot.lane.b32.xlu0 %v288, 96
  %v290 = vpop.permute.xlu0 %289
  %v292 = vsel %vm35, %v19, 0
  %v295 = vsel %vm35, %v290, 0
  %297 = vmatprep.subr.bf16.mxu0 0
  %298 = vmatpush1.bf16.xpose.msra.mxu0 %v295
  %299 = vmatprep.subr.bf16.mxu0 0
  %300 = vmatpush1.bf16.xpose.msra.mxu0 0
  %301 = vmatprep.subr.bf16.mxu0 0
  %302 = vmatpush1.bf16.xpose.msra.mxu0 0
  %303 = vmatprep.subr.bf16.mxu0 0
  %304 = vmatpush1.bf16.xpose.msra.mxu0 0
  %305 = vmatprep.subr.bf16.mxu0 0
  %306 = vmatpush1.bf16.xpose.msra.mxu0 0
  %307 = vmatprep.subr.bf16.mxu0 0
  %308 = vmatpush1.bf16.xpose.msra.mxu0 0
  %309 = vmatprep.subr.bf16.mxu0 0
  %310 = vmatpush1.bf16.xpose.msra.mxu0 0
  %311 = vmatprep.subr.bf16.mxu0 0
  %312 = vmatpush1.bf16.xpose.msra.mxu0 0
  %313 = vmatprep.subr.bf16.mxu0 0
  %314 = vmatpush1.bf16.xpose.msra.mxu0 0
  %315 = vmatprep.subr.bf16.mxu0 0
  %316 = vmatpush1.bf16.xpose.msra.mxu0 0
  %317 = vmatprep.subr.bf16.mxu0 0
  %318 = vmatpush1.bf16.xpose.msra.mxu0 0
  %319 = vmatprep.subr.bf16.mxu0 0
  %320 = vmatpush1.bf16.xpose.msra.mxu0 0
  %321 = vmatprep.subr.bf16.mxu0 0
  %322 = vmatpush1.bf16.xpose.msra.mxu0 0
  %323 = vmatprep.subr.bf16.mxu0 0
  %324 = vmatpush1.bf16.xpose.msra.mxu0 0
  %325 = vmatprep.subr.bf16.mxu0 0
  %326 = vmatpush1.bf16.xpose.msra.mxu0 0
  %327 = vmatprep.subr.bf16.mxu0 0
  %328 = vmatpush1.bf16.xpose.msra.mxu0 0
  %329 = vmatprep.mubr.bf16.mxu0 0
  %330 = vmatmul.mubr.bf16.gmra.mrb[0].mxu0 %v292
  %v331 = vpop.f32.mrb[0].mxu0
  %v332 = vadd.f32 0.0, %v331
  %v333 = vpop.f32.mrb[0].mxu0
  %v334 = vpop.f32.mrb[0].mxu0
  %v335 = vpop.f32.mrb[0].mxu0
  %336 = vdwg.mxu0
  %v338 = vunpack.c.l.b16 %v20
  %v339 = vpack.c.b16 %v338, %v338
  %340 = vrot.lane.b32.xlu0 %v339, 96
  %v341 = vpop.permute.xlu0 %340
  %v343 = vsel %vm35, %v20, 0
  %v346 = vsel %vm35, %v341, 0
  %348 = vmatprep.subr.bf16.mxu0 0
  %349 = vmatpush1.bf16.xpose.msra.mxu0 %v346
  %350 = vmatprep.subr.bf16.mxu0 0
  %351 = vmatpush1.bf16.xpose.msra.mxu0 0
  %352 = vmatprep.subr.bf16.mxu0 0
  %353 = vmatpush1.bf16.xpose.msra.mxu0 0
  %354 = vmatprep.subr.bf16.mxu0 0
  %355 = vmatpush1.bf16.xpose.msra.mxu0 0
  %356 = vmatprep.subr.bf16.mxu0 0
  %357 = vmatpush1.bf16.xpose.msra.mxu0 0
  %358 = vmatprep.subr.bf16.mxu0 0
  %359 = vmatpush1.bf16.xpose.msra.mxu0 0
  %360 = vmatprep.subr.bf16.mxu0 0
  %361 = vmatpush1.bf16.xpose.msra.mxu0 0
  %362 = vmatprep.subr.bf16.mxu0 0
  %363 = vmatpush1.bf16.xpose.msra.mxu0 0
  %364 = vmatprep.subr.bf16.mxu0 0
  %365 = vmatpush1.bf16.xpose.msra.mxu0 0
  %366 = vmatprep.subr.bf16.mxu0 0
  %367 = vmatpush1.bf16.xpose.msra.mxu0 0
  %368 = vmatprep.subr.bf16.mxu0 0
  %369 = vmatpush1.bf16.xpose.msra.mxu0 0
  %370 = vmatprep.subr.bf16.mxu0 0
  %371 = vmatpush1.bf16.xpose.msra.mxu0 0
  %372 = vmatprep.subr.bf16.mxu0 0
  %373 = vmatpush1.bf16.xpose.msra.mxu0 0
  %374 = vmatprep.subr.bf16.mxu0 0
  %375 = vmatpush1.bf16.xpose.msra.mxu0 0
  %376 = vmatprep.subr.bf16.mxu0 0
  %377 = vmatpush1.bf16.xpose.msra.mxu0 0
  %378 = vmatprep.subr.bf16.mxu0 0
  %379 = vmatpush1.bf16.xpose.msra.mxu0 0
  %380 = vmatprep.mubr.bf16.mxu0 0
  %381 = vmatmul.mubr.bf16.gmra.mrb[0].mxu0 %v343
  %v382 = vpop.f32.mrb[0].mxu0
  %v383 = vadd.f32 0.0, %v382
  %v384 = vpop.f32.mrb[0].mxu0
  %v385 = vpop.f32.mrb[0].mxu0
  %v386 = vpop.f32.mrb[0].mxu0
  %387 = vdwg.mxu0
  %v389 = vunpack.c.l.b16 %v21
  %v390 = vpack.c.b16 %v389, %v389
  %391 = vrot.lane.b32.xlu0 %v390, 96
  %v392 = vpop.permute.xlu0 %391
  %v394 = vsel %vm35, %v21, 0
  %v397 = vsel %vm35, %v392, 0
  %399 = vmatprep.subr.bf16.mxu0 0
  %400 = vmatpush1.bf16.xpose.msra.mxu0 %v397
  %401 = vmatprep.subr.bf16.mxu0 0
  %402 = vmatpush1.bf16.xpose.msra.mxu0 0
  %403 = vmatprep.subr.bf16.mxu0 0
  %404 = vmatpush1.bf16.xpose.msra.mxu0 0
  %405 = vmatprep.subr.bf16.mxu0 0
  %406 = vmatpush1.bf16.xpose.msra.mxu0 0
  %407 = vmatprep.subr.bf16.mxu0 0
  %408 = vmatpush1.bf16.xpose.msra.mxu0 0
  %409 = vmatprep.subr.bf16.mxu0 0
  %410 = vmatpush1.bf16.xpose.msra.mxu0 0
  %411 = vmatprep.subr.bf16.mxu0 0
  %412 = vmatpush1.bf16.xpose.msra.mxu0 0
  %413 = vmatprep.subr.bf16.mxu0 0
  %414 = vmatpush1.bf16.xpose.msra.mxu0 0
  %415 = vmatprep.subr.bf16.mxu0 0
  %416 = vmatpush1.bf16.xpose.msra.mxu0 0
  %417 = vmatprep.subr.bf16.mxu0 0
  %418 = vmatpush1.bf16.xpose.msra.mxu0 0
  %419 = vmatprep.subr.bf16.mxu0 0
  %420 = vmatpush1.bf16.xpose.msra.mxu0 0
  %421 = vmatprep.subr.bf16.mxu0 0
  %422 = vmatpush1.bf16.xpose.msra.mxu0 0
  %423 = vmatprep.subr.bf16.mxu0 0
  %424 = vmatpush1.bf16.xpose.msra.mxu0 0
  %425 = vmatprep.subr.bf16.mxu0 0
  %426 = vmatpush1.bf16.xpose.msra.mxu0 0
  %427 = vmatprep.subr.bf16.mxu0 0
  %428 = vmatpush1.bf16.xpose.msra.mxu0 0
  %429 = vmatprep.subr.bf16.mxu0 0
  %430 = vmatpush1.bf16.xpose.msra.mxu0 0
  %431 = vmatprep.mubr.bf16.mxu0 0
  %432 = vmatmul.mubr.bf16.gmra.mrb[0].mxu0 %v394
  %v433 = vpop.f32.mrb[0].mxu0
  %v434 = vadd.f32 0.0, %v433
  %v435 = vpop.f32.mrb[0].mxu0
  %v436 = vpop.f32.mrb[0].mxu0
  %v437 = vpop.f32.mrb[0].mxu0
  %438 = vdwg.mxu0
  %v439 = vmul.f32 %v77, 0.35355338
  %v440 = vmul.f32 %v128, 0.35355338
  %v441 = vmul.f32 %v179, 0.35355338
  %v442 = vmul.f32 %v230, 0.35355338
  %v443 = vmul.f32 %v281, 0.35355338
  %v444 = vmul.f32 %v332, 0.35355338
  %v445 = vmul.f32 %v383, 0.35355338
  %v446 = vmul.f32 %v434, 0.35355338
  %v447 = vadd.f32 %v439, %v22
  %v448 = vadd.f32 %v440, %v23
  %v449 = vadd.f32 %v441, %v24
  %v450 = vadd.f32 %v442, %v25
  %v451 = vadd.f32 %v443, %v26
  %v452 = vadd.f32 %v444, %v27
  %v453 = vadd.f32 %v445, %v28
  %v454 = vadd.f32 %v446, %v29
  %v455 = vsel %vm35, %v447, -inf
  %456 = vmax.xlane.f32.xlu0 %v455
  %v457 = vpop.xlane.xlu0 %456
  %v458 = vsel %vm35, %v448, -inf
  %459 = vmax.xlane.f32.xlu0 %v458
  %v460 = vpop.xlane.xlu0 %459
  %v461 = vsel %vm35, %v449, -inf
  %462 = vmax.xlane.f32.xlu0 %v461
  %v463 = vpop.xlane.xlu0 %462
  %v464 = vsel %vm35, %v450, -inf
  %465 = vmax.xlane.f32.xlu0 %v464
  %v466 = vpop.xlane.xlu0 %465
  %v467 = vsel %vm35, %v451, -inf
  %468 = vmax.xlane.f32.xlu0 %v467
  %v469 = vpop.xlane.xlu0 %468
  %v470 = vsel %vm35, %v452, -inf
  %471 = vmax.xlane.f32.xlu0 %v470
  %v472 = vpop.xlane.xlu0 %471
  %v473 = vsel %vm35, %v453, -inf
  %474 = vmax.xlane.f32.xlu0 %v473
  %v475 = vpop.xlane.xlu0 %474
  %v476 = vsel %vm35, %v454, -inf
  %477 = vmax.xlane.f32.xlu0 %v476
  %v478 = vpop.xlane.xlu0 %477
  %v479 = vsub.f32 %v447, %v457
  %v480 = vsub.f32 %v448, %v460
  %v481 = vsub.f32 %v449, %v463
  %v482 = vsub.f32 %v450, %v466
  %v483 = vsub.f32 %v451, %v469
  %v484 = vsub.f32 %v452, %v472
  %v485 = vsub.f32 %v453, %v475
  %v486 = vsub.f32 %v454, %v478
  %v487 = vmul.f32 %v479, 1.442695
  %v488 = vpow.pop %v487
  %v489 = vmul.f32 %v480, 1.442695
  %v490 = vpow.pop %v489
  %v491 = vmul.f32 %v481, 1.442695
  %v492 = vpow.pop %v491
  %v493 = vmul.f32 %v482, 1.442695
  %v494 = vpow.pop %v493
  %v495 = vmul.f32 %v483, 1.442695
  %v496 = vpow.pop %v495
  %v497 = vmul.f32 %v484, 1.442695
  %v498 = vpow.pop %v497
  %v499 = vmul.f32 %v485, 1.442695
  %v500 = vpow.pop %v499
  %v501 = vmul.f32 %v486, 1.442695
  %v502 = vpow.pop %v501
  %v503 = vsel %vm35, %v488, 0.0
  %504 = vadd.xlane.f32.xlu0 %v503
  %v505 = vpop.xlane.xlu0 %504
  %v506 = vsel %vm35, %v490, 0.0
  %507 = vadd.xlane.f32.xlu0 %v506
  %v508 = vpop.xlane.xlu0 %507
  %v509 = vsel %vm35, %v492, 0.0
  %510 = vadd.xlane.f32.xlu0 %v509
  %v511 = vpop.xlane.xlu0 %510
  %v512 = vsel %vm35, %v494, 0.0
  %513 = vadd.xlane.f32.xlu0 %v512
  %v514 = vpop.xlane.xlu0 %513
  %v515 = vsel %vm35, %v496, 0.0
  %516 = vadd.xlane.f32.xlu0 %v515
  %v517 = vpop.xlane.xlu0 %516
  %v518 = vsel %vm35, %v498, 0.0
  %519 = vadd.xlane.f32.xlu0 %v518
  %v520 = vpop.xlane.xlu0 %519
  %v521 = vsel %vm35, %v500, 0.0
  %522 = vadd.xlane.f32.xlu0 %v521
  %v523 = vpop.xlane.xlu0 %522
  %v524 = vsel %vm35, %v502, 0.0
  %525 = vadd.xlane.f32.xlu0 %v524
  %v526 = vpop.xlane.xlu0 %525
  %v527 = vrcp.pop %v505
  %v528 = vrcp.pop %v508
  %v529 = vrcp.pop %v511
  %v530 = vrcp.pop %v514
  %v531 = vrcp.pop %v517
  %v532 = vrcp.pop %v520
  %v533 = vrcp.pop %v523
  %v534 = vrcp.pop %v526
  %v535 = vmul.f32 %v488, %v527
  %v536 = vmul.f32 %v490, %v528
  %v537 = vmul.f32 %v492, %v529
  %v538 = vmul.f32 %v494, %v530
  %v539 = vmul.f32 %v496, %v531
  %v540 = vmul.f32 %v498, %v532
  %v541 = vmul.f32 %v500, %v533
  %v542 = vmul.f32 %v502, %v534
  %v543 = vpack.c.bf16 %v535, %v535
  %v544 = vpack.c.bf16 %v536, %v536
  %v545 = vpack.c.bf16 %v537, %v537
  %v546 = vpack.c.bf16 %v538, %v538
  %v547 = vpack.c.bf16 %v539, %v539
  %v548 = vpack.c.bf16 %v540, %v540
  %v549 = vpack.c.bf16 %v541, %v541
  %v550 = vpack.c.bf16 %v542, %v542
  %551 = vrot.lane.b32.xlu0 %v32, 64
  %v552 = vpop.permute.xlu0 %551
  %v554 = vsel %vm35, %v543, 0
  %vm556 = vcmask 1043456
  %v558 = vsel %vm556, %v552, 0
  %560 = vmatprep.subr.bf16.mxu0 0
  %561 = vmatpush1.bf16.msra.mxu0 %v558
  %562 = vmatprep.subr.bf16.mxu0 0
  %563 = vmatpush1.bf16.msra.mxu0 0
  %564 = vmatprep.subr.bf16.mxu0 0
  %565 = vmatpush1.bf16.msra.mxu0 0
  %566 = vmatprep.subr.bf16.mxu0 0
  %567 = vmatpush1.bf16.msra.mxu0 0
  %568 = vmatprep.subr.bf16.mxu0 0
  %569 = vmatpush1.bf16.msra.mxu0 0
  %570 = vmatprep.subr.bf16.mxu0 0
  %571 = vmatpush1.bf16.msra.mxu0 0
  %572 = vmatprep.subr.bf16.mxu0 0
  %573 = vmatpush1.bf16.msra.mxu0 0
  %574 = vmatprep.subr.bf16.mxu0 0
  %575 = vmatpush1.bf16.msra.mxu0 0
  %576 = vmatprep.subr.bf16.mxu0 0
  %577 = vmatpush1.bf16.msra.mxu0 0
  %578 = vmatprep.subr.bf16.mxu0 0
  %579 = vmatpush1.bf16.msra.mxu0 0
  %580 = vmatprep.subr.bf16.mxu0 0
  %581 = vmatpush1.bf16.msra.mxu0 0
  %582 = vmatprep.subr.bf16.mxu0 0
  %583 = vmatpush1.bf16.msra.mxu0 0
  %584 = vmatprep.subr.bf16.mxu0 0
  %585 = vmatpush1.bf16.msra.mxu0 0
  %586 = vmatprep.subr.bf16.mxu0 0
  %587 = vmatpush1.bf16.msra.mxu0 0
  %588 = vmatprep.subr.bf16.mxu0 0
  %589 = vmatpush1.bf16.msra.mxu0 0
  %590 = vmatprep.subr.bf16.mxu0 0
  %591 = vmatpush1.bf16.msra.mxu0 0
  %592 = vmatprep.mubr.bf16.mxu0 0
  %593 = vmatmul.mubr.bf16.gmra.mrb[0].mxu0 %v554
  %v594 = vpop.f32.mrb[0].mxu0
  %v595 = vadd.f32 0.0, %v594
  %v596 = vpop.f32.mrb[0].mxu0
  %v597 = vpop.f32.mrb[0].mxu0
  %v598 = vpop.f32.mrb[0].mxu0
  %599 = vdwg.mxu0
  %600 = vrot.lane.b32.xlu0 %v84, 64
  %v601 = vpop.permute.xlu0 %600
  %v603 = vsel %vm35, %v544, 0
  %v606 = vsel %vm556, %v601, 0
  %608 = vmatprep.subr.bf16.mxu0 0
  %609 = vmatpush1.bf16.msra.mxu0 %v606
  %610 = vmatprep.subr.bf16.mxu0 0
  %611 = vmatpush1.bf16.msra.mxu0 0
  %612 = vmatprep.subr.bf16.mxu0 0
  %613 = vmatpush1.bf16.msra.mxu0 0
  %614 = vmatprep.subr.bf16.mxu0 0
  %615 = vmatpush1.bf16.msra.mxu0 0
  %616 = vmatprep.subr.bf16.mxu0 0
  %617 = vmatpush1.bf16.msra.mxu0 0
  %618 = vmatprep.subr.bf16.mxu0 0
  %619 = vmatpush1.bf16.msra.mxu0 0
  %620 = vmatprep.subr.bf16.mxu0 0
  %621 = vmatpush1.bf16.msra.mxu0 0
  %622 = vmatprep.subr.bf16.mxu0 0
  %623 = vmatpush1.bf16.msra.mxu0 0
  %624 = vmatprep.subr.bf16.mxu0 0
  %625 = vmatpush1.bf16.msra.mxu0 0
  %626 = vmatprep.subr.bf16.mxu0 0
  %627 = vmatpush1.bf16.msra.mxu0 0
  %628 = vmatprep.subr.bf16.mxu0 0
  %629 = vmatpush1.bf16.msra.mxu0 0
  %630 = vmatprep.subr.bf16.mxu0 0
  %631 = vmatpush1.bf16.msra.mxu0 0
  %632 = vmatprep.subr.bf16.mxu0 0
  %633 = vmatpush1.bf16.msra.mxu0 0
  %634 = vmatprep.subr.bf16.mxu0 0
  %635 = vmatpush1.bf16.msra.mxu0 0
  %636 = vmatprep.subr.bf16.mxu0 0
  %637 = vmatpush1.bf16.msra.mxu0 0
  %638 = vmatprep.subr.bf16.mxu0 0
  %639 = vmatpush1.bf16.msra.mxu0 0
  %640 = vmatprep.mubr.bf16.mxu0 0
  %641 = vmatmul.mubr.bf16.gmra.mrb[0].mxu0 %v603
  %v642 = vpop.f32.mrb[0].mxu0
  %v643 = vadd.f32 0.0, %v642
  %v644 = vpop.f32.mrb[0].mxu0
  %v645 = vpop.f32.mrb[0].mxu0
  %v646 = vpop.f32.mrb[0].mxu0
  %647 = vdwg.mxu0
  %648 = vrot.lane.b32.xlu0 %v135, 64
  %v649 = vpop.permute.xlu0 %648
  %v651 = vsel %vm35, %v545, 0
  %v654 = vsel %vm556, %v649, 0
  %656 = vmatprep.subr.bf16.mxu0 0
  %657 = vmatpush1.bf16.msra.mxu0 %v654
  %658 = vmatprep.subr.bf16.mxu0 0
  %659 = vmatpush1.bf16.msra.mxu0 0
  %660 = vmatprep.subr.bf16.mxu0 0
  %661 = vmatpush1.bf16.msra.mxu0 0
  %662 = vmatprep.subr.bf16.mxu0 0
  %663 = vmatpush1.bf16.msra.mxu0 0
  %664 = vmatprep.subr.bf16.mxu0 0
  %665 = vmatpush1.bf16.msra.mxu0 0
  %666 = vmatprep.subr.bf16.mxu0 0
  %667 = vmatpush1.bf16.msra.mxu0 0
  %668 = vmatprep.subr.bf16.mxu0 0
  %669 = vmatpush1.bf16.msra.mxu0 0
  %670 = vmatprep.subr.bf16.mxu0 0
  %671 = vmatpush1.bf16.msra.mxu0 0
  %672 = vmatprep.subr.bf16.mxu0 0
  %673 = vmatpush1.bf16.msra.mxu0 0
  %674 = vmatprep.subr.bf16.mxu0 0
  %675 = vmatpush1.bf16.msra.mxu0 0
  %676 = vmatprep.subr.bf16.mxu0 0
  %677 = vmatpush1.bf16.msra.mxu0 0
  %678 = vmatprep.subr.bf16.mxu0 0
  %679 = vmatpush1.bf16.msra.mxu0 0
  %680 = vmatprep.subr.bf16.mxu0 0
  %681 = vmatpush1.bf16.msra.mxu0 0
  %682 = vmatprep.subr.bf16.mxu0 0
  %683 = vmatpush1.bf16.msra.mxu0 0
  %684 = vmatprep.subr.bf16.mxu0 0
  %685 = vmatpush1.bf16.msra.mxu0 0
  %686 = vmatprep.subr.bf16.mxu0 0
  %687 = vmatpush1.bf16.msra.mxu0 0
  %688 = vmatprep.mubr.bf16.mxu0 0
  %689 = vmatmul.mubr.bf16.gmra.mrb[0].mxu0 %v651
  %v690 = vpop.f32.mrb[0].mxu0
  %v691 = vadd.f32 0.0, %v690
  %v692 = vpop.f32.mrb[0].mxu0
  %v693 = vpop.f32.mrb[0].mxu0
  %v694 = vpop.f32.mrb[0].mxu0
  %695 = vdwg.mxu0
  %696 = vrot.lane.b32.xlu0 %v186, 64
  %v697 = vpop.permute.xlu0 %696
  %v699 = vsel %vm35, %v546, 0
  %v702 = vsel %vm556, %v697, 0
  %704 = vmatprep.subr.bf16.mxu0 0
  %705 = vmatpush1.bf16.msra.mxu0 %v702
  %706 = vmatprep.subr.bf16.mxu0 0
  %707 = vmatpush1.bf16.msra.mxu0 0
  %708 = vmatprep.subr.bf16.mxu0 0
  %709 = vmatpush1.bf16.msra.mxu0 0
  %710 = vmatprep.subr.bf16.mxu0 0
  %711 = vmatpush1.bf16.msra.mxu0 0
  %712 = vmatprep.subr.bf16.mxu0 0
  %713 = vmatpush1.bf16.msra.mxu0 0
  %714 = vmatprep.subr.bf16.mxu0 0
  %715 = vmatpush1.bf16.msra.mxu0 0
  %716 = vmatprep.subr.bf16.mxu0 0
  %717 = vmatpush1.bf16.msra.mxu0 0
  %718 = vmatprep.subr.bf16.mxu0 0
  %719 = vmatpush1.bf16.msra.mxu0 0
  %720 = vmatprep.subr.bf16.mxu0 0
  %721 = vmatpush1.bf16.msra.mxu0 0
  %722 = vmatprep.subr.bf16.mxu0 0
  %723 = vmatpush1.bf16.msra.mxu0 0
  %724 = vmatprep.subr.bf16.mxu0 0
  %725 = vmatpush1.bf16.msra.mxu0 0
  %726 = vmatprep.subr.bf16.mxu0 0
  %727 = vmatpush1.bf16.msra.mxu0 0
  %728 = vmatprep.subr.bf16.mxu0 0
  %729 = vmatpush1.bf16.msra.mxu0 0
  %730 = vmatprep.subr.bf16.mxu0 0
  %731 = vmatpush1.bf16.msra.mxu0 0
  %732 = vmatprep.subr.bf16.mxu0 0
  %733 = vmatpush1.bf16.msra.mxu0 0
  %734 = vmatprep.subr.bf16.mxu0 0
  %735 = vmatpush1.bf16.msra.mxu0 0
  %736 = vmatprep.mubr.bf16.mxu0 0
  %737 = vmatmul.mubr.bf16.gmra.mrb[0].mxu0 %v699
  %v738 = vpop.f32.mrb[0].mxu0
  %v739 = vadd.f32 0.0, %v738
  %v740 = vpop.f32.mrb[0].mxu0
  %v741 = vpop.f32.mrb[0].mxu0
  %v742 = vpop.f32.mrb[0].mxu0
  %743 = vdwg.mxu0
  %744 = vrot.lane.b32.xlu0 %v237, 64
  %v745 = vpop.permute.xlu0 %744
  %v747 = vsel %vm35, %v547, 0
  %v750 = vsel %vm556, %v745, 0
  %752 = vmatprep.subr.bf16.mxu0 0
  %753 = vmatpush1.bf16.msra.mxu0 %v750
  %754 = vmatprep.subr.bf16.mxu0 0
  %755 = vmatpush1.bf16.msra.mxu0 0
  %756 = vmatprep.subr.bf16.mxu0 0
  %757 = vmatpush1.bf16.msra.mxu0 0
  %758 = vmatprep.subr.bf16.mxu0 0
  %759 = vmatpush1.bf16.msra.mxu0 0
  %760 = vmatprep.subr.bf16.mxu0 0
  %761 = vmatpush1.bf16.msra.mxu0 0
  %762 = vmatprep.subr.bf16.mxu0 0
  %763 = vmatpush1.bf16.msra.mxu0 0
  %764 = vmatprep.subr.bf16.mxu0 0
  %765 = vmatpush1.bf16.msra.mxu0 0
  %766 = vmatprep.subr.bf16.mxu0 0
  %767 = vmatpush1.bf16.msra.mxu0 0
  %768 = vmatprep.subr.bf16.mxu0 0
  %769 = vmatpush1.bf16.msra.mxu0 0
  %770 = vmatprep.subr.bf16.mxu0 0
  %771 = vmatpush1.bf16.msra.mxu0 0
  %772 = vmatprep.subr.bf16.mxu0 0
  %773 = vmatpush1.bf16.msra.mxu0 0
  %774 = vmatprep.subr.bf16.mxu0 0
  %775 = vmatpush1.bf16.msra.mxu0 0
  %776 = vmatprep.subr.bf16.mxu0 0
  %777 = vmatpush1.bf16.msra.mxu0 0
  %778 = vmatprep.subr.bf16.mxu0 0
  %779 = vmatpush1.bf16.msra.mxu0 0
  %780 = vmatprep.subr.bf16.mxu0 0
  %781 = vmatpush1.bf16.msra.mxu0 0
  %782 = vmatprep.subr.bf16.mxu0 0
  %783 = vmatpush1.bf16.msra.mxu0 0
  %784 = vmatprep.mubr.bf16.mxu0 0
  %785 = vmatmul.mubr.bf16.gmra.mrb[0].mxu0 %v747
  %v786 = vpop.f32.mrb[0].mxu0
  %v787 = vadd.f32 0.0, %v786
  %v788 = vpop.f32.mrb[0].mxu0
  %v789 = vpop.f32.mrb[0].mxu0
  %v790 = vpop.f32.mrb[0].mxu0
  %791 = vdwg.mxu0
  %792 = vrot.lane.b32.xlu0 %v288, 64
  %v793 = vpop.permute.xlu0 %792
  %v795 = vsel %vm35, %v548, 0
  %v798 = vsel %vm556, %v793, 0
  %800 = vmatprep.subr.bf16.mxu0 0
  %801 = vmatpush1.bf16.msra.mxu0 %v798
  %802 = vmatprep.subr.bf16.mxu0 0
  %803 = vmatpush1.bf16.msra.mxu0 0
  %804 = vmatprep.subr.bf16.mxu0 0
  %805 = vmatpush1.bf16.msra.mxu0 0
  %806 = vmatprep.subr.bf16.mxu0 0
  %807 = vmatpush1.bf16.msra.mxu0 0
  %808 = vmatprep.subr.bf16.mxu0 0
  %809 = vmatpush1.bf16.msra.mxu0 0
  %810 = vmatprep.subr.bf16.mxu0 0
  %811 = vmatpush1.bf16.msra.mxu0 0
  %812 = vmatprep.subr.bf16.mxu0 0
  %813 = vmatpush1.bf16.msra.mxu0 0
  %814 = vmatprep.subr.bf16.mxu0 0
  %815 = vmatpush1.bf16.msra.mxu0 0
  %816 = vmatprep.subr.bf16.mxu0 0
  %817 = vmatpush1.bf16.msra.mxu0 0
  %818 = vmatprep.subr.bf16.mxu0 0
  %819 = vmatpush1.bf16.msra.mxu0 0
  %820 = vmatprep.subr.bf16.mxu0 0
  %821 = vmatpush1.bf16.msra.mxu0 0
  %822 = vmatprep.subr.bf16.mxu0 0
  %823 = vmatpush1.bf16.msra.mxu0 0
  %824 = vmatprep.subr.bf16.mxu0 0
  %825 = vmatpush1.bf16.msra.mxu0 0
  %826 = vmatprep.subr.bf16.mxu0 0
  %827 = vmatpush1.bf16.msra.mxu0 0
  %828 = vmatprep.subr.bf16.mxu0 0
  %829 = vmatpush1.bf16.msra.mxu0 0
  %830 = vmatprep.subr.bf16.mxu0 0
  %831 = vmatpush1.bf16.msra.mxu0 0
  %832 = vmatprep.mubr.bf16.mxu0 0
  %833 = vmatmul.mubr.bf16.gmra.mrb[0].mxu0 %v795
  %v834 = vpop.f32.mrb[0].mxu0
  %v835 = vadd.f32 0.0, %v834
  %v836 = vpop.f32.mrb[0].mxu0
  %v837 = vpop.f32.mrb[0].mxu0
  %v838 = vpop.f32.mrb[0].mxu0
  %839 = vdwg.mxu0
  %840 = vrot.lane.b32.xlu0 %v339, 64
  %v841 = vpop.permute.xlu0 %840
  %v843 = vsel %vm35, %v549, 0
  %v846 = vsel %vm556, %v841, 0
  %848 = vmatprep.subr.bf16.mxu0 0
  %849 = vmatpush1.bf16.msra.mxu0 %v846
  %850 = vmatprep.subr.bf16.mxu0 0
  %851 = vmatpush1.bf16.msra.mxu0 0
  %852 = vmatprep.subr.bf16.mxu0 0
  %853 = vmatpush1.bf16.msra.mxu0 0
  %854 = vmatprep.subr.bf16.mxu0 0
  %855 = vmatpush1.bf16.msra.mxu0 0
  %856 = vmatprep.subr.bf16.mxu0 0
  %857 = vmatpush1.bf16.msra.mxu0 0
  %858 = vmatprep.subr.bf16.mxu0 0
  %859 = vmatpush1.bf16.msra.mxu0 0
  %860 = vmatprep.subr.bf16.mxu0 0
  %861 = vmatpush1.bf16.msra.mxu0 0
  %862 = vmatprep.subr.bf16.mxu0 0
  %863 = vmatpush1.bf16.msra.mxu0 0
  %864 = vmatprep.subr.bf16.mxu0 0
  %865 = vmatpush1.bf16.msra.mxu0 0
  %866 = vmatprep.subr.bf16.mxu0 0
  %867 = vmatpush1.bf16.msra.mxu0 0
  %868 = vmatprep.subr.bf16.mxu0 0
  %869 = vmatpush1.bf16.msra.mxu0 0
  %870 = vmatprep.subr.bf16.mxu0 0
  %871 = vmatpush1.bf16.msra.mxu0 0
  %872 = vmatprep.subr.bf16.mxu0 0
  %873 = vmatpush1.bf16.msra.mxu0 0
  %874 = vmatprep.subr.bf16.mxu0 0
  %875 = vmatpush1.bf16.msra.mxu0 0
  %876 = vmatprep.subr.bf16.mxu0 0
  %877 = vmatpush1.bf16.msra.mxu0 0
  %878 = vmatprep.subr.bf16.mxu0 0
  %879 = vmatpush1.bf16.msra.mxu0 0
  %880 = vmatprep.mubr.bf16.mxu0 0
  %881 = vmatmul.mubr.bf16.gmra.mrb[0].mxu0 %v843
  %v882 = vpop.f32.mrb[0].mxu0
  %v883 = vadd.f32 0.0, %v882
  %v884 = vpop.f32.mrb[0].mxu0
  %v885 = vpop.f32.mrb[0].mxu0
  %v886 = vpop.f32.mrb[0].mxu0
  %887 = vdwg.mxu0
  %888 = vrot.lane.b32.xlu0 %v390, 64
  %v889 = vpop.permute.xlu0 %888
  %v891 = vsel %vm35, %v550, 0
  %v894 = vsel %vm556, %v889, 0
  %896 = vmatprep.subr.bf16.mxu0 0
  %897 = vmatpush1.bf16.msra.mxu0 %v894
  %898 = vmatprep.subr.bf16.mxu0 0
  %899 = vmatpush1.bf16.msra.mxu0 0
  %900 = vmatprep.subr.bf16.mxu0 0
  %901 = vmatpush1.bf16.msra.mxu0 0
  %902 = vmatprep.subr.bf16.mxu0 0
  %903 = vmatpush1.bf16.msra.mxu0 0
  %904 = vmatprep.subr.bf16.mxu0 0
  %905 = vmatpush1.bf16.msra.mxu0 0
  %906 = vmatprep.subr.bf16.mxu0 0
  %907 = vmatpush1.bf16.msra.mxu0 0
  %908 = vmatprep.subr.bf16.mxu0 0
  %909 = vmatpush1.bf16.msra.mxu0 0
  %910 = vmatprep.subr.bf16.mxu0 0
  %911 = vmatpush1.bf16.msra.mxu0 0
  %912 = vmatprep.subr.bf16.mxu0 0
  %913 = vmatpush1.bf16.msra.mxu0 0
  %914 = vmatprep.subr.bf16.mxu0 0
  %915 = vmatpush1.bf16.msra.mxu0 0
  %916 = vmatprep.subr.bf16.mxu0 0
  %917 = vmatpush1.bf16.msra.mxu0 0
  %918 = vmatprep.subr.bf16.mxu0 0
  %919 = vmatpush1.bf16.msra.mxu0 0
  %920 = vmatprep.subr.bf16.mxu0 0
  %921 = vmatpush1.bf16.msra.mxu0 0
  %922 = vmatprep.subr.bf16.mxu0 0
  %923 = vmatpush1.bf16.msra.mxu0 0
  %924 = vmatprep.subr.bf16.mxu0 0
  %925 = vmatpush1.bf16.msra.mxu0 0
  %926 = vmatprep.subr.bf16.mxu0 0
  %927 = vmatpush1.bf16.msra.mxu0 0
  %928 = vmatprep.mubr.bf16.mxu0 0
  %929 = vmatmul.mubr.bf16.gmra.mrb[0].mxu0 %v891
  %v930 = vpop.f32.mrb[0].mxu0
  %v931 = vadd.f32 0.0, %v930
  %v932 = vpop.f32.mrb[0].mxu0
  %v933 = vpop.f32.mrb[0].mxu0
  %v934 = vpop.f32.mrb[0].mxu0
  %935 = vdwg.mxu0
  %936 = vrot.lane.b32.xlu0 %v32, 120
  %v937 = vpop.permute.xlu0 %936
  %938 = vrot.lane.b32.xlu0 %v32, 88
  %v939 = vpop.permute.xlu0 %938
  %v941 = vsel %vm35, %v937, 0
  %v944 = vsel %vm35, %v939, 0
  %946 = vmatprep.subr.bf16.mxu0 0
  %947 = vmatpush1.bf16.xpose.msra.mxu0 %v944
  %948 = vmatprep.subr.bf16.mxu0 0
  %949 = vmatpush1.bf16.xpose.msra.mxu0 0
  %950 = vmatprep.subr.bf16.mxu0 0
  %951 = vmatpush1.bf16.xpose.msra.mxu0 0
  %952 = vmatprep.subr.bf16.mxu0 0
  %953 = vmatpush1.bf16.xpose.msra.mxu0 0
  %954 = vmatprep.subr.bf16.mxu0 0
  %955 = vmatpush1.bf16.xpose.msra.mxu0 0
  %956 = vmatprep.subr.bf16.mxu0 0
  %957 = vmatpush1.bf16.xpose.msra.mxu0 0
  %958 = vmatprep.subr.bf16.mxu0 0
  %959 = vmatpush1.bf16.xpose.msra.mxu0 0
  %960 = vmatprep.subr.bf16.mxu0 0
  %961 = vmatpush1.bf16.xpose.msra.mxu0 0
  %962 = vmatprep.subr.bf16.mxu0 0
  %963 = vmatpush1.bf16.xpose.msra.mxu0 0
  %964 = vmatprep.subr.bf16.mxu0 0
  %965 = vmatpush1.bf16.xpose.msra.mxu0 0
  %966 = vmatprep.subr.bf16.mxu0 0
  %967 = vmatpush1.bf16.xpose.msra.mxu0 0
  %968 = vmatprep.subr.bf16.mxu0 0
  %969 = vmatpush1.bf16.xpose.msra.mxu0 0
  %970 = vmatprep.subr.bf16.mxu0 0
  %971 = vmatpush1.bf16.xpose.msra.mxu0 0
  %972 = vmatprep.subr.bf16.mxu0 0
  %973 = vmatpush1.bf16.xpose.msra.mxu0 0
  %974 = vmatprep.subr.bf16.mxu0 0
  %975 = vmatpush1.bf16.xpose.msra.mxu0 0
  %976 = vmatprep.subr.bf16.mxu0 0
  %977 = vmatpush1.bf16.xpose.msra.mxu0 0
  %978 = vmatprep.mubr.bf16.mxu0 0
  %979 = vmatmul.mubr.bf16.gmra.mrb[0].mxu0 %v941
  %v980 = vpop.f32.mrb[0].mxu0
  %v981 = vadd.f32 0.0, %v980
  %v982 = vpop.f32.mrb[0].mxu0
  %v983 = vpop.f32.mrb[0].mxu0
  %v984 = vpop.f32.mrb[0].mxu0
  %985 = vdwg.mxu0
  %986 = vrot.lane.b32.xlu0 %v84, 120
  %v987 = vpop.permute.xlu0 %986
  %988 = vrot.lane.b32.xlu0 %v84, 88
  %v989 = vpop.permute.xlu0 %988
  %v991 = vsel %vm35, %v987, 0
  %v994 = vsel %vm35, %v989, 0
  %996 = vmatprep.subr.bf16.mxu0 0
  %997 = vmatpush1.bf16.xpose.msra.mxu0 %v994
  %998 = vmatprep.subr.bf16.mxu0 0
  %999 = vmatpush1.bf16.xpose.msra.mxu0 0
  %1000 = vmatprep.subr.bf16.mxu0 0
  %1001 = vmatpush1.bf16.xpose.msra.mxu0 0
  %1002 = vmatprep.subr.bf16.mxu0 0
  %1003 = vmatpush1.bf16.xpose.msra.mxu0 0
  %1004 = vmatprep.subr.bf16.mxu0 0
  %1005 = vmatpush1.bf16.xpose.msra.mxu0 0
  %1006 = vmatprep.subr.bf16.mxu0 0
  %1007 = vmatpush1.bf16.xpose.msra.mxu0 0
  %1008 = vmatprep.subr.bf16.mxu0 0
  %1009 = vmatpush1.bf16.xpose.msra.mxu0 0
  %1010 = vmatprep.subr.bf16.mxu0 0
  %1011 = vmatpush1.bf16.xpose.msra.mxu0 0
  %1012 = vmatprep.subr.bf16.mxu0 0
  %1013 = vmatpush1.bf16.xpose.msra.mxu0 0
  %1014 = vmatprep.subr.bf16.mxu0 0
  %1015 = vmatpush1.bf16.xpose.msra.mxu0 0
  %1016 = vmatprep.subr.bf16.mxu0 0
  %1017 = vmatpush1.bf16.xpose.msra.mxu0 0
  %1018 = vmatprep.subr.bf16.mxu0 0
  %1019 = vmatpush1.bf16.xpose.msra.mxu0 0
  %1020 = vmatprep.subr.bf16.mxu0 0
  %1021 = vmatpush1.bf16.xpose.msra.mxu0 0
  %1022 = vmatprep.subr.bf16.mxu0 0
  %1023 = vmatpush1.bf16.xpose.msra.mxu0 0
  %1024 = vmatprep.subr.bf16.mxu0 0
  %1025 = vmatpush1.bf16.xpose.msra.mxu0 0
  %1026 = vmatprep.subr.bf16.mxu0 0
  %1027 = vmatpush1.bf16.xpose.msra.mxu0 0
  %1028 = vmatprep.mubr.bf16.mxu0 0
  %1029 = vmatmul.mubr.bf16.gmra.mrb[0].mxu0 %v991
  %v1030 = vpop.f32.mrb[0].mxu0
  %v1031 = vadd.f32 0.0, %v1030
  %v1032 = vpop.f32.mrb[0].mxu0
  %v1033 = vpop.f32.mrb[0].mxu0
  %v1034 = vpop.f32.mrb[0].mxu0
  %1035 = vdwg.mxu0
  %1036 = vrot.lane.b32.xlu0 %v135, 120
  %v1037 = vpop.permute.xlu0 %1036
  %1038 = vrot.lane.b32.xlu0 %v135, 88
  %v1039 = vpop.permute.xlu0 %1038
  %v1041 = vsel %vm35, %v1037, 0
  %v1044 = vsel %vm35, %v1039, 0
  %1046 = vmatprep.subr.bf16.mxu0 0
  %1047 = vmatpush1.bf16.xpose.msra.mxu0 %v1044
  %1048 = vmatprep.subr.bf16.mxu0 0
  %1049 = vmatpush1.bf16.xpose.msra.mxu0 0
  %1050 = vmatprep.subr.bf16.mxu0 0
  %1051 = vmatpush1.bf16.xpose.msra.mxu0 0
  %1052 = vmatprep.subr.bf16.mxu0 0
  %1053 = vmatpush1.bf16.xpose.msra.mxu0 0
  %1054 = vmatprep.subr.bf16.mxu0 0
  %1055 = vmatpush1.bf16.xpose.msra.mxu0 0
  %1056 = vmatprep.subr.bf16.mxu0 0
  %1057 = vmatpush1.bf16.xpose.msra.mxu0 0
  %1058 = vmatprep.subr.bf16.mxu0 0
  %1059 = vmatpush1.bf16.xpose.msra.mxu0 0
  %1060 = vmatprep.subr.bf16.mxu0 0
  %1061 = vmatpush1.bf16.xpose.msra.mxu0 0
  %1062 = vmatprep.subr.bf16.mxu0 0
  %1063 = vmatpush1.bf16.xpose.msra.mxu0 0
  %1064 = vmatprep.subr.bf16.mxu0 0
  %1065 = vmatpush1.bf16.xpose.msra.mxu0 0
  %1066 = vmatprep.subr.bf16.mxu0 0
  %1067 = vmatpush1.bf16.xpose.msra.mxu0 0
  %1068 = vmatprep.subr.bf16.mxu0 0
  %1069 = vmatpush1.bf16.xpose.msra.mxu0 0
  %1070 = vmatprep.subr.bf16.mxu0 0
  %1071 = vmatpush1.bf16.xpose.msra.mxu0 0
  %1072 = vmatprep.subr.bf16.mxu0 0
  %1073 = vmatpush1.bf16.xpose.msra.mxu0 0
  %1074 = vmatprep.subr.bf16.mxu0 0
  %1075 = vmatpush1.bf16.xpose.msra.mxu0 0
  %1076 = vmatprep.subr.bf16.mxu0 0
  %1077 = vmatpush1.bf16.xpose.msra.mxu0 0
  %1078 = vmatprep.mubr.bf16.mxu0 0
  %1079 = vmatmul.mubr.bf16.gmra.mrb[0].mxu0 %v1041
  %v1080 = vpop.f32.mrb[0].mxu0
  %v1081 = vadd.f32 0.0, %v1080
  %v1082 = vpop.f32.mrb[0].mxu0
  %v1083 = vpop.f32.mrb[0].mxu0
  %v1084 = vpop.f32.mrb[0].mxu0
  %1085 = vdwg.mxu0
  %1086 = vrot.lane.b32.xlu0 %v186, 120
  %v1087 = vpop.permute.xlu0 %1086
  %1088 = vrot.lane.b32.xlu0 %v186, 88
  %v1089 = vpop.permute.xlu0 %1088
  %v1091 = vsel %vm35, %v1087, 0
  %v1094 = vsel %vm35, %v1089, 0
  %1096 = vmatprep.subr.bf16.mxu0 0
  %1097 = vmatpush1.bf16.xpose.msra.mxu0 %v1094
  %1098 = vmatprep.subr.bf16.mxu0 0
  %1099 = vmatpush1.bf16.xpose.msra.mxu0 0
  %1100 = vmatprep.subr.bf16.mxu0 0
  %1101 = vmatpush1.bf16.xpose.msra.mxu0 0
  %1102 = vmatprep.subr.bf16.mxu0 0
  %1103 = vmatpush1.bf16.xpose.msra.mxu0 0
  %1104 = vmatprep.subr.bf16.mxu0 0
  %1105 = vmatpush1.bf16.xpose.msra.mxu0 0
  %1106 = vmatprep.subr.bf16.mxu0 0
  %1107 = vmatpush1.bf16.xpose.msra.mxu0 0
  %1108 = vmatprep.subr.bf16.mxu0 0
  %1109 = vmatpush1.bf16.xpose.msra.mxu0 0
  %1110 = vmatprep.subr.bf16.mxu0 0
  %1111 = vmatpush1.bf16.xpose.msra.mxu0 0
  %1112 = vmatprep.subr.bf16.mxu0 0
  %1113 = vmatpush1.bf16.xpose.msra.mxu0 0
  %1114 = vmatprep.subr.bf16.mxu0 0
  %1115 = vmatpush1.bf16.xpose.msra.mxu0 0
  %1116 = vmatprep.subr.bf16.mxu0 0
  %1117 = vmatpush1.bf16.xpose.msra.mxu0 0
  %1118 = vmatprep.subr.bf16.mxu0 0
  %1119 = vmatpush1.bf16.xpose.msra.mxu0 0
  %1120 = vmatprep.subr.bf16.mxu0 0
  %1121 = vmatpush1.bf16.xpose.msra.mxu0 0
  %1122 = vmatprep.subr.bf16.mxu0 0
  %1123 = vmatpush1.bf16.xpose.msra.mxu0 0
  %1124 = vmatprep.subr.bf16.mxu0 0
  %1125 = vmatpush1.bf16.xpose.msra.mxu0 0
  %1126 = vmatprep.subr.bf16.mxu0 0
  %1127 = vmatpush1.bf16.xpose.msra.mxu0 0
  %1128 = vmatprep.mubr.bf16.mxu0 0
  %1129 = vmatmul.mubr.bf16.gmra.mrb[0].mxu0 %v1091
  %v1130 = vpop.f32.mrb[0].mxu0
  %v1131 = vadd.f32 0.0, %v1130
  %v1132 = vpop.f32.mrb[0].mxu0
  %v1133 = vpop.f32.mrb[0].mxu0
  %v1134 = vpop.f32.mrb[0].mxu0
  %1135 = vdwg.mxu0
  %1136 = vrot.lane.b32.xlu0 %v237, 120
  %v1137 = vpop.permute.xlu0 %1136
  %1138 = vrot.lane.b32.xlu0 %v237, 88
  %v1139 = vpop.permute.xlu0 %1138
  %v1141 = vsel %vm35, %v1137, 0
  %v1144 = vsel %vm35, %v1139, 0
  %1146 = vmatprep.subr.bf16.mxu0 0
  %1147 = vmatpush1.bf16.xpose.msra.mxu0 %v1144
  %1148 = vmatprep.subr.bf16.mxu0 0
  %1149 = vmatpush1.bf16.xpose.msra.mxu0 0
  %1150 = vmatprep.subr.bf16.mxu0 0
  %1151 = vmatpush1.bf16.xpose.msra.mxu0 0
  %1152 = vmatprep.subr.bf16.mxu0 0
  %1153 = vmatpush1.bf16.xpose.msra.mxu0 0
  %1154 = vmatprep.subr.bf16.mxu0 0
  %1155 = vmatpush1.bf16.xpose.msra.mxu0 0
  %1156 = vmatprep.subr.bf16.mxu0 0
  %1157 = vmatpush1.bf16.xpose.msra.mxu0 0
  %1158 = vmatprep.subr.bf16.mxu0 0
  %1159 = vmatpush1.bf16.xpose.msra.mxu0 0
  %1160 = vmatprep.subr.bf16.mxu0 0
  %1161 = vmatpush1.bf16.xpose.msra.mxu0 0
  %1162 = vmatprep.subr.bf16.mxu0 0
  %1163 = vmatpush1.bf16.xpose.msra.mxu0 0
  %1164 = vmatprep.subr.bf16.mxu0 0
  %1165 = vmatpush1.bf16.xpose.msra.mxu0 0
  %1166 = vmatprep.subr.bf16.mxu0 0
  %1167 = vmatpush1.bf16.xpose.msra.mxu0 0
  %1168 = vmatprep.subr.bf16.mxu0 0
  %1169 = vmatpush1.bf16.xpose.msra.mxu0 0
  %1170 = vmatprep.subr.bf16.mxu0 0
  %1171 = vmatpush1.bf16.xpose.msra.mxu0 0
  %1172 = vmatprep.subr.bf16.mxu0 0
  %1173 = vmatpush1.bf16.xpose.msra.mxu0 0
  %1174 = vmatprep.subr.bf16.mxu0 0
  %1175 = vmatpush1.bf16.xpose.msra.mxu0 0
  %1176 = vmatprep.subr.bf16.mxu0 0
  %1177 = vmatpush1.bf16.xpose.msra.mxu0 0
  %1178 = vmatprep.mubr.bf16.mxu0 0
  %1179 = vmatmul.mubr.bf16.gmra.mrb[0].mxu0 %v1141
  %v1180 = vpop.f32.mrb[0].mxu0
  %v1181 = vadd.f32 0.0, %v1180
  %v1182 = vpop.f32.mrb[0].mxu0
  %v1183 = vpop.f32.mrb[0].mxu0
  %v1184 = vpop.f32.mrb[0].mxu0
  %1185 = vdwg.mxu0
  %1186 = vrot.lane.b32.xlu0 %v288, 120
  %v1187 = vpop.permute.xlu0 %1186
  %1188 = vrot.lane.b32.xlu0 %v288, 88
  %v1189 = vpop.permute.xlu0 %1188
  %v1191 = vsel %vm35, %v1187, 0
  %v1194 = vsel %vm35, %v1189, 0
  %1196 = vmatprep.subr.bf16.mxu0 0
  %1197 = vmatpush1.bf16.xpose.msra.mxu0 %v1194
  %1198 = vmatprep.subr.bf16.mxu0 0
  %1199 = vmatpush1.bf16.xpose.msra.mxu0 0
  %1200 = vmatprep.subr.bf16.mxu0 0
  %1201 = vmatpush1.bf16.xpose.msra.mxu0 0
  %1202 = vmatprep.subr.bf16.mxu0 0
  %1203 = vmatpush1.bf16.xpose.msra.mxu0 0
  %1204 = vmatprep.subr.bf16.mxu0 0
  %1205 = vmatpush1.bf16.xpose.msra.mxu0 0
  %1206 = vmatprep.subr.bf16.mxu0 0
  %1207 = vmatpush1.bf16.xpose.msra.mxu0 0
  %1208 = vmatprep.subr.bf16.mxu0 0
  %1209 = vmatpush1.bf16.xpose.msra.mxu0 0
  %1210 = vmatprep.subr.bf16.mxu0 0
  %1211 = vmatpush1.bf16.xpose.msra.mxu0 0
  %1212 = vmatprep.subr.bf16.mxu0 0
  %1213 = vmatpush1.bf16.xpose.msra.mxu0 0
  %1214 = vmatprep.subr.bf16.mxu0 0
  %1215 = vmatpush1.bf16.xpose.msra.mxu0 0
  %1216 = vmatprep.subr.bf16.mxu0 0
  %1217 = vmatpush1.bf16.xpose.msra.mxu0 0
  %1218 = vmatprep.subr.bf16.mxu0 0
  %1219 = vmatpush1.bf16.xpose.msra.mxu0 0
  %1220 = vmatprep.subr.bf16.mxu0 0
  %1221 = vmatpush1.bf16.xpose.msra.mxu0 0
  %1222 = vmatprep.subr.bf16.mxu0 0
  %1223 = vmatpush1.bf16.xpose.msra.mxu0 0
  %1224 = vmatprep.subr.bf16.mxu0 0
  %1225 = vmatpush1.bf16.xpose.msra.mxu0 0
  %1226 = vmatprep.subr.bf16.mxu0 0
  %1227 = vmatpush1.bf16.xpose.msra.mxu0 0
  %1228 = vmatprep.mubr.bf16.mxu0 0
  %1229 = vmatmul.mubr.bf16.gmra.mrb[0].mxu0 %v1191
  %v1230 = vpop.f32.mrb[0].mxu0
  %v1231 = vadd.f32 0.0, %v1230
  %v1232 = vpop.f32.mrb[0].mxu0
  %v1233 = vpop.f32.mrb[0].mxu0
  %v1234 = vpop.f32.mrb[0].mxu0
  %1235 = vdwg.mxu0
  %1236 = vrot.lane.b32.xlu0 %v339, 120
  %v1237 = vpop.permute.xlu0 %1236
  %1238 = vrot.lane.b32.xlu0 %v339, 88
  %v1239 = vpop.permute.xlu0 %1238
  %v1241 = vsel %vm35, %v1237, 0
  %v1244 = vsel %vm35, %v1239, 0
  %1246 = vmatprep.subr.bf16.mxu0 0
  %1247 = vmatpush1.bf16.xpose.msra.mxu0 %v1244
  %1248 = vmatprep.subr.bf16.mxu0 0
  %1249 = vmatpush1.bf16.xpose.msra.mxu0 0
  %1250 = vmatprep.subr.bf16.mxu0 0
  %1251 = vmatpush1.bf16.xpose.msra.mxu0 0
  %1252 = vmatprep.subr.bf16.mxu0 0
  %1253 = vmatpush1.bf16.xpose.msra.mxu0 0
  %1254 = vmatprep.subr.bf16.mxu0 0
  %1255 = vmatpush1.bf16.xpose.msra.mxu0 0
  %1256 = vmatprep.subr.bf16.mxu0 0
  %1257 = vmatpush1.bf16.xpose.msra.mxu0 0
  %1258 = vmatprep.subr.bf16.mxu0 0
  %1259 = vmatpush1.bf16.xpose.msra.mxu0 0
  %1260 = vmatprep.subr.bf16.mxu0 0
  %1261 = vmatpush1.bf16.xpose.msra.mxu0 0
  %1262 = vmatprep.subr.bf16.mxu0 0
  %1263 = vmatpush1.bf16.xpose.msra.mxu0 0
  %1264 = vmatprep.subr.bf16.mxu0 0
  %1265 = vmatpush1.bf16.xpose.msra.mxu0 0
  %1266 = vmatprep.subr.bf16.mxu0 0
  %1267 = vmatpush1.bf16.xpose.msra.mxu0 0
  %1268 = vmatprep.subr.bf16.mxu0 0
  %1269 = vmatpush1.bf16.xpose.msra.mxu0 0
  %1270 = vmatprep.subr.bf16.mxu0 0
  %1271 = vmatpush1.bf16.xpose.msra.mxu0 0
  %1272 = vmatprep.subr.bf16.mxu0 0
  %1273 = vmatpush1.bf16.xpose.msra.mxu0 0
  %1274 = vmatprep.subr.bf16.mxu0 0
  %1275 = vmatpush1.bf16.xpose.msra.mxu0 0
  %1276 = vmatprep.subr.bf16.mxu0 0
  %1277 = vmatpush1.bf16.xpose.msra.mxu0 0
  %1278 = vmatprep.mubr.bf16.mxu0 0
  %1279 = vmatmul.mubr.bf16.gmra.mrb[0].mxu0 %v1241
  %v1280 = vpop.f32.mrb[0].mxu0
  %v1281 = vadd.f32 0.0, %v1280
  %v1282 = vpop.f32.mrb[0].mxu0
  %v1283 = vpop.f32.mrb[0].mxu0
  %v1284 = vpop.f32.mrb[0].mxu0
  %1285 = vdwg.mxu0
  %1286 = vrot.lane.b32.xlu0 %v390, 120
  %v1287 = vpop.permute.xlu0 %1286
  %1288 = vrot.lane.b32.xlu0 %v390, 88
  %v1289 = vpop.permute.xlu0 %1288
  %v1291 = vsel %vm35, %v1287, 0
  %v1294 = vsel %vm35, %v1289, 0
  %1296 = vmatprep.subr.bf16.mxu0 0
  %1297 = vmatpush1.bf16.xpose.msra.mxu0 %v1294
  %1298 = vmatprep.subr.bf16.mxu0 0
  %1299 = vmatpush1.bf16.xpose.msra.mxu0 0
  %1300 = vmatprep.subr.bf16.mxu0 0
  %1301 = vmatpush1.bf16.xpose.msra.mxu0 0
  %1302 = vmatprep.subr.bf16.mxu0 0
  %1303 = vmatpush1.bf16.xpose.msra.mxu0 0
  %1304 = vmatprep.subr.bf16.mxu0 0
  %1305 = vmatpush1.bf16.xpose.msra.mxu0 0
  %1306 = vmatprep.subr.bf16.mxu0 0
  %1307 = vmatpush1.bf16.xpose.msra.mxu0 0
  %1308 = vmatprep.subr.bf16.mxu0 0
  %1309 = vmatpush1.bf16.xpose.msra.mxu0 0
  %1310 = vmatprep.subr.bf16.mxu0 0
  %1311 = vmatpush1.bf16.xpose.msra.mxu0 0
  %1312 = vmatprep.subr.bf16.mxu0 0
  %1313 = vmatpush1.bf16.xpose.msra.mxu0 0
  %1314 = vmatprep.subr.bf16.mxu0 0
  %1315 = vmatpush1.bf16.xpose.msra.mxu0 0
  %1316 = vmatprep.subr.bf16.mxu0 0
  %1317 = vmatpush1.bf16.xpose.msra.mxu0 0
  %1318 = vmatprep.subr.bf16.mxu0 0
  %1319 = vmatpush1.bf16.xpose.msra.mxu0 0
  %1320 = vmatprep.subr.bf16.mxu0 0
  %1321 = vmatpush1.bf16.xpose.msra.mxu0 0
  %1322 = vmatprep.subr.bf16.mxu0 0
  %1323 = vmatpush1.bf16.xpose.msra.mxu0 0
  %1324 = vmatprep.subr.bf16.mxu0 0
  %1325 = vmatpush1.bf16.xpose.msra.mxu0 0
  %1326 = vmatprep.subr.bf16.mxu0 0
  %1327 = vmatpush1.bf16.xpose.msra.mxu0 0
  %1328 = vmatprep.mubr.bf16.mxu0 0
  %1329 = vmatmul.mubr.bf16.gmra.mrb[0].mxu0 %v1291
  %v1330 = vpop.f32.mrb[0].mxu0
  %v1331 = vadd.f32 0.0, %v1330
  %v1332 = vpop.f32.mrb[0].mxu0
  %v1333 = vpop.f32.mrb[0].mxu0
  %v1334 = vpop.f32.mrb[0].mxu0
  %1335 = vdwg.mxu0
  %v1336 = vmul.f32 %v981, 0.35355338
  %v1337 = vmul.f32 %v1031, 0.35355338
  %v1338 = vmul.f32 %v1081, 0.35355338
  %v1339 = vmul.f32 %v1131, 0.35355338
  %v1340 = vmul.f32 %v1181, 0.35355338
  %v1341 = vmul.f32 %v1231, 0.35355338
  %v1342 = vmul.f32 %v1281, 0.35355338
  %v1343 = vmul.f32 %v1331, 0.35355338
  %1352 = vrot.lane.b32.xlu0 %v22, 120
  %v1353 = vpop.permute.xlu0 %1352
  %1354 = vrot.lane.b32.xlu0 %v23, 120
  %v1355 = vpop.permute.xlu0 %1354
  %1356 = vrot.lane.b32.xlu0 %v24, 120
  %v1357 = vpop.permute.xlu0 %1356
  %1358 = vrot.lane.b32.xlu0 %v25, 120
  %v1359 = vpop.permute.xlu0 %1358
  %1360 = vrot.lane.b32.xlu0 %v26, 120
  %v1361 = vpop.permute.xlu0 %1360
  %1362 = vrot.lane.b32.xlu0 %v27, 120
  %v1363 = vpop.permute.xlu0 %1362
  %1364 = vrot.lane.b32.xlu0 %v28, 120
  %v1365 = vpop.permute.xlu0 %1364
  %1366 = vrot.lane.b32.xlu0 %v29, 120
  %v1367 = vpop.permute.xlu0 %1366
  %v1376 = vadd.f32 %v1336, %v1353
  %v1377 = vadd.f32 %v1337, %v1355
  %v1378 = vadd.f32 %v1338, %v1357
  %v1379 = vadd.f32 %v1339, %v1359
  %v1380 = vadd.f32 %v1340, %v1361
  %v1381 = vadd.f32 %v1341, %v1363
  %v1382 = vadd.f32 %v1342, %v1365
  %v1383 = vadd.f32 %v1343, %v1367
  %v1384 = vsel %vm35, %v1376, -inf
  %1385 = vmax.xlane.f32.xlu0 %v1384
  %v1386 = vpop.xlane.xlu0 %1385
  %v1387 = vsel %vm35, %v1377, -inf
  %1388 = vmax.xlane.f32.xlu0 %v1387
  %v1389 = vpop.xlane.xlu0 %1388
  %v1390 = vsel %vm35, %v1378, -inf
  %1391 = vmax.xlane.f32.xlu0 %v1390
  %v1392 = vpop.xlane.xlu0 %1391
  %v1393 = vsel %vm35, %v1379, -inf
  %1394 = vmax.xlane.f32.xlu0 %v1393
  %v1395 = vpop.xlane.xlu0 %1394
  %v1396 = vsel %vm35, %v1380, -inf
  %1397 = vmax.xlane.f32.xlu0 %v1396
  %v1398 = vpop.xlane.xlu0 %1397
  %v1399 = vsel %vm35, %v1381, -inf
  %1400 = vmax.xlane.f32.xlu0 %v1399
  %v1401 = vpop.xlane.xlu0 %1400
  %v1402 = vsel %vm35, %v1382, -inf
  %1403 = vmax.xlane.f32.xlu0 %v1402
  %v1404 = vpop.xlane.xlu0 %1403
  %v1405 = vsel %vm35, %v1383, -inf
  %1406 = vmax.xlane.f32.xlu0 %v1405
  %v1407 = vpop.xlane.xlu0 %1406
  %v1408 = vsub.f32 %v1376, %v1386
  %v1409 = vsub.f32 %v1377, %v1389
  %v1410 = vsub.f32 %v1378, %v1392
  %v1411 = vsub.f32 %v1379, %v1395
  %v1412 = vsub.f32 %v1380, %v1398
  %v1413 = vsub.f32 %v1381, %v1401
  %v1414 = vsub.f32 %v1382, %v1404
  %v1415 = vsub.f32 %v1383, %v1407
  %v1416 = vmul.f32 %v1408, 1.442695
  %v1417 = vpow.pop %v1416
  %v1418 = vmul.f32 %v1409, 1.442695
  %v1419 = vpow.pop %v1418
  %v1420 = vmul.f32 %v1410, 1.442695
  %v1421 = vpow.pop %v1420
  %v1422 = vmul.f32 %v1411, 1.442695
  %v1423 = vpow.pop %v1422
  %v1424 = vmul.f32 %v1412, 1.442695
  %v1425 = vpow.pop %v1424
  %v1426 = vmul.f32 %v1413, 1.442695
  %v1427 = vpow.pop %v1426
  %v1428 = vmul.f32 %v1414, 1.442695
  %v1429 = vpow.pop %v1428
  %v1430 = vmul.f32 %v1415, 1.442695
  %v1431 = vpow.pop %v1430
  %v1432 = vsel %vm35, %v1417, 0.0
  %1433 = vadd.xlane.f32.xlu0 %v1432
  %v1434 = vpop.xlane.xlu0 %1433
  %v1435 = vsel %vm35, %v1419, 0.0
  %1436 = vadd.xlane.f32.xlu0 %v1435
  %v1437 = vpop.xlane.xlu0 %1436
  %v1438 = vsel %vm35, %v1421, 0.0
  %1439 = vadd.xlane.f32.xlu0 %v1438
  %v1440 = vpop.xlane.xlu0 %1439
  %v1441 = vsel %vm35, %v1423, 0.0
  %1442 = vadd.xlane.f32.xlu0 %v1441
  %v1443 = vpop.xlane.xlu0 %1442
  %v1444 = vsel %vm35, %v1425, 0.0
  %1445 = vadd.xlane.f32.xlu0 %v1444
  %v1446 = vpop.xlane.xlu0 %1445
  %v1447 = vsel %vm35, %v1427, 0.0
  %1448 = vadd.xlane.f32.xlu0 %v1447
  %v1449 = vpop.xlane.xlu0 %1448
  %v1450 = vsel %vm35, %v1429, 0.0
  %1451 = vadd.xlane.f32.xlu0 %v1450
  %v1452 = vpop.xlane.xlu0 %1451
  %v1453 = vsel %vm35, %v1431, 0.0
  %1454 = vadd.xlane.f32.xlu0 %v1453
  %v1455 = vpop.xlane.xlu0 %1454
  %v1456 = vrcp.pop %v1434
  %v1457 = vrcp.pop %v1437
  %v1458 = vrcp.pop %v1440
  %v1459 = vrcp.pop %v1443
  %v1460 = vrcp.pop %v1446
  %v1461 = vrcp.pop %v1449
  %v1462 = vrcp.pop %v1452
  %v1463 = vrcp.pop %v1455
  %v1464 = vmul.f32 %v1417, %v1456
  %v1465 = vmul.f32 %v1419, %v1457
  %v1466 = vmul.f32 %v1421, %v1458
  %v1467 = vmul.f32 %v1423, %v1459
  %v1468 = vmul.f32 %v1425, %v1460
  %v1469 = vmul.f32 %v1427, %v1461
  %v1470 = vmul.f32 %v1429, %v1462
  %v1471 = vmul.f32 %v1431, %v1463
  %v1472 = vpack.c.bf16 %v1464, %v1464
  %v1473 = vpack.c.bf16 %v1465, %v1465
  %v1474 = vpack.c.bf16 %v1466, %v1466
  %v1475 = vpack.c.bf16 %v1467, %v1467
  %v1476 = vpack.c.bf16 %v1468, %v1468
  %v1477 = vpack.c.bf16 %v1469, %v1469
  %v1478 = vpack.c.bf16 %v1470, %v1470
  %v1479 = vpack.c.bf16 %v1471, %v1471
  %1480 = vrot.lane.b32.xlu0 %v32, 56
  %v1481 = vpop.permute.xlu0 %1480
  %v1483 = vsel %vm35, %v1472, 0
  %v1486 = vsel %vm556, %v1481, 0
  %1488 = vmatprep.subr.bf16.mxu0 0
  %1489 = vmatpush1.bf16.msra.mxu0 %v1486
  %1490 = vmatprep.subr.bf16.mxu0 0
  %1491 = vmatpush1.bf16.msra.mxu0 0
  %1492 = vmatprep.subr.bf16.mxu0 0
  %1493 = vmatpush1.bf16.msra.mxu0 0
  %1494 = vmatprep.subr.bf16.mxu0 0
  %1495 = vmatpush1.bf16.msra.mxu0 0
  %1496 = vmatprep.subr.bf16.mxu0 0
  %1497 = vmatpush1.bf16.msra.mxu0 0
  %1498 = vmatprep.subr.bf16.mxu0 0
  %1499 = vmatpush1.bf16.msra.mxu0 0
  %1500 = vmatprep.subr.bf16.mxu0 0
  %1501 = vmatpush1.bf16.msra.mxu0 0
  %1502 = vmatprep.subr.bf16.mxu0 0
  %1503 = vmatpush1.bf16.msra.mxu0 0
  %1504 = vmatprep.subr.bf16.mxu0 0
  %1505 = vmatpush1.bf16.msra.mxu0 0
  %1506 = vmatprep.subr.bf16.mxu0 0
  %1507 = vmatpush1.bf16.msra.mxu0 0
  %1508 = vmatprep.subr.bf16.mxu0 0
  %1509 = vmatpush1.bf16.msra.mxu0 0
  %1510 = vmatprep.subr.bf16.mxu0 0
  %1511 = vmatpush1.bf16.msra.mxu0 0
  %1512 = vmatprep.subr.bf16.mxu0 0
  %1513 = vmatpush1.bf16.msra.mxu0 0
  %1514 = vmatprep.subr.bf16.mxu0 0
  %1515 = vmatpush1.bf16.msra.mxu0 0
  %1516 = vmatprep.subr.bf16.mxu0 0
  %1517 = vmatpush1.bf16.msra.mxu0 0
  %1518 = vmatprep.subr.bf16.mxu0 0
  %1519 = vmatpush1.bf16.msra.mxu0 0
  %1520 = vmatprep.mubr.bf16.mxu0 0
  %1521 = vmatmul.mubr.bf16.gmra.mrb[0].mxu0 %v1483
  %v1522 = vpop.f32.mrb[0].mxu0
  %v1523 = vadd.f32 0.0, %v1522
  %v1524 = vpop.f32.mrb[0].mxu0
  %v1525 = vpop.f32.mrb[0].mxu0
  %v1526 = vpop.f32.mrb[0].mxu0
  %1527 = vdwg.mxu0
  %1528 = vrot.lane.b32.xlu0 %v84, 56
  %v1529 = vpop.permute.xlu0 %1528
  %v1531 = vsel %vm35, %v1473, 0
  %v1534 = vsel %vm556, %v1529, 0
  %1536 = vmatprep.subr.bf16.mxu0 0
  %1537 = vmatpush1.bf16.msra.mxu0 %v1534
  %1538 = vmatprep.subr.bf16.mxu0 0
  %1539 = vmatpush1.bf16.msra.mxu0 0
  %1540 = vmatprep.subr.bf16.mxu0 0
  %1541 = vmatpush1.bf16.msra.mxu0 0
  %1542 = vmatprep.subr.bf16.mxu0 0
  %1543 = vmatpush1.bf16.msra.mxu0 0
  %1544 = vmatprep.subr.bf16.mxu0 0
  %1545 = vmatpush1.bf16.msra.mxu0 0
  %1546 = vmatprep.subr.bf16.mxu0 0
  %1547 = vmatpush1.bf16.msra.mxu0 0
  %1548 = vmatprep.subr.bf16.mxu0 0
  %1549 = vmatpush1.bf16.msra.mxu0 0
  %1550 = vmatprep.subr.bf16.mxu0 0
  %1551 = vmatpush1.bf16.msra.mxu0 0
  %1552 = vmatprep.subr.bf16.mxu0 0
  %1553 = vmatpush1.bf16.msra.mxu0 0
  %1554 = vmatprep.subr.bf16.mxu0 0
  %1555 = vmatpush1.bf16.msra.mxu0 0
  %1556 = vmatprep.subr.bf16.mxu0 0
  %1557 = vmatpush1.bf16.msra.mxu0 0
  %1558 = vmatprep.subr.bf16.mxu0 0
  %1559 = vmatpush1.bf16.msra.mxu0 0
  %1560 = vmatprep.subr.bf16.mxu0 0
  %1561 = vmatpush1.bf16.msra.mxu0 0
  %1562 = vmatprep.subr.bf16.mxu0 0
  %1563 = vmatpush1.bf16.msra.mxu0 0
  %1564 = vmatprep.subr.bf16.mxu0 0
  %1565 = vmatpush1.bf16.msra.mxu0 0
  %1566 = vmatprep.subr.bf16.mxu0 0
  %1567 = vmatpush1.bf16.msra.mxu0 0
  %1568 = vmatprep.mubr.bf16.mxu0 0
  %1569 = vmatmul.mubr.bf16.gmra.mrb[0].mxu0 %v1531
  %v1570 = vpop.f32.mrb[0].mxu0
  %v1571 = vadd.f32 0.0, %v1570
  %v1572 = vpop.f32.mrb[0].mxu0
  %v1573 = vpop.f32.mrb[0].mxu0
  %v1574 = vpop.f32.mrb[0].mxu0
  %1575 = vdwg.mxu0
  %1576 = vrot.lane.b32.xlu0 %v135, 56
  %v1577 = vpop.permute.xlu0 %1576
  %v1579 = vsel %vm35, %v1474, 0
  %v1582 = vsel %vm556, %v1577, 0
  %1584 = vmatprep.subr.bf16.mxu0 0
  %1585 = vmatpush1.bf16.msra.mxu0 %v1582
  %1586 = vmatprep.subr.bf16.mxu0 0
  %1587 = vmatpush1.bf16.msra.mxu0 0
  %1588 = vmatprep.subr.bf16.mxu0 0
  %1589 = vmatpush1.bf16.msra.mxu0 0
  %1590 = vmatprep.subr.bf16.mxu0 0
  %1591 = vmatpush1.bf16.msra.mxu0 0
  %1592 = vmatprep.subr.bf16.mxu0 0
  %1593 = vmatpush1.bf16.msra.mxu0 0
  %1594 = vmatprep.subr.bf16.mxu0 0
  %1595 = vmatpush1.bf16.msra.mxu0 0
  %1596 = vmatprep.subr.bf16.mxu0 0
  %1597 = vmatpush1.bf16.msra.mxu0 0
  %1598 = vmatprep.subr.bf16.mxu0 0
  %1599 = vmatpush1.bf16.msra.mxu0 0
  %1600 = vmatprep.subr.bf16.mxu0 0
  %1601 = vmatpush1.bf16.msra.mxu0 0
  %1602 = vmatprep.subr.bf16.mxu0 0
  %1603 = vmatpush1.bf16.msra.mxu0 0
  %1604 = vmatprep.subr.bf16.mxu0 0
  %1605 = vmatpush1.bf16.msra.mxu0 0
  %1606 = vmatprep.subr.bf16.mxu0 0
  %1607 = vmatpush1.bf16.msra.mxu0 0
  %1608 = vmatprep.subr.bf16.mxu0 0
  %1609 = vmatpush1.bf16.msra.mxu0 0
  %1610 = vmatprep.subr.bf16.mxu0 0
  %1611 = vmatpush1.bf16.msra.mxu0 0
  %1612 = vmatprep.subr.bf16.mxu0 0
  %1613 = vmatpush1.bf16.msra.mxu0 0
  %1614 = vmatprep.subr.bf16.mxu0 0
  %1615 = vmatpush1.bf16.msra.mxu0 0
  %1616 = vmatprep.mubr.bf16.mxu0 0
  %1617 = vmatmul.mubr.bf16.gmra.mrb[0].mxu0 %v1579
  %v1618 = vpop.f32.mrb[0].mxu0
  %v1619 = vadd.f32 0.0, %v1618
  %v1620 = vpop.f32.mrb[0].mxu0
  %v1621 = vpop.f32.mrb[0].mxu0
  %v1622 = vpop.f32.mrb[0].mxu0
  %1623 = vdwg.mxu0
  %1624 = vrot.lane.b32.xlu0 %v186, 56
  %v1625 = vpop.permute.xlu0 %1624
  %v1627 = vsel %vm35, %v1475, 0
  %v1630 = vsel %vm556, %v1625, 0
  %1632 = vmatprep.subr.bf16.mxu0 0
  %1633 = vmatpush1.bf16.msra.mxu0 %v1630
  %1634 = vmatprep.subr.bf16.mxu0 0
  %1635 = vmatpush1.bf16.msra.mxu0 0
  %1636 = vmatprep.subr.bf16.mxu0 0
  %1637 = vmatpush1.bf16.msra.mxu0 0
  %1638 = vmatprep.subr.bf16.mxu0 0
  %1639 = vmatpush1.bf16.msra.mxu0 0
  %1640 = vmatprep.subr.bf16.mxu0 0
  %1641 = vmatpush1.bf16.msra.mxu0 0
  %1642 = vmatprep.subr.bf16.mxu0 0
  %1643 = vmatpush1.bf16.msra.mxu0 0
  %1644 = vmatprep.subr.bf16.mxu0 0
  %1645 = vmatpush1.bf16.msra.mxu0 0
  %1646 = vmatprep.subr.bf16.mxu0 0
  %1647 = vmatpush1.bf16.msra.mxu0 0
  %1648 = vmatprep.subr.bf16.mxu0 0
  %1649 = vmatpush1.bf16.msra.mxu0 0
  %1650 = vmatprep.subr.bf16.mxu0 0
  %1651 = vmatpush1.bf16.msra.mxu0 0
  %1652 = vmatprep.subr.bf16.mxu0 0
  %1653 = vmatpush1.bf16.msra.mxu0 0
  %1654 = vmatprep.subr.bf16.mxu0 0
  %1655 = vmatpush1.bf16.msra.mxu0 0
  %1656 = vmatprep.subr.bf16.mxu0 0
  %1657 = vmatpush1.bf16.msra.mxu0 0
  %1658 = vmatprep.subr.bf16.mxu0 0
  %1659 = vmatpush1.bf16.msra.mxu0 0
  %1660 = vmatprep.subr.bf16.mxu0 0
  %1661 = vmatpush1.bf16.msra.mxu0 0
  %1662 = vmatprep.subr.bf16.mxu0 0
  %1663 = vmatpush1.bf16.msra.mxu0 0
  %1664 = vmatprep.mubr.bf16.mxu0 0
  %1665 = vmatmul.mubr.bf16.gmra.mrb[0].mxu0 %v1627
  %v1666 = vpop.f32.mrb[0].mxu0
  %v1667 = vadd.f32 0.0, %v1666
  %v1668 = vpop.f32.mrb[0].mxu0
  %v1669 = vpop.f32.mrb[0].mxu0
  %v1670 = vpop.f32.mrb[0].mxu0
  %1671 = vdwg.mxu0
  %1672 = vrot.lane.b32.xlu0 %v237, 56
  %v1673 = vpop.permute.xlu0 %1672
  %v1675 = vsel %vm35, %v1476, 0
  %v1678 = vsel %vm556, %v1673, 0
  %1680 = vmatprep.subr.bf16.mxu0 0
  %1681 = vmatpush1.bf16.msra.mxu0 %v1678
  %1682 = vmatprep.subr.bf16.mxu0 0
  %1683 = vmatpush1.bf16.msra.mxu0 0
  %1684 = vmatprep.subr.bf16.mxu0 0
  %1685 = vmatpush1.bf16.msra.mxu0 0
  %1686 = vmatprep.subr.bf16.mxu0 0
  %1687 = vmatpush1.bf16.msra.mxu0 0
  %1688 = vmatprep.subr.bf16.mxu0 0
  %1689 = vmatpush1.bf16.msra.mxu0 0
  %1690 = vmatprep.subr.bf16.mxu0 0
  %1691 = vmatpush1.bf16.msra.mxu0 0
  %1692 = vmatprep.subr.bf16.mxu0 0
  %1693 = vmatpush1.bf16.msra.mxu0 0
  %1694 = vmatprep.subr.bf16.mxu0 0
  %1695 = vmatpush1.bf16.msra.mxu0 0
  %1696 = vmatprep.subr.bf16.mxu0 0
  %1697 = vmatpush1.bf16.msra.mxu0 0
  %1698 = vmatprep.subr.bf16.mxu0 0
  %1699 = vmatpush1.bf16.msra.mxu0 0
  %1700 = vmatprep.subr.bf16.mxu0 0
  %1701 = vmatpush1.bf16.msra.mxu0 0
  %1702 = vmatprep.subr.bf16.mxu0 0
  %1703 = vmatpush1.bf16.msra.mxu0 0
  %1704 = vmatprep.subr.bf16.mxu0 0
  %1705 = vmatpush1.bf16.msra.mxu0 0
  %1706 = vmatprep.subr.bf16.mxu0 0
  %1707 = vmatpush1.bf16.msra.mxu0 0
  %1708 = vmatprep.subr.bf16.mxu0 0
  %1709 = vmatpush1.bf16.msra.mxu0 0
  %1710 = vmatprep.subr.bf16.mxu0 0
  %1711 = vmatpush1.bf16.msra.mxu0 0
  %1712 = vmatprep.mubr.bf16.mxu0 0
  %1713 = vmatmul.mubr.bf16.gmra.mrb[0].mxu0 %v1675
  %v1714 = vpop.f32.mrb[0].mxu0
  %v1715 = vadd.f32 0.0, %v1714
  %v1716 = vpop.f32.mrb[0].mxu0
  %v1717 = vpop.f32.mrb[0].mxu0
  %v1718 = vpop.f32.mrb[0].mxu0
  %1719 = vdwg.mxu0
  %1720 = vrot.lane.b32.xlu0 %v288, 56
  %v1721 = vpop.permute.xlu0 %1720
  %v1723 = vsel %vm35, %v1477, 0
  %v1726 = vsel %vm556, %v1721, 0
  %1728 = vmatprep.subr.bf16.mxu0 0
  %1729 = vmatpush1.bf16.msra.mxu0 %v1726
  %1730 = vmatprep.subr.bf16.mxu0 0
  %1731 = vmatpush1.bf16.msra.mxu0 0
  %1732 = vmatprep.subr.bf16.mxu0 0
  %1733 = vmatpush1.bf16.msra.mxu0 0
  %1734 = vmatprep.subr.bf16.mxu0 0
  %1735 = vmatpush1.bf16.msra.mxu0 0
  %1736 = vmatprep.subr.bf16.mxu0 0
  %1737 = vmatpush1.bf16.msra.mxu0 0
  %1738 = vmatprep.subr.bf16.mxu0 0
  %1739 = vmatpush1.bf16.msra.mxu0 0
  %1740 = vmatprep.subr.bf16.mxu0 0
  %1741 = vmatpush1.bf16.msra.mxu0 0
  %1742 = vmatprep.subr.bf16.mxu0 0
  %1743 = vmatpush1.bf16.msra.mxu0 0
  %1744 = vmatprep.subr.bf16.mxu0 0
  %1745 = vmatpush1.bf16.msra.mxu0 0
  %1746 = vmatprep.subr.bf16.mxu0 0
  %1747 = vmatpush1.bf16.msra.mxu0 0
  %1748 = vmatprep.subr.bf16.mxu0 0
  %1749 = vmatpush1.bf16.msra.mxu0 0
  %1750 = vmatprep.subr.bf16.mxu0 0
  %1751 = vmatpush1.bf16.msra.mxu0 0
  %1752 = vmatprep.subr.bf16.mxu0 0
  %1753 = vmatpush1.bf16.msra.mxu0 0
  %1754 = vmatprep.subr.bf16.mxu0 0
  %1755 = vmatpush1.bf16.msra.mxu0 0
  %1756 = vmatprep.subr.bf16.mxu0 0
  %1757 = vmatpush1.bf16.msra.mxu0 0
  %1758 = vmatprep.subr.bf16.mxu0 0
  %1759 = vmatpush1.bf16.msra.mxu0 0
  %1760 = vmatprep.mubr.bf16.mxu0 0
  %1761 = vmatmul.mubr.bf16.gmra.mrb[0].mxu0 %v1723
  %v1762 = vpop.f32.mrb[0].mxu0
  %v1763 = vadd.f32 0.0, %v1762
  %v1764 = vpop.f32.mrb[0].mxu0
  %v1765 = vpop.f32.mrb[0].mxu0
  %v1766 = vpop.f32.mrb[0].mxu0
  %1767 = vdwg.mxu0
  %1768 = vrot.lane.b32.xlu0 %v339, 56
  %v1769 = vpop.permute.xlu0 %1768
  %v1771 = vsel %vm35, %v1478, 0
  %v1774 = vsel %vm556, %v1769, 0
  %1776 = vmatprep.subr.bf16.mxu0 0
  %1777 = vmatpush1.bf16.msra.mxu0 %v1774
  %1778 = vmatprep.subr.bf16.mxu0 0
  %1779 = vmatpush1.bf16.msra.mxu0 0
  %1780 = vmatprep.subr.bf16.mxu0 0
  %1781 = vmatpush1.bf16.msra.mxu0 0
  %1782 = vmatprep.subr.bf16.mxu0 0
  %1783 = vmatpush1.bf16.msra.mxu0 0
  %1784 = vmatprep.subr.bf16.mxu0 0
  %1785 = vmatpush1.bf16.msra.mxu0 0
  %1786 = vmatprep.subr.bf16.mxu0 0
  %1787 = vmatpush1.bf16.msra.mxu0 0
  %1788 = vmatprep.subr.bf16.mxu0 0
  %1789 = vmatpush1.bf16.msra.mxu0 0
  %1790 = vmatprep.subr.bf16.mxu0 0
  %1791 = vmatpush1.bf16.msra.mxu0 0
  %1792 = vmatprep.subr.bf16.mxu0 0
  %1793 = vmatpush1.bf16.msra.mxu0 0
  %1794 = vmatprep.subr.bf16.mxu0 0
  %1795 = vmatpush1.bf16.msra.mxu0 0
  %1796 = vmatprep.subr.bf16.mxu0 0
  %1797 = vmatpush1.bf16.msra.mxu0 0
  %1798 = vmatprep.subr.bf16.mxu0 0
  %1799 = vmatpush1.bf16.msra.mxu0 0
  %1800 = vmatprep.subr.bf16.mxu0 0
  %1801 = vmatpush1.bf16.msra.mxu0 0
  %1802 = vmatprep.subr.bf16.mxu0 0
  %1803 = vmatpush1.bf16.msra.mxu0 0
  %1804 = vmatprep.subr.bf16.mxu0 0
  %1805 = vmatpush1.bf16.msra.mxu0 0
  %1806 = vmatprep.subr.bf16.mxu0 0
  %1807 = vmatpush1.bf16.msra.mxu0 0
  %1808 = vmatprep.mubr.bf16.mxu0 0
  %1809 = vmatmul.mubr.bf16.gmra.mrb[0].mxu0 %v1771
  %v1810 = vpop.f32.mrb[0].mxu0
  %v1811 = vadd.f32 0.0, %v1810
  %v1812 = vpop.f32.mrb[0].mxu0
  %v1813 = vpop.f32.mrb[0].mxu0
  %v1814 = vpop.f32.mrb[0].mxu0
  %1815 = vdwg.mxu0
  %1816 = vrot.lane.b32.xlu0 %v390, 56
  %v1817 = vpop.permute.xlu0 %1816
  %v1819 = vsel %vm35, %v1479, 0
  %v1822 = vsel %vm556, %v1817, 0
  %1824 = vmatprep.subr.bf16.mxu0 0
  %1825 = vmatpush1.bf16.msra.mxu0 %v1822
  %1826 = vmatprep.subr.bf16.mxu0 0
  %1827 = vmatpush1.bf16.msra.mxu0 0
  %1828 = vmatprep.subr.bf16.mxu0 0
  %1829 = vmatpush1.bf16.msra.mxu0 0
  %1830 = vmatprep.subr.bf16.mxu0 0
  %1831 = vmatpush1.bf16.msra.mxu0 0
  %1832 = vmatprep.subr.bf16.mxu0 0
  %1833 = vmatpush1.bf16.msra.mxu0 0
  %1834 = vmatprep.subr.bf16.mxu0 0
  %1835 = vmatpush1.bf16.msra.mxu0 0
  %1836 = vmatprep.subr.bf16.mxu0 0
  %1837 = vmatpush1.bf16.msra.mxu0 0
  %1838 = vmatprep.subr.bf16.mxu0 0
  %1839 = vmatpush1.bf16.msra.mxu0 0
  %1840 = vmatprep.subr.bf16.mxu0 0
  %1841 = vmatpush1.bf16.msra.mxu0 0
  %1842 = vmatprep.subr.bf16.mxu0 0
  %1843 = vmatpush1.bf16.msra.mxu0 0
  %1844 = vmatprep.subr.bf16.mxu0 0
  %1845 = vmatpush1.bf16.msra.mxu0 0
  %1846 = vmatprep.subr.bf16.mxu0 0
  %1847 = vmatpush1.bf16.msra.mxu0 0
  %1848 = vmatprep.subr.bf16.mxu0 0
  %1849 = vmatpush1.bf16.msra.mxu0 0
  %1850 = vmatprep.subr.bf16.mxu0 0
  %1851 = vmatpush1.bf16.msra.mxu0 0
  %1852 = vmatprep.subr.bf16.mxu0 0
  %1853 = vmatpush1.bf16.msra.mxu0 0
  %1854 = vmatprep.subr.bf16.mxu0 0
  %1855 = vmatpush1.bf16.msra.mxu0 0
  %1856 = vmatprep.mubr.bf16.mxu0 0
  %1857 = vmatmul.mubr.bf16.gmra.mrb[0].mxu0 %v1819
  %v1858 = vpop.f32.mrb[0].mxu0
  %v1859 = vadd.f32 0.0, %v1858
  %v1860 = vpop.f32.mrb[0].mxu0
  %v1861 = vpop.f32.mrb[0].mxu0
  %v1862 = vpop.f32.mrb[0].mxu0
  %1863 = vdwg.mxu0
  %1864 = vrot.lane.b32.xlu0 %v32, 112
  %v1865 = vpop.permute.xlu0 %1864
  %1866 = vrot.lane.b32.xlu0 %v32, 80
  %v1867 = vpop.permute.xlu0 %1866
  %v1869 = vsel %vm35, %v1865, 0
  %v1872 = vsel %vm35, %v1867, 0
  %1874 = vmatprep.subr.bf16.mxu0 0
  %1875 = vmatpush1.bf16.xpose.msra.mxu0 %v1872
  %1876 = vmatprep.subr.bf16.mxu0 0
  %1877 = vmatpush1.bf16.xpose.msra.mxu0 0
  %1878 = vmatprep.subr.bf16.mxu0 0
  %1879 = vmatpush1.bf16.xpose.msra.mxu0 0
  %1880 = vmatprep.subr.bf16.mxu0 0
  %1881 = vmatpush1.bf16.xpose.msra.mxu0 0
  %1882 = vmatprep.subr.bf16.mxu0 0
  %1883 = vmatpush1.bf16.xpose.msra.mxu0 0
  %1884 = vmatprep.subr.bf16.mxu0 0
  %1885 = vmatpush1.bf16.xpose.msra.mxu0 0
  %1886 = vmatprep.subr.bf16.mxu0 0
  %1887 = vmatpush1.bf16.xpose.msra.mxu0 0
  %1888 = vmatprep.subr.bf16.mxu0 0
  %1889 = vmatpush1.bf16.xpose.msra.mxu0 0
  %1890 = vmatprep.subr.bf16.mxu0 0
  %1891 = vmatpush1.bf16.xpose.msra.mxu0 0
  %1892 = vmatprep.subr.bf16.mxu0 0
  %1893 = vmatpush1.bf16.xpose.msra.mxu0 0
  %1894 = vmatprep.subr.bf16.mxu0 0
  %1895 = vmatpush1.bf16.xpose.msra.mxu0 0
  %1896 = vmatprep.subr.bf16.mxu0 0
  %1897 = vmatpush1.bf16.xpose.msra.mxu0 0
  %1898 = vmatprep.subr.bf16.mxu0 0
  %1899 = vmatpush1.bf16.xpose.msra.mxu0 0
  %1900 = vmatprep.subr.bf16.mxu0 0
  %1901 = vmatpush1.bf16.xpose.msra.mxu0 0
  %1902 = vmatprep.subr.bf16.mxu0 0
  %1903 = vmatpush1.bf16.xpose.msra.mxu0 0
  %1904 = vmatprep.subr.bf16.mxu0 0
  %1905 = vmatpush1.bf16.xpose.msra.mxu0 0
  %1906 = vmatprep.mubr.bf16.mxu0 0
  %1907 = vmatmul.mubr.bf16.gmra.mrb[0].mxu0 %v1869
  %v1908 = vpop.f32.mrb[0].mxu0
  %v1909 = vadd.f32 0.0, %v1908
  %v1910 = vpop.f32.mrb[0].mxu0
  %v1911 = vpop.f32.mrb[0].mxu0
  %v1912 = vpop.f32.mrb[0].mxu0
  %1913 = vdwg.mxu0
  %1914 = vrot.lane.b32.xlu0 %v84, 112
  %v1915 = vpop.permute.xlu0 %1914
  %1916 = vrot.lane.b32.xlu0 %v84, 80
  %v1917 = vpop.permute.xlu0 %1916
  %v1919 = vsel %vm35, %v1915, 0
  %v1922 = vsel %vm35, %v1917, 0
  %1924 = vmatprep.subr.bf16.mxu0 0
  %1925 = vmatpush1.bf16.xpose.msra.mxu0 %v1922
  %1926 = vmatprep.subr.bf16.mxu0 0
  %1927 = vmatpush1.bf16.xpose.msra.mxu0 0
  %1928 = vmatprep.subr.bf16.mxu0 0
  %1929 = vmatpush1.bf16.xpose.msra.mxu0 0
  %1930 = vmatprep.subr.bf16.mxu0 0
  %1931 = vmatpush1.bf16.xpose.msra.mxu0 0
  %1932 = vmatprep.subr.bf16.mxu0 0
  %1933 = vmatpush1.bf16.xpose.msra.mxu0 0
  %1934 = vmatprep.subr.bf16.mxu0 0
  %1935 = vmatpush1.bf16.xpose.msra.mxu0 0
  %1936 = vmatprep.subr.bf16.mxu0 0
  %1937 = vmatpush1.bf16.xpose.msra.mxu0 0
  %1938 = vmatprep.subr.bf16.mxu0 0
  %1939 = vmatpush1.bf16.xpose.msra.mxu0 0
  %1940 = vmatprep.subr.bf16.mxu0 0
  %1941 = vmatpush1.bf16.xpose.msra.mxu0 0
  %1942 = vmatprep.subr.bf16.mxu0 0
  %1943 = vmatpush1.bf16.xpose.msra.mxu0 0
  %1944 = vmatprep.subr.bf16.mxu0 0
  %1945 = vmatpush1.bf16.xpose.msra.mxu0 0
  %1946 = vmatprep.subr.bf16.mxu0 0
  %1947 = vmatpush1.bf16.xpose.msra.mxu0 0
  %1948 = vmatprep.subr.bf16.mxu0 0
  %1949 = vmatpush1.bf16.xpose.msra.mxu0 0
  %1950 = vmatprep.subr.bf16.mxu0 0
  %1951 = vmatpush1.bf16.xpose.msra.mxu0 0
  %1952 = vmatprep.subr.bf16.mxu0 0
  %1953 = vmatpush1.bf16.xpose.msra.mxu0 0
  %1954 = vmatprep.subr.bf16.mxu0 0
  %1955 = vmatpush1.bf16.xpose.msra.mxu0 0
  %1956 = vmatprep.mubr.bf16.mxu0 0
  %1957 = vmatmul.mubr.bf16.gmra.mrb[0].mxu0 %v1919
  %v1958 = vpop.f32.mrb[0].mxu0
  %v1959 = vadd.f32 0.0, %v1958
  %v1960 = vpop.f32.mrb[0].mxu0
  %v1961 = vpop.f32.mrb[0].mxu0
  %v1962 = vpop.f32.mrb[0].mxu0
  %1963 = vdwg.mxu0
  %1964 = vrot.lane.b32.xlu0 %v135, 112
  %v1965 = vpop.permute.xlu0 %1964
  %1966 = vrot.lane.b32.xlu0 %v135, 80
  %v1967 = vpop.permute.xlu0 %1966
  %v1969 = vsel %vm35, %v1965, 0
  %v1972 = vsel %vm35, %v1967, 0
  %1974 = vmatprep.subr.bf16.mxu0 0
  %1975 = vmatpush1.bf16.xpose.msra.mxu0 %v1972
  %1976 = vmatprep.subr.bf16.mxu0 0
  %1977 = vmatpush1.bf16.xpose.msra.mxu0 0
  %1978 = vmatprep.subr.bf16.mxu0 0
  %1979 = vmatpush1.bf16.xpose.msra.mxu0 0
  %1980 = vmatprep.subr.bf16.mxu0 0
  %1981 = vmatpush1.bf16.xpose.msra.mxu0 0
  %1982 = vmatprep.subr.bf16.mxu0 0
  %1983 = vmatpush1.bf16.xpose.msra.mxu0 0
  %1984 = vmatprep.subr.bf16.mxu0 0
  %1985 = vmatpush1.bf16.xpose.msra.mxu0 0
  %1986 = vmatprep.subr.bf16.mxu0 0
  %1987 = vmatpush1.bf16.xpose.msra.mxu0 0
  %1988 = vmatprep.subr.bf16.mxu0 0
  %1989 = vmatpush1.bf16.xpose.msra.mxu0 0
  %1990 = vmatprep.subr.bf16.mxu0 0
  %1991 = vmatpush1.bf16.xpose.msra.mxu0 0
  %1992 = vmatprep.subr.bf16.mxu0 0
  %1993 = vmatpush1.bf16.xpose.msra.mxu0 0
  %1994 = vmatprep.subr.bf16.mxu0 0
  %1995 = vmatpush1.bf16.xpose.msra.mxu0 0
  %1996 = vmatprep.subr.bf16.mxu0 0
  %1997 = vmatpush1.bf16.xpose.msra.mxu0 0
  %1998 = vmatprep.subr.bf16.mxu0 0
  %1999 = vmatpush1.bf16.xpose.msra.mxu0 0
  %2000 = vmatprep.subr.bf16.mxu0 0
  %2001 = vmatpush1.bf16.xpose.msra.mxu0 0
  %2002 = vmatprep.subr.bf16.mxu0 0
  %2003 = vmatpush1.bf16.xpose.msra.mxu0 0
  %2004 = vmatprep.subr.bf16.mxu0 0
  %2005 = vmatpush1.bf16.xpose.msra.mxu0 0
  %2006 = vmatprep.mubr.bf16.mxu0 0
  %2007 = vmatmul.mubr.bf16.gmra.mrb[0].mxu0 %v1969
  %v2008 = vpop.f32.mrb[0].mxu0
  %v2009 = vadd.f32 0.0, %v2008
  %v2010 = vpop.f32.mrb[0].mxu0
  %v2011 = vpop.f32.mrb[0].mxu0
  %v2012 = vpop.f32.mrb[0].mxu0
  %2013 = vdwg.mxu0
  %2014 = vrot.lane.b32.xlu0 %v186, 112
  %v2015 = vpop.permute.xlu0 %2014
  %2016 = vrot.lane.b32.xlu0 %v186, 80
  %v2017 = vpop.permute.xlu0 %2016
  %v2019 = vsel %vm35, %v2015, 0
  %v2022 = vsel %vm35, %v2017, 0
  %2024 = vmatprep.subr.bf16.mxu0 0
  %2025 = vmatpush1.bf16.xpose.msra.mxu0 %v2022
  %2026 = vmatprep.subr.bf16.mxu0 0
  %2027 = vmatpush1.bf16.xpose.msra.mxu0 0
  %2028 = vmatprep.subr.bf16.mxu0 0
  %2029 = vmatpush1.bf16.xpose.msra.mxu0 0
  %2030 = vmatprep.subr.bf16.mxu0 0
  %2031 = vmatpush1.bf16.xpose.msra.mxu0 0
  %2032 = vmatprep.subr.bf16.mxu0 0
  %2033 = vmatpush1.bf16.xpose.msra.mxu0 0
  %2034 = vmatprep.subr.bf16.mxu0 0
  %2035 = vmatpush1.bf16.xpose.msra.mxu0 0
  %2036 = vmatprep.subr.bf16.mxu0 0
  %2037 = vmatpush1.bf16.xpose.msra.mxu0 0
  %2038 = vmatprep.subr.bf16.mxu0 0
  %2039 = vmatpush1.bf16.xpose.msra.mxu0 0
  %2040 = vmatprep.subr.bf16.mxu0 0
  %2041 = vmatpush1.bf16.xpose.msra.mxu0 0
  %2042 = vmatprep.subr.bf16.mxu0 0
  %2043 = vmatpush1.bf16.xpose.msra.mxu0 0
  %2044 = vmatprep.subr.bf16.mxu0 0
  %2045 = vmatpush1.bf16.xpose.msra.mxu0 0
  %2046 = vmatprep.subr.bf16.mxu0 0
  %2047 = vmatpush1.bf16.xpose.msra.mxu0 0
  %2048 = vmatprep.subr.bf16.mxu0 0
  %2049 = vmatpush1.bf16.xpose.msra.mxu0 0
  %2050 = vmatprep.subr.bf16.mxu0 0
  %2051 = vmatpush1.bf16.xpose.msra.mxu0 0
  %2052 = vmatprep.subr.bf16.mxu0 0
  %2053 = vmatpush1.bf16.xpose.msra.mxu0 0
  %2054 = vmatprep.subr.bf16.mxu0 0
  %2055 = vmatpush1.bf16.xpose.msra.mxu0 0
  %2056 = vmatprep.mubr.bf16.mxu0 0
  %2057 = vmatmul.mubr.bf16.gmra.mrb[0].mxu0 %v2019
  %v2058 = vpop.f32.mrb[0].mxu0
  %v2059 = vadd.f32 0.0, %v2058
  %v2060 = vpop.f32.mrb[0].mxu0
  %v2061 = vpop.f32.mrb[0].mxu0
  %v2062 = vpop.f32.mrb[0].mxu0
  %2063 = vdwg.mxu0
  %2064 = vrot.lane.b32.xlu0 %v237, 112
  %v2065 = vpop.permute.xlu0 %2064
  %2066 = vrot.lane.b32.xlu0 %v237, 80
  %v2067 = vpop.permute.xlu0 %2066
  %v2069 = vsel %vm35, %v2065, 0
  %v2072 = vsel %vm35, %v2067, 0
  %2074 = vmatprep.subr.bf16.mxu0 0
  %2075 = vmatpush1.bf16.xpose.msra.mxu0 %v2072
  %2076 = vmatprep.subr.bf16.mxu0 0
  %2077 = vmatpush1.bf16.xpose.msra.mxu0 0
  %2078 = vmatprep.subr.bf16.mxu0 0
  %2079 = vmatpush1.bf16.xpose.msra.mxu0 0
  %2080 = vmatprep.subr.bf16.mxu0 0
  %2081 = vmatpush1.bf16.xpose.msra.mxu0 0
  %2082 = vmatprep.subr.bf16.mxu0 0
  %2083 = vmatpush1.bf16.xpose.msra.mxu0 0
  %2084 = vmatprep.subr.bf16.mxu0 0
  %2085 = vmatpush1.bf16.xpose.msra.mxu0 0
  %2086 = vmatprep.subr.bf16.mxu0 0
  %2087 = vmatpush1.bf16.xpose.msra.mxu0 0
  %2088 = vmatprep.subr.bf16.mxu0 0
  %2089 = vmatpush1.bf16.xpose.msra.mxu0 0
  %2090 = vmatprep.subr.bf16.mxu0 0
  %2091 = vmatpush1.bf16.xpose.msra.mxu0 0
  %2092 = vmatprep.subr.bf16.mxu0 0
  %2093 = vmatpush1.bf16.xpose.msra.mxu0 0
  %2094 = vmatprep.subr.bf16.mxu0 0
  %2095 = vmatpush1.bf16.xpose.msra.mxu0 0
  %2096 = vmatprep.subr.bf16.mxu0 0
  %2097 = vmatpush1.bf16.xpose.msra.mxu0 0
  %2098 = vmatprep.subr.bf16.mxu0 0
  %2099 = vmatpush1.bf16.xpose.msra.mxu0 0
  %2100 = vmatprep.subr.bf16.mxu0 0
  %2101 = vmatpush1.bf16.xpose.msra.mxu0 0
  %2102 = vmatprep.subr.bf16.mxu0 0
  %2103 = vmatpush1.bf16.xpose.msra.mxu0 0
  %2104 = vmatprep.subr.bf16.mxu0 0
  %2105 = vmatpush1.bf16.xpose.msra.mxu0 0
  %2106 = vmatprep.mubr.bf16.mxu0 0
  %2107 = vmatmul.mubr.bf16.gmra.mrb[0].mxu0 %v2069
  %v2108 = vpop.f32.mrb[0].mxu0
  %v2109 = vadd.f32 0.0, %v2108
  %v2110 = vpop.f32.mrb[0].mxu0
  %v2111 = vpop.f32.mrb[0].mxu0
  %v2112 = vpop.f32.mrb[0].mxu0
  %2113 = vdwg.mxu0
  %2114 = vrot.lane.b32.xlu0 %v288, 112
  %v2115 = vpop.permute.xlu0 %2114
  %2116 = vrot.lane.b32.xlu0 %v288, 80
  %v2117 = vpop.permute.xlu0 %2116
  %v2119 = vsel %vm35, %v2115, 0
  %v2122 = vsel %vm35, %v2117, 0
  %2124 = vmatprep.subr.bf16.mxu0 0
  %2125 = vmatpush1.bf16.xpose.msra.mxu0 %v2122
  %2126 = vmatprep.subr.bf16.mxu0 0
  %2127 = vmatpush1.bf16.xpose.msra.mxu0 0
  %2128 = vmatprep.subr.bf16.mxu0 0
  %2129 = vmatpush1.bf16.xpose.msra.mxu0 0
  %2130 = vmatprep.subr.bf16.mxu0 0
  %2131 = vmatpush1.bf16.xpose.msra.mxu0 0
  %2132 = vmatprep.subr.bf16.mxu0 0
  %2133 = vmatpush1.bf16.xpose.msra.mxu0 0
  %2134 = vmatprep.subr.bf16.mxu0 0
  %2135 = vmatpush1.bf16.xpose.msra.mxu0 0
  %2136 = vmatprep.subr.bf16.mxu0 0
  %2137 = vmatpush1.bf16.xpose.msra.mxu0 0
  %2138 = vmatprep.subr.bf16.mxu0 0
  %2139 = vmatpush1.bf16.xpose.msra.mxu0 0
  %2140 = vmatprep.subr.bf16.mxu0 0
  %2141 = vmatpush1.bf16.xpose.msra.mxu0 0
  %2142 = vmatprep.subr.bf16.mxu0 0
  %2143 = vmatpush1.bf16.xpose.msra.mxu0 0
  %2144 = vmatprep.subr.bf16.mxu0 0
  %2145 = vmatpush1.bf16.xpose.msra.mxu0 0
  %2146 = vmatprep.subr.bf16.mxu0 0
  %2147 = vmatpush1.bf16.xpose.msra.mxu0 0
  %2148 = vmatprep.subr.bf16.mxu0 0
  %2149 = vmatpush1.bf16.xpose.msra.mxu0 0
  %2150 = vmatprep.subr.bf16.mxu0 0
  %2151 = vmatpush1.bf16.xpose.msra.mxu0 0
  %2152 = vmatprep.subr.bf16.mxu0 0
  %2153 = vmatpush1.bf16.xpose.msra.mxu0 0
  %2154 = vmatprep.subr.bf16.mxu0 0
  %2155 = vmatpush1.bf16.xpose.msra.mxu0 0
  %2156 = vmatprep.mubr.bf16.mxu0 0
  %2157 = vmatmul.mubr.bf16.gmra.mrb[0].mxu0 %v2119
  %v2158 = vpop.f32.mrb[0].mxu0
  %v2159 = vadd.f32 0.0, %v2158
  %v2160 = vpop.f32.mrb[0].mxu0
  %v2161 = vpop.f32.mrb[0].mxu0
  %v2162 = vpop.f32.mrb[0].mxu0
  %2163 = vdwg.mxu0
  %2164 = vrot.lane.b32.xlu0 %v339, 112
  %v2165 = vpop.permute.xlu0 %2164
  %2166 = vrot.lane.b32.xlu0 %v339, 80
  %v2167 = vpop.permute.xlu0 %2166
  %v2169 = vsel %vm35, %v2165, 0
  %v2172 = vsel %vm35, %v2167, 0
  %2174 = vmatprep.subr.bf16.mxu0 0
  %2175 = vmatpush1.bf16.xpose.msra.mxu0 %v2172
  %2176 = vmatprep.subr.bf16.mxu0 0
  %2177 = vmatpush1.bf16.xpose.msra.mxu0 0
  %2178 = vmatprep.subr.bf16.mxu0 0
  %2179 = vmatpush1.bf16.xpose.msra.mxu0 0
  %2180 = vmatprep.subr.bf16.mxu0 0
  %2181 = vmatpush1.bf16.xpose.msra.mxu0 0
  %2182 = vmatprep.subr.bf16.mxu0 0
  %2183 = vmatpush1.bf16.xpose.msra.mxu0 0
  %2184 = vmatprep.subr.bf16.mxu0 0
  %2185 = vmatpush1.bf16.xpose.msra.mxu0 0
  %2186 = vmatprep.subr.bf16.mxu0 0
  %2187 = vmatpush1.bf16.xpose.msra.mxu0 0
  %2188 = vmatprep.subr.bf16.mxu0 0
  %2189 = vmatpush1.bf16.xpose.msra.mxu0 0
  %2190 = vmatprep.subr.bf16.mxu0 0
  %2191 = vmatpush1.bf16.xpose.msra.mxu0 0
  %2192 = vmatprep.subr.bf16.mxu0 0
  %2193 = vmatpush1.bf16.xpose.msra.mxu0 0
  %2194 = vmatprep.subr.bf16.mxu0 0
  %2195 = vmatpush1.bf16.xpose.msra.mxu0 0
  %2196 = vmatprep.subr.bf16.mxu0 0
  %2197 = vmatpush1.bf16.xpose.msra.mxu0 0
  %2198 = vmatprep.subr.bf16.mxu0 0
  %2199 = vmatpush1.bf16.xpose.msra.mxu0 0
  %2200 = vmatprep.subr.bf16.mxu0 0
  %2201 = vmatpush1.bf16.xpose.msra.mxu0 0
  %2202 = vmatprep.subr.bf16.mxu0 0
  %2203 = vmatpush1.bf16.xpose.msra.mxu0 0
  %2204 = vmatprep.subr.bf16.mxu0 0
  %2205 = vmatpush1.bf16.xpose.msra.mxu0 0
  %2206 = vmatprep.mubr.bf16.mxu0 0
  %2207 = vmatmul.mubr.bf16.gmra.mrb[0].mxu0 %v2169
  %v2208 = vpop.f32.mrb[0].mxu0
  %v2209 = vadd.f32 0.0, %v2208
  %v2210 = vpop.f32.mrb[0].mxu0
  %v2211 = vpop.f32.mrb[0].mxu0
  %v2212 = vpop.f32.mrb[0].mxu0
  %2213 = vdwg.mxu0
  %2214 = vrot.lane.b32.xlu0 %v390, 112
  %v2215 = vpop.permute.xlu0 %2214
  %2216 = vrot.lane.b32.xlu0 %v390, 80
  %v2217 = vpop.permute.xlu0 %2216
  %v2219 = vsel %vm35, %v2215, 0
  %v2222 = vsel %vm35, %v2217, 0
  %2224 = vmatprep.subr.bf16.mxu0 0
  %2225 = vmatpush1.bf16.xpose.msra.mxu0 %v2222
  %2226 = vmatprep.subr.bf16.mxu0 0
  %2227 = vmatpush1.bf16.xpose.msra.mxu0 0
  %2228 = vmatprep.subr.bf16.mxu0 0
  %2229 = vmatpush1.bf16.xpose.msra.mxu0 0
  %2230 = vmatprep.subr.bf16.mxu0 0
  %2231 = vmatpush1.bf16.xpose.msra.mxu0 0
  %2232 = vmatprep.subr.bf16.mxu0 0
  %2233 = vmatpush1.bf16.xpose.msra.mxu0 0
  %2234 = vmatprep.subr.bf16.mxu0 0
  %2235 = vmatpush1.bf16.xpose.msra.mxu0 0
  %2236 = vmatprep.subr.bf16.mxu0 0
  %2237 = vmatpush1.bf16.xpose.msra.mxu0 0
  %2238 = vmatprep.subr.bf16.mxu0 0
  %2239 = vmatpush1.bf16.xpose.msra.mxu0 0
  %2240 = vmatprep.subr.bf16.mxu0 0
  %2241 = vmatpush1.bf16.xpose.msra.mxu0 0
  %2242 = vmatprep.subr.bf16.mxu0 0
  %2243 = vmatpush1.bf16.xpose.msra.mxu0 0
  %2244 = vmatprep.subr.bf16.mxu0 0
  %2245 = vmatpush1.bf16.xpose.msra.mxu0 0
  %2246 = vmatprep.subr.bf16.mxu0 0
  %2247 = vmatpush1.bf16.xpose.msra.mxu0 0
  %2248 = vmatprep.subr.bf16.mxu0 0
  %2249 = vmatpush1.bf16.xpose.msra.mxu0 0
  %2250 = vmatprep.subr.bf16.mxu0 0
  %2251 = vmatpush1.bf16.xpose.msra.mxu0 0
  %2252 = vmatprep.subr.bf16.mxu0 0
  %2253 = vmatpush1.bf16.xpose.msra.mxu0 0
  %2254 = vmatprep.subr.bf16.mxu0 0
  %2255 = vmatpush1.bf16.xpose.msra.mxu0 0
  %2256 = vmatprep.mubr.bf16.mxu0 0
  %2257 = vmatmul.mubr.bf16.gmra.mrb[0].mxu0 %v2219
  %v2258 = vpop.f32.mrb[0].mxu0
  %v2259 = vadd.f32 0.0, %v2258
  %v2260 = vpop.f32.mrb[0].mxu0
  %v2261 = vpop.f32.mrb[0].mxu0
  %v2262 = vpop.f32.mrb[0].mxu0
  %2263 = vdwg.mxu0
  %v2264 = vmul.f32 %v1909, 0.35355338
  %v2265 = vmul.f32 %v1959, 0.35355338
  %v2266 = vmul.f32 %v2009, 0.35355338
  %v2267 = vmul.f32 %v2059, 0.35355338
  %v2268 = vmul.f32 %v2109, 0.35355338
  %v2269 = vmul.f32 %v2159, 0.35355338
  %v2270 = vmul.f32 %v2209, 0.35355338
  %v2271 = vmul.f32 %v2259, 0.35355338
  %2272 = vrot.lane.b32.xlu0 %v22, 112
  %v2273 = vpop.permute.xlu0 %2272
  %2274 = vrot.lane.b32.xlu0 %v23, 112
  %v2275 = vpop.permute.xlu0 %2274
  %2276 = vrot.lane.b32.xlu0 %v24, 112
  %v2277 = vpop.permute.xlu0 %2276
  %2278 = vrot.lane.b32.xlu0 %v25, 112
  %v2279 = vpop.permute.xlu0 %2278
  %2280 = vrot.lane.b32.xlu0 %v26, 112
  %v2281 = vpop.permute.xlu0 %2280
  %2282 = vrot.lane.b32.xlu0 %v27, 112
  %v2283 = vpop.permute.xlu0 %2282
  %2284 = vrot.lane.b32.xlu0 %v28, 112
  %v2285 = vpop.permute.xlu0 %2284
  %2286 = vrot.lane.b32.xlu0 %v29, 112
  %v2287 = vpop.permute.xlu0 %2286
  %v2296 = vadd.f32 %v2264, %v2273
  %v2297 = vadd.f32 %v2265, %v2275
  %v2298 = vadd.f32 %v2266, %v2277
  %v2299 = vadd.f32 %v2267, %v2279
  %v2300 = vadd.f32 %v2268, %v2281
  %v2301 = vadd.f32 %v2269, %v2283
  %v2302 = vadd.f32 %v2270, %v2285
  %v2303 = vadd.f32 %v2271, %v2287
  %v2304 = vsel %vm35, %v2296, -inf
  %2305 = vmax.xlane.f32.xlu0 %v2304
  %v2306 = vpop.xlane.xlu0 %2305
  %v2307 = vsel %vm35, %v2297, -inf
  %2308 = vmax.xlane.f32.xlu0 %v2307
  %v2309 = vpop.xlane.xlu0 %2308
  %v2310 = vsel %vm35, %v2298, -inf
  %2311 = vmax.xlane.f32.xlu0 %v2310
  %v2312 = vpop.xlane.xlu0 %2311
  %v2313 = vsel %vm35, %v2299, -inf
  %2314 = vmax.xlane.f32.xlu0 %v2313
  %v2315 = vpop.xlane.xlu0 %2314
  %v2316 = vsel %vm35, %v2300, -inf
  %2317 = vmax.xlane.f32.xlu0 %v2316
  %v2318 = vpop.xlane.xlu0 %2317
  %v2319 = vsel %vm35, %v2301, -inf
  %2320 = vmax.xlane.f32.xlu0 %v2319
  %v2321 = vpop.xlane.xlu0 %2320
  %v2322 = vsel %vm35, %v2302, -inf
  %2323 = vmax.xlane.f32.xlu0 %v2322
  %v2324 = vpop.xlane.xlu0 %2323
  %v2325 = vsel %vm35, %v2303, -inf
  %2326 = vmax.xlane.f32.xlu0 %v2325
  %v2327 = vpop.xlane.xlu0 %2326
  %v2328 = vsub.f32 %v2296, %v2306
  %v2329 = vsub.f32 %v2297, %v2309
  %v2330 = vsub.f32 %v2298, %v2312
  %v2331 = vsub.f32 %v2299, %v2315
  %v2332 = vsub.f32 %v2300, %v2318
  %v2333 = vsub.f32 %v2301, %v2321
  %v2334 = vsub.f32 %v2302, %v2324
  %v2335 = vsub.f32 %v2303, %v2327
  %v2336 = vmul.f32 %v2328, 1.442695
  %v2337 = vpow.pop %v2336
  %v2338 = vmul.f32 %v2329, 1.442695
  %v2339 = vpow.pop %v2338
  %v2340 = vmul.f32 %v2330, 1.442695
  %v2341 = vpow.pop %v2340
  %v2342 = vmul.f32 %v2331, 1.442695
  %v2343 = vpow.pop %v2342
  %v2344 = vmul.f32 %v2332, 1.442695
  %v2345 = vpow.pop %v2344
  %v2346 = vmul.f32 %v2333, 1.442695
  %v2347 = vpow.pop %v2346
  %v2348 = vmul.f32 %v2334, 1.442695
  %v2349 = vpow.pop %v2348
  %v2350 = vmul.f32 %v2335, 1.442695
  %v2351 = vpow.pop %v2350
  %v2352 = vsel %vm35, %v2337, 0.0
  %2353 = vadd.xlane.f32.xlu0 %v2352
  %v2354 = vpop.xlane.xlu0 %2353
  %v2355 = vsel %vm35, %v2339, 0.0
  %2356 = vadd.xlane.f32.xlu0 %v2355
  %v2357 = vpop.xlane.xlu0 %2356
  %v2358 = vsel %vm35, %v2341, 0.0
  %2359 = vadd.xlane.f32.xlu0 %v2358
  %v2360 = vpop.xlane.xlu0 %2359
  %v2361 = vsel %vm35, %v2343, 0.0
  %2362 = vadd.xlane.f32.xlu0 %v2361
  %v2363 = vpop.xlane.xlu0 %2362
  %v2364 = vsel %vm35, %v2345, 0.0
  %2365 = vadd.xlane.f32.xlu0 %v2364
  %v2366 = vpop.xlane.xlu0 %2365
  %v2367 = vsel %vm35, %v2347, 0.0
  %2368 = vadd.xlane.f32.xlu0 %v2367
  %v2369 = vpop.xlane.xlu0 %2368
  %v2370 = vsel %vm35, %v2349, 0.0
  %2371 = vadd.xlane.f32.xlu0 %v2370
  %v2372 = vpop.xlane.xlu0 %2371
  %v2373 = vsel %vm35, %v2351, 0.0
  %2374 = vadd.xlane.f32.xlu0 %v2373
  %v2375 = vpop.xlane.xlu0 %2374
  %v2376 = vrcp.pop %v2354
  %v2377 = vrcp.pop %v2357
  %v2378 = vrcp.pop %v2360
  %v2379 = vrcp.pop %v2363
  %v2380 = vrcp.pop %v2366
  %v2381 = vrcp.pop %v2369
  %v2382 = vrcp.pop %v2372
  %v2383 = vrcp.pop %v2375
  %v2384 = vmul.f32 %v2337, %v2376
  %v2385 = vmul.f32 %v2339, %v2377
  %v2386 = vmul.f32 %v2341, %v2378
  %v2387 = vmul.f32 %v2343, %v2379
  %v2388 = vmul.f32 %v2345, %v2380
  %v2389 = vmul.f32 %v2347, %v2381
  %v2390 = vmul.f32 %v2349, %v2382
  %v2391 = vmul.f32 %v2351, %v2383
  %v2392 = vpack.c.bf16 %v2384, %v2384
  %v2393 = vpack.c.bf16 %v2385, %v2385
  %v2394 = vpack.c.bf16 %v2386, %v2386
  %v2395 = vpack.c.bf16 %v2387, %v2387
  %v2396 = vpack.c.bf16 %v2388, %v2388
  %v2397 = vpack.c.bf16 %v2389, %v2389
  %v2398 = vpack.c.bf16 %v2390, %v2390
  %v2399 = vpack.c.bf16 %v2391, %v2391
  %2400 = vrot.lane.b32.xlu0 %v32, 48
  %v2401 = vpop.permute.xlu0 %2400
  %v2403 = vsel %vm35, %v2392, 0
  %v2406 = vsel %vm556, %v2401, 0
  %2408 = vmatprep.subr.bf16.mxu0 0
  %2409 = vmatpush1.bf16.msra.mxu0 %v2406
  %2410 = vmatprep.subr.bf16.mxu0 0
  %2411 = vmatpush1.bf16.msra.mxu0 0
  %2412 = vmatprep.subr.bf16.mxu0 0
  %2413 = vmatpush1.bf16.msra.mxu0 0
  %2414 = vmatprep.subr.bf16.mxu0 0
  %2415 = vmatpush1.bf16.msra.mxu0 0
  %2416 = vmatprep.subr.bf16.mxu0 0
  %2417 = vmatpush1.bf16.msra.mxu0 0
  %2418 = vmatprep.subr.bf16.mxu0 0
  %2419 = vmatpush1.bf16.msra.mxu0 0
  %2420 = vmatprep.subr.bf16.mxu0 0
  %2421 = vmatpush1.bf16.msra.mxu0 0
  %2422 = vmatprep.subr.bf16.mxu0 0
  %2423 = vmatpush1.bf16.msra.mxu0 0
  %2424 = vmatprep.subr.bf16.mxu0 0
  %2425 = vmatpush1.bf16.msra.mxu0 0
  %2426 = vmatprep.subr.bf16.mxu0 0
  %2427 = vmatpush1.bf16.msra.mxu0 0
  %2428 = vmatprep.subr.bf16.mxu0 0
  %2429 = vmatpush1.bf16.msra.mxu0 0
  %2430 = vmatprep.subr.bf16.mxu0 0
  %2431 = vmatpush1.bf16.msra.mxu0 0
  %2432 = vmatprep.subr.bf16.mxu0 0
  %2433 = vmatpush1.bf16.msra.mxu0 0
  %2434 = vmatprep.subr.bf16.mxu0 0
  %2435 = vmatpush1.bf16.msra.mxu0 0
  %2436 = vmatprep.subr.bf16.mxu0 0
  %2437 = vmatpush1.bf16.msra.mxu0 0
  %2438 = vmatprep.subr.bf16.mxu0 0
  %2439 = vmatpush1.bf16.msra.mxu0 0
  %2440 = vmatprep.mubr.bf16.mxu0 0
  %2441 = vmatmul.mubr.bf16.gmra.mrb[0].mxu0 %v2403
  %v2442 = vpop.f32.mrb[0].mxu0
  %v2443 = vadd.f32 0.0, %v2442
  %v2444 = vpop.f32.mrb[0].mxu0
  %v2445 = vpop.f32.mrb[0].mxu0
  %v2446 = vpop.f32.mrb[0].mxu0
  %2447 = vdwg.mxu0
  %2448 = vrot.lane.b32.xlu0 %v84, 48
  %v2449 = vpop.permute.xlu0 %2448
  %v2451 = vsel %vm35, %v2393, 0
  %v2454 = vsel %vm556, %v2449, 0
  %2456 = vmatprep.subr.bf16.mxu0 0
  %2457 = vmatpush1.bf16.msra.mxu0 %v2454
  %2458 = vmatprep.subr.bf16.mxu0 0
  %2459 = vmatpush1.bf16.msra.mxu0 0
  %2460 = vmatprep.subr.bf16.mxu0 0
  %2461 = vmatpush1.bf16.msra.mxu0 0
  %2462 = vmatprep.subr.bf16.mxu0 0
  %2463 = vmatpush1.bf16.msra.mxu0 0
  %2464 = vmatprep.subr.bf16.mxu0 0
  %2465 = vmatpush1.bf16.msra.mxu0 0
  %2466 = vmatprep.subr.bf16.mxu0 0
  %2467 = vmatpush1.bf16.msra.mxu0 0
  %2468 = vmatprep.subr.bf16.mxu0 0
  %2469 = vmatpush1.bf16.msra.mxu0 0
  %2470 = vmatprep.subr.bf16.mxu0 0
  %2471 = vmatpush1.bf16.msra.mxu0 0
  %2472 = vmatprep.subr.bf16.mxu0 0
  %2473 = vmatpush1.bf16.msra.mxu0 0
  %2474 = vmatprep.subr.bf16.mxu0 0
  %2475 = vmatpush1.bf16.msra.mxu0 0
  %2476 = vmatprep.subr.bf16.mxu0 0
  %2477 = vmatpush1.bf16.msra.mxu0 0
  %2478 = vmatprep.subr.bf16.mxu0 0
  %2479 = vmatpush1.bf16.msra.mxu0 0
  %2480 = vmatprep.subr.bf16.mxu0 0
  %2481 = vmatpush1.bf16.msra.mxu0 0
  %2482 = vmatprep.subr.bf16.mxu0 0
  %2483 = vmatpush1.bf16.msra.mxu0 0
  %2484 = vmatprep.subr.bf16.mxu0 0
  %2485 = vmatpush1.bf16.msra.mxu0 0
  %2486 = vmatprep.subr.bf16.mxu0 0
  %2487 = vmatpush1.bf16.msra.mxu0 0
  %2488 = vmatprep.mubr.bf16.mxu0 0
  %2489 = vmatmul.mubr.bf16.gmra.mrb[0].mxu0 %v2451
  %v2490 = vpop.f32.mrb[0].mxu0
  %v2491 = vadd.f32 0.0, %v2490
  %v2492 = vpop.f32.mrb[0].mxu0
  %v2493 = vpop.f32.mrb[0].mxu0
  %v2494 = vpop.f32.mrb[0].mxu0
  %2495 = vdwg.mxu0
  %2496 = vrot.lane.b32.xlu0 %v135, 48
  %v2497 = vpop.permute.xlu0 %2496
  %v2499 = vsel %vm35, %v2394, 0
  %v2502 = vsel %vm556, %v2497, 0
  %2504 = vmatprep.subr.bf16.mxu0 0
  %2505 = vmatpush1.bf16.msra.mxu0 %v2502
  %2506 = vmatprep.subr.bf16.mxu0 0
  %2507 = vmatpush1.bf16.msra.mxu0 0
  %2508 = vmatprep.subr.bf16.mxu0 0
  %2509 = vmatpush1.bf16.msra.mxu0 0
  %2510 = vmatprep.subr.bf16.mxu0 0
  %2511 = vmatpush1.bf16.msra.mxu0 0
  %2512 = vmatprep.subr.bf16.mxu0 0
  %2513 = vmatpush1.bf16.msra.mxu0 0
  %2514 = vmatprep.subr.bf16.mxu0 0
  %2515 = vmatpush1.bf16.msra.mxu0 0
  %2516 = vmatprep.subr.bf16.mxu0 0
  %2517 = vmatpush1.bf16.msra.mxu0 0
  %2518 = vmatprep.subr.bf16.mxu0 0
  %2519 = vmatpush1.bf16.msra.mxu0 0
  %2520 = vmatprep.subr.bf16.mxu0 0
  %2521 = vmatpush1.bf16.msra.mxu0 0
  %2522 = vmatprep.subr.bf16.mxu0 0
  %2523 = vmatpush1.bf16.msra.mxu0 0
  %2524 = vmatprep.subr.bf16.mxu0 0
  %2525 = vmatpush1.bf16.msra.mxu0 0
  %2526 = vmatprep.subr.bf16.mxu0 0
  %2527 = vmatpush1.bf16.msra.mxu0 0
  %2528 = vmatprep.subr.bf16.mxu0 0
  %2529 = vmatpush1.bf16.msra.mxu0 0
  %2530 = vmatprep.subr.bf16.mxu0 0
  %2531 = vmatpush1.bf16.msra.mxu0 0
  %2532 = vmatprep.subr.bf16.mxu0 0
  %2533 = vmatpush1.bf16.msra.mxu0 0
  %2534 = vmatprep.subr.bf16.mxu0 0
  %2535 = vmatpush1.bf16.msra.mxu0 0
  %2536 = vmatprep.mubr.bf16.mxu0 0
  %2537 = vmatmul.mubr.bf16.gmra.mrb[0].mxu0 %v2499
  %v2538 = vpop.f32.mrb[0].mxu0
  %v2539 = vadd.f32 0.0, %v2538
  %v2540 = vpop.f32.mrb[0].mxu0
  %v2541 = vpop.f32.mrb[0].mxu0
  %v2542 = vpop.f32.mrb[0].mxu0
  %2543 = vdwg.mxu0
  %2544 = vrot.lane.b32.xlu0 %v186, 48
  %v2545 = vpop.permute.xlu0 %2544
  %v2547 = vsel %vm35, %v2395, 0
  %v2550 = vsel %vm556, %v2545, 0
  %2552 = vmatprep.subr.bf16.mxu0 0
  %2553 = vmatpush1.bf16.msra.mxu0 %v2550
  %2554 = vmatprep.subr.bf16.mxu0 0
  %2555 = vmatpush1.bf16.msra.mxu0 0
  %2556 = vmatprep.subr.bf16.mxu0 0
  %2557 = vmatpush1.bf16.msra.mxu0 0
  %2558 = vmatprep.subr.bf16.mxu0 0
  %2559 = vmatpush1.bf16.msra.mxu0 0
  %2560 = vmatprep.subr.bf16.mxu0 0
  %2561 = vmatpush1.bf16.msra.mxu0 0
  %2562 = vmatprep.subr.bf16.mxu0 0
  %2563 = vmatpush1.bf16.msra.mxu0 0
  %2564 = vmatprep.subr.bf16.mxu0 0
  %2565 = vmatpush1.bf16.msra.mxu0 0
  %2566 = vmatprep.subr.bf16.mxu0 0
  %2567 = vmatpush1.bf16.msra.mxu0 0
  %2568 = vmatprep.subr.bf16.mxu0 0
  %2569 = vmatpush1.bf16.msra.mxu0 0
  %2570 = vmatprep.subr.bf16.mxu0 0
  %2571 = vmatpush1.bf16.msra.mxu0 0
  %2572 = vmatprep.subr.bf16.mxu0 0
  %2573 = vmatpush1.bf16.msra.mxu0 0
  %2574 = vmatprep.subr.bf16.mxu0 0
  %2575 = vmatpush1.bf16.msra.mxu0 0
  %2576 = vmatprep.subr.bf16.mxu0 0
  %2577 = vmatpush1.bf16.msra.mxu0 0
  %2578 = vmatprep.subr.bf16.mxu0 0
  %2579 = vmatpush1.bf16.msra.mxu0 0
  %2580 = vmatprep.subr.bf16.mxu0 0
  %2581 = vmatpush1.bf16.msra.mxu0 0
  %2582 = vmatprep.subr.bf16.mxu0 0
  %2583 = vmatpush1.bf16.msra.mxu0 0
  %2584 = vmatprep.mubr.bf16.mxu0 0
  %2585 = vmatmul.mubr.bf16.gmra.mrb[0].mxu0 %v2547
  %v2586 = vpop.f32.mrb[0].mxu0
  %v2587 = vadd.f32 0.0, %v2586
  %v2588 = vpop.f32.mrb[0].mxu0
  %v2589 = vpop.f32.mrb[0].mxu0
  %v2590 = vpop.f32.mrb[0].mxu0
  %2591 = vdwg.mxu0
  %2592 = vrot.lane.b32.xlu0 %v237, 48
  %v2593 = vpop.permute.xlu0 %2592
  %v2595 = vsel %vm35, %v2396, 0
  %v2598 = vsel %vm556, %v2593, 0
  %2600 = vmatprep.subr.bf16.mxu0 0
  %2601 = vmatpush1.bf16.msra.mxu0 %v2598
  %2602 = vmatprep.subr.bf16.mxu0 0
  %2603 = vmatpush1.bf16.msra.mxu0 0
  %2604 = vmatprep.subr.bf16.mxu0 0
  %2605 = vmatpush1.bf16.msra.mxu0 0
  %2606 = vmatprep.subr.bf16.mxu0 0
  %2607 = vmatpush1.bf16.msra.mxu0 0
  %2608 = vmatprep.subr.bf16.mxu0 0
  %2609 = vmatpush1.bf16.msra.mxu0 0
  %2610 = vmatprep.subr.bf16.mxu0 0
  %2611 = vmatpush1.bf16.msra.mxu0 0
  %2612 = vmatprep.subr.bf16.mxu0 0
  %2613 = vmatpush1.bf16.msra.mxu0 0
  %2614 = vmatprep.subr.bf16.mxu0 0
  %2615 = vmatpush1.bf16.msra.mxu0 0
  %2616 = vmatprep.subr.bf16.mxu0 0
  %2617 = vmatpush1.bf16.msra.mxu0 0
  %2618 = vmatprep.subr.bf16.mxu0 0
  %2619 = vmatpush1.bf16.msra.mxu0 0
  %2620 = vmatprep.subr.bf16.mxu0 0
  %2621 = vmatpush1.bf16.msra.mxu0 0
  %2622 = vmatprep.subr.bf16.mxu0 0
  %2623 = vmatpush1.bf16.msra.mxu0 0
  %2624 = vmatprep.subr.bf16.mxu0 0
  %2625 = vmatpush1.bf16.msra.mxu0 0
  %2626 = vmatprep.subr.bf16.mxu0 0
  %2627 = vmatpush1.bf16.msra.mxu0 0
  %2628 = vmatprep.subr.bf16.mxu0 0
  %2629 = vmatpush1.bf16.msra.mxu0 0
  %2630 = vmatprep.subr.bf16.mxu0 0
  %2631 = vmatpush1.bf16.msra.mxu0 0
  %2632 = vmatprep.mubr.bf16.mxu0 0
  %2633 = vmatmul.mubr.bf16.gmra.mrb[0].mxu0 %v2595
  %v2634 = vpop.f32.mrb[0].mxu0
  %v2635 = vadd.f32 0.0, %v2634
  %v2636 = vpop.f32.mrb[0].mxu0
  %v2637 = vpop.f32.mrb[0].mxu0
  %v2638 = vpop.f32.mrb[0].mxu0
  %2639 = vdwg.mxu0
  %2640 = vrot.lane.b32.xlu0 %v288, 48
  %v2641 = vpop.permute.xlu0 %2640
  %v2643 = vsel %vm35, %v2397, 0
  %v2646 = vsel %vm556, %v2641, 0
  %2648 = vmatprep.subr.bf16.mxu0 0
  %2649 = vmatpush1.bf16.msra.mxu0 %v2646
  %2650 = vmatprep.subr.bf16.mxu0 0
  %2651 = vmatpush1.bf16.msra.mxu0 0
  %2652 = vmatprep.subr.bf16.mxu0 0
  %2653 = vmatpush1.bf16.msra.mxu0 0
  %2654 = vmatprep.subr.bf16.mxu0 0
  %2655 = vmatpush1.bf16.msra.mxu0 0
  %2656 = vmatprep.subr.bf16.mxu0 0
  %2657 = vmatpush1.bf16.msra.mxu0 0
  %2658 = vmatprep.subr.bf16.mxu0 0
  %2659 = vmatpush1.bf16.msra.mxu0 0
  %2660 = vmatprep.subr.bf16.mxu0 0
  %2661 = vmatpush1.bf16.msra.mxu0 0
  %2662 = vmatprep.subr.bf16.mxu0 0
  %2663 = vmatpush1.bf16.msra.mxu0 0
  %2664 = vmatprep.subr.bf16.mxu0 0
  %2665 = vmatpush1.bf16.msra.mxu0 0
  %2666 = vmatprep.subr.bf16.mxu0 0
  %2667 = vmatpush1.bf16.msra.mxu0 0
  %2668 = vmatprep.subr.bf16.mxu0 0
  %2669 = vmatpush1.bf16.msra.mxu0 0
  %2670 = vmatprep.subr.bf16.mxu0 0
  %2671 = vmatpush1.bf16.msra.mxu0 0
  %2672 = vmatprep.subr.bf16.mxu0 0
  %2673 = vmatpush1.bf16.msra.mxu0 0
  %2674 = vmatprep.subr.bf16.mxu0 0
  %2675 = vmatpush1.bf16.msra.mxu0 0
  %2676 = vmatprep.subr.bf16.mxu0 0
  %2677 = vmatpush1.bf16.msra.mxu0 0
  %2678 = vmatprep.subr.bf16.mxu0 0
  %2679 = vmatpush1.bf16.msra.mxu0 0
  %2680 = vmatprep.mubr.bf16.mxu0 0
  %2681 = vmatmul.mubr.bf16.gmra.mrb[0].mxu0 %v2643
  %v2682 = vpop.f32.mrb[0].mxu0
  %v2683 = vadd.f32 0.0, %v2682
  %v2684 = vpop.f32.mrb[0].mxu0
  %v2685 = vpop.f32.mrb[0].mxu0
  %v2686 = vpop.f32.mrb[0].mxu0
  %2687 = vdwg.mxu0
  %2688 = vrot.lane.b32.xlu0 %v339, 48
  %v2689 = vpop.permute.xlu0 %2688
  %v2691 = vsel %vm35, %v2398, 0
  %v2694 = vsel %vm556, %v2689, 0
  %2696 = vmatprep.subr.bf16.mxu0 0
  %2697 = vmatpush1.bf16.msra.mxu0 %v2694
  %2698 = vmatprep.subr.bf16.mxu0 0
  %2699 = vmatpush1.bf16.msra.mxu0 0
  %2700 = vmatprep.subr.bf16.mxu0 0
  %2701 = vmatpush1.bf16.msra.mxu0 0
  %2702 = vmatprep.subr.bf16.mxu0 0
  %2703 = vmatpush1.bf16.msra.mxu0 0
  %2704 = vmatprep.subr.bf16.mxu0 0
  %2705 = vmatpush1.bf16.msra.mxu0 0
  %2706 = vmatprep.subr.bf16.mxu0 0
  %2707 = vmatpush1.bf16.msra.mxu0 0
  %2708 = vmatprep.subr.bf16.mxu0 0
  %2709 = vmatpush1.bf16.msra.mxu0 0
  %2710 = vmatprep.subr.bf16.mxu0 0
  %2711 = vmatpush1.bf16.msra.mxu0 0
  %2712 = vmatprep.subr.bf16.mxu0 0
  %2713 = vmatpush1.bf16.msra.mxu0 0
  %2714 = vmatprep.subr.bf16.mxu0 0
  %2715 = vmatpush1.bf16.msra.mxu0 0
  %2716 = vmatprep.subr.bf16.mxu0 0
  %2717 = vmatpush1.bf16.msra.mxu0 0
  %2718 = vmatprep.subr.bf16.mxu0 0
  %2719 = vmatpush1.bf16.msra.mxu0 0
  %2720 = vmatprep.subr.bf16.mxu0 0
  %2721 = vmatpush1.bf16.msra.mxu0 0
  %2722 = vmatprep.subr.bf16.mxu0 0
  %2723 = vmatpush1.bf16.msra.mxu0 0
  %2724 = vmatprep.subr.bf16.mxu0 0
  %2725 = vmatpush1.bf16.msra.mxu0 0
  %2726 = vmatprep.subr.bf16.mxu0 0
  %2727 = vmatpush1.bf16.msra.mxu0 0
  %2728 = vmatprep.mubr.bf16.mxu0 0
  %2729 = vmatmul.mubr.bf16.gmra.mrb[0].mxu0 %v2691
  %v2730 = vpop.f32.mrb[0].mxu0
  %v2731 = vadd.f32 0.0, %v2730
  %v2732 = vpop.f32.mrb[0].mxu0
  %v2733 = vpop.f32.mrb[0].mxu0
  %v2734 = vpop.f32.mrb[0].mxu0
  %2735 = vdwg.mxu0
  %2736 = vrot.lane.b32.xlu0 %v390, 48
  %v2737 = vpop.permute.xlu0 %2736
  %v2739 = vsel %vm35, %v2399, 0
  %v2742 = vsel %vm556, %v2737, 0
  %2744 = vmatprep.subr.bf16.mxu0 0
  %2745 = vmatpush1.bf16.msra.mxu0 %v2742
  %2746 = vmatprep.subr.bf16.mxu0 0
  %2747 = vmatpush1.bf16.msra.mxu0 0
  %2748 = vmatprep.subr.bf16.mxu0 0
  %2749 = vmatpush1.bf16.msra.mxu0 0
  %2750 = vmatprep.subr.bf16.mxu0 0
  %2751 = vmatpush1.bf16.msra.mxu0 0
  %2752 = vmatprep.subr.bf16.mxu0 0
  %2753 = vmatpush1.bf16.msra.mxu0 0
  %2754 = vmatprep.subr.bf16.mxu0 0
  %2755 = vmatpush1.bf16.msra.mxu0 0
  %2756 = vmatprep.subr.bf16.mxu0 0
  %2757 = vmatpush1.bf16.msra.mxu0 0
  %2758 = vmatprep.subr.bf16.mxu0 0
  %2759 = vmatpush1.bf16.msra.mxu0 0
  %2760 = vmatprep.subr.bf16.mxu0 0
  %2761 = vmatpush1.bf16.msra.mxu0 0
  %2762 = vmatprep.subr.bf16.mxu0 0
  %2763 = vmatpush1.bf16.msra.mxu0 0
  %2764 = vmatprep.subr.bf16.mxu0 0
  %2765 = vmatpush1.bf16.msra.mxu0 0
  %2766 = vmatprep.subr.bf16.mxu0 0
  %2767 = vmatpush1.bf16.msra.mxu0 0
  %2768 = vmatprep.subr.bf16.mxu0 0
  %2769 = vmatpush1.bf16.msra.mxu0 0
  %2770 = vmatprep.subr.bf16.mxu0 0
  %2771 = vmatpush1.bf16.msra.mxu0 0
  %2772 = vmatprep.subr.bf16.mxu0 0
  %2773 = vmatpush1.bf16.msra.mxu0 0
  %2774 = vmatprep.subr.bf16.mxu0 0
  %2775 = vmatpush1.bf16.msra.mxu0 0
  %2776 = vmatprep.mubr.bf16.mxu0 0
  %2777 = vmatmul.mubr.bf16.gmra.mrb[0].mxu0 %v2739
  %v2778 = vpop.f32.mrb[0].mxu0
  %v2779 = vadd.f32 0.0, %v2778
  %v2780 = vpop.f32.mrb[0].mxu0
  %v2781 = vpop.f32.mrb[0].mxu0
  %v2782 = vpop.f32.mrb[0].mxu0
  %2783 = vdwg.mxu0
  %2784 = vrot.lane.b32.xlu0 %v32, 104
  %v2785 = vpop.permute.xlu0 %2784
  %2786 = vrot.lane.b32.xlu0 %v32, 72
  %v2787 = vpop.permute.xlu0 %2786
  %v2789 = vsel %vm35, %v2785, 0
  %v2792 = vsel %vm35, %v2787, 0
  %2794 = vmatprep.subr.bf16.mxu0 0
  %2795 = vmatpush1.bf16.xpose.msra.mxu0 %v2792
  %2796 = vmatprep.subr.bf16.mxu0 0
  %2797 = vmatpush1.bf16.xpose.msra.mxu0 0
  %2798 = vmatprep.subr.bf16.mxu0 0
  %2799 = vmatpush1.bf16.xpose.msra.mxu0 0
  %2800 = vmatprep.subr.bf16.mxu0 0
  %2801 = vmatpush1.bf16.xpose.msra.mxu0 0
  %2802 = vmatprep.subr.bf16.mxu0 0
  %2803 = vmatpush1.bf16.xpose.msra.mxu0 0
  %2804 = vmatprep.subr.bf16.mxu0 0
  %2805 = vmatpush1.bf16.xpose.msra.mxu0 0
  %2806 = vmatprep.subr.bf16.mxu0 0
  %2807 = vmatpush1.bf16.xpose.msra.mxu0 0
  %2808 = vmatprep.subr.bf16.mxu0 0
  %2809 = vmatpush1.bf16.xpose.msra.mxu0 0
  %2810 = vmatprep.subr.bf16.mxu0 0
  %2811 = vmatpush1.bf16.xpose.msra.mxu0 0
  %2812 = vmatprep.subr.bf16.mxu0 0
  %2813 = vmatpush1.bf16.xpose.msra.mxu0 0
  %2814 = vmatprep.subr.bf16.mxu0 0
  %2815 = vmatpush1.bf16.xpose.msra.mxu0 0
  %2816 = vmatprep.subr.bf16.mxu0 0
  %2817 = vmatpush1.bf16.xpose.msra.mxu0 0
  %2818 = vmatprep.subr.bf16.mxu0 0
  %2819 = vmatpush1.bf16.xpose.msra.mxu0 0
  %2820 = vmatprep.subr.bf16.mxu0 0
  %2821 = vmatpush1.bf16.xpose.msra.mxu0 0
  %2822 = vmatprep.subr.bf16.mxu0 0
  %2823 = vmatpush1.bf16.xpose.msra.mxu0 0
  %2824 = vmatprep.subr.bf16.mxu0 0
  %2825 = vmatpush1.bf16.xpose.msra.mxu0 0
  %2826 = vmatprep.mubr.bf16.mxu0 0
  %2827 = vmatmul.mubr.bf16.gmra.mrb[0].mxu0 %v2789
  %v2828 = vpop.f32.mrb[0].mxu0
  %v2829 = vadd.f32 0.0, %v2828
  %v2830 = vpop.f32.mrb[0].mxu0
  %v2831 = vpop.f32.mrb[0].mxu0
  %v2832 = vpop.f32.mrb[0].mxu0
  %2833 = vdwg.mxu0
  %2834 = vrot.lane.b32.xlu0 %v84, 104
  %v2835 = vpop.permute.xlu0 %2834
  %2836 = vrot.lane.b32.xlu0 %v84, 72
  %v2837 = vpop.permute.xlu0 %2836
  %v2839 = vsel %vm35, %v2835, 0
  %v2842 = vsel %vm35, %v2837, 0
  %2844 = vmatprep.subr.bf16.mxu0 0
  %2845 = vmatpush1.bf16.xpose.msra.mxu0 %v2842
  %2846 = vmatprep.subr.bf16.mxu0 0
  %2847 = vmatpush1.bf16.xpose.msra.mxu0 0
  %2848 = vmatprep.subr.bf16.mxu0 0
  %2849 = vmatpush1.bf16.xpose.msra.mxu0 0
  %2850 = vmatprep.subr.bf16.mxu0 0
  %2851 = vmatpush1.bf16.xpose.msra.mxu0 0
  %2852 = vmatprep.subr.bf16.mxu0 0
  %2853 = vmatpush1.bf16.xpose.msra.mxu0 0
  %2854 = vmatprep.subr.bf16.mxu0 0
  %2855 = vmatpush1.bf16.xpose.msra.mxu0 0
  %2856 = vmatprep.subr.bf16.mxu0 0
  %2857 = vmatpush1.bf16.xpose.msra.mxu0 0
  %2858 = vmatprep.subr.bf16.mxu0 0
  %2859 = vmatpush1.bf16.xpose.msra.mxu0 0
  %2860 = vmatprep.subr.bf16.mxu0 0
  %2861 = vmatpush1.bf16.xpose.msra.mxu0 0
  %2862 = vmatprep.subr.bf16.mxu0 0
  %2863 = vmatpush1.bf16.xpose.msra.mxu0 0
  %2864 = vmatprep.subr.bf16.mxu0 0
  %2865 = vmatpush1.bf16.xpose.msra.mxu0 0
  %2866 = vmatprep.subr.bf16.mxu0 0
  %2867 = vmatpush1.bf16.xpose.msra.mxu0 0
  %2868 = vmatprep.subr.bf16.mxu0 0
  %2869 = vmatpush1.bf16.xpose.msra.mxu0 0
  %2870 = vmatprep.subr.bf16.mxu0 0
  %2871 = vmatpush1.bf16.xpose.msra.mxu0 0
  %2872 = vmatprep.subr.bf16.mxu0 0
  %2873 = vmatpush1.bf16.xpose.msra.mxu0 0
  %2874 = vmatprep.subr.bf16.mxu0 0
  %2875 = vmatpush1.bf16.xpose.msra.mxu0 0
  %2876 = vmatprep.mubr.bf16.mxu0 0
  %2877 = vmatmul.mubr.bf16.gmra.mrb[0].mxu0 %v2839
  %v2878 = vpop.f32.mrb[0].mxu0
  %v2879 = vadd.f32 0.0, %v2878
  %v2880 = vpop.f32.mrb[0].mxu0
  %v2881 = vpop.f32.mrb[0].mxu0
  %v2882 = vpop.f32.mrb[0].mxu0
  %2883 = vdwg.mxu0
  %2884 = vrot.lane.b32.xlu0 %v135, 104
  %v2885 = vpop.permute.xlu0 %2884
  %2886 = vrot.lane.b32.xlu0 %v135, 72
  %v2887 = vpop.permute.xlu0 %2886
  %v2889 = vsel %vm35, %v2885, 0
  %v2892 = vsel %vm35, %v2887, 0
  %2894 = vmatprep.subr.bf16.mxu0 0
  %2895 = vmatpush1.bf16.xpose.msra.mxu0 %v2892
  %2896 = vmatprep.subr.bf16.mxu0 0
  %2897 = vmatpush1.bf16.xpose.msra.mxu0 0
  %2898 = vmatprep.subr.bf16.mxu0 0
  %2899 = vmatpush1.bf16.xpose.msra.mxu0 0
  %2900 = vmatprep.subr.bf16.mxu0 0
  %2901 = vmatpush1.bf16.xpose.msra.mxu0 0
  %2902 = vmatprep.subr.bf16.mxu0 0
  %2903 = vmatpush1.bf16.xpose.msra.mxu0 0
  %2904 = vmatprep.subr.bf16.mxu0 0
  %2905 = vmatpush1.bf16.xpose.msra.mxu0 0
  %2906 = vmatprep.subr.bf16.mxu0 0
  %2907 = vmatpush1.bf16.xpose.msra.mxu0 0
  %2908 = vmatprep.subr.bf16.mxu0 0
  %2909 = vmatpush1.bf16.xpose.msra.mxu0 0
  %2910 = vmatprep.subr.bf16.mxu0 0
  %2911 = vmatpush1.bf16.xpose.msra.mxu0 0
  %2912 = vmatprep.subr.bf16.mxu0 0
  %2913 = vmatpush1.bf16.xpose.msra.mxu0 0
  %2914 = vmatprep.subr.bf16.mxu0 0
  %2915 = vmatpush1.bf16.xpose.msra.mxu0 0
  %2916 = vmatprep.subr.bf16.mxu0 0
  %2917 = vmatpush1.bf16.xpose.msra.mxu0 0
  %2918 = vmatprep.subr.bf16.mxu0 0
  %2919 = vmatpush1.bf16.xpose.msra.mxu0 0
  %2920 = vmatprep.subr.bf16.mxu0 0
  %2921 = vmatpush1.bf16.xpose.msra.mxu0 0
  %2922 = vmatprep.subr.bf16.mxu0 0
  %2923 = vmatpush1.bf16.xpose.msra.mxu0 0
  %2924 = vmatprep.subr.bf16.mxu0 0
  %2925 = vmatpush1.bf16.xpose.msra.mxu0 0
  %2926 = vmatprep.mubr.bf16.mxu0 0
  %2927 = vmatmul.mubr.bf16.gmra.mrb[0].mxu0 %v2889
  %v2928 = vpop.f32.mrb[0].mxu0
  %v2929 = vadd.f32 0.0, %v2928
  %v2930 = vpop.f32.mrb[0].mxu0
  %v2931 = vpop.f32.mrb[0].mxu0
  %v2932 = vpop.f32.mrb[0].mxu0
  %2933 = vdwg.mxu0
  %2934 = vrot.lane.b32.xlu0 %v186, 104
  %v2935 = vpop.permute.xlu0 %2934
  %2936 = vrot.lane.b32.xlu0 %v186, 72
  %v2937 = vpop.permute.xlu0 %2936
  %v2939 = vsel %vm35, %v2935, 0
  %v2942 = vsel %vm35, %v2937, 0
  %2944 = vmatprep.subr.bf16.mxu0 0
  %2945 = vmatpush1.bf16.xpose.msra.mxu0 %v2942
  %2946 = vmatprep.subr.bf16.mxu0 0
  %2947 = vmatpush1.bf16.xpose.msra.mxu0 0
  %2948 = vmatprep.subr.bf16.mxu0 0
  %2949 = vmatpush1.bf16.xpose.msra.mxu0 0
  %2950 = vmatprep.subr.bf16.mxu0 0
  %2951 = vmatpush1.bf16.xpose.msra.mxu0 0
  %2952 = vmatprep.subr.bf16.mxu0 0
  %2953 = vmatpush1.bf16.xpose.msra.mxu0 0
  %2954 = vmatprep.subr.bf16.mxu0 0
  %2955 = vmatpush1.bf16.xpose.msra.mxu0 0
  %2956 = vmatprep.subr.bf16.mxu0 0
  %2957 = vmatpush1.bf16.xpose.msra.mxu0 0
  %2958 = vmatprep.subr.bf16.mxu0 0
  %2959 = vmatpush1.bf16.xpose.msra.mxu0 0
  %2960 = vmatprep.subr.bf16.mxu0 0
  %2961 = vmatpush1.bf16.xpose.msra.mxu0 0
  %2962 = vmatprep.subr.bf16.mxu0 0
  %2963 = vmatpush1.bf16.xpose.msra.mxu0 0
  %2964 = vmatprep.subr.bf16.mxu0 0
  %2965 = vmatpush1.bf16.xpose.msra.mxu0 0
  %2966 = vmatprep.subr.bf16.mxu0 0
  %2967 = vmatpush1.bf16.xpose.msra.mxu0 0
  %2968 = vmatprep.subr.bf16.mxu0 0
  %2969 = vmatpush1.bf16.xpose.msra.mxu0 0
  %2970 = vmatprep.subr.bf16.mxu0 0
  %2971 = vmatpush1.bf16.xpose.msra.mxu0 0
  %2972 = vmatprep.subr.bf16.mxu0 0
  %2973 = vmatpush1.bf16.xpose.msra.mxu0 0
  %2974 = vmatprep.subr.bf16.mxu0 0
  %2975 = vmatpush1.bf16.xpose.msra.mxu0 0
  %2976 = vmatprep.mubr.bf16.mxu0 0
  %2977 = vmatmul.mubr.bf16.gmra.mrb[0].mxu0 %v2939
  %v2978 = vpop.f32.mrb[0].mxu0
  %v2979 = vadd.f32 0.0, %v2978
  %v2980 = vpop.f32.mrb[0].mxu0
  %v2981 = vpop.f32.mrb[0].mxu0
  %v2982 = vpop.f32.mrb[0].mxu0
  %2983 = vdwg.mxu0
  %2984 = vrot.lane.b32.xlu0 %v237, 104
  %v2985 = vpop.permute.xlu0 %2984
  %2986 = vrot.lane.b32.xlu0 %v237, 72
  %v2987 = vpop.permute.xlu0 %2986
  %v2989 = vsel %vm35, %v2985, 0
  %v2992 = vsel %vm35, %v2987, 0
  %2994 = vmatprep.subr.bf16.mxu0 0
  %2995 = vmatpush1.bf16.xpose.msra.mxu0 %v2992
  %2996 = vmatprep.subr.bf16.mxu0 0
  %2997 = vmatpush1.bf16.xpose.msra.mxu0 0
  %2998 = vmatprep.subr.bf16.mxu0 0
  %2999 = vmatpush1.bf16.xpose.msra.mxu0 0
  %3000 = vmatprep.subr.bf16.mxu0 0
  %3001 = vmatpush1.bf16.xpose.msra.mxu0 0
  %3002 = vmatprep.subr.bf16.mxu0 0
  %3003 = vmatpush1.bf16.xpose.msra.mxu0 0
  %3004 = vmatprep.subr.bf16.mxu0 0
  %3005 = vmatpush1.bf16.xpose.msra.mxu0 0
  %3006 = vmatprep.subr.bf16.mxu0 0
  %3007 = vmatpush1.bf16.xpose.msra.mxu0 0
  %3008 = vmatprep.subr.bf16.mxu0 0
  %3009 = vmatpush1.bf16.xpose.msra.mxu0 0
  %3010 = vmatprep.subr.bf16.mxu0 0
  %3011 = vmatpush1.bf16.xpose.msra.mxu0 0
  %3012 = vmatprep.subr.bf16.mxu0 0
  %3013 = vmatpush1.bf16.xpose.msra.mxu0 0
  %3014 = vmatprep.subr.bf16.mxu0 0
  %3015 = vmatpush1.bf16.xpose.msra.mxu0 0
  %3016 = vmatprep.subr.bf16.mxu0 0
  %3017 = vmatpush1.bf16.xpose.msra.mxu0 0
  %3018 = vmatprep.subr.bf16.mxu0 0
  %3019 = vmatpush1.bf16.xpose.msra.mxu0 0
  %3020 = vmatprep.subr.bf16.mxu0 0
  %3021 = vmatpush1.bf16.xpose.msra.mxu0 0
  %3022 = vmatprep.subr.bf16.mxu0 0
  %3023 = vmatpush1.bf16.xpose.msra.mxu0 0
  %3024 = vmatprep.subr.bf16.mxu0 0
  %3025 = vmatpush1.bf16.xpose.msra.mxu0 0
  %3026 = vmatprep.mubr.bf16.mxu0 0
  %3027 = vmatmul.mubr.bf16.gmra.mrb[0].mxu0 %v2989
  %v3028 = vpop.f32.mrb[0].mxu0
  %v3029 = vadd.f32 0.0, %v3028
  %v3030 = vpop.f32.mrb[0].mxu0
  %v3031 = vpop.f32.mrb[0].mxu0
  %v3032 = vpop.f32.mrb[0].mxu0
  %3033 = vdwg.mxu0
  %3034 = vrot.lane.b32.xlu0 %v288, 104
  %v3035 = vpop.permute.xlu0 %3034
  %3036 = vrot.lane.b32.xlu0 %v288, 72
  %v3037 = vpop.permute.xlu0 %3036
  %v3039 = vsel %vm35, %v3035, 0
  %v3042 = vsel %vm35, %v3037, 0
  %3044 = vmatprep.subr.bf16.mxu0 0
  %3045 = vmatpush1.bf16.xpose.msra.mxu0 %v3042
  %3046 = vmatprep.subr.bf16.mxu0 0
  %3047 = vmatpush1.bf16.xpose.msra.mxu0 0
  %3048 = vmatprep.subr.bf16.mxu0 0
  %3049 = vmatpush1.bf16.xpose.msra.mxu0 0
  %3050 = vmatprep.subr.bf16.mxu0 0
  %3051 = vmatpush1.bf16.xpose.msra.mxu0 0
  %3052 = vmatprep.subr.bf16.mxu0 0
  %3053 = vmatpush1.bf16.xpose.msra.mxu0 0
  %3054 = vmatprep.subr.bf16.mxu0 0
  %3055 = vmatpush1.bf16.xpose.msra.mxu0 0
  %3056 = vmatprep.subr.bf16.mxu0 0
  %3057 = vmatpush1.bf16.xpose.msra.mxu0 0
  %3058 = vmatprep.subr.bf16.mxu0 0
  %3059 = vmatpush1.bf16.xpose.msra.mxu0 0
  %3060 = vmatprep.subr.bf16.mxu0 0
  %3061 = vmatpush1.bf16.xpose.msra.mxu0 0
  %3062 = vmatprep.subr.bf16.mxu0 0
  %3063 = vmatpush1.bf16.xpose.msra.mxu0 0
  %3064 = vmatprep.subr.bf16.mxu0 0
  %3065 = vmatpush1.bf16.xpose.msra.mxu0 0
  %3066 = vmatprep.subr.bf16.mxu0 0
  %3067 = vmatpush1.bf16.xpose.msra.mxu0 0
  %3068 = vmatprep.subr.bf16.mxu0 0
  %3069 = vmatpush1.bf16.xpose.msra.mxu0 0
  %3070 = vmatprep.subr.bf16.mxu0 0
  %3071 = vmatpush1.bf16.xpose.msra.mxu0 0
  %3072 = vmatprep.subr.bf16.mxu0 0
  %3073 = vmatpush1.bf16.xpose.msra.mxu0 0
  %3074 = vmatprep.subr.bf16.mxu0 0
  %3075 = vmatpush1.bf16.xpose.msra.mxu0 0
  %3076 = vmatprep.mubr.bf16.mxu0 0
  %3077 = vmatmul.mubr.bf16.gmra.mrb[0].mxu0 %v3039
  %v3078 = vpop.f32.mrb[0].mxu0
  %v3079 = vadd.f32 0.0, %v3078
  %v3080 = vpop.f32.mrb[0].mxu0
  %v3081 = vpop.f32.mrb[0].mxu0
  %v3082 = vpop.f32.mrb[0].mxu0
  %3083 = vdwg.mxu0
  %3084 = vrot.lane.b32.xlu0 %v339, 104
  %v3085 = vpop.permute.xlu0 %3084
  %3086 = vrot.lane.b32.xlu0 %v339, 72
  %v3087 = vpop.permute.xlu0 %3086
  %v3089 = vsel %vm35, %v3085, 0
  %v3092 = vsel %vm35, %v3087, 0
  %3094 = vmatprep.subr.bf16.mxu0 0
  %3095 = vmatpush1.bf16.xpose.msra.mxu0 %v3092
  %3096 = vmatprep.subr.bf16.mxu0 0
  %3097 = vmatpush1.bf16.xpose.msra.mxu0 0
  %3098 = vmatprep.subr.bf16.mxu0 0
  %3099 = vmatpush1.bf16.xpose.msra.mxu0 0
  %3100 = vmatprep.subr.bf16.mxu0 0
  %3101 = vmatpush1.bf16.xpose.msra.mxu0 0
  %3102 = vmatprep.subr.bf16.mxu0 0
  %3103 = vmatpush1.bf16.xpose.msra.mxu0 0
  %3104 = vmatprep.subr.bf16.mxu0 0
  %3105 = vmatpush1.bf16.xpose.msra.mxu0 0
  %3106 = vmatprep.subr.bf16.mxu0 0
  %3107 = vmatpush1.bf16.xpose.msra.mxu0 0
  %3108 = vmatprep.subr.bf16.mxu0 0
  %3109 = vmatpush1.bf16.xpose.msra.mxu0 0
  %3110 = vmatprep.subr.bf16.mxu0 0
  %3111 = vmatpush1.bf16.xpose.msra.mxu0 0
  %3112 = vmatprep.subr.bf16.mxu0 0
  %3113 = vmatpush1.bf16.xpose.msra.mxu0 0
  %3114 = vmatprep.subr.bf16.mxu0 0
  %3115 = vmatpush1.bf16.xpose.msra.mxu0 0
  %3116 = vmatprep.subr.bf16.mxu0 0
  %3117 = vmatpush1.bf16.xpose.msra.mxu0 0
  %3118 = vmatprep.subr.bf16.mxu0 0
  %3119 = vmatpush1.bf16.xpose.msra.mxu0 0
  %3120 = vmatprep.subr.bf16.mxu0 0
  %3121 = vmatpush1.bf16.xpose.msra.mxu0 0
  %3122 = vmatprep.subr.bf16.mxu0 0
  %3123 = vmatpush1.bf16.xpose.msra.mxu0 0
  %3124 = vmatprep.subr.bf16.mxu0 0
  %3125 = vmatpush1.bf16.xpose.msra.mxu0 0
  %3126 = vmatprep.mubr.bf16.mxu0 0
  %3127 = vmatmul.mubr.bf16.gmra.mrb[0].mxu0 %v3089
  %v3128 = vpop.f32.mrb[0].mxu0
  %v3129 = vadd.f32 0.0, %v3128
  %v3130 = vpop.f32.mrb[0].mxu0
  %v3131 = vpop.f32.mrb[0].mxu0
  %v3132 = vpop.f32.mrb[0].mxu0
  %3133 = vdwg.mxu0
  %3134 = vrot.lane.b32.xlu0 %v390, 104
  %v3135 = vpop.permute.xlu0 %3134
  %3136 = vrot.lane.b32.xlu0 %v390, 72
  %v3137 = vpop.permute.xlu0 %3136
  %v3139 = vsel %vm35, %v3135, 0
  %v3142 = vsel %vm35, %v3137, 0
  %3144 = vmatprep.subr.bf16.mxu0 0
  %3145 = vmatpush1.bf16.xpose.msra.mxu0 %v3142
  %3146 = vmatprep.subr.bf16.mxu0 0
  %3147 = vmatpush1.bf16.xpose.msra.mxu0 0
  %3148 = vmatprep.subr.bf16.mxu0 0
  %3149 = vmatpush1.bf16.xpose.msra.mxu0 0
  %3150 = vmatprep.subr.bf16.mxu0 0
  %3151 = vmatpush1.bf16.xpose.msra.mxu0 0
  %3152 = vmatprep.subr.bf16.mxu0 0
  %3153 = vmatpush1.bf16.xpose.msra.mxu0 0
  %3154 = vmatprep.subr.bf16.mxu0 0
  %3155 = vmatpush1.bf16.xpose.msra.mxu0 0
  %3156 = vmatprep.subr.bf16.mxu0 0
  %3157 = vmatpush1.bf16.xpose.msra.mxu0 0
  %3158 = vmatprep.subr.bf16.mxu0 0
  %3159 = vmatpush1.bf16.xpose.msra.mxu0 0
  %3160 = vmatprep.subr.bf16.mxu0 0
  %3161 = vmatpush1.bf16.xpose.msra.mxu0 0
  %3162 = vmatprep.subr.bf16.mxu0 0
  %3163 = vmatpush1.bf16.xpose.msra.mxu0 0
  %3164 = vmatprep.subr.bf16.mxu0 0
  %3165 = vmatpush1.bf16.xpose.msra.mxu0 0
  %3166 = vmatprep.subr.bf16.mxu0 0
  %3167 = vmatpush1.bf16.xpose.msra.mxu0 0
  %3168 = vmatprep.subr.bf16.mxu0 0
  %3169 = vmatpush1.bf16.xpose.msra.mxu0 0
  %3170 = vmatprep.subr.bf16.mxu0 0
  %3171 = vmatpush1.bf16.xpose.msra.mxu0 0
  %3172 = vmatprep.subr.bf16.mxu0 0
  %3173 = vmatpush1.bf16.xpose.msra.mxu0 0
  %3174 = vmatprep.subr.bf16.mxu0 0
  %3175 = vmatpush1.bf16.xpose.msra.mxu0 0
  %3176 = vmatprep.mubr.bf16.mxu0 0
  %3177 = vmatmul.mubr.bf16.gmra.mrb[0].mxu0 %v3139
  %v3178 = vpop.f32.mrb[0].mxu0
  %v3179 = vadd.f32 0.0, %v3178
  %v3180 = vpop.f32.mrb[0].mxu0
  %v3181 = vpop.f32.mrb[0].mxu0
  %v3182 = vpop.f32.mrb[0].mxu0
  %3183 = vdwg.mxu0
  %v3184 = vmul.f32 %v2829, 0.35355338
  %v3185 = vmul.f32 %v2879, 0.35355338
  %v3186 = vmul.f32 %v2929, 0.35355338
  %v3187 = vmul.f32 %v2979, 0.35355338
  %v3188 = vmul.f32 %v3029, 0.35355338
  %v3189 = vmul.f32 %v3079, 0.35355338
  %v3190 = vmul.f32 %v3129, 0.35355338
  %v3191 = vmul.f32 %v3179, 0.35355338
  %3192 = vrot.lane.b32.xlu0 %v22, 104
  %v3193 = vpop.permute.xlu0 %3192
  %3194 = vrot.lane.b32.xlu0 %v23, 104
  %v3195 = vpop.permute.xlu0 %3194
  %3196 = vrot.lane.b32.xlu0 %v24, 104
  %v3197 = vpop.permute.xlu0 %3196
  %3198 = vrot.lane.b32.xlu0 %v25, 104
  %v3199 = vpop.permute.xlu0 %3198
  %3200 = vrot.lane.b32.xlu0 %v26, 104
  %v3201 = vpop.permute.xlu0 %3200
  %3202 = vrot.lane.b32.xlu0 %v27, 104
  %v3203 = vpop.permute.xlu0 %3202
  %3204 = vrot.lane.b32.xlu0 %v28, 104
  %v3205 = vpop.permute.xlu0 %3204
  %3206 = vrot.lane.b32.xlu0 %v29, 104
  %v3207 = vpop.permute.xlu0 %3206
  %v3216 = vadd.f32 %v3184, %v3193
  %v3217 = vadd.f32 %v3185, %v3195
  %v3218 = vadd.f32 %v3186, %v3197
  %v3219 = vadd.f32 %v3187, %v3199
  %v3220 = vadd.f32 %v3188, %v3201
  %v3221 = vadd.f32 %v3189, %v3203
  %v3222 = vadd.f32 %v3190, %v3205
  %v3223 = vadd.f32 %v3191, %v3207
  %v3224 = vsel %vm35, %v3216, -inf
  %3225 = vmax.xlane.f32.xlu0 %v3224
  %v3226 = vpop.xlane.xlu0 %3225
  %v3227 = vsel %vm35, %v3217, -inf
  %3228 = vmax.xlane.f32.xlu0 %v3227
  %v3229 = vpop.xlane.xlu0 %3228
  %v3230 = vsel %vm35, %v3218, -inf
  %3231 = vmax.xlane.f32.xlu0 %v3230
  %v3232 = vpop.xlane.xlu0 %3231
  %v3233 = vsel %vm35, %v3219, -inf
  %3234 = vmax.xlane.f32.xlu0 %v3233
  %v3235 = vpop.xlane.xlu0 %3234
  %v3236 = vsel %vm35, %v3220, -inf
  %3237 = vmax.xlane.f32.xlu0 %v3236
  %v3238 = vpop.xlane.xlu0 %3237
  %v3239 = vsel %vm35, %v3221, -inf
  %3240 = vmax.xlane.f32.xlu0 %v3239
  %v3241 = vpop.xlane.xlu0 %3240
  %v3242 = vsel %vm35, %v3222, -inf
  %3243 = vmax.xlane.f32.xlu0 %v3242
  %v3244 = vpop.xlane.xlu0 %3243
  %v3245 = vsel %vm35, %v3223, -inf
  %3246 = vmax.xlane.f32.xlu0 %v3245
  %v3247 = vpop.xlane.xlu0 %3246
  %v3248 = vsub.f32 %v3216, %v3226
  %v3249 = vsub.f32 %v3217, %v3229
  %v3250 = vsub.f32 %v3218, %v3232
  %v3251 = vsub.f32 %v3219, %v3235
  %v3252 = vsub.f32 %v3220, %v3238
  %v3253 = vsub.f32 %v3221, %v3241
  %v3254 = vsub.f32 %v3222, %v3244
  %v3255 = vsub.f32 %v3223, %v3247
  %v3256 = vmul.f32 %v3248, 1.442695
  %v3257 = vpow.pop %v3256
  %v3258 = vmul.f32 %v3249, 1.442695
  %v3259 = vpow.pop %v3258
  %v3260 = vmul.f32 %v3250, 1.442695
  %v3261 = vpow.pop %v3260
  %v3262 = vmul.f32 %v3251, 1.442695
  %v3263 = vpow.pop %v3262
  %v3264 = vmul.f32 %v3252, 1.442695
  %v3265 = vpow.pop %v3264
  %v3266 = vmul.f32 %v3253, 1.442695
  %v3267 = vpow.pop %v3266
  %v3268 = vmul.f32 %v3254, 1.442695
  %v3269 = vpow.pop %v3268
  %v3270 = vmul.f32 %v3255, 1.442695
  %v3271 = vpow.pop %v3270
  %v3272 = vsel %vm35, %v3257, 0.0
  %3273 = vadd.xlane.f32.xlu0 %v3272
  %v3274 = vpop.xlane.xlu0 %3273
  %v3275 = vsel %vm35, %v3259, 0.0
  %3276 = vadd.xlane.f32.xlu0 %v3275
  %v3277 = vpop.xlane.xlu0 %3276
  %v3278 = vsel %vm35, %v3261, 0.0
  %3279 = vadd.xlane.f32.xlu0 %v3278
  %v3280 = vpop.xlane.xlu0 %3279
  %v3281 = vsel %vm35, %v3263, 0.0
  %3282 = vadd.xlane.f32.xlu0 %v3281
  %v3283 = vpop.xlane.xlu0 %3282
  %v3284 = vsel %vm35, %v3265, 0.0
  %3285 = vadd.xlane.f32.xlu0 %v3284
  %v3286 = vpop.xlane.xlu0 %3285
  %v3287 = vsel %vm35, %v3267, 0.0
  %3288 = vadd.xlane.f32.xlu0 %v3287
  %v3289 = vpop.xlane.xlu0 %3288
  %v3290 = vsel %vm35, %v3269, 0.0
  %3291 = vadd.xlane.f32.xlu0 %v3290
  %v3292 = vpop.xlane.xlu0 %3291
  %v3293 = vsel %vm35, %v3271, 0.0
  %3294 = vadd.xlane.f32.xlu0 %v3293
  %v3295 = vpop.xlane.xlu0 %3294
  %v3296 = vrcp.pop %v3274
  %v3297 = vrcp.pop %v3277
  %v3298 = vrcp.pop %v3280
  %v3299 = vrcp.pop %v3283
  %v3300 = vrcp.pop %v3286
  %v3301 = vrcp.pop %v3289
  %v3302 = vrcp.pop %v3292
  %v3303 = vrcp.pop %v3295
  %v3304 = vmul.f32 %v3257, %v3296
  %v3305 = vmul.f32 %v3259, %v3297
  %v3306 = vmul.f32 %v3261, %v3298
  %v3307 = vmul.f32 %v3263, %v3299
  %v3308 = vmul.f32 %v3265, %v3300
  %v3309 = vmul.f32 %v3267, %v3301
  %v3310 = vmul.f32 %v3269, %v3302
  %v3311 = vmul.f32 %v3271, %v3303
  %v3312 = vpack.c.bf16 %v3304, %v3304
  %v3313 = vpack.c.bf16 %v3305, %v3305
  %v3314 = vpack.c.bf16 %v3306, %v3306
  %v3315 = vpack.c.bf16 %v3307, %v3307
  %v3316 = vpack.c.bf16 %v3308, %v3308
  %v3317 = vpack.c.bf16 %v3309, %v3309
  %v3318 = vpack.c.bf16 %v3310, %v3310
  %v3319 = vpack.c.bf16 %v3311, %v3311
  %3320 = vrot.lane.b32.xlu0 %v32, 40
  %v3321 = vpop.permute.xlu0 %3320
  %v3323 = vsel %vm35, %v3312, 0
  %v3326 = vsel %vm556, %v3321, 0
  %3328 = vmatprep.subr.bf16.mxu0 0
  %3329 = vmatpush1.bf16.msra.mxu0 %v3326
  %3330 = vmatprep.subr.bf16.mxu0 0
  %3331 = vmatpush1.bf16.msra.mxu0 0
  %3332 = vmatprep.subr.bf16.mxu0 0
  %3333 = vmatpush1.bf16.msra.mxu0 0
  %3334 = vmatprep.subr.bf16.mxu0 0
  %3335 = vmatpush1.bf16.msra.mxu0 0
  %3336 = vmatprep.subr.bf16.mxu0 0
  %3337 = vmatpush1.bf16.msra.mxu0 0
  %3338 = vmatprep.subr.bf16.mxu0 0
  %3339 = vmatpush1.bf16.msra.mxu0 0
  %3340 = vmatprep.subr.bf16.mxu0 0
  %3341 = vmatpush1.bf16.msra.mxu0 0
  %3342 = vmatprep.subr.bf16.mxu0 0
  %3343 = vmatpush1.bf16.msra.mxu0 0
  %3344 = vmatprep.subr.bf16.mxu0 0
  %3345 = vmatpush1.bf16.msra.mxu0 0
  %3346 = vmatprep.subr.bf16.mxu0 0
  %3347 = vmatpush1.bf16.msra.mxu0 0
  %3348 = vmatprep.subr.bf16.mxu0 0
  %3349 = vmatpush1.bf16.msra.mxu0 0
  %3350 = vmatprep.subr.bf16.mxu0 0
  %3351 = vmatpush1.bf16.msra.mxu0 0
  %3352 = vmatprep.subr.bf16.mxu0 0
  %3353 = vmatpush1.bf16.msra.mxu0 0
  %3354 = vmatprep.subr.bf16.mxu0 0
  %3355 = vmatpush1.bf16.msra.mxu0 0
  %3356 = vmatprep.subr.bf16.mxu0 0
  %3357 = vmatpush1.bf16.msra.mxu0 0
  %3358 = vmatprep.subr.bf16.mxu0 0
  %3359 = vmatpush1.bf16.msra.mxu0 0
  %3360 = vmatprep.mubr.bf16.mxu0 0
  %3361 = vmatmul.mubr.bf16.gmra.mrb[0].mxu0 %v3323
  %v3362 = vpop.f32.mrb[0].mxu0
  %v3363 = vadd.f32 0.0, %v3362
  %v3364 = vpop.f32.mrb[0].mxu0
  %v3365 = vpop.f32.mrb[0].mxu0
  %v3366 = vpop.f32.mrb[0].mxu0
  %3367 = vdwg.mxu0
  %3368 = vrot.lane.b32.xlu0 %v84, 40
  %v3369 = vpop.permute.xlu0 %3368
  %v3371 = vsel %vm35, %v3313, 0
  %v3374 = vsel %vm556, %v3369, 0
  %3376 = vmatprep.subr.bf16.mxu0 0
  %3377 = vmatpush1.bf16.msra.mxu0 %v3374
  %3378 = vmatprep.subr.bf16.mxu0 0
  %3379 = vmatpush1.bf16.msra.mxu0 0
  %3380 = vmatprep.subr.bf16.mxu0 0
  %3381 = vmatpush1.bf16.msra.mxu0 0
  %3382 = vmatprep.subr.bf16.mxu0 0
  %3383 = vmatpush1.bf16.msra.mxu0 0
  %3384 = vmatprep.subr.bf16.mxu0 0
  %3385 = vmatpush1.bf16.msra.mxu0 0
  %3386 = vmatprep.subr.bf16.mxu0 0
  %3387 = vmatpush1.bf16.msra.mxu0 0
  %3388 = vmatprep.subr.bf16.mxu0 0
  %3389 = vmatpush1.bf16.msra.mxu0 0
  %3390 = vmatprep.subr.bf16.mxu0 0
  %3391 = vmatpush1.bf16.msra.mxu0 0
  %3392 = vmatprep.subr.bf16.mxu0 0
  %3393 = vmatpush1.bf16.msra.mxu0 0
  %3394 = vmatprep.subr.bf16.mxu0 0
  %3395 = vmatpush1.bf16.msra.mxu0 0
  %3396 = vmatprep.subr.bf16.mxu0 0
  %3397 = vmatpush1.bf16.msra.mxu0 0
  %3398 = vmatprep.subr.bf16.mxu0 0
  %3399 = vmatpush1.bf16.msra.mxu0 0
  %3400 = vmatprep.subr.bf16.mxu0 0
  %3401 = vmatpush1.bf16.msra.mxu0 0
  %3402 = vmatprep.subr.bf16.mxu0 0
  %3403 = vmatpush1.bf16.msra.mxu0 0
  %3404 = vmatprep.subr.bf16.mxu0 0
  %3405 = vmatpush1.bf16.msra.mxu0 0
  %3406 = vmatprep.subr.bf16.mxu0 0
  %3407 = vmatpush1.bf16.msra.mxu0 0
  %3408 = vmatprep.mubr.bf16.mxu0 0
  %3409 = vmatmul.mubr.bf16.gmra.mrb[0].mxu0 %v3371
  %v3410 = vpop.f32.mrb[0].mxu0
  %v3411 = vadd.f32 0.0, %v3410
  %v3412 = vpop.f32.mrb[0].mxu0
  %v3413 = vpop.f32.mrb[0].mxu0
  %v3414 = vpop.f32.mrb[0].mxu0
  %3415 = vdwg.mxu0
  %3416 = vrot.lane.b32.xlu0 %v135, 40
  %v3417 = vpop.permute.xlu0 %3416
  %v3419 = vsel %vm35, %v3314, 0
  %v3422 = vsel %vm556, %v3417, 0
  %3424 = vmatprep.subr.bf16.mxu0 0
  %3425 = vmatpush1.bf16.msra.mxu0 %v3422
  %3426 = vmatprep.subr.bf16.mxu0 0
  %3427 = vmatpush1.bf16.msra.mxu0 0
  %3428 = vmatprep.subr.bf16.mxu0 0
  %3429 = vmatpush1.bf16.msra.mxu0 0
  %3430 = vmatprep.subr.bf16.mxu0 0
  %3431 = vmatpush1.bf16.msra.mxu0 0
  %3432 = vmatprep.subr.bf16.mxu0 0
  %3433 = vmatpush1.bf16.msra.mxu0 0
  %3434 = vmatprep.subr.bf16.mxu0 0
  %3435 = vmatpush1.bf16.msra.mxu0 0
  %3436 = vmatprep.subr.bf16.mxu0 0
  %3437 = vmatpush1.bf16.msra.mxu0 0
  %3438 = vmatprep.subr.bf16.mxu0 0
  %3439 = vmatpush1.bf16.msra.mxu0 0
  %3440 = vmatprep.subr.bf16.mxu0 0
  %3441 = vmatpush1.bf16.msra.mxu0 0
  %3442 = vmatprep.subr.bf16.mxu0 0
  %3443 = vmatpush1.bf16.msra.mxu0 0
  %3444 = vmatprep.subr.bf16.mxu0 0
  %3445 = vmatpush1.bf16.msra.mxu0 0
  %3446 = vmatprep.subr.bf16.mxu0 0
  %3447 = vmatpush1.bf16.msra.mxu0 0
  %3448 = vmatprep.subr.bf16.mxu0 0
  %3449 = vmatpush1.bf16.msra.mxu0 0
  %3450 = vmatprep.subr.bf16.mxu0 0
  %3451 = vmatpush1.bf16.msra.mxu0 0
  %3452 = vmatprep.subr.bf16.mxu0 0
  %3453 = vmatpush1.bf16.msra.mxu0 0
  %3454 = vmatprep.subr.bf16.mxu0 0
  %3455 = vmatpush1.bf16.msra.mxu0 0
  %3456 = vmatprep.mubr.bf16.mxu0 0
  %3457 = vmatmul.mubr.bf16.gmra.mrb[0].mxu0 %v3419
  %v3458 = vpop.f32.mrb[0].mxu0
  %v3459 = vadd.f32 0.0, %v3458
  %v3460 = vpop.f32.mrb[0].mxu0
  %v3461 = vpop.f32.mrb[0].mxu0
  %v3462 = vpop.f32.mrb[0].mxu0
  %3463 = vdwg.mxu0
  %3464 = vrot.lane.b32.xlu0 %v186, 40
  %v3465 = vpop.permute.xlu0 %3464
  %v3467 = vsel %vm35, %v3315, 0
  %v3470 = vsel %vm556, %v3465, 0
  %3472 = vmatprep.subr.bf16.mxu0 0
  %3473 = vmatpush1.bf16.msra.mxu0 %v3470
  %3474 = vmatprep.subr.bf16.mxu0 0
  %3475 = vmatpush1.bf16.msra.mxu0 0
  %3476 = vmatprep.subr.bf16.mxu0 0
  %3477 = vmatpush1.bf16.msra.mxu0 0
  %3478 = vmatprep.subr.bf16.mxu0 0
  %3479 = vmatpush1.bf16.msra.mxu0 0
  %3480 = vmatprep.subr.bf16.mxu0 0
  %3481 = vmatpush1.bf16.msra.mxu0 0
  %3482 = vmatprep.subr.bf16.mxu0 0
  %3483 = vmatpush1.bf16.msra.mxu0 0
  %3484 = vmatprep.subr.bf16.mxu0 0
  %3485 = vmatpush1.bf16.msra.mxu0 0
  %3486 = vmatprep.subr.bf16.mxu0 0
  %3487 = vmatpush1.bf16.msra.mxu0 0
  %3488 = vmatprep.subr.bf16.mxu0 0
  %3489 = vmatpush1.bf16.msra.mxu0 0
  %3490 = vmatprep.subr.bf16.mxu0 0
  %3491 = vmatpush1.bf16.msra.mxu0 0
  %3492 = vmatprep.subr.bf16.mxu0 0
  %3493 = vmatpush1.bf16.msra.mxu0 0
  %3494 = vmatprep.subr.bf16.mxu0 0
  %3495 = vmatpush1.bf16.msra.mxu0 0
  %3496 = vmatprep.subr.bf16.mxu0 0
  %3497 = vmatpush1.bf16.msra.mxu0 0
  %3498 = vmatprep.subr.bf16.mxu0 0
  %3499 = vmatpush1.bf16.msra.mxu0 0
  %3500 = vmatprep.subr.bf16.mxu0 0
  %3501 = vmatpush1.bf16.msra.mxu0 0
  %3502 = vmatprep.subr.bf16.mxu0 0
  %3503 = vmatpush1.bf16.msra.mxu0 0
  %3504 = vmatprep.mubr.bf16.mxu0 0
  %3505 = vmatmul.mubr.bf16.gmra.mrb[0].mxu0 %v3467
  %v3506 = vpop.f32.mrb[0].mxu0
  %v3507 = vadd.f32 0.0, %v3506
  %v3508 = vpop.f32.mrb[0].mxu0
  %v3509 = vpop.f32.mrb[0].mxu0
  %v3510 = vpop.f32.mrb[0].mxu0
  %3511 = vdwg.mxu0
  %3512 = vrot.lane.b32.xlu0 %v237, 40
  %v3513 = vpop.permute.xlu0 %3512
  %v3515 = vsel %vm35, %v3316, 0
  %v3518 = vsel %vm556, %v3513, 0
  %3520 = vmatprep.subr.bf16.mxu0 0
  %3521 = vmatpush1.bf16.msra.mxu0 %v3518
  %3522 = vmatprep.subr.bf16.mxu0 0
  %3523 = vmatpush1.bf16.msra.mxu0 0
  %3524 = vmatprep.subr.bf16.mxu0 0
  %3525 = vmatpush1.bf16.msra.mxu0 0
  %3526 = vmatprep.subr.bf16.mxu0 0
  %3527 = vmatpush1.bf16.msra.mxu0 0
  %3528 = vmatprep.subr.bf16.mxu0 0
  %3529 = vmatpush1.bf16.msra.mxu0 0
  %3530 = vmatprep.subr.bf16.mxu0 0
  %3531 = vmatpush1.bf16.msra.mxu0 0
  %3532 = vmatprep.subr.bf16.mxu0 0
  %3533 = vmatpush1.bf16.msra.mxu0 0
  %3534 = vmatprep.subr.bf16.mxu0 0
  %3535 = vmatpush1.bf16.msra.mxu0 0
  %3536 = vmatprep.subr.bf16.mxu0 0
  %3537 = vmatpush1.bf16.msra.mxu0 0
  %3538 = vmatprep.subr.bf16.mxu0 0
  %3539 = vmatpush1.bf16.msra.mxu0 0
  %3540 = vmatprep.subr.bf16.mxu0 0
  %3541 = vmatpush1.bf16.msra.mxu0 0
  %3542 = vmatprep.subr.bf16.mxu0 0
  %3543 = vmatpush1.bf16.msra.mxu0 0
  %3544 = vmatprep.subr.bf16.mxu0 0
  %3545 = vmatpush1.bf16.msra.mxu0 0
  %3546 = vmatprep.subr.bf16.mxu0 0
  %3547 = vmatpush1.bf16.msra.mxu0 0
  %3548 = vmatprep.subr.bf16.mxu0 0
  %3549 = vmatpush1.bf16.msra.mxu0 0
  %3550 = vmatprep.subr.bf16.mxu0 0
  %3551 = vmatpush1.bf16.msra.mxu0 0
  %3552 = vmatprep.mubr.bf16.mxu0 0
  %3553 = vmatmul.mubr.bf16.gmra.mrb[0].mxu0 %v3515
  %v3554 = vpop.f32.mrb[0].mxu0
  %v3555 = vadd.f32 0.0, %v3554
  %v3556 = vpop.f32.mrb[0].mxu0
  %v3557 = vpop.f32.mrb[0].mxu0
  %v3558 = vpop.f32.mrb[0].mxu0
  %3559 = vdwg.mxu0
  %3560 = vrot.lane.b32.xlu0 %v288, 40
  %v3561 = vpop.permute.xlu0 %3560
  %v3563 = vsel %vm35, %v3317, 0
  %v3566 = vsel %vm556, %v3561, 0
  %3568 = vmatprep.subr.bf16.mxu0 0
  %3569 = vmatpush1.bf16.msra.mxu0 %v3566
  %3570 = vmatprep.subr.bf16.mxu0 0
  %3571 = vmatpush1.bf16.msra.mxu0 0
  %3572 = vmatprep.subr.bf16.mxu0 0
  %3573 = vmatpush1.bf16.msra.mxu0 0
  %3574 = vmatprep.subr.bf16.mxu0 0
  %3575 = vmatpush1.bf16.msra.mxu0 0
  %3576 = vmatprep.subr.bf16.mxu0 0
  %3577 = vmatpush1.bf16.msra.mxu0 0
  %3578 = vmatprep.subr.bf16.mxu0 0
  %3579 = vmatpush1.bf16.msra.mxu0 0
  %3580 = vmatprep.subr.bf16.mxu0 0
  %3581 = vmatpush1.bf16.msra.mxu0 0
  %3582 = vmatprep.subr.bf16.mxu0 0
  %3583 = vmatpush1.bf16.msra.mxu0 0
  %3584 = vmatprep.subr.bf16.mxu0 0
  %3585 = vmatpush1.bf16.msra.mxu0 0
  %3586 = vmatprep.subr.bf16.mxu0 0
  %3587 = vmatpush1.bf16.msra.mxu0 0
  %3588 = vmatprep.subr.bf16.mxu0 0
  %3589 = vmatpush1.bf16.msra.mxu0 0
  %3590 = vmatprep.subr.bf16.mxu0 0
  %3591 = vmatpush1.bf16.msra.mxu0 0
  %3592 = vmatprep.subr.bf16.mxu0 0
  %3593 = vmatpush1.bf16.msra.mxu0 0
  %3594 = vmatprep.subr.bf16.mxu0 0
  %3595 = vmatpush1.bf16.msra.mxu0 0
  %3596 = vmatprep.subr.bf16.mxu0 0
  %3597 = vmatpush1.bf16.msra.mxu0 0
  %3598 = vmatprep.subr.bf16.mxu0 0
  %3599 = vmatpush1.bf16.msra.mxu0 0
  %3600 = vmatprep.mubr.bf16.mxu0 0
  %3601 = vmatmul.mubr.bf16.gmra.mrb[0].mxu0 %v3563
  %v3602 = vpop.f32.mrb[0].mxu0
  %v3603 = vadd.f32 0.0, %v3602
  %v3604 = vpop.f32.mrb[0].mxu0
  %v3605 = vpop.f32.mrb[0].mxu0
  %v3606 = vpop.f32.mrb[0].mxu0
  %3607 = vdwg.mxu0
  %3608 = vrot.lane.b32.xlu0 %v339, 40
  %v3609 = vpop.permute.xlu0 %3608
  %v3611 = vsel %vm35, %v3318, 0
  %v3614 = vsel %vm556, %v3609, 0
  %3616 = vmatprep.subr.bf16.mxu0 0
  %3617 = vmatpush1.bf16.msra.mxu0 %v3614
  %3618 = vmatprep.subr.bf16.mxu0 0
  %3619 = vmatpush1.bf16.msra.mxu0 0
  %3620 = vmatprep.subr.bf16.mxu0 0
  %3621 = vmatpush1.bf16.msra.mxu0 0
  %3622 = vmatprep.subr.bf16.mxu0 0
  %3623 = vmatpush1.bf16.msra.mxu0 0
  %3624 = vmatprep.subr.bf16.mxu0 0
  %3625 = vmatpush1.bf16.msra.mxu0 0
  %3626 = vmatprep.subr.bf16.mxu0 0
  %3627 = vmatpush1.bf16.msra.mxu0 0
  %3628 = vmatprep.subr.bf16.mxu0 0
  %3629 = vmatpush1.bf16.msra.mxu0 0
  %3630 = vmatprep.subr.bf16.mxu0 0
  %3631 = vmatpush1.bf16.msra.mxu0 0
  %3632 = vmatprep.subr.bf16.mxu0 0
  %3633 = vmatpush1.bf16.msra.mxu0 0
  %3634 = vmatprep.subr.bf16.mxu0 0
  %3635 = vmatpush1.bf16.msra.mxu0 0
  %3636 = vmatprep.subr.bf16.mxu0 0
  %3637 = vmatpush1.bf16.msra.mxu0 0
  %3638 = vmatprep.subr.bf16.mxu0 0
  %3639 = vmatpush1.bf16.msra.mxu0 0
  %3640 = vmatprep.subr.bf16.mxu0 0
  %3641 = vmatpush1.bf16.msra.mxu0 0
  %3642 = vmatprep.subr.bf16.mxu0 0
  %3643 = vmatpush1.bf16.msra.mxu0 0
  %3644 = vmatprep.subr.bf16.mxu0 0
  %3645 = vmatpush1.bf16.msra.mxu0 0
  %3646 = vmatprep.subr.bf16.mxu0 0
  %3647 = vmatpush1.bf16.msra.mxu0 0
  %3648 = vmatprep.mubr.bf16.mxu0 0
  %3649 = vmatmul.mubr.bf16.gmra.mrb[0].mxu0 %v3611
  %v3650 = vpop.f32.mrb[0].mxu0
  %v3651 = vadd.f32 0.0, %v3650
  %v3652 = vpop.f32.mrb[0].mxu0
  %v3653 = vpop.f32.mrb[0].mxu0
  %v3654 = vpop.f32.mrb[0].mxu0
  %3655 = vdwg.mxu0
  %3656 = vrot.lane.b32.xlu0 %v390, 40
  %v3657 = vpop.permute.xlu0 %3656
  %v3659 = vsel %vm35, %v3319, 0
  %v3662 = vsel %vm556, %v3657, 0
  %3664 = vmatprep.subr.bf16.mxu0 0
  %3665 = vmatpush1.bf16.msra.mxu0 %v3662
  %3666 = vmatprep.subr.bf16.mxu0 0
  %3667 = vmatpush1.bf16.msra.mxu0 0
  %3668 = vmatprep.subr.bf16.mxu0 0
  %3669 = vmatpush1.bf16.msra.mxu0 0
  %3670 = vmatprep.subr.bf16.mxu0 0
  %3671 = vmatpush1.bf16.msra.mxu0 0
  %3672 = vmatprep.subr.bf16.mxu0 0
  %3673 = vmatpush1.bf16.msra.mxu0 0
  %3674 = vmatprep.subr.bf16.mxu0 0
  %3675 = vmatpush1.bf16.msra.mxu0 0
  %3676 = vmatprep.subr.bf16.mxu0 0
  %3677 = vmatpush1.bf16.msra.mxu0 0
  %3678 = vmatprep.subr.bf16.mxu0 0
  %3679 = vmatpush1.bf16.msra.mxu0 0
  %3680 = vmatprep.subr.bf16.mxu0 0
  %3681 = vmatpush1.bf16.msra.mxu0 0
  %3682 = vmatprep.subr.bf16.mxu0 0
  %3683 = vmatpush1.bf16.msra.mxu0 0
  %3684 = vmatprep.subr.bf16.mxu0 0
  %3685 = vmatpush1.bf16.msra.mxu0 0
  %3686 = vmatprep.subr.bf16.mxu0 0
  %3687 = vmatpush1.bf16.msra.mxu0 0
  %3688 = vmatprep.subr.bf16.mxu0 0
  %3689 = vmatpush1.bf16.msra.mxu0 0
  %3690 = vmatprep.subr.bf16.mxu0 0
  %3691 = vmatpush1.bf16.msra.mxu0 0
  %3692 = vmatprep.subr.bf16.mxu0 0
  %3693 = vmatpush1.bf16.msra.mxu0 0
  %3694 = vmatprep.subr.bf16.mxu0 0
  %3695 = vmatpush1.bf16.msra.mxu0 0
  %3696 = vmatprep.mubr.bf16.mxu0 0
  %3697 = vmatmul.mubr.bf16.gmra.mrb[0].mxu0 %v3659
  %v3698 = vpop.f32.mrb[0].mxu0
  %v3699 = vadd.f32 0.0, %v3698
  %v3700 = vpop.f32.mrb[0].mxu0
  %v3701 = vpop.f32.mrb[0].mxu0
  %v3702 = vpop.f32.mrb[0].mxu0
  %3703 = vdwg.mxu0
  %3712 = vrot.lane.b32.xlu0 %v1523, 8
  %v3713 = vpop.permute.xlu0 %3712
  %3714 = vrot.lane.b32.xlu0 %v1571, 8
  %v3715 = vpop.permute.xlu0 %3714
  %3716 = vrot.lane.b32.xlu0 %v1619, 8
  %v3717 = vpop.permute.xlu0 %3716
  %3718 = vrot.lane.b32.xlu0 %v1667, 8
  %v3719 = vpop.permute.xlu0 %3718
  %3720 = vrot.lane.b32.xlu0 %v1715, 8
  %v3721 = vpop.permute.xlu0 %3720
  %3722 = vrot.lane.b32.xlu0 %v1763, 8
  %v3723 = vpop.permute.xlu0 %3722
  %3724 = vrot.lane.b32.xlu0 %v1811, 8
  %v3725 = vpop.permute.xlu0 %3724
  %3726 = vrot.lane.b32.xlu0 %v1859, 8
  %v3727 = vpop.permute.xlu0 %3726
  %3744 = vrot.lane.b32.xlu0 %v2443, 16
  %v3745 = vpop.permute.xlu0 %3744
  %3746 = vrot.lane.b32.xlu0 %v2491, 16
  %v3747 = vpop.permute.xlu0 %3746
  %3748 = vrot.lane.b32.xlu0 %v2539, 16
  %v3749 = vpop.permute.xlu0 %3748
  %3750 = vrot.lane.b32.xlu0 %v2587, 16
  %v3751 = vpop.permute.xlu0 %3750
  %3752 = vrot.lane.b32.xlu0 %v2635, 16
  %v3753 = vpop.permute.xlu0 %3752
  %3754 = vrot.lane.b32.xlu0 %v2683, 16
  %v3755 = vpop.permute.xlu0 %3754
  %3756 = vrot.lane.b32.xlu0 %v2731, 16
  %v3757 = vpop.permute.xlu0 %3756
  %3758 = vrot.lane.b32.xlu0 %v2779, 16
  %v3759 = vpop.permute.xlu0 %3758
  %3776 = vrot.lane.b32.xlu0 %v3363, 24
  %v3777 = vpop.permute.xlu0 %3776
  %3778 = vrot.lane.b32.xlu0 %v3411, 24
  %v3779 = vpop.permute.xlu0 %3778
  %3780 = vrot.lane.b32.xlu0 %v3459, 24
  %v3781 = vpop.permute.xlu0 %3780
  %3782 = vrot.lane.b32.xlu0 %v3507, 24
  %v3783 = vpop.permute.xlu0 %3782
  %3784 = vrot.lane.b32.xlu0 %v3555, 24
  %v3785 = vpop.permute.xlu0 %3784
  %3786 = vrot.lane.b32.xlu0 %v3603, 24
  %v3787 = vpop.permute.xlu0 %3786
  %3788 = vrot.lane.b32.xlu0 %v3651, 24
  %v3789 = vpop.permute.xlu0 %3788
  %3790 = vrot.lane.b32.xlu0 %v3699, 24
  %v3791 = vpop.permute.xlu0 %3790
  %v3800 = vsel %vm35, %v595, %v3713
  %v3801 = vsel %vm35, %v643, %v3715
  %v3802 = vsel %vm35, %v691, %v3717
  %v3803 = vsel %vm35, %v739, %v3719
  %v3804 = vsel %vm35, %v787, %v3721
  %v3805 = vsel %vm35, %v835, %v3723
  %v3806 = vsel %vm35, %v883, %v3725
  %v3807 = vsel %vm35, %v931, %v3727
  %vm3808 = vcmask 130048
  %v3809 = vsel %vm3808, %v3800, %v3745
  %v3810 = vsel %vm3808, %v3801, %v3747
  %v3811 = vsel %vm3808, %v3802, %v3749
  %v3812 = vsel %vm3808, %v3803, %v3751
  %v3813 = vsel %vm3808, %v3804, %v3753
  %v3814 = vsel %vm3808, %v3805, %v3755
  %v3815 = vsel %vm3808, %v3806, %v3757
  %v3816 = vsel %vm3808, %v3807, %v3759
  %vm3817 = vcmask 195584
  %v3818 = vsel %vm3817, %v3809, %v3777
  %v3819 = vsel %vm3817, %v3810, %v3779
  %v3820 = vsel %vm3817, %v3811, %v3781
  %v3821 = vsel %vm3817, %v3812, %v3783
  %v3822 = vsel %vm3817, %v3813, %v3785
  %v3823 = vsel %vm3817, %v3814, %v3787
  %v3824 = vsel %vm3817, %v3815, %v3789
  %v3825 = vsel %vm3817, %v3816, %v3791
  %v3826 = vpack.c.bf16 %v3818, %v3818
  %v3827 = vpack.c.bf16 %v3819, %v3819
  %v3828 = vpack.c.bf16 %v3820, %v3820
  %v3829 = vpack.c.bf16 %v3821, %v3821
  %v3830 = vpack.c.bf16 %v3822, %v3822
  %v3831 = vpack.c.bf16 %v3823, %v3823
  %v3832 = vpack.c.bf16 %v3824, %v3824
  %v3833 = vpack.c.bf16 %v3825, %v3825
  %vm3834 = vcmask 257024
  %3835 = vst.msk [vmem:[%s2] sm:$0xf] %vm3834, %v3826
  %3836 = vst.msk [vmem:[%s2 + $0x4] sm:$0xf] %vm3834, %v3827
  %3837 = vst.msk [vmem:[%s2 + $0x8] sm:$0xf] %vm3834, %v3828
  %3838 = vst.msk [vmem:[%s2 + $0xc] sm:$0xf] %vm3834, %v3829
  %3839 = vst.msk [vmem:[%s2 + $0x10] sm:$0xf] %vm3834, %v3830
  %3840 = vst.msk [vmem:[%s2 + $0x14] sm:$0xf] %vm3834, %v3831
  %3841 = vst.msk [vmem:[%s2 + $0x18] sm:$0xf] %vm3834, %v3832
  %3842 = vst.msk [vmem:[%s2 + $0x1c] sm:$0xf] %vm3834, %v3833
  %3851 = vrot.lane.b32.xlu0 %v1376, 8
  %v3852 = vpop.permute.xlu0 %3851
  %3853 = vrot.lane.b32.xlu0 %v1377, 8
  %v3854 = vpop.permute.xlu0 %3853
  %3855 = vrot.lane.b32.xlu0 %v1378, 8
  %v3856 = vpop.permute.xlu0 %3855
  %3857 = vrot.lane.b32.xlu0 %v1379, 8
  %v3858 = vpop.permute.xlu0 %3857
  %3859 = vrot.lane.b32.xlu0 %v1380, 8
  %v3860 = vpop.permute.xlu0 %3859
  %3861 = vrot.lane.b32.xlu0 %v1381, 8
  %v3862 = vpop.permute.xlu0 %3861
  %3863 = vrot.lane.b32.xlu0 %v1382, 8
  %v3864 = vpop.permute.xlu0 %3863
  %3865 = vrot.lane.b32.xlu0 %v1383, 8
  %v3866 = vpop.permute.xlu0 %3865
  %3883 = vrot.lane.b32.xlu0 %v2296, 16
  %v3884 = vpop.permute.xlu0 %3883
  %3885 = vrot.lane.b32.xlu0 %v2297, 16
  %v3886 = vpop.permute.xlu0 %3885
  %3887 = vrot.lane.b32.xlu0 %v2298, 16
  %v3888 = vpop.permute.xlu0 %3887
  %3889 = vrot.lane.b32.xlu0 %v2299, 16
  %v3890 = vpop.permute.xlu0 %3889
  %3891 = vrot.lane.b32.xlu0 %v2300, 16
  %v3892 = vpop.permute.xlu0 %3891
  %3893 = vrot.lane.b32.xlu0 %v2301, 16
  %v3894 = vpop.permute.xlu0 %3893
  %3895 = vrot.lane.b32.xlu0 %v2302, 16
  %v3896 = vpop.permute.xlu0 %3895
  %3897 = vrot.lane.b32.xlu0 %v2303, 16
  %v3898 = vpop.permute.xlu0 %3897
  %3915 = vrot.lane.b32.xlu0 %v3216, 24
  %v3916 = vpop.permute.xlu0 %3915
  %3917 = vrot.lane.b32.xlu0 %v3217, 24
  %v3918 = vpop.permute.xlu0 %3917
  %3919 = vrot.lane.b32.xlu0 %v3218, 24
  %v3920 = vpop.permute.xlu0 %3919
  %3921 = vrot.lane.b32.xlu0 %v3219, 24
  %v3922 = vpop.permute.xlu0 %3921
  %3923 = vrot.lane.b32.xlu0 %v3220, 24
  %v3924 = vpop.permute.xlu0 %3923
  %3925 = vrot.lane.b32.xlu0 %v3221, 24
  %v3926 = vpop.permute.xlu0 %3925
  %3927 = vrot.lane.b32.xlu0 %v3222, 24
  %v3928 = vpop.permute.xlu0 %3927
  %3929 = vrot.lane.b32.xlu0 %v3223, 24
  %v3930 = vpop.permute.xlu0 %3929
  %v3939 = vsel %vm35, %v447, %v3852
  %v3940 = vsel %vm35, %v448, %v3854
  %v3941 = vsel %vm35, %v449, %v3856
  %v3942 = vsel %vm35, %v450, %v3858
  %v3943 = vsel %vm35, %v451, %v3860
  %v3944 = vsel %vm35, %v452, %v3862
  %v3945 = vsel %vm35, %v453, %v3864
  %v3946 = vsel %vm35, %v454, %v3866
  %v3947 = vsel %vm3808, %v3939, %v3884
  %v3948 = vsel %vm3808, %v3940, %v3886
  %v3949 = vsel %vm3808, %v3941, %v3888
  %v3950 = vsel %vm3808, %v3942, %v3890
  %v3951 = vsel %vm3808, %v3943, %v3892
  %v3952 = vsel %vm3808, %v3944, %v3894
  %v3953 = vsel %vm3808, %v3945, %v3896
  %v3954 = vsel %vm3808, %v3946, %v3898
  %v3955 = vsel %vm3817, %v3947, %v3916
  %v3956 = vsel %vm3817, %v3948, %v3918
  %v3957 = vsel %vm3817, %v3949, %v3920
  %v3958 = vsel %vm3817, %v3950, %v3922
  %v3959 = vsel %vm3817, %v3951, %v3924
  %v3960 = vsel %vm3817, %v3952, %v3926
  %v3961 = vsel %vm3817, %v3953, %v3928
  %v3962 = vsel %vm3817, %v3954, %v3930
  %vm3963 = vcmask 261120
  %3964 = vst.msk [vmem:[%s3] sm:$0xff] %vm3963, %v3955
  %3965 = vst.msk [vmem:[%s3 + $0x8] sm:$0xff] %vm3963, %v3956
  %3966 = vst.msk [vmem:[%s3 + $0x10] sm:$0xff] %vm3963, %v3957
  %3967 = vst.msk [vmem:[%s3 + $0x18] sm:$0xff] %vm3963, %v3958
  %3968 = vst.msk [vmem:[%s3 + $0x20] sm:$0xff] %vm3963, %v3959
  %3969 = vst.msk [vmem:[%s3 + $0x28] sm:$0xff] %vm3963, %v3960
  %3970 = vst.msk [vmem:[%s3 + $0x30] sm:$0xff] %vm3963, %v3961
  %3971 = vst.msk [vmem:[%s3 + $0x38] sm:$0xff] %vm3963, %v3962
  // Predicated region
  $region10: #{_lambda_.22} parent=0 // pred_check
    _
  $region11: #{_lambda_.22} parent=0 // pred_check_branch
    %3973 = sbr.rel (0) target = $region13
  $region12: #{_lambda_.22} parent=0 // pred_region
    _
  $region13: #{_lambda_.22} parent=0 // pred_fallthru
    _
  // Predicated region
  $region14: #{_lambda_.22} parent=0 // pred_check
    _
  $region15: #{_lambda_.22} parent=0 // pred_check_branch
    %3975 = sbr.rel (0) target = $region17
  $region16: #{_lambda_.22} parent=0 // pred_region
    _
  $region17: #{_lambda_.22} parent=0 // pred_fallthru
    _
  // Predicated region
  $region18: #{_lambda_.22} parent=0 // pred_check
    _
  $region19: #{_lambda_.22} parent=0 // pred_check_branch
    %3977 = sbr.rel (0) target = $region21
  $region20: #{_lambda_.22} parent=0 // pred_region
    _
  $region21: #{_lambda_.22} parent=0 // pred_fallthru
    _
  // Predicated region
  $region22: #{_lambda_.22} parent=0 // pred_check
    _
  $region23: #{_lambda_.22} parent=0 // pred_check_branch
    %3979 = sbr.rel (0) target = $region25
  $region24: #{_lambda_.22} parent=0 // pred_region
    _
  $region25: #{_lambda_.22} parent=0 // pred_fallthru
    _

// kernel: _lambda_.39
$region0: #{_lambda_.39}
  #allocation0 [shape = 'u32[]', space=smem, size = 0x4, offset = 0x4, fixed_abs, tag = 'smem constant byte address 0x4 - core index']
  #allocation1 [shape = 'u32[144,128]{1,0:T(1,128)}', space=vmem, size = 0x12000, scoped, tag = 'internal scratch']
  #allocation2 [shape = 'f32[8,16]{1,0:T(8,128)}', space=vmem, size = 0x1000, scoped, tag = 'scratch operand']
  %s0 = inlined_call_operand.vmem [shape: f32[8,256], index: 0, kind: input, shape index: {}]
  %s1 = inlined_call_operand.vmem [shape: bf16[256,16], index: 1, kind: input, shape index: {}]
  %s2 = inlined_call_operand.vmem [shape: f32[1,16], index: 2, kind: input, shape index: {}]
  %s3 = inlined_call_operand.hbm [shape: f32[8,16], index: 3, kind: output, shape index: {}]
  %s4 = sld [smem:[#allocation0]]
  $region30: #{_lambda_.39} parent=0
    _
  %s6 = ssub.s32 1, %s4
  %s7 = scalar_select 0, %s6, %s4
  $region1: #{_lambda_.39} parent=0
    #allocation3 [shape = 'u8[4096]{0}', space=vmem, size = 0x1000, scoped, tag = 'output window, operand 0, single buffered']
    #allocation4 [shape = 's32[1]{0}', space=sflag, size = 0x4, scoped, tag = 'scoped memory for _lambda_.39']
    %8 = vsyncpa [#allocation4], 0
    // Predicated region
    $region2: #{_lambda_.39} parent=1 // pred_check
      _
    $region3: #{_lambda_.39} parent=1 // pred_check_branch
      %10 = sbr.rel (0) target = $region5
    $region4: #{_lambda_.39} parent=1 // pred_region
      _
    $region5: #{_lambda_.39} parent=1 // pred_fallthru
      _
    // Predicated region
    $region6: #{_lambda_.39} parent=1 // pred_check
      _
    $region7: #{_lambda_.39} parent=1 // pred_check_branch
      %12 = sbr.rel (0) target = $region9
    $region8: #{_lambda_.39} parent=1 // pred_region
      _
    $region9: #{_lambda_.39} parent=1 // pred_fallthru
      _
    // Predicated region
    $region10: #{_lambda_.39} parent=1 // pred_check
      _
    $region11: #{_lambda_.39} parent=1 // pred_check_branch
      %14 = sbr.rel (0) target = $region13
    $region12: #{_lambda_.39} parent=1 // pred_region
      _
    $region13: #{_lambda_.39} parent=1 // pred_fallthru
      _
    %p16 = scmp.eq.s32.totalorder 0, 0
    // Predicated region
    $region14: #{_lambda_.39} parent=1 // pred_check
      %p17 = pneg %p16
    $region15: #{_lambda_.39} parent=1 // pred_check_branch
      %19 = sbr.rel (%p17) target = $region17
    $region16: #{_lambda_.39} parent=1 // pred_region
      %vm20 = vcmask 130048
      %21 = vst.msk [vmem:[#allocation2] sm:$0xff] %vm20, 0.0
    $region17: #{_lambda_.39} parent=1 // pred_fallthru
      _
    %v22 = vld [vmem:[#allocation2] sm:$0xff]
    %v23 = vld [vmem:[%s0] sm:$0xff]
    %v24 = vld [vmem:[%s0 + $0x8] sm:$0xff]
    %v25 = vpack.c.bf16 %v23, %v23
    %v26 = vpack.c.bf16 %v24, %v24
    %v27 = vld [vmem:[%s1] sm:$0xf]
    %v28 = vld [vmem:[%s1 + $0x4] sm:$0xf]
    %v29 = vld [vmem:[%s1 + $0x8] sm:$0xf]
    %v30 = vld [vmem:[%s1 + $0xc] sm:$0xf]
    %v31 = vld [vmem:[%s1 + $0x10] sm:$0xf]
    %v32 = vld [vmem:[%s1 + $0x14] sm:$0xf]
    %v33 = vld [vmem:[%s1 + $0x18] sm:$0xf]
    %v34 = vld [vmem:[%s1 + $0x1c] sm:$0xf]
    %v35 = vld [vmem:[%s1 + $0x20] sm:$0xf]
    %v36 = vld [vmem:[%s1 + $0x24] sm:$0xf]
    %v37 = vld [vmem:[%s1 + $0x28] sm:$0xf]
    %v38 = vld [vmem:[%s1 + $0x2c] sm:$0xf]
    %v39 = vld [vmem:[%s1 + $0x30] sm:$0xf]
    %v40 = vld [vmem:[%s1 + $0x34] sm:$0xf]
    %v41 = vld [vmem:[%s1 + $0x38] sm:$0xf]
    %v42 = vld [vmem:[%s1 + $0x3c] sm:$0xf]
    %v43 = vld [vmem:[%s1 + $0x40] sm:$0xf]
    %v44 = vld [vmem:[%s1 + $0x44] sm:$0xf]
    %v45 = vld [vmem:[%s1 + $0x48] sm:$0xf]
    %v46 = vld [vmem:[%s1 + $0x4c] sm:$0xf]
    %v47 = vld [vmem:[%s1 + $0x50] sm:$0xf]
    %v48 = vld [vmem:[%s1 + $0x54] sm:$0xf]
    %v49 = vld [vmem:[%s1 + $0x58] sm:$0xf]
    %v50 = vld [vmem:[%s1 + $0x5c] sm:$0xf]
    %v51 = vld [vmem:[%s1 + $0x60] sm:$0xf]
    %v52 = vld [vmem:[%s1 + $0x64] sm:$0xf]
    %v53 = vld [vmem:[%s1 + $0x68] sm:$0xf]
    %v54 = vld [vmem:[%s1 + $0x6c] sm:$0xf]
    %v55 = vld [vmem:[%s1 + $0x70] sm:$0xf]
    %v56 = vld [vmem:[%s1 + $0x74] sm:$0xf]
    %v57 = vld [vmem:[%s1 + $0x78] sm:$0xf]
    %v58 = vld [vmem:[%s1 + $0x7c] sm:$0xf]
    %v91 = vunpack.c.l.b16 %v27
    %v92 = vunpack.c.l.b16 %v28
    %v93 = vunpack.c.l.b16 %v29
    %v94 = vunpack.c.l.b16 %v30
    %v95 = vunpack.c.l.b16 %v31
    %v96 = vunpack.c.l.b16 %v32
    %v97 = vunpack.c.l.b16 %v33
    %v98 = vunpack.c.l.b16 %v34
    %v99 = vunpack.c.l.b16 %v35
    %v100 = vunpack.c.l.b16 %v36
    %v101 = vunpack.c.l.b16 %v37
    %v102 = vunpack.c.l.b16 %v38
    %v103 = vunpack.c.l.b16 %v39
    %v104 = vunpack.c.l.b16 %v40
    %v105 = vunpack.c.l.b16 %v41
    %v106 = vunpack.c.l.b16 %v42
    %v107 = vunpack.c.l.b16 %v43
    %v108 = vunpack.c.l.b16 %v44
    %v109 = vunpack.c.l.b16 %v45
    %v110 = vunpack.c.l.b16 %v46
    %v111 = vunpack.c.l.b16 %v47
    %v112 = vunpack.c.l.b16 %v48
    %v113 = vunpack.c.l.b16 %v49
    %v114 = vunpack.c.l.b16 %v50
    %v115 = vunpack.c.l.b16 %v51
    %v116 = vunpack.c.l.b16 %v52
    %v117 = vunpack.c.l.b16 %v53
    %v118 = vunpack.c.l.b16 %v54
    %v119 = vunpack.c.l.b16 %v55
    %v120 = vunpack.c.l.b16 %v56
    %v121 = vunpack.c.l.b16 %v57
    %v122 = vunpack.c.l.b16 %v58
    %v123 = vpack.c.b16 %v92, %v91
    %v124 = vpack.c.b16 %v94, %v93
    %v125 = vpack.c.b16 %v96, %v95
    %v126 = vpack.c.b16 %v98, %v97
    %v127 = vpack.c.b16 %v100, %v99
    %v128 = vpack.c.b16 %v102, %v101
    %v129 = vpack.c.b16 %v104, %v103
    %v130 = vpack.c.b16 %v106, %v105
    %v131 = vpack.c.b16 %v108, %v107
    %v132 = vpack.c.b16 %v110, %v109
    %v133 = vpack.c.b16 %v112, %v111
    %v134 = vpack.c.b16 %v114, %v113
    %v135 = vpack.c.b16 %v116, %v115
    %v136 = vpack.c.b16 %v118, %v117
    %v137 = vpack.c.b16 %v120, %v119
    %v138 = vpack.c.b16 %v122, %v121
    %155 = vmatprep.subr.bf16.mxu0 0
    %156 = vmatpush1.bf16.msra.mxu0 %v123
    %157 = vmatprep.subr.bf16.mxu0 0
    %158 = vmatpush1.bf16.msra.mxu0 %v124
    %159 = vmatprep.subr.bf16.mxu0 0
    %160 = vmatpush1.bf16.msra.mxu0 %v125
    %161 = vmatprep.subr.bf16.mxu0 0
    %162 = vmatpush1.bf16.msra.mxu0 %v126
    %163 = vmatprep.subr.bf16.mxu0 0
    %164 = vmatpush1.bf16.msra.mxu0 %v127
    %165 = vmatprep.subr.bf16.mxu0 0
    %166 = vmatpush1.bf16.msra.mxu0 %v128
    %167 = vmatprep.subr.bf16.mxu0 0
    %168 = vmatpush1.bf16.msra.mxu0 %v129
    %169 = vmatprep.subr.bf16.mxu0 0
    %170 = vmatpush1.bf16.msra.mxu0 %v130
    %171 = vmatprep.subr.bf16.mxu0 0
    %172 = vmatpush1.bf16.msra.mxu0 %v131
    %173 = vmatprep.subr.bf16.mxu0 0
    %174 = vmatpush1.bf16.msra.mxu0 %v132
    %175 = vmatprep.subr.bf16.mxu0 0
    %176 = vmatpush1.bf16.msra.mxu0 %v133
    %177 = vmatprep.subr.bf16.mxu0 0
    %178 = vmatpush1.bf16.msra.mxu0 %v134
    %179 = vmatprep.subr.bf16.mxu0 0
    %180 = vmatpush1.bf16.msra.mxu0 %v135
    %181 = vmatprep.subr.bf16.mxu0 0
    %182 = vmatpush1.bf16.msra.mxu0 %v136
    %183 = vmatprep.subr.bf16.mxu0 0
    %184 = vmatpush1.bf16.msra.mxu0 %v137
    %185 = vmatprep.subr.bf16.mxu0 0
    %186 = vmatpush1.bf16.msra.mxu0 %v138
    %187 = vmatprep.mubr.bf16.mxu0 %v26
    %188 = vmatmul.mubr.bf16.gmra.mrb[0].mxu0 %v25
    %v189 = vpop.f32.mrb[0].mxu0
    %v190 = vadd.f32 0.0, %v189
    %v191 = vpop.f32.mrb[0].mxu0
    %v192 = vpop.f32.mrb[0].mxu0
    %v193 = vpop.f32.mrb[0].mxu0
    %194 = vdwg.mxu0
    %v195 = vadd.f32 %v22, %v190
    %vm196 = vcmask 130048
    %197 = vst.msk [vmem:[#allocation2] sm:$0xff] %vm196, %v195
    // Predicated region
    $region18: #{_lambda_.39} parent=1 // pred_check
      %p198 = pneg %p16
    $region19: #{_lambda_.39} parent=1 // pred_check_branch
      %200 = sbr.rel (%p198) target = $region21
    $region20: #{_lambda_.39} parent=1 // pred_region
      %v201 = vld [vmem:[#allocation2] sm:$0xff]
      %v202 = vld [vmem:[%s2] sm:$0x1]
      %v204 = vlaneseq
      %v205 = vshrl.u32 %v204, 7
      %v206 = vsub.s32 0, %v205
      %v207 = vrot.slane %v202, %v206
      %v209 = vadd.f32 %v201, %v207
      %210 = vst.msk [vmem:[#allocation3] sm:$0xff] %vm196, %v209
    $region21: #{_lambda_.39} parent=1 // pred_fallthru
      _
    // Predicated region
    $region22: #{_lambda_.39} parent=1 // pred_check
      _
    $region23: #{_lambda_.39} parent=1 // pred_check_branch
      %212 = sbr.rel (0) target = $region25
    $region24: #{_lambda_.39} parent=1 // pred_region
      %s214 = ssub.s32 128, 128
      %215 = vsyncadd [#allocation4], %s214
      %s217 = sshll.u32 [#allocation3], 4
      %s218 = int_to_ptr.vmem [resolvable:$true] %s217
      %220 = dma.vmem_to_hbm [thread:$0]  %s218, 128, %s3, [#allocation4]
    $region25: #{_lambda_.39} parent=1 // pred_fallthru
      _
    // Predicated region
    $region26: #{_lambda_.39} parent=1 // pred_check
      _
    $region27: #{_lambda_.39} parent=1 // pred_check_branch
      %222 = sbr.rel (0) target = $region29
    $region28: #{_lambda_.39} parent=1 // pred_region
      %223 = dma.done [#allocation4], 128
    $region29: #{_lambda_.39} parent=1 // pred_fallthru
      _
    %224 = vsyncpa [#allocation4], 1

// kernel: _lambda_.31
$region0: #{_lambda_.31}
  #allocation0 [shape = 'u32[]', space=smem, size = 0x4, offset = 0x4, fixed_abs, tag = 'smem constant byte address 0x4 - core index']
  #allocation1 [shape = 'u32[144,128]{1,0:T(1,128)}', space=vmem, size = 0x12000, scoped, tag = 'internal scratch']
  %s0 = inlined_call_operand.vmem [shape: bf16[8,8,96], index: 0, kind: input, shape index: {}]
  %s1 = inlined_call_operand.vmem [shape: f32[8,8,32], index: 1, kind: input, shape index: {}]
  %s2 = inlined_call_operand.vmem [shape: bf16[8,8,32], index: 2, kind: output, shape index: {0}]
  %s3 = inlined_call_operand.hbm [shape: f32[8,8,32], index: 3, kind: output, shape index: {1}]
  %4 = xla_tuple %s2, %s3
  %s5 = sld [smem:[#allocation0]]
  $region26: #{_lambda_.31} parent=0
    _
  %s7 = ssub.s32 1, %s5
  %s8 = scalar_select 0, %s7, %s5
  $region1: #{_lambda_.31} parent=0
    #allocation2 [shape = 'u8[32768]{0}', space=vmem, size = 0x8000, scoped, tag = 'output window, operand 1, single buffered']
    #allocation3 [shape = 's32[1]{0}', space=sflag, size = 0x4, scoped, tag = 'scoped memory for _lambda_.31']
    %9 = vsyncpa [#allocation3], 0
    // Predicated region
    $region2: #{_lambda_.31} parent=1 // pred_check
      _
    $region3: #{_lambda_.31} parent=1 // pred_check_branch
      %11 = sbr.rel (0) target = $region5
    $region4: #{_lambda_.31} parent=1 // pred_region
      _
    $region5: #{_lambda_.31} parent=1 // pred_fallthru
      _
    // Predicated region
    $region6: #{_lambda_.31} parent=1 // pred_check
      _
    $region7: #{_lambda_.31} parent=1 // pred_check_branch
      %13 = sbr.rel (0) target = $region9
    $region8: #{_lambda_.31} parent=1 // pred_region
      _
    $region9: #{_lambda_.31} parent=1 // pred_fallthru
      _
    %v15 = vld [vmem:[%s0] sm:$0xf]
    %v16 = vld [vmem:[%s0 + $0x4] sm:$0xf]
    %v17 = vld [vmem:[%s0 + $0x8] sm:$0xf]
    %v18 = vld [vmem:[%s0 + $0xc] sm:$0xf]
    %v19 = vld [vmem:[%s0 + $0x10] sm:$0xf]
    %v20 = vld [vmem:[%s0 + $0x14] sm:$0xf]
    %v21 = vld [vmem:[%s0 + $0x18] sm:$0xf]
    %v22 = vld [vmem:[%s0 + $0x1c] sm:$0xf]
    %v23 = vld [vmem:[%s1] sm:$0xff]
    %v24 = vld [vmem:[%s1 + $0x8] sm:$0xff]
    %v25 = vld [vmem:[%s1 + $0x10] sm:$0xff]
    %v26 = vld [vmem:[%s1 + $0x18] sm:$0xff]
    %v27 = vld [vmem:[%s1 + $0x20] sm:$0xff]
    %v28 = vld [vmem:[%s1 + $0x28] sm:$0xff]
    %v29 = vld [vmem:[%s1 + $0x30] sm:$0xff]
    %v30 = vld [vmem:[%s1 + $0x38] sm:$0xff]
    %v32 = vunpack.c.l.b16 %v15
    %v33 = vpack.c.b16 %v32, %v32
    %34 = vrot.lane.b32.xlu0 %v33, 96
    %v35 = vpop.permute.xlu0 %34
    %vm36 = vcmask 64512
    %v38 = vsel %vm36, %v15, 0
    %v41 = vsel %vm36, %v35, 0
    %43 = vmatprep.subr.bf16.mxu0 0
    %44 = vmatpush1.bf16.xpose.msra.mxu0 %v41
    %45 = vmatprep.subr.bf16.mxu0 0
    %46 = vmatpush1.bf16.xpose.msra.mxu0 0
    %47 = vmatprep.subr.bf16.mxu0 0
    %48 = vmatpush1.bf16.xpose.msra.mxu0 0
    %49 = vmatprep.subr.bf16.mxu0 0
    %50 = vmatpush1.bf16.xpose.msra.mxu0 0
    %51 = vmatprep.subr.bf16.mxu0 0
    %52 = vmatpush1.bf16.xpose.msra.mxu0 0
    %53 = vmatprep.subr.bf16.mxu0 0
    %54 = vmatpush1.bf16.xpose.msra.mxu0 0
    %55 = vmatprep.subr.bf16.mxu0 0
    %56 = vmatpush1.bf16.xpose.msra.mxu0 0
    %57 = vmatprep.subr.bf16.mxu0 0
    %58 = vmatpush1.bf16.xpose.msra.mxu0 0
    %59 = vmatprep.subr.bf16.mxu0 0
    %60 = vmatpush1.bf16.xpose.msra.mxu0 0
    %61 = vmatprep.subr.bf16.mxu0 0
    %62 = vmatpush1.bf16.xpose.msra.mxu0 0
    %63 = vmatprep.subr.bf16.mxu0 0
    %64 = vmatpush1.bf16.xpose.msra.mxu0 0
    %65 = vmatprep.subr.bf16.mxu0 0
    %66 = vmatpush1.bf16.xpose.msra.mxu0 0
    %67 = vmatprep.subr.bf16.mxu0 0
    %68 = vmatpush1.bf16.xpose.msra.mxu0 0
    %69 = vmatprep.subr.bf16.mxu0 0
    %70 = vmatpush1.bf16.xpose.msra.mxu0 0
    %71 = vmatprep.subr.bf16.mxu0 0
    %72 = vmatpush1.bf16.xpose.msra.mxu0 0
    %73 = vmatprep.subr.bf16.mxu0 0
    %74 = vmatpush1.bf16.xpose.msra.mxu0 0
    %75 = vmatprep.mubr.bf16.mxu0 0
    %76 = vmatmul.mubr.bf16.gmra.mrb[0].mxu0 %v38
    %v77 = vpop.f32.mrb[0].mxu0
    %v78 = vadd.f32 0.0, %v77
    %v79 = vpop.f32.mrb[0].mxu0
    %v80 = vpop.f32.mrb[0].mxu0
    %v81 = vpop.f32.mrb[0].mxu0
    %82 = vdwg.mxu0
    %v84 = vunpack.c.l.b16 %v16
    %v85 = vpack.c.b16 %v84, %v84
    %86 = vrot.lane.b32.xlu0 %v85, 96
    %v87 = vpop.permute.xlu0 %86
    %v89 = vsel %vm36, %v16, 0
    %v92 = vsel %vm36, %v87, 0
    %94 = vmatprep.subr.bf16.mxu0 0
    %95 = vmatpush1.bf16.xpose.msra.mxu0 %v92
    %96 = vmatprep.subr.bf16.mxu0 0
    %97 = vmatpush1.bf16.xpose.msra.mxu0 0
    %98 = vmatprep.subr.bf16.mxu0 0
    %99 = vmatpush1.bf16.xpose.msra.mxu0 0
    %100 = vmatprep.subr.bf16.mxu0 0
    %101 = vmatpush1.bf16.xpose.msra.mxu0 0
    %102 = vmatprep.subr.bf16.mxu0 0
    %103 = vmatpush1.bf16.xpose.msra.mxu0 0
    %104 = vmatprep.subr.bf16.mxu0 0
    %105 = vmatpush1.bf16.xpose.msra.mxu0 0
    %106 = vmatprep.subr.bf16.mxu0 0
    %107 = vmatpush1.bf16.xpose.msra.mxu0 0
    %108 = vmatprep.subr.bf16.mxu0 0
    %109 = vmatpush1.bf16.xpose.msra.mxu0 0
    %110 = vmatprep.subr.bf16.mxu0 0
    %111 = vmatpush1.bf16.xpose.msra.mxu0 0
    %112 = vmatprep.subr.bf16.mxu0 0
    %113 = vmatpush1.bf16.xpose.msra.mxu0 0
    %114 = vmatprep.subr.bf16.mxu0 0
    %115 = vmatpush1.bf16.xpose.msra.mxu0 0
    %116 = vmatprep.subr.bf16.mxu0 0
    %117 = vmatpush1.bf16.xpose.msra.mxu0 0
    %118 = vmatprep.subr.bf16.mxu0 0
    %119 = vmatpush1.bf16.xpose.msra.mxu0 0
    %120 = vmatprep.subr.bf16.mxu0 0
    %121 = vmatpush1.bf16.xpose.msra.mxu0 0
    %122 = vmatprep.subr.bf16.mxu0 0
    %123 = vmatpush1.bf16.xpose.msra.mxu0 0
    %124 = vmatprep.subr.bf16.mxu0 0
    %125 = vmatpush1.bf16.xpose.msra.mxu0 0
    %126 = vmatprep.mubr.bf16.mxu0 0
    %127 = vmatmul.mubr.bf16.gmra.mrb[0].mxu0 %v89
    %v128 = vpop.f32.mrb[0].mxu0
    %v129 = vadd.f32 0.0, %v128
    %v130 = vpop.f32.mrb[0].mxu0
    %v131 = vpop.f32.mrb[0].mxu0
    %v132 = vpop.f32.mrb[0].mxu0
    %133 = vdwg.mxu0
    %v135 = vunpack.c.l.b16 %v17
    %v136 = vpack.c.b16 %v135, %v135
    %137 = vrot.lane.b32.xlu0 %v136, 96
    %v138 = vpop.permute.xlu0 %137
    %v140 = vsel %vm36, %v17, 0
    %v143 = vsel %vm36, %v138, 0
    %145 = vmatprep.subr.bf16.mxu0 0
    %146 = vmatpush1.bf16.xpose.msra.mxu0 %v143
    %147 = vmatprep.subr.bf16.mxu0 0
    %148 = vmatpush1.bf16.xpose.msra.mxu0 0
    %149 = vmatprep.subr.bf16.mxu0 0
    %150 = vmatpush1.bf16.xpose.msra.mxu0 0
    %151 = vmatprep.subr.bf16.mxu0 0
    %152 = vmatpush1.bf16.xpose.msra.mxu0 0
    %153 = vmatprep.subr.bf16.mxu0 0
    %154 = vmatpush1.bf16.xpose.msra.mxu0 0
    %155 = vmatprep.subr.bf16.mxu0 0
    %156 = vmatpush1.bf16.xpose.msra.mxu0 0
    %157 = vmatprep.subr.bf16.mxu0 0
    %158 = vmatpush1.bf16.xpose.msra.mxu0 0
    %159 = vmatprep.subr.bf16.mxu0 0
    %160 = vmatpush1.bf16.xpose.msra.mxu0 0
    %161 = vmatprep.subr.bf16.mxu0 0
    %162 = vmatpush1.bf16.xpose.msra.mxu0 0
    %163 = vmatprep.subr.bf16.mxu0 0
    %164 = vmatpush1.bf16.xpose.msra.mxu0 0
    %165 = vmatprep.subr.bf16.mxu0 0
    %166 = vmatpush1.bf16.xpose.msra.mxu0 0
    %167 = vmatprep.subr.bf16.mxu0 0
    %168 = vmatpush1.bf16.xpose.msra.mxu0 0
    %169 = vmatprep.subr.bf16.mxu0 0
    %170 = vmatpush1.bf16.xpose.msra.mxu0 0
    %171 = vmatprep.subr.bf16.mxu0 0
    %172 = vmatpush1.bf16.xpose.msra.mxu0 0
    %173 = vmatprep.subr.bf16.mxu0 0
    %174 = vmatpush1.bf16.xpose.msra.mxu0 0
    %175 = vmatprep.subr.bf16.mxu0 0
    %176 = vmatpush1.bf16.xpose.msra.mxu0 0
    %177 = vmatprep.mubr.bf16.mxu0 0
    %178 = vmatmul.mubr.bf16.gmra.mrb[0].mxu0 %v140
    %v179 = vpop.f32.mrb[0].mxu0
    %v180 = vadd.f32 0.0, %v179
    %v181 = vpop.f32.mrb[0].mxu0
    %v182 = vpop.f32.mrb[0].mxu0
    %v183 = vpop.f32.mrb[0].mxu0
    %184 = vdwg.mxu0
    %v186 = vunpack.c.l.b16 %v18
    %v187 = vpack.c.b16 %v186, %v186
    %188 = vrot.lane.b32.xlu0 %v187, 96
    %v189 = vpop.permute.xlu0 %188
    %v191 = vsel %vm36, %v18, 0
    %v194 = vsel %vm36, %v189, 0
    %196 = vmatprep.subr.bf16.mxu0 0
    %197 = vmatpush1.bf16.xpose.msra.mxu0 %v194
    %198 = vmatprep.subr.bf16.mxu0 0
    %199 = vmatpush1.bf16.xpose.msra.mxu0 0
    %200 = vmatprep.subr.bf16.mxu0 0
    %201 = vmatpush1.bf16.xpose.msra.mxu0 0
    %202 = vmatprep.subr.bf16.mxu0 0
    %203 = vmatpush1.bf16.xpose.msra.mxu0 0
    %204 = vmatprep.subr.bf16.mxu0 0
    %205 = vmatpush1.bf16.xpose.msra.mxu0 0
    %206 = vmatprep.subr.bf16.mxu0 0
    %207 = vmatpush1.bf16.xpose.msra.mxu0 0
    %208 = vmatprep.subr.bf16.mxu0 0
    %209 = vmatpush1.bf16.xpose.msra.mxu0 0
    %210 = vmatprep.subr.bf16.mxu0 0
    %211 = vmatpush1.bf16.xpose.msra.mxu0 0
    %212 = vmatprep.subr.bf16.mxu0 0
    %213 = vmatpush1.bf16.xpose.msra.mxu0 0
    %214 = vmatprep.subr.bf16.mxu0 0
    %215 = vmatpush1.bf16.xpose.msra.mxu0 0
    %216 = vmatprep.subr.bf16.mxu0 0
    %217 = vmatpush1.bf16.xpose.msra.mxu0 0
    %218 = vmatprep.subr.bf16.mxu0 0
    %219 = vmatpush1.bf16.xpose.msra.mxu0 0
    %220 = vmatprep.subr.bf16.mxu0 0
    %221 = vmatpush1.bf16.xpose.msra.mxu0 0
    %222 = vmatprep.subr.bf16.mxu0 0
    %223 = vmatpush1.bf16.xpose.msra.mxu0 0
    %224 = vmatprep.subr.bf16.mxu0 0
    %225 = vmatpush1.bf16.xpose.msra.mxu0 0
    %226 = vmatprep.subr.bf16.mxu0 0
    %227 = vmatpush1.bf16.xpose.msra.mxu0 0
    %228 = vmatprep.mubr.bf16.mxu0 0
    %229 = vmatmul.mubr.bf16.gmra.mrb[0].mxu0 %v191
    %v230 = vpop.f32.mrb[0].mxu0
    %v231 = vadd.f32 0.0, %v230
    %v232 = vpop.f32.mrb[0].mxu0
    %v233 = vpop.f32.mrb[0].mxu0
    %v234 = vpop.f32.mrb[0].mxu0
    %235 = vdwg.mxu0
    %v237 = vunpack.c.l.b16 %v19
    %v238 = vpack.c.b16 %v237, %v237
    %239 = vrot.lane.b32.xlu0 %v238, 96
    %v240 = vpop.permute.xlu0 %239
    %v242 = vsel %vm36, %v19, 0
    %v245 = vsel %vm36, %v240, 0
    %247 = vmatprep.subr.bf16.mxu0 0
    %248 = vmatpush1.bf16.xpose.msra.mxu0 %v245
    %249 = vmatprep.subr.bf16.mxu0 0
    %250 = vmatpush1.bf16.xpose.msra.mxu0 0
    %251 = vmatprep.subr.bf16.mxu0 0
    %252 = vmatpush1.bf16.xpose.msra.mxu0 0
    %253 = vmatprep.subr.bf16.mxu0 0
    %254 = vmatpush1.bf16.xpose.msra.mxu0 0
    %255 = vmatprep.subr.bf16.mxu0 0
    %256 = vmatpush1.bf16.xpose.msra.mxu0 0
    %257 = vmatprep.subr.bf16.mxu0 0
    %258 = vmatpush1.bf16.xpose.msra.mxu0 0
    %259 = vmatprep.subr.bf16.mxu0 0
    %260 = vmatpush1.bf16.xpose.msra.mxu0 0
    %261 = vmatprep.subr.bf16.mxu0 0
    %262 = vmatpush1.bf16.xpose.msra.mxu0 0
    %263 = vmatprep.subr.bf16.mxu0 0
    %264 = vmatpush1.bf16.xpose.msra.mxu0 0
    %265 = vmatprep.subr.bf16.mxu0 0
    %266 = vmatpush1.bf16.xpose.msra.mxu0 0
    %267 = vmatprep.subr.bf16.mxu0 0
    %268 = vmatpush1.bf16.xpose.msra.mxu0 0
    %269 = vmatprep.subr.bf16.mxu0 0
    %270 = vmatpush1.bf16.xpose.msra.mxu0 0
    %271 = vmatprep.subr.bf16.mxu0 0
    %272 = vmatpush1.bf16.xpose.msra.mxu0 0
    %273 = vmatprep.subr.bf16.mxu0 0
    %274 = vmatpush1.bf16.xpose.msra.mxu0 0
    %275 = vmatprep.subr.bf16.mxu0 0
    %276 = vmatpush1.bf16.xpose.msra.mxu0 0
    %277 = vmatprep.subr.bf16.mxu0 0
    %278 = vmatpush1.bf16.xpose.msra.mxu0 0
    %279 = vmatprep.mubr.bf16.mxu0 0
    %280 = vmatmul.mubr.bf16.gmra.mrb[0].mxu0 %v242
    %v281 = vpop.f32.mrb[0].mxu0
    %v282 = vadd.f32 0.0, %v281
    %v283 = vpop.f32.mrb[0].mxu0
    %v284 = vpop.f32.mrb[0].mxu0
    %v285 = vpop.f32.mrb[0].mxu0
    %286 = vdwg.mxu0
    %v288 = vunpack.c.l.b16 %v20
    %v289 = vpack.c.b16 %v288, %v288
    %290 = vrot.lane.b32.xlu0 %v289, 96
    %v291 = vpop.permute.xlu0 %290
    %v293 = vsel %vm36, %v20, 0
    %v296 = vsel %vm36, %v291, 0
    %298 = vmatprep.subr.bf16.mxu0 0
    %299 = vmatpush1.bf16.xpose.msra.mxu0 %v296
    %300 = vmatprep.subr.bf16.mxu0 0
    %301 = vmatpush1.bf16.xpose.msra.mxu0 0
    %302 = vmatprep.subr.bf16.mxu0 0
    %303 = vmatpush1.bf16.xpose.msra.mxu0 0
    %304 = vmatprep.subr.bf16.mxu0 0
    %305 = vmatpush1.bf16.xpose.msra.mxu0 0
    %306 = vmatprep.subr.bf16.mxu0 0
    %307 = vmatpush1.bf16.xpose.msra.mxu0 0
    %308 = vmatprep.subr.bf16.mxu0 0
    %309 = vmatpush1.bf16.xpose.msra.mxu0 0
    %310 = vmatprep.subr.bf16.mxu0 0
    %311 = vmatpush1.bf16.xpose.msra.mxu0 0
    %312 = vmatprep.subr.bf16.mxu0 0
    %313 = vmatpush1.bf16.xpose.msra.mxu0 0
    %314 = vmatprep.subr.bf16.mxu0 0
    %315 = vmatpush1.bf16.xpose.msra.mxu0 0
    %316 = vmatprep.subr.bf16.mxu0 0
    %317 = vmatpush1.bf16.xpose.msra.mxu0 0
    %318 = vmatprep.subr.bf16.mxu0 0
    %319 = vmatpush1.bf16.xpose.msra.mxu0 0
    %320 = vmatprep.subr.bf16.mxu0 0
    %321 = vmatpush1.bf16.xpose.msra.mxu0 0
    %322 = vmatprep.subr.bf16.mxu0 0
    %323 = vmatpush1.bf16.xpose.msra.mxu0 0
    %324 = vmatprep.subr.bf16.mxu0 0
    %325 = vmatpush1.bf16.xpose.msra.mxu0 0
    %326 = vmatprep.subr.bf16.mxu0 0
    %327 = vmatpush1.bf16.xpose.msra.mxu0 0
    %328 = vmatprep.subr.bf16.mxu0 0
    %329 = vmatpush1.bf16.xpose.msra.mxu0 0
    %330 = vmatprep.mubr.bf16.mxu0 0
    %331 = vmatmul.mubr.bf16.gmra.mrb[0].mxu0 %v293
    %v332 = vpop.f32.mrb[0].mxu0
    %v333 = vadd.f32 0.0, %v332
    %v334 = vpop.f32.mrb[0].mxu0
    %v335 = vpop.f32.mrb[0].mxu0
    %v336 = vpop.f32.mrb[0].mxu0
    %337 = vdwg.mxu0
    %v339 = vunpack.c.l.b16 %v21
    %v340 = vpack.c.b16 %v339, %v339
    %341 = vrot.lane.b32.xlu0 %v340, 96
    %v342 = vpop.permute.xlu0 %341
    %v344 = vsel %vm36, %v21, 0
    %v347 = vsel %vm36, %v342, 0
    %349 = vmatprep.subr.bf16.mxu0 0
    %350 = vmatpush1.bf16.xpose.msra.mxu0 %v347
    %351 = vmatprep.subr.bf16.mxu0 0
    %352 = vmatpush1.bf16.xpose.msra.mxu0 0
    %353 = vmatprep.subr.bf16.mxu0 0
    %354 = vmatpush1.bf16.xpose.msra.mxu0 0
    %355 = vmatprep.subr.bf16.mxu0 0
    %356 = vmatpush1.bf16.xpose.msra.mxu0 0
    %357 = vmatprep.subr.bf16.mxu0 0
    %358 = vmatpush1.bf16.xpose.msra.mxu0 0
    %359 = vmatprep.subr.bf16.mxu0 0
    %360 = vmatpush1.bf16.xpose.msra.mxu0 0
    %361 = vmatprep.subr.bf16.mxu0 0
    %362 = vmatpush1.bf16.xpose.msra.mxu0 0
    %363 = vmatprep.subr.bf16.mxu0 0
    %364 = vmatpush1.bf16.xpose.msra.mxu0 0
    %365 = vmatprep.subr.bf16.mxu0 0
    %366 = vmatpush1.bf16.xpose.msra.mxu0 0
    %367 = vmatprep.subr.bf16.mxu0 0
    %368 = vmatpush1.bf16.xpose.msra.mxu0 0
    %369 = vmatprep.subr.bf16.mxu0 0
    %370 = vmatpush1.bf16.xpose.msra.mxu0 0
    %371 = vmatprep.subr.bf16.mxu0 0
    %372 = vmatpush1.bf16.xpose.msra.mxu0 0
    %373 = vmatprep.subr.bf16.mxu0 0
    %374 = vmatpush1.bf16.xpose.msra.mxu0 0
    %375 = vmatprep.subr.bf16.mxu0 0
    %376 = vmatpush1.bf16.xpose.msra.mxu0 0
    %377 = vmatprep.subr.bf16.mxu0 0
    %378 = vmatpush1.bf16.xpose.msra.mxu0 0
    %379 = vmatprep.subr.bf16.mxu0 0
    %380 = vmatpush1.bf16.xpose.msra.mxu0 0
    %381 = vmatprep.mubr.bf16.mxu0 0
    %382 = vmatmul.mubr.bf16.gmra.mrb[0].mxu0 %v344
    %v383 = vpop.f32.mrb[0].mxu0
    %v384 = vadd.f32 0.0, %v383
    %v385 = vpop.f32.mrb[0].mxu0
    %v386 = vpop.f32.mrb[0].mxu0
    %v387 = vpop.f32.mrb[0].mxu0
    %388 = vdwg.mxu0
    %v390 = vunpack.c.l.b16 %v22
    %v391 = vpack.c.b16 %v390, %v390
    %392 = vrot.lane.b32.xlu0 %v391, 96
    %v393 = vpop.permute.xlu0 %392
    %v395 = vsel %vm36, %v22, 0
    %v398 = vsel %vm36, %v393, 0
    %400 = vmatprep.subr.bf16.mxu0 0
    %401 = vmatpush1.bf16.xpose.msra.mxu0 %v398
    %402 = vmatprep.subr.bf16.mxu0 0
    %403 = vmatpush1.bf16.xpose.msra.mxu0 0
    %404 = vmatprep.subr.bf16.mxu0 0
    %405 = vmatpush1.bf16.xpose.msra.mxu0 0
    %406 = vmatprep.subr.bf16.mxu0 0
    %407 = vmatpush1.bf16.xpose.msra.mxu0 0
    %408 = vmatprep.subr.bf16.mxu0 0
    %409 = vmatpush1.bf16.xpose.msra.mxu0 0
    %410 = vmatprep.subr.bf16.mxu0 0
    %411 = vmatpush1.bf16.xpose.msra.mxu0 0
    %412 = vmatprep.subr.bf16.mxu0 0
    %413 = vmatpush1.bf16.xpose.msra.mxu0 0
    %414 = vmatprep.subr.bf16.mxu0 0
    %415 = vmatpush1.bf16.xpose.msra.mxu0 0
    %416 = vmatprep.subr.bf16.mxu0 0
    %417 = vmatpush1.bf16.xpose.msra.mxu0 0
    %418 = vmatprep.subr.bf16.mxu0 0
    %419 = vmatpush1.bf16.xpose.msra.mxu0 0
    %420 = vmatprep.subr.bf16.mxu0 0
    %421 = vmatpush1.bf16.xpose.msra.mxu0 0
    %422 = vmatprep.subr.bf16.mxu0 0
    %423 = vmatpush1.bf16.xpose.msra.mxu0 0
    %424 = vmatprep.subr.bf16.mxu0 0
    %425 = vmatpush1.bf16.xpose.msra.mxu0 0
    %426 = vmatprep.subr.bf16.mxu0 0
    %427 = vmatpush1.bf16.xpose.msra.mxu0 0
    %428 = vmatprep.subr.bf16.mxu0 0
    %429 = vmatpush1.bf16.xpose.msra.mxu0 0
    %430 = vmatprep.subr.bf16.mxu0 0
    %431 = vmatpush1.bf16.xpose.msra.mxu0 0
    %432 = vmatprep.mubr.bf16.mxu0 0
    %433 = vmatmul.mubr.bf16.gmra.mrb[0].mxu0 %v395
    %v434 = vpop.f32.mrb[0].mxu0
    %v435 = vadd.f32 0.0, %v434
    %v436 = vpop.f32.mrb[0].mxu0
    %v437 = vpop.f32.mrb[0].mxu0
    %v438 = vpop.f32.mrb[0].mxu0
    %439 = vdwg.mxu0
    %v440 = vmul.f32 %v78, 0.35355338
    %v441 = vmul.f32 %v129, 0.35355338
    %v442 = vmul.f32 %v180, 0.35355338
    %v443 = vmul.f32 %v231, 0.35355338
    %v444 = vmul.f32 %v282, 0.35355338
    %v445 = vmul.f32 %v333, 0.35355338
    %v446 = vmul.f32 %v384, 0.35355338
    %v447 = vmul.f32 %v435, 0.35355338
    %v448 = vadd.f32 %v440, %v23
    %v449 = vadd.f32 %v441, %v24
    %v450 = vadd.f32 %v442, %v25
    %v451 = vadd.f32 %v443, %v26
    %v452 = vadd.f32 %v444, %v27
    %v453 = vadd.f32 %v445, %v28
    %v454 = vadd.f32 %v446, %v29
    %v455 = vadd.f32 %v447, %v30
    %v456 = vsel %vm36, %v448, -inf
    %457 = vmax.xlane.f32.xlu0 %v456
    %v458 = vpop.xlane.xlu0 %457
    %v459 = vsel %vm36, %v449, -inf
    %460 = vmax.xlane.f32.xlu0 %v459
    %v461 = vpop.xlane.xlu0 %460
    %v462 = vsel %vm36, %v450, -inf
    %463 = vmax.xlane.f32.xlu0 %v462
    %v464 = vpop.xlane.xlu0 %463
    %v465 = vsel %vm36, %v451, -inf
    %466 = vmax.xlane.f32.xlu0 %v465
    %v467 = vpop.xlane.xlu0 %466
    %v468 = vsel %vm36, %v452, -inf
    %469 = vmax.xlane.f32.xlu0 %v468
    %v470 = vpop.xlane.xlu0 %469
    %v471 = vsel %vm36, %v453, -inf
    %472 = vmax.xlane.f32.xlu0 %v471
    %v473 = vpop.xlane.xlu0 %472
    %v474 = vsel %vm36, %v454, -inf
    %475 = vmax.xlane.f32.xlu0 %v474
    %v476 = vpop.xlane.xlu0 %475
    %v477 = vsel %vm36, %v455, -inf
    %478 = vmax.xlane.f32.xlu0 %v477
    %v479 = vpop.xlane.xlu0 %478
    %v480 = vsub.f32 %v448, %v458
    %v481 = vsub.f32 %v449, %v461
    %v482 = vsub.f32 %v450, %v464
    %v483 = vsub.f32 %v451, %v467
    %v484 = vsub.f32 %v452, %v470
    %v485 = vsub.f32 %v453, %v473
    %v486 = vsub.f32 %v454, %v476
    %v487 = vsub.f32 %v455, %v479
    %v488 = vmul.f32 %v480, 1.442695
    %v489 = vpow.pop %v488
    %v490 = vmul.f32 %v481, 1.442695
    %v491 = vpow.pop %v490
    %v492 = vmul.f32 %v482, 1.442695
    %v493 = vpow.pop %v492
    %v494 = vmul.f32 %v483, 1.442695
    %v495 = vpow.pop %v494
    %v496 = vmul.f32 %v484, 1.442695
    %v497 = vpow.pop %v496
    %v498 = vmul.f32 %v485, 1.442695
    %v499 = vpow.pop %v498
    %v500 = vmul.f32 %v486, 1.442695
    %v501 = vpow.pop %v500
    %v502 = vmul.f32 %v487, 1.442695
    %v503 = vpow.pop %v502
    %v504 = vsel %vm36, %v489, 0.0
    %505 = vadd.xlane.f32.xlu0 %v504
    %v506 = vpop.xlane.xlu0 %505
    %v507 = vsel %vm36, %v491, 0.0
    %508 = vadd.xlane.f32.xlu0 %v507
    %v509 = vpop.xlane.xlu0 %508
    %v510 = vsel %vm36, %v493, 0.0
    %511 = vadd.xlane.f32.xlu0 %v510
    %v512 = vpop.xlane.xlu0 %511
    %v513 = vsel %vm36, %v495, 0.0
    %514 = vadd.xlane.f32.xlu0 %v513
    %v515 = vpop.xlane.xlu0 %514
    %v516 = vsel %vm36, %v497, 0.0
    %517 = vadd.xlane.f32.xlu0 %v516
    %v518 = vpop.xlane.xlu0 %517
    %v519 = vsel %vm36, %v499, 0.0
    %520 = vadd.xlane.f32.xlu0 %v519
    %v521 = vpop.xlane.xlu0 %520
    %v522 = vsel %vm36, %v501, 0.0
    %523 = vadd.xlane.f32.xlu0 %v522
    %v524 = vpop.xlane.xlu0 %523
    %v525 = vsel %vm36, %v503, 0.0
    %526 = vadd.xlane.f32.xlu0 %v525
    %v527 = vpop.xlane.xlu0 %526
    %v528 = vrcp.pop %v506
    %v529 = vrcp.pop %v509
    %v530 = vrcp.pop %v512
    %v531 = vrcp.pop %v515
    %v532 = vrcp.pop %v518
    %v533 = vrcp.pop %v521
    %v534 = vrcp.pop %v524
    %v535 = vrcp.pop %v527
    %v536 = vmul.f32 %v489, %v528
    %v537 = vmul.f32 %v491, %v529
    %v538 = vmul.f32 %v493, %v530
    %v539 = vmul.f32 %v495, %v531
    %v540 = vmul.f32 %v497, %v532
    %v541 = vmul.f32 %v499, %v533
    %v542 = vmul.f32 %v501, %v534
    %v543 = vmul.f32 %v503, %v535
    %v544 = vpack.c.bf16 %v536, %v536
    %v545 = vpack.c.bf16 %v537, %v537
    %v546 = vpack.c.bf16 %v538, %v538
    %v547 = vpack.c.bf16 %v539, %v539
    %v548 = vpack.c.bf16 %v540, %v540
    %v549 = vpack.c.bf16 %v541, %v541
    %v550 = vpack.c.bf16 %v542, %v542
    %v551 = vpack.c.bf16 %v543, %v543
    %552 = vrot.lane.b32.xlu0 %v33, 64
    %v553 = vpop.permute.xlu0 %552
    %v555 = vsel %vm36, %v544, 0
    %vm557 = vcmask 1043456
    %v559 = vsel %vm557, %v553, 0
    %561 = vmatprep.subr.bf16.mxu0 0
    %562 = vmatpush1.bf16.msra.mxu0 %v559
    %563 = vmatprep.subr.bf16.mxu0 0
    %564 = vmatpush1.bf16.msra.mxu0 0
    %565 = vmatprep.subr.bf16.mxu0 0
    %566 = vmatpush1.bf16.msra.mxu0 0
    %567 = vmatprep.subr.bf16.mxu0 0
    %568 = vmatpush1.bf16.msra.mxu0 0
    %569 = vmatprep.subr.bf16.mxu0 0
    %570 = vmatpush1.bf16.msra.mxu0 0
    %571 = vmatprep.subr.bf16.mxu0 0
    %572 = vmatpush1.bf16.msra.mxu0 0
    %573 = vmatprep.subr.bf16.mxu0 0
    %574 = vmatpush1.bf16.msra.mxu0 0
    %575 = vmatprep.subr.bf16.mxu0 0
    %576 = vmatpush1.bf16.msra.mxu0 0
    %577 = vmatprep.subr.bf16.mxu0 0
    %578 = vmatpush1.bf16.msra.mxu0 0
    %579 = vmatprep.subr.bf16.mxu0 0
    %580 = vmatpush1.bf16.msra.mxu0 0
    %581 = vmatprep.subr.bf16.mxu0 0
    %582 = vmatpush1.bf16.msra.mxu0 0
    %583 = vmatprep.subr.bf16.mxu0 0
    %584 = vmatpush1.bf16.msra.mxu0 0
    %585 = vmatprep.subr.bf16.mxu0 0
    %586 = vmatpush1.bf16.msra.mxu0 0
    %587 = vmatprep.subr.bf16.mxu0 0
    %588 = vmatpush1.bf16.msra.mxu0 0
    %589 = vmatprep.subr.bf16.mxu0 0
    %590 = vmatpush1.bf16.msra.mxu0 0
    %591 = vmatprep.subr.bf16.mxu0 0
    %592 = vmatpush1.bf16.msra.mxu0 0
    %593 = vmatprep.mubr.bf16.mxu0 0
    %594 = vmatmul.mubr.bf16.gmra.mrb[0].mxu0 %v555
    %v595 = vpop.f32.mrb[0].mxu0
    %v596 = vadd.f32 0.0, %v595
    %v597 = vpop.f32.mrb[0].mxu0
    %v598 = vpop.f32.mrb[0].mxu0
    %v599 = vpop.f32.mrb[0].mxu0
    %600 = vdwg.mxu0
    %601 = vrot.lane.b32.xlu0 %v85, 64
    %v602 = vpop.permute.xlu0 %601
    %v604 = vsel %vm36, %v545, 0
    %v607 = vsel %vm557, %v602, 0
    %609 = vmatprep.subr.bf16.mxu0 0
    %610 = vmatpush1.bf16.msra.mxu0 %v607
    %611 = vmatprep.subr.bf16.mxu0 0
    %612 = vmatpush1.bf16.msra.mxu0 0
    %613 = vmatprep.subr.bf16.mxu0 0
    %614 = vmatpush1.bf16.msra.mxu0 0
    %615 = vmatprep.subr.bf16.mxu0 0
    %616 = vmatpush1.bf16.msra.mxu0 0
    %617 = vmatprep.subr.bf16.mxu0 0
    %618 = vmatpush1.bf16.msra.mxu0 0
    %619 = vmatprep.subr.bf16.mxu0 0
    %620 = vmatpush1.bf16.msra.mxu0 0
    %621 = vmatprep.subr.bf16.mxu0 0
    %622 = vmatpush1.bf16.msra.mxu0 0
    %623 = vmatprep.subr.bf16.mxu0 0
    %624 = vmatpush1.bf16.msra.mxu0 0
    %625 = vmatprep.subr.bf16.mxu0 0
    %626 = vmatpush1.bf16.msra.mxu0 0
    %627 = vmatprep.subr.bf16.mxu0 0
    %628 = vmatpush1.bf16.msra.mxu0 0
    %629 = vmatprep.subr.bf16.mxu0 0
    %630 = vmatpush1.bf16.msra.mxu0 0
    %631 = vmatprep.subr.bf16.mxu0 0
    %632 = vmatpush1.bf16.msra.mxu0 0
    %633 = vmatprep.subr.bf16.mxu0 0
    %634 = vmatpush1.bf16.msra.mxu0 0
    %635 = vmatprep.subr.bf16.mxu0 0
    %636 = vmatpush1.bf16.msra.mxu0 0
    %637 = vmatprep.subr.bf16.mxu0 0
    %638 = vmatpush1.bf16.msra.mxu0 0
    %639 = vmatprep.subr.bf16.mxu0 0
    %640 = vmatpush1.bf16.msra.mxu0 0
    %641 = vmatprep.mubr.bf16.mxu0 0
    %642 = vmatmul.mubr.bf16.gmra.mrb[0].mxu0 %v604
    %v643 = vpop.f32.mrb[0].mxu0
    %v644 = vadd.f32 0.0, %v643
    %v645 = vpop.f32.mrb[0].mxu0
    %v646 = vpop.f32.mrb[0].mxu0
    %v647 = vpop.f32.mrb[0].mxu0
    %648 = vdwg.mxu0
    %649 = vrot.lane.b32.xlu0 %v136, 64
    %v650 = vpop.permute.xlu0 %649
    %v652 = vsel %vm36, %v546, 0
    %v655 = vsel %vm557, %v650, 0
    %657 = vmatprep.subr.bf16.mxu0 0
    %658 = vmatpush1.bf16.msra.mxu0 %v655
    %659 = vmatprep.subr.bf16.mxu0 0
    %660 = vmatpush1.bf16.msra.mxu0 0
    %661 = vmatprep.subr.bf16.mxu0 0
    %662 = vmatpush1.bf16.msra.mxu0 0
    %663 = vmatprep.subr.bf16.mxu0 0
    %664 = vmatpush1.bf16.msra.mxu0 0
    %665 = vmatprep.subr.bf16.mxu0 0
    %666 = vmatpush1.bf16.msra.mxu0 0
    %667 = vmatprep.subr.bf16.mxu0 0
    %668 = vmatpush1.bf16.msra.mxu0 0
    %669 = vmatprep.subr.bf16.mxu0 0
    %670 = vmatpush1.bf16.msra.mxu0 0
    %671 = vmatprep.subr.bf16.mxu0 0
    %672 = vmatpush1.bf16.msra.mxu0 0
    %673 = vmatprep.subr.bf16.mxu0 0
    %674 = vmatpush1.bf16.msra.mxu0 0
    %675 = vmatprep.subr.bf16.mxu0 0
    %676 = vmatpush1.bf16.msra.mxu0 0
    %677 = vmatprep.subr.bf16.mxu0 0
    %678 = vmatpush1.bf16.msra.mxu0 0
    %679 = vmatprep.subr.bf16.mxu0 0
    %680 = vmatpush1.bf16.msra.mxu0 0
    %681 = vmatprep.subr.bf16.mxu0 0
    %682 = vmatpush1.bf16.msra.mxu0 0
    %683 = vmatprep.subr.bf16.mxu0 0
    %684 = vmatpush1.bf16.msra.mxu0 0
    %685 = vmatprep.subr.bf16.mxu0 0
    %686 = vmatpush1.bf16.msra.mxu0 0
    %687 = vmatprep.subr.bf16.mxu0 0
    %688 = vmatpush1.bf16.msra.mxu0 0
    %689 = vmatprep.mubr.bf16.mxu0 0
    %690 = vmatmul.mubr.bf16.gmra.mrb[0].mxu0 %v652
    %v691 = vpop.f32.mrb[0].mxu0
    %v692 = vadd.f32 0.0, %v691
    %v693 = vpop.f32.mrb[0].mxu0
    %v694 = vpop.f32.mrb[0].mxu0
    %v695 = vpop.f32.mrb[0].mxu0
    %696 = vdwg.mxu0
    %697 = vrot.lane.b32.xlu0 %v187, 64
    %v698 = vpop.permute.xlu0 %697
    %v700 = vsel %vm36, %v547, 0
    %v703 = vsel %vm557, %v698, 0
    %705 = vmatprep.subr.bf16.mxu0 0
    %706 = vmatpush1.bf16.msra.mxu0 %v703
    %707 = vmatprep.subr.bf16.mxu0 0
    %708 = vmatpush1.bf16.msra.mxu0 0
    %709 = vmatprep.subr.bf16.mxu0 0
    %710 = vmatpush1.bf16.msra.mxu0 0
    %711 = vmatprep.subr.bf16.mxu0 0
    %712 = vmatpush1.bf16.msra.mxu0 0
    %713 = vmatprep.subr.bf16.mxu0 0
    %714 = vmatpush1.bf16.msra.mxu0 0
    %715 = vmatprep.subr.bf16.mxu0 0
    %716 = vmatpush1.bf16.msra.mxu0 0
    %717 = vmatprep.subr.bf16.mxu0 0
    %718 = vmatpush1.bf16.msra.mxu0 0
    %719 = vmatprep.subr.bf16.mxu0 0
    %720 = vmatpush1.bf16.msra.mxu0 0
    %721 = vmatprep.subr.bf16.mxu0 0
    %722 = vmatpush1.bf16.msra.mxu0 0
    %723 = vmatprep.subr.bf16.mxu0 0
    %724 = vmatpush1.bf16.msra.mxu0 0
    %725 = vmatprep.subr.bf16.mxu0 0
    %726 = vmatpush1.bf16.msra.mxu0 0
    %727 = vmatprep.subr.bf16.mxu0 0
    %728 = vmatpush1.bf16.msra.mxu0 0
    %729 = vmatprep.subr.bf16.mxu0 0
    %730 = vmatpush1.bf16.msra.mxu0 0
    %731 = vmatprep.subr.bf16.mxu0 0
    %732 = vmatpush1.bf16.msra.mxu0 0
    %733 = vmatprep.subr.bf16.mxu0 0
    %734 = vmatpush1.bf16.msra.mxu0 0
    %735 = vmatprep.subr.bf16.mxu0 0
    %736 = vmatpush1.bf16.msra.mxu0 0
    %737 = vmatprep.mubr.bf16.mxu0 0
    %738 = vmatmul.mubr.bf16.gmra.mrb[0].mxu0 %v700
    %v739 = vpop.f32.mrb[0].mxu0
    %v740 = vadd.f32 0.0, %v739
    %v741 = vpop.f32.mrb[0].mxu0
    %v742 = vpop.f32.mrb[0].mxu0
    %v743 = vpop.f32.mrb[0].mxu0
    %744 = vdwg.mxu0
    %745 = vrot.lane.b32.xlu0 %v238, 64
    %v746 = vpop.permute.xlu0 %745
    %v748 = vsel %vm36, %v548, 0
    %v751 = vsel %vm557, %v746, 0
    %753 = vmatprep.subr.bf16.mxu0 0
    %754 = vmatpush1.bf16.msra.mxu0 %v751
    %755 = vmatprep.subr.bf16.mxu0 0
    %756 = vmatpush1.bf16.msra.mxu0 0
    %757 = vmatprep.subr.bf16.mxu0 0
    %758 = vmatpush1.bf16.msra.mxu0 0
    %759 = vmatprep.subr.bf16.mxu0 0
    %760 = vmatpush1.bf16.msra.mxu0 0
    %761 = vmatprep.subr.bf16.mxu0 0
    %762 = vmatpush1.bf16.msra.mxu0 0
    %763 = vmatprep.subr.bf16.mxu0 0
    %764 = vmatpush1.bf16.msra.mxu0 0
    %765 = vmatprep.subr.bf16.mxu0 0
    %766 = vmatpush1.bf16.msra.mxu0 0
    %767 = vmatprep.subr.bf16.mxu0 0
    %768 = vmatpush1.bf16.msra.mxu0 0
    %769 = vmatprep.subr.bf16.mxu0 0
    %770 = vmatpush1.bf16.msra.mxu0 0
    %771 = vmatprep.subr.bf16.mxu0 0
    %772 = vmatpush1.bf16.msra.mxu0 0
    %773 = vmatprep.subr.bf16.mxu0 0
    %774 = vmatpush1.bf16.msra.mxu0 0
    %775 = vmatprep.subr.bf16.mxu0 0
    %776 = vmatpush1.bf16.msra.mxu0 0
    %777 = vmatprep.subr.bf16.mxu0 0
    %778 = vmatpush1.bf16.msra.mxu0 0
    %779 = vmatprep.subr.bf16.mxu0 0
    %780 = vmatpush1.bf16.msra.mxu0 0
    %781 = vmatprep.subr.bf16.mxu0 0
    %782 = vmatpush1.bf16.msra.mxu0 0
    %783 = vmatprep.subr.bf16.mxu0 0
    %784 = vmatpush1.bf16.msra.mxu0 0
    %785 = vmatprep.mubr.bf16.mxu0 0
    %786 = vmatmul.mubr.bf16.gmra.mrb[0].mxu0 %v748
    %v787 = vpop.f32.mrb[0].mxu0
    %v788 = vadd.f32 0.0, %v787
    %v789 = vpop.f32.mrb[0].mxu0
    %v790 = vpop.f32.mrb[0].mxu0
    %v791 = vpop.f32.mrb[0].mxu0
    %792 = vdwg.mxu0
    %793 = vrot.lane.b32.xlu0 %v289, 64
    %v794 = vpop.permute.xlu0 %793
    %v796 = vsel %vm36, %v549, 0
    %v799 = vsel %vm557, %v794, 0
    %801 = vmatprep.subr.bf16.mxu0 0
    %802 = vmatpush1.bf16.msra.mxu0 %v799
    %803 = vmatprep.subr.bf16.mxu0 0
    %804 = vmatpush1.bf16.msra.mxu0 0
    %805 = vmatprep.subr.bf16.mxu0 0
    %806 = vmatpush1.bf16.msra.mxu0 0
    %807 = vmatprep.subr.bf16.mxu0 0
    %808 = vmatpush1.bf16.msra.mxu0 0
    %809 = vmatprep.subr.bf16.mxu0 0
    %810 = vmatpush1.bf16.msra.mxu0 0
    %811 = vmatprep.subr.bf16.mxu0 0
    %812 = vmatpush1.bf16.msra.mxu0 0
    %813 = vmatprep.subr.bf16.mxu0 0
    %814 = vmatpush1.bf16.msra.mxu0 0
    %815 = vmatprep.subr.bf16.mxu0 0
    %816 = vmatpush1.bf16.msra.mxu0 0
    %817 = vmatprep.subr.bf16.mxu0 0
    %818 = vmatpush1.bf16.msra.mxu0 0
    %819 = vmatprep.subr.bf16.mxu0 0
    %820 = vmatpush1.bf16.msra.mxu0 0
    %821 = vmatprep.subr.bf16.mxu0 0
    %822 = vmatpush1.bf16.msra.mxu0 0
    %823 = vmatprep.subr.bf16.mxu0 0
    %824 = vmatpush1.bf16.msra.mxu0 0
    %825 = vmatprep.subr.bf16.mxu0 0
    %826 = vmatpush1.bf16.msra.mxu0 0
    %827 = vmatprep.subr.bf16.mxu0 0
    %828 = vmatpush1.bf16.msra.mxu0 0
    %829 = vmatprep.subr.bf16.mxu0 0
    %830 = vmatpush1.bf16.msra.mxu0 0
    %831 = vmatprep.subr.bf16.mxu0 0
    %832 = vmatpush1.bf16.msra.mxu0 0
    %833 = vmatprep.mubr.bf16.mxu0 0
    %834 = vmatmul.mubr.bf16.gmra.mrb[0].mxu0 %v796
    %v835 = vpop.f32.mrb[0].mxu0
    %v836 = vadd.f32 0.0, %v835
    %v837 = vpop.f32.mrb[0].mxu0
    %v838 = vpop.f32.mrb[0].mxu0
    %v839 = vpop.f32.mrb[0].mxu0
    %840 = vdwg.mxu0
    %841 = vrot.lane.b32.xlu0 %v340, 64
    %v842 = vpop.permute.xlu0 %841
    %v844 = vsel %vm36, %v550, 0
    %v847 = vsel %vm557, %v842, 0
    %849 = vmatprep.subr.bf16.mxu0 0
    %850 = vmatpush1.bf16.msra.mxu0 %v847
    %851 = vmatprep.subr.bf16.mxu0 0
    %852 = vmatpush1.bf16.msra.mxu0 0
    %853 = vmatprep.subr.bf16.mxu0 0
    %854 = vmatpush1.bf16.msra.mxu0 0
    %855 = vmatprep.subr.bf16.mxu0 0
    %856 = vmatpush1.bf16.msra.mxu0 0
    %857 = vmatprep.subr.bf16.mxu0 0
    %858 = vmatpush1.bf16.msra.mxu0 0
    %859 = vmatprep.subr.bf16.mxu0 0
    %860 = vmatpush1.bf16.msra.mxu0 0
    %861 = vmatprep.subr.bf16.mxu0 0
    %862 = vmatpush1.bf16.msra.mxu0 0
    %863 = vmatprep.subr.bf16.mxu0 0
    %864 = vmatpush1.bf16.msra.mxu0 0
    %865 = vmatprep.subr.bf16.mxu0 0
    %866 = vmatpush1.bf16.msra.mxu0 0
    %867 = vmatprep.subr.bf16.mxu0 0
    %868 = vmatpush1.bf16.msra.mxu0 0
    %869 = vmatprep.subr.bf16.mxu0 0
    %870 = vmatpush1.bf16.msra.mxu0 0
    %871 = vmatprep.subr.bf16.mxu0 0
    %872 = vmatpush1.bf16.msra.mxu0 0
    %873 = vmatprep.subr.bf16.mxu0 0
    %874 = vmatpush1.bf16.msra.mxu0 0
    %875 = vmatprep.subr.bf16.mxu0 0
    %876 = vmatpush1.bf16.msra.mxu0 0
    %877 = vmatprep.subr.bf16.mxu0 0
    %878 = vmatpush1.bf16.msra.mxu0 0
    %879 = vmatprep.subr.bf16.mxu0 0
    %880 = vmatpush1.bf16.msra.mxu0 0
    %881 = vmatprep.mubr.bf16.mxu0 0
    %882 = vmatmul.mubr.bf16.gmra.mrb[0].mxu0 %v844
    %v883 = vpop.f32.mrb[0].mxu0
    %v884 = vadd.f32 0.0, %v883
    %v885 = vpop.f32.mrb[0].mxu0
    %v886 = vpop.f32.mrb[0].mxu0
    %v887 = vpop.f32.mrb[0].mxu0
    %888 = vdwg.mxu0
    %889 = vrot.lane.b32.xlu0 %v391, 64
    %v890 = vpop.permute.xlu0 %889
    %v892 = vsel %vm36, %v551, 0
    %v895 = vsel %vm557, %v890, 0
    %897 = vmatprep.subr.bf16.mxu0 0
    %898 = vmatpush1.bf16.msra.mxu0 %v895
    %899 = vmatprep.subr.bf16.mxu0 0
    %900 = vmatpush1.bf16.msra.mxu0 0
    %901 = vmatprep.subr.bf16.mxu0 0
    %902 = vmatpush1.bf16.msra.mxu0 0
    %903 = vmatprep.subr.bf16.mxu0 0
    %904 = vmatpush1.bf16.msra.mxu0 0
    %905 = vmatprep.subr.bf16.mxu0 0
    %906 = vmatpush1.bf16.msra.mxu0 0
    %907 = vmatprep.subr.bf16.mxu0 0
    %908 = vmatpush1.bf16.msra.mxu0 0
    %909 = vmatprep.subr.bf16.mxu0 0
    %910 = vmatpush1.bf16.msra.mxu0 0
    %911 = vmatprep.subr.bf16.mxu0 0
    %912 = vmatpush1.bf16.msra.mxu0 0
    %913 = vmatprep.subr.bf16.mxu0 0
    %914 = vmatpush1.bf16.msra.mxu0 0
    %915 = vmatprep.subr.bf16.mxu0 0
    %916 = vmatpush1.bf16.msra.mxu0 0
    %917 = vmatprep.subr.bf16.mxu0 0
    %918 = vmatpush1.bf16.msra.mxu0 0
    %919 = vmatprep.subr.bf16.mxu0 0
    %920 = vmatpush1.bf16.msra.mxu0 0
    %921 = vmatprep.subr.bf16.mxu0 0
    %922 = vmatpush1.bf16.msra.mxu0 0
    %923 = vmatprep.subr.bf16.mxu0 0
    %924 = vmatpush1.bf16.msra.mxu0 0
    %925 = vmatprep.subr.bf16.mxu0 0
    %926 = vmatpush1.bf16.msra.mxu0 0
    %927 = vmatprep.subr.bf16.mxu0 0
    %928 = vmatpush1.bf16.msra.mxu0 0
    %929 = vmatprep.mubr.bf16.mxu0 0
    %930 = vmatmul.mubr.bf16.gmra.mrb[0].mxu0 %v892
    %v931 = vpop.f32.mrb[0].mxu0
    %v932 = vadd.f32 0.0, %v931
    %v933 = vpop.f32.mrb[0].mxu0
    %v934 = vpop.f32.mrb[0].mxu0
    %v935 = vpop.f32.mrb[0].mxu0
    %936 = vdwg.mxu0
    %937 = vrot.lane.b32.xlu0 %v33, 120
    %v938 = vpop.permute.xlu0 %937
    %939 = vrot.lane.b32.xlu0 %v33, 88
    %v940 = vpop.permute.xlu0 %939
    %v942 = vsel %vm36, %v938, 0
    %v945 = vsel %vm36, %v940, 0
    %947 = vmatprep.subr.bf16.mxu0 0
    %948 = vmatpush1.bf16.xpose.msra.mxu0 %v945
    %949 = vmatprep.subr.bf16.mxu0 0
    %950 = vmatpush1.bf16.xpose.msra.mxu0 0
    %951 = vmatprep.subr.bf16.mxu0 0
    %952 = vmatpush1.bf16.xpose.msra.mxu0 0
    %953 = vmatprep.subr.bf16.mxu0 0
    %954 = vmatpush1.bf16.xpose.msra.mxu0 0
    %955 = vmatprep.subr.bf16.mxu0 0
    %956 = vmatpush1.bf16.xpose.msra.mxu0 0
    %957 = vmatprep.subr.bf16.mxu0 0
    %958 = vmatpush1.bf16.xpose.msra.mxu0 0
    %959 = vmatprep.subr.bf16.mxu0 0
    %960 = vmatpush1.bf16.xpose.msra.mxu0 0
    %961 = vmatprep.subr.bf16.mxu0 0
    %962 = vmatpush1.bf16.xpose.msra.mxu0 0
    %963 = vmatprep.subr.bf16.mxu0 0
    %964 = vmatpush1.bf16.xpose.msra.mxu0 0
    %965 = vmatprep.subr.bf16.mxu0 0
    %966 = vmatpush1.bf16.xpose.msra.mxu0 0
    %967 = vmatprep.subr.bf16.mxu0 0
    %968 = vmatpush1.bf16.xpose.msra.mxu0 0
    %969 = vmatprep.subr.bf16.mxu0 0
    %970 = vmatpush1.bf16.xpose.msra.mxu0 0
    %971 = vmatprep.subr.bf16.mxu0 0
    %972 = vmatpush1.bf16.xpose.msra.mxu0 0
    %973 = vmatprep.subr.bf16.mxu0 0
    %974 = vmatpush1.bf16.xpose.msra.mxu0 0
    %975 = vmatprep.subr.bf16.mxu0 0
    %976 = vmatpush1.bf16.xpose.msra.mxu0 0
    %977 = vmatprep.subr.bf16.mxu0 0
    %978 = vmatpush1.bf16.xpose.msra.mxu0 0
    %979 = vmatprep.mubr.bf16.mxu0 0
    %980 = vmatmul.mubr.bf16.gmra.mrb[0].mxu0 %v942
    %v981 = vpop.f32.mrb[0].mxu0
    %v982 = vadd.f32 0.0, %v981
    %v983 = vpop.f32.mrb[0].mxu0
    %v984 = vpop.f32.mrb[0].mxu0
    %v985 = vpop.f32.mrb[0].mxu0
    %986 = vdwg.mxu0
    %987 = vrot.lane.b32.xlu0 %v85, 120
    %v988 = vpop.permute.xlu0 %987
    %989 = vrot.lane.b32.xlu0 %v85, 88
    %v990 = vpop.permute.xlu0 %989
    %v992 = vsel %vm36, %v988, 0
    %v995 = vsel %vm36, %v990, 0
    %997 = vmatprep.subr.bf16.mxu0 0
    %998 = vmatpush1.bf16.xpose.msra.mxu0 %v995
    %999 = vmatprep.subr.bf16.mxu0 0
    %1000 = vmatpush1.bf16.xpose.msra.mxu0 0
    %1001 = vmatprep.subr.bf16.mxu0 0
    %1002 = vmatpush1.bf16.xpose.msra.mxu0 0
    %1003 = vmatprep.subr.bf16.mxu0 0
    %1004 = vmatpush1.bf16.xpose.msra.mxu0 0
    %1005 = vmatprep.subr.bf16.mxu0 0
    %1006 = vmatpush1.bf16.xpose.msra.mxu0 0
    %1007 = vmatprep.subr.bf16.mxu0 0
    %1008 = vmatpush1.bf16.xpose.msra.mxu0 0
    %1009 = vmatprep.subr.bf16.mxu0 0
    %1010 = vmatpush1.bf16.xpose.msra.mxu0 0
    %1011 = vmatprep.subr.bf16.mxu0 0
    %1012 = vmatpush1.bf16.xpose.msra.mxu0 0
    %1013 = vmatprep.subr.bf16.mxu0 0
    %1014 = vmatpush1.bf16.xpose.msra.mxu0 0
    %1015 = vmatprep.subr.bf16.mxu0 0
    %1016 = vmatpush1.bf16.xpose.msra.mxu0 0
    %1017 = vmatprep.subr.bf16.mxu0 0
    %1018 = vmatpush1.bf16.xpose.msra.mxu0 0
    %1019 = vmatprep.subr.bf16.mxu0 0
    %1020 = vmatpush1.bf16.xpose.msra.mxu0 0
    %1021 = vmatprep.subr.bf16.mxu0 0
    %1022 = vmatpush1.bf16.xpose.msra.mxu0 0
    %1023 = vmatprep.subr.bf16.mxu0 0
    %1024 = vmatpush1.bf16.xpose.msra.mxu0 0
    %1025 = vmatprep.subr.bf16.mxu0 0
    %1026 = vmatpush1.bf16.xpose.msra.mxu0 0
    %1027 = vmatprep.subr.bf16.mxu0 0
    %1028 = vmatpush1.bf16.xpose.msra.mxu0 0
    %1029 = vmatprep.mubr.bf16.mxu0 0
    %1030 = vmatmul.mubr.bf16.gmra.mrb[0].mxu0 %v992
    %v1031 = vpop.f32.mrb[0].mxu0
    %v1032 = vadd.f32 0.0, %v1031
    %v1033 = vpop.f32.mrb[0].mxu0
    %v1034 = vpop.f32.mrb[0].mxu0
    %v1035 = vpop.f32.mrb[0].mxu0
    %1036 = vdwg.mxu0
    %1037 = vrot.lane.b32.xlu0 %v136, 120
    %v1038 = vpop.permute.xlu0 %1037
    %1039 = vrot.lane.b32.xlu0 %v136, 88
    %v1040 = vpop.permute.xlu0 %1039
    %v1042 = vsel %vm36, %v1038, 0
    %v1045 = vsel %vm36, %v1040, 0
    %1047 = vmatprep.subr.bf16.mxu0 0
    %1048 = vmatpush1.bf16.xpose.msra.mxu0 %v1045
    %1049 = vmatprep.subr.bf16.mxu0 0
    %1050 = vmatpush1.bf16.xpose.msra.mxu0 0
    %1051 = vmatprep.subr.bf16.mxu0 0
    %1052 = vmatpush1.bf16.xpose.msra.mxu0 0
    %1053 = vmatprep.subr.bf16.mxu0 0
    %1054 = vmatpush1.bf16.xpose.msra.mxu0 0
    %1055 = vmatprep.subr.bf16.mxu0 0
    %1056 = vmatpush1.bf16.xpose.msra.mxu0 0
    %1057 = vmatprep.subr.bf16.mxu0 0
    %1058 = vmatpush1.bf16.xpose.msra.mxu0 0
    %1059 = vmatprep.subr.bf16.mxu0 0
    %1060 = vmatpush1.bf16.xpose.msra.mxu0 0
    %1061 = vmatprep.subr.bf16.mxu0 0
    %1062 = vmatpush1.bf16.xpose.msra.mxu0 0
    %1063 = vmatprep.subr.bf16.mxu0 0
    %1064 = vmatpush1.bf16.xpose.msra.mxu0 0
    %1065 = vmatprep.subr.bf16.mxu0 0
    %1066 = vmatpush1.bf16.xpose.msra.mxu0 0
    %1067 = vmatprep.subr.bf16.mxu0 0
    %1068 = vmatpush1.bf16.xpose.msra.mxu0 0
    %1069 = vmatprep.subr.bf16.mxu0 0
    %1070 = vmatpush1.bf16.xpose.msra.mxu0 0
    %1071 = vmatprep.subr.bf16.mxu0 0
    %1072 = vmatpush1.bf16.xpose.msra.mxu0 0
    %1073 = vmatprep.subr.bf16.mxu0 0
    %1074 = vmatpush1.bf16.xpose.msra.mxu0 0
    %1075 = vmatprep.subr.bf16.mxu0 0
    %1076 = vmatpush1.bf16.xpose.msra.mxu0 0
    %1077 = vmatprep.subr.bf16.mxu0 0
    %1078 = vmatpush1.bf16.xpose.msra.mxu0 0
    %1079 = vmatprep.mubr.bf16.mxu0 0
    %1080 = vmatmul.mubr.bf16.gmra.mrb[0].mxu0 %v1042
    %v1081 = vpop.f32.mrb[0].mxu0
    %v1082 = vadd.f32 0.0, %v1081
    %v1083 = vpop.f32.mrb[0].mxu0
    %v1084 = vpop.f32.mrb[0].mxu0
    %v1085 = vpop.f32.mrb[0].mxu0
    %1086 = vdwg.mxu0
    %1087 = vrot.lane.b32.xlu0 %v187, 120
    %v1088 = vpop.permute.xlu0 %1087
    %1089 = vrot.lane.b32.xlu0 %v187, 88
    %v1090 = vpop.permute.xlu0 %1089
    %v1092 = vsel %vm36, %v1088, 0
    %v1095 = vsel %vm36, %v1090, 0
    %1097 = vmatprep.subr.bf16.mxu0 0
    %1098 = vmatpush1.bf16.xpose.msra.mxu0 %v1095
    %1099 = vmatprep.subr.bf16.mxu0 0
    %1100 = vmatpush1.bf16.xpose.msra.mxu0 0
    %1101 = vmatprep.subr.bf16.mxu0 0
    %1102 = vmatpush1.bf16.xpose.msra.mxu0 0
    %1103 = vmatprep.subr.bf16.mxu0 0
    %1104 = vmatpush1.bf16.xpose.msra.mxu0 0
    %1105 = vmatprep.subr.bf16.mxu0 0
    %1106 = vmatpush1.bf16.xpose.msra.mxu0 0
    %1107 = vmatprep.subr.bf16.mxu0 0
    %1108 = vmatpush1.bf16.xpose.msra.mxu0 0
    %1109 = vmatprep.subr.bf16.mxu0 0
    %1110 = vmatpush1.bf16.xpose.msra.mxu0 0
    %1111 = vmatprep.subr.bf16.mxu0 0
    %1112 = vmatpush1.bf16.xpose.msra.mxu0 0
    %1113 = vmatprep.subr.bf16.mxu0 0
    %1114 = vmatpush1.bf16.xpose.msra.mxu0 0
    %1115 = vmatprep.subr.bf16.mxu0 0
    %1116 = vmatpush1.bf16.xpose.msra.mxu0 0
    %1117 = vmatprep.subr.bf16.mxu0 0
    %1118 = vmatpush1.bf16.xpose.msra.mxu0 0
    %1119 = vmatprep.subr.bf16.mxu0 0
    %1120 = vmatpush1.bf16.xpose.msra.mxu0 0
    %1121 = vmatprep.subr.bf16.mxu0 0
    %1122 = vmatpush1.bf16.xpose.msra.mxu0 0
    %1123 = vmatprep.subr.bf16.mxu0 0
    %1124 = vmatpush1.bf16.xpose.msra.mxu0 0
    %1125 = vmatprep.subr.bf16.mxu0 0
    %1126 = vmatpush1.bf16.xpose.msra.mxu0 0
    %1127 = vmatprep.subr.bf16.mxu0 0
    %1128 = vmatpush1.bf16.xpose.msra.mxu0 0
    %1129 = vmatprep.mubr.bf16.mxu0 0
    %1130 = vmatmul.mubr.bf16.gmra.mrb[0].mxu0 %v1092
    %v1131 = vpop.f32.mrb[0].mxu0
    %v1132 = vadd.f32 0.0, %v1131
    %v1133 = vpop.f32.mrb[0].mxu0
    %v1134 = vpop.f32.mrb[0].mxu0
    %v1135 = vpop.f32.mrb[0].mxu0
    %1136 = vdwg.mxu0
    %1137 = vrot.lane.b32.xlu0 %v238, 120
    %v1138 = vpop.permute.xlu0 %1137
    %1139 = vrot.lane.b32.xlu0 %v238, 88
    %v1140 = vpop.permute.xlu0 %1139
    %v1142 = vsel %vm36, %v1138, 0
    %v1145 = vsel %vm36, %v1140, 0
    %1147 = vmatprep.subr.bf16.mxu0 0
    %1148 = vmatpush1.bf16.xpose.msra.mxu0 %v1145
    %1149 = vmatprep.subr.bf16.mxu0 0
    %1150 = vmatpush1.bf16.xpose.msra.mxu0 0
    %1151 = vmatprep.subr.bf16.mxu0 0
    %1152 = vmatpush1.bf16.xpose.msra.mxu0 0
    %1153 = vmatprep.subr.bf16.mxu0 0
    %1154 = vmatpush1.bf16.xpose.msra.mxu0 0
    %1155 = vmatprep.subr.bf16.mxu0 0
    %1156 = vmatpush1.bf16.xpose.msra.mxu0 0
    %1157 = vmatprep.subr.bf16.mxu0 0
    %1158 = vmatpush1.bf16.xpose.msra.mxu0 0
    %1159 = vmatprep.subr.bf16.mxu0 0
    %1160 = vmatpush1.bf16.xpose.msra.mxu0 0
    %1161 = vmatprep.subr.bf16.mxu0 0
    %1162 = vmatpush1.bf16.xpose.msra.mxu0 0
    %1163 = vmatprep.subr.bf16.mxu0 0
    %1164 = vmatpush1.bf16.xpose.msra.mxu0 0
    %1165 = vmatprep.subr.bf16.mxu0 0
    %1166 = vmatpush1.bf16.xpose.msra.mxu0 0
    %1167 = vmatprep.subr.bf16.mxu0 0
    %1168 = vmatpush1.bf16.xpose.msra.mxu0 0
    %1169 = vmatprep.subr.bf16.mxu0 0
    %1170 = vmatpush1.bf16.xpose.msra.mxu0 0
    %1171 = vmatprep.subr.bf16.mxu0 0
    %1172 = vmatpush1.bf16.xpose.msra.mxu0 0
    %1173 = vmatprep.subr.bf16.mxu0 0
    %1174 = vmatpush1.bf16.xpose.msra.mxu0 0
    %1175 = vmatprep.subr.bf16.mxu0 0
    %1176 = vmatpush1.bf16.xpose.msra.mxu0 0
    %1177 = vmatprep.subr.bf16.mxu0 0
    %1178 = vmatpush1.bf16.xpose.msra.mxu0 0
    %1179 = vmatprep.mubr.bf16.mxu0 0
    %1180 = vmatmul.mubr.bf16.gmra.mrb[0].mxu0 %v1142
    %v1181 = vpop.f32.mrb[0].mxu0
    %v1182 = vadd.f32 0.0, %v1181
    %v1183 = vpop.f32.mrb[0].mxu0
    %v1184 = vpop.f32.mrb[0].mxu0
    %v1185 = vpop.f32.mrb[0].mxu0
    %1186 = vdwg.mxu0
    %1187 = vrot.lane.b32.xlu0 %v289, 120
    %v1188 = vpop.permute.xlu0 %1187
    %1189 = vrot.lane.b32.xlu0 %v289, 88
    %v1190 = vpop.permute.xlu0 %1189
    %v1192 = vsel %vm36, %v1188, 0
    %v1195 = vsel %vm36, %v1190, 0
    %1197 = vmatprep.subr.bf16.mxu0 0
    %1198 = vmatpush1.bf16.xpose.msra.mxu0 %v1195
    %1199 = vmatprep.subr.bf16.mxu0 0
    %1200 = vmatpush1.bf16.xpose.msra.mxu0 0
    %1201 = vmatprep.subr.bf16.mxu0 0
    %1202 = vmatpush1.bf16.xpose.msra.mxu0 0
    %1203 = vmatprep.subr.bf16.mxu0 0
    %1204 = vmatpush1.bf16.xpose.msra.mxu0 0
    %1205 = vmatprep.subr.bf16.mxu0 0
    %1206 = vmatpush1.bf16.xpose.msra.mxu0 0
    %1207 = vmatprep.subr.bf16.mxu0 0
    %1208 = vmatpush1.bf16.xpose.msra.mxu0 0
    %1209 = vmatprep.subr.bf16.mxu0 0
    %1210 = vmatpush1.bf16.xpose.msra.mxu0 0
    %1211 = vmatprep.subr.bf16.mxu0 0
    %1212 = vmatpush1.bf16.xpose.msra.mxu0 0
    %1213 = vmatprep.subr.bf16.mxu0 0
    %1214 = vmatpush1.bf16.xpose.msra.mxu0 0
    %1215 = vmatprep.subr.bf16.mxu0 0
    %1216 = vmatpush1.bf16.xpose.msra.mxu0 0
    %1217 = vmatprep.subr.bf16.mxu0 0
    %1218 = vmatpush1.bf16.xpose.msra.mxu0 0
    %1219 = vmatprep.subr.bf16.mxu0 0
    %1220 = vmatpush1.bf16.xpose.msra.mxu0 0
    %1221 = vmatprep.subr.bf16.mxu0 0
    %1222 = vmatpush1.bf16.xpose.msra.mxu0 0
    %1223 = vmatprep.subr.bf16.mxu0 0
    %1224 = vmatpush1.bf16.xpose.msra.mxu0 0
    %1225 = vmatprep.subr.bf16.mxu0 0
    %1226 = vmatpush1.bf16.xpose.msra.mxu0 0
    %1227 = vmatprep.subr.bf16.mxu0 0
    %1228 = vmatpush1.bf16.xpose.msra.mxu0 0
    %1229 = vmatprep.mubr.bf16.mxu0 0
    %1230 = vmatmul.mubr.bf16.gmra.mrb[0].mxu0 %v1192
    %v1231 = vpop.f32.mrb[0].mxu0
    %v1232 = vadd.f32 0.0, %v1231
    %v1233 = vpop.f32.mrb[0].mxu0
    %v1234 = vpop.f32.mrb[0].mxu0
    %v1235 = vpop.f32.mrb[0].mxu0
    %1236 = vdwg.mxu0
    %1237 = vrot.lane.b32.xlu0 %v340, 120
    %v1238 = vpop.permute.xlu0 %1237
    %1239 = vrot.lane.b32.xlu0 %v340, 88
    %v1240 = vpop.permute.xlu0 %1239
    %v1242 = vsel %vm36, %v1238, 0
    %v1245 = vsel %vm36, %v1240, 0
    %1247 = vmatprep.subr.bf16.mxu0 0
    %1248 = vmatpush1.bf16.xpose.msra.mxu0 %v1245
    %1249 = vmatprep.subr.bf16.mxu0 0
    %1250 = vmatpush1.bf16.xpose.msra.mxu0 0
    %1251 = vmatprep.subr.bf16.mxu0 0
    %1252 = vmatpush1.bf16.xpose.msra.mxu0 0
    %1253 = vmatprep.subr.bf16.mxu0 0
    %1254 = vmatpush1.bf16.xpose.msra.mxu0 0
    %1255 = vmatprep.subr.bf16.mxu0 0
    %1256 = vmatpush1.bf16.xpose.msra.mxu0 0
    %1257 = vmatprep.subr.bf16.mxu0 0
    %1258 = vmatpush1.bf16.xpose.msra.mxu0 0
    %1259 = vmatprep.subr.bf16.mxu0 0
    %1260 = vmatpush1.bf16.xpose.msra.mxu0 0
    %1261 = vmatprep.subr.bf16.mxu0 0
    %1262 = vmatpush1.bf16.xpose.msra.mxu0 0
    %1263 = vmatprep.subr.bf16.mxu0 0
    %1264 = vmatpush1.bf16.xpose.msra.mxu0 0
    %1265 = vmatprep.subr.bf16.mxu0 0
    %1266 = vmatpush1.bf16.xpose.msra.mxu0 0
    %1267 = vmatprep.subr.bf16.mxu0 0
    %1268 = vmatpush1.bf16.xpose.msra.mxu0 0
    %1269 = vmatprep.subr.bf16.mxu0 0
    %1270 = vmatpush1.bf16.xpose.msra.mxu0 0
    %1271 = vmatprep.subr.bf16.mxu0 0
    %1272 = vmatpush1.bf16.xpose.msra.mxu0 0
    %1273 = vmatprep.subr.bf16.mxu0 0
    %1274 = vmatpush1.bf16.xpose.msra.mxu0 0
    %1275 = vmatprep.subr.bf16.mxu0 0
    %1276 = vmatpush1.bf16.xpose.msra.mxu0 0
    %1277 = vmatprep.subr.bf16.mxu0 0
    %1278 = vmatpush1.bf16.xpose.msra.mxu0 0
    %1279 = vmatprep.mubr.bf16.mxu0 0
    %1280 = vmatmul.mubr.bf16.gmra.mrb[0].mxu0 %v1242
    %v1281 = vpop.f32.mrb[0].mxu0
    %v1282 = vadd.f32 0.0, %v1281
    %v1283 = vpop.f32.mrb[0].mxu0
    %v1284 = vpop.f32.mrb[0].mxu0
    %v1285 = vpop.f32.mrb[0].mxu0
    %1286 = vdwg.mxu0
    %1287 = vrot.lane.b32.xlu0 %v391, 120
    %v1288 = vpop.permute.xlu0 %1287
    %1289 = vrot.lane.b32.xlu0 %v391, 88
    %v1290 = vpop.permute.xlu0 %1289
    %v1292 = vsel %vm36, %v1288, 0
    %v1295 = vsel %vm36, %v1290, 0
    %1297 = vmatprep.subr.bf16.mxu0 0
    %1298 = vmatpush1.bf16.xpose.msra.mxu0 %v1295
    %1299 = vmatprep.subr.bf16.mxu0 0
    %1300 = vmatpush1.bf16.xpose.msra.mxu0 0
    %1301 = vmatprep.subr.bf16.mxu0 0
    %1302 = vmatpush1.bf16.xpose.msra.mxu0 0
    %1303 = vmatprep.subr.bf16.mxu0 0
    %1304 = vmatpush1.bf16.xpose.msra.mxu0 0
    %1305 = vmatprep.subr.bf16.mxu0 0
    %1306 = vmatpush1.bf16.xpose.msra.mxu0 0
    %1307 = vmatprep.subr.bf16.mxu0 0
    %1308 = vmatpush1.bf16.xpose.msra.mxu0 0
    %1309 = vmatprep.subr.bf16.mxu0 0
    %1310 = vmatpush1.bf16.xpose.msra.mxu0 0
    %1311 = vmatprep.subr.bf16.mxu0 0
    %1312 = vmatpush1.bf16.xpose.msra.mxu0 0
    %1313 = vmatprep.subr.bf16.mxu0 0
    %1314 = vmatpush1.bf16.xpose.msra.mxu0 0
    %1315 = vmatprep.subr.bf16.mxu0 0
    %1316 = vmatpush1.bf16.xpose.msra.mxu0 0
    %1317 = vmatprep.subr.bf16.mxu0 0
    %1318 = vmatpush1.bf16.xpose.msra.mxu0 0
    %1319 = vmatprep.subr.bf16.mxu0 0
    %1320 = vmatpush1.bf16.xpose.msra.mxu0 0
    %1321 = vmatprep.subr.bf16.mxu0 0
    %1322 = vmatpush1.bf16.xpose.msra.mxu0 0
    %1323 = vmatprep.subr.bf16.mxu0 0
    %1324 = vmatpush1.bf16.xpose.msra.mxu0 0
    %1325 = vmatprep.subr.bf16.mxu0 0
    %1326 = vmatpush1.bf16.xpose.msra.mxu0 0
    %1327 = vmatprep.subr.bf16.mxu0 0
    %1328 = vmatpush1.bf16.xpose.msra.mxu0 0
    %1329 = vmatprep.mubr.bf16.mxu0 0
    %1330 = vmatmul.mubr.bf16.gmra.mrb[0].mxu0 %v1292
    %v1331 = vpop.f32.mrb[0].mxu0
    %v1332 = vadd.f32 0.0, %v1331
    %v1333 = vpop.f32.mrb[0].mxu0
    %v1334 = vpop.f32.mrb[0].mxu0
    %v1335 = vpop.f32.mrb[0].mxu0
    %1336 = vdwg.mxu0
    %v1337 = vmul.f32 %v982, 0.35355338
    %v1338 = vmul.f32 %v1032, 0.35355338
    %v1339 = vmul.f32 %v1082, 0.35355338
    %v1340 = vmul.f32 %v1132, 0.35355338
    %v1341 = vmul.f32 %v1182, 0.35355338
    %v1342 = vmul.f32 %v1232, 0.35355338
    %v1343 = vmul.f32 %v1282, 0.35355338
    %v1344 = vmul.f32 %v1332, 0.35355338
    %1353 = vrot.lane.b32.xlu0 %v23, 120
    %v1354 = vpop.permute.xlu0 %1353
    %1355 = vrot.lane.b32.xlu0 %v24, 120
    %v1356 = vpop.permute.xlu0 %1355
    %1357 = vrot.lane.b32.xlu0 %v25, 120
    %v1358 = vpop.permute.xlu0 %1357
    %1359 = vrot.lane.b32.xlu0 %v26, 120
    %v1360 = vpop.permute.xlu0 %1359
    %1361 = vrot.lane.b32.xlu0 %v27, 120
    %v1362 = vpop.permute.xlu0 %1361
    %1363 = vrot.lane.b32.xlu0 %v28, 120
    %v1364 = vpop.permute.xlu0 %1363
    %1365 = vrot.lane.b32.xlu0 %v29, 120
    %v1366 = vpop.permute.xlu0 %1365
    %1367 = vrot.lane.b32.xlu0 %v30, 120
    %v1368 = vpop.permute.xlu0 %1367
    %v1377 = vadd.f32 %v1337, %v1354
    %v1378 = vadd.f32 %v1338, %v1356
    %v1379 = vadd.f32 %v1339, %v1358
    %v1380 = vadd.f32 %v1340, %v1360
    %v1381 = vadd.f32 %v1341, %v1362
    %v1382 = vadd.f32 %v1342, %v1364
    %v1383 = vadd.f32 %v1343, %v1366
    %v1384 = vadd.f32 %v1344, %v1368
    %v1385 = vsel %vm36, %v1377, -inf
    %1386 = vmax.xlane.f32.xlu0 %v1385
    %v1387 = vpop.xlane.xlu0 %1386
    %v1388 = vsel %vm36, %v1378, -inf
    %1389 = vmax.xlane.f32.xlu0 %v1388
    %v1390 = vpop.xlane.xlu0 %1389
    %v1391 = vsel %vm36, %v1379, -inf
    %1392 = vmax.xlane.f32.xlu0 %v1391
    %v1393 = vpop.xlane.xlu0 %1392
    %v1394 = vsel %vm36, %v1380, -inf
    %1395 = vmax.xlane.f32.xlu0 %v1394
    %v1396 = vpop.xlane.xlu0 %1395
    %v1397 = vsel %vm36, %v1381, -inf
    %1398 = vmax.xlane.f32.xlu0 %v1397
    %v1399 = vpop.xlane.xlu0 %1398
    %v1400 = vsel %vm36, %v1382, -inf
    %1401 = vmax.xlane.f32.xlu0 %v1400
    %v1402 = vpop.xlane.xlu0 %1401
    %v1403 = vsel %vm36, %v1383, -inf
    %1404 = vmax.xlane.f32.xlu0 %v1403
    %v1405 = vpop.xlane.xlu0 %1404
    %v1406 = vsel %vm36, %v1384, -inf
    %1407 = vmax.xlane.f32.xlu0 %v1406
    %v1408 = vpop.xlane.xlu0 %1407
    %v1409 = vsub.f32 %v1377, %v1387
    %v1410 = vsub.f32 %v1378, %v1390
    %v1411 = vsub.f32 %v1379, %v1393
    %v1412 = vsub.f32 %v1380, %v1396
    %v1413 = vsub.f32 %v1381, %v1399
    %v1414 = vsub.f32 %v1382, %v1402
    %v1415 = vsub.f32 %v1383, %v1405
    %v1416 = vsub.f32 %v1384, %v1408
    %v1417 = vmul.f32 %v1409, 1.442695
    %v1418 = vpow.pop %v1417
    %v1419 = vmul.f32 %v1410, 1.442695
    %v1420 = vpow.pop %v1419
    %v1421 = vmul.f32 %v1411, 1.442695
    %v1422 = vpow.pop %v1421
    %v1423 = vmul.f32 %v1412, 1.442695
    %v1424 = vpow.pop %v1423
    %v1425 = vmul.f32 %v1413, 1.442695
    %v1426 = vpow.pop %v1425
    %v1427 = vmul.f32 %v1414, 1.442695
    %v1428 = vpow.pop %v1427
    %v1429 = vmul.f32 %v1415, 1.442695
    %v1430 = vpow.pop %v1429
    %v1431 = vmul.f32 %v1416, 1.442695
    %v1432 = vpow.pop %v1431
    %v1433 = vsel %vm36, %v1418, 0.0
    %1434 = vadd.xlane.f32.xlu0 %v1433
    %v1435 = vpop.xlane.xlu0 %1434
    %v1436 = vsel %vm36, %v1420, 0.0
    %1437 = vadd.xlane.f32.xlu0 %v1436
    %v1438 = vpop.xlane.xlu0 %1437
    %v1439 = vsel %vm36, %v1422, 0.0
    %1440 = vadd.xlane.f32.xlu0 %v1439
    %v1441 = vpop.xlane.xlu0 %1440
    %v1442 = vsel %vm36, %v1424, 0.0
    %1443 = vadd.xlane.f32.xlu0 %v1442
    %v1444 = vpop.xlane.xlu0 %1443
    %v1445 = vsel %vm36, %v1426, 0.0
    %1446 = vadd.xlane.f32.xlu0 %v1445
    %v1447 = vpop.xlane.xlu0 %1446
    %v1448 = vsel %vm36, %v1428, 0.0
    %1449 = vadd.xlane.f32.xlu0 %v1448
    %v1450 = vpop.xlane.xlu0 %1449
    %v1451 = vsel %vm36, %v1430, 0.0
    %1452 = vadd.xlane.f32.xlu0 %v1451
    %v1453 = vpop.xlane.xlu0 %1452
    %v1454 = vsel %vm36, %v1432, 0.0
    %1455 = vadd.xlane.f32.xlu0 %v1454
    %v1456 = vpop.xlane.xlu0 %1455
    %v1457 = vrcp.pop %v1435
    %v1458 = vrcp.pop %v1438
    %v1459 = vrcp.pop %v1441
    %v1460 = vrcp.pop %v1444
    %v1461 = vrcp.pop %v1447
    %v1462 = vrcp.pop %v1450
    %v1463 = vrcp.pop %v1453
    %v1464 = vrcp.pop %v1456
    %v1465 = vmul.f32 %v1418, %v1457
    %v1466 = vmul.f32 %v1420, %v1458
    %v1467 = vmul.f32 %v1422, %v1459
    %v1468 = vmul.f32 %v1424, %v1460
    %v1469 = vmul.f32 %v1426, %v1461
    %v1470 = vmul.f32 %v1428, %v1462
    %v1471 = vmul.f32 %v1430, %v1463
    %v1472 = vmul.f32 %v1432, %v1464
    %v1473 = vpack.c.bf16 %v1465, %v1465
    %v1474 = vpack.c.bf16 %v1466, %v1466
    %v1475 = vpack.c.bf16 %v1467, %v1467
    %v1476 = vpack.c.bf16 %v1468, %v1468
    %v1477 = vpack.c.bf16 %v1469, %v1469
    %v1478 = vpack.c.bf16 %v1470, %v1470
    %v1479 = vpack.c.bf16 %v1471, %v1471
    %v1480 = vpack.c.bf16 %v1472, %v1472
    %1481 = vrot.lane.b32.xlu0 %v33, 56
    %v1482 = vpop.permute.xlu0 %1481
    %v1484 = vsel %vm36, %v1473, 0
    %v1487 = vsel %vm557, %v1482, 0
    %1489 = vmatprep.subr.bf16.mxu0 0
    %1490 = vmatpush1.bf16.msra.mxu0 %v1487
    %1491 = vmatprep.subr.bf16.mxu0 0
    %1492 = vmatpush1.bf16.msra.mxu0 0
    %1493 = vmatprep.subr.bf16.mxu0 0
    %1494 = vmatpush1.bf16.msra.mxu0 0
    %1495 = vmatprep.subr.bf16.mxu0 0
    %1496 = vmatpush1.bf16.msra.mxu0 0
    %1497 = vmatprep.subr.bf16.mxu0 0
    %1498 = vmatpush1.bf16.msra.mxu0 0
    %1499 = vmatprep.subr.bf16.mxu0 0
    %1500 = vmatpush1.bf16.msra.mxu0 0
    %1501 = vmatprep.subr.bf16.mxu0 0
    %1502 = vmatpush1.bf16.msra.mxu0 0
    %1503 = vmatprep.subr.bf16.mxu0 0
    %1504 = vmatpush1.bf16.msra.mxu0 0
    %1505 = vmatprep.subr.bf16.mxu0 0
    %1506 = vmatpush1.bf16.msra.mxu0 0
    %1507 = vmatprep.subr.bf16.mxu0 0
    %1508 = vmatpush1.bf16.msra.mxu0 0
    %1509 = vmatprep.subr.bf16.mxu0 0
    %1510 = vmatpush1.bf16.msra.mxu0 0
    %1511 = vmatprep.subr.bf16.mxu0 0
    %1512 = vmatpush1.bf16.msra.mxu0 0
    %1513 = vmatprep.subr.bf16.mxu0 0
    %1514 = vmatpush1.bf16.msra.mxu0 0
    %1515 = vmatprep.subr.bf16.mxu0 0
    %1516 = vmatpush1.bf16.msra.mxu0 0
    %1517 = vmatprep.subr.bf16.mxu0 0
    %1518 = vmatpush1.bf16.msra.mxu0 0
    %1519 = vmatprep.subr.bf16.mxu0 0
    %1520 = vmatpush1.bf16.msra.mxu0 0
    %1521 = vmatprep.mubr.bf16.mxu0 0
    %1522 = vmatmul.mubr.bf16.gmra.mrb[0].mxu0 %v1484
    %v1523 = vpop.f32.mrb[0].mxu0
    %v1524 = vadd.f32 0.0, %v1523
    %v1525 = vpop.f32.mrb[0].mxu0
    %v1526 = vpop.f32.mrb[0].mxu0
    %v1527 = vpop.f32.mrb[0].mxu0
    %1528 = vdwg.mxu0
    %1529 = vrot.lane.b32.xlu0 %v85, 56
    %v1530 = vpop.permute.xlu0 %1529
    %v1532 = vsel %vm36, %v1474, 0
    %v1535 = vsel %vm557, %v1530, 0
    %1537 = vmatprep.subr.bf16.mxu0 0
    %1538 = vmatpush1.bf16.msra.mxu0 %v1535
    %1539 = vmatprep.subr.bf16.mxu0 0
    %1540 = vmatpush1.bf16.msra.mxu0 0
    %1541 = vmatprep.subr.bf16.mxu0 0
    %1542 = vmatpush1.bf16.msra.mxu0 0
    %1543 = vmatprep.subr.bf16.mxu0 0
    %1544 = vmatpush1.bf16.msra.mxu0 0
    %1545 = vmatprep.subr.bf16.mxu0 0
    %1546 = vmatpush1.bf16.msra.mxu0 0
    %1547 = vmatprep.subr.bf16.mxu0 0
    %1548 = vmatpush1.bf16.msra.mxu0 0
    %1549 = vmatprep.subr.bf16.mxu0 0
    %1550 = vmatpush1.bf16.msra.mxu0 0
    %1551 = vmatprep.subr.bf16.mxu0 0
    %1552 = vmatpush1.bf16.msra.mxu0 0
    %1553 = vmatprep.subr.bf16.mxu0 0
    %1554 = vmatpush1.bf16.msra.mxu0 0
    %1555 = vmatprep.subr.bf16.mxu0 0
    %1556 = vmatpush1.bf16.msra.mxu0 0
    %1557 = vmatprep.subr.bf16.mxu0 0
    %1558 = vmatpush1.bf16.msra.mxu0 0
    %1559 = vmatprep.subr.bf16.mxu0 0
    %1560 = vmatpush1.bf16.msra.mxu0 0
    %1561 = vmatprep.subr.bf16.mxu0 0
    %1562 = vmatpush1.bf16.msra.mxu0 0
    %1563 = vmatprep.subr.bf16.mxu0 0
    %1564 = vmatpush1.bf16.msra.mxu0 0
    %1565 = vmatprep.subr.bf16.mxu0 0
    %1566 = vmatpush1.bf16.msra.mxu0 0
    %1567 = vmatprep.subr.bf16.mxu0 0
    %1568 = vmatpush1.bf16.msra.mxu0 0
    %1569 = vmatprep.mubr.bf16.mxu0 0
    %1570 = vmatmul.mubr.bf16.gmra.mrb[0].mxu0 %v1532
    %v1571 = vpop.f32.mrb[0].mxu0
    %v1572 = vadd.f32 0.0, %v1571
    %v1573 = vpop.f32.mrb[0].mxu0
    %v1574 = vpop.f32.mrb[0].mxu0
    %v1575 = vpop.f32.mrb[0].mxu0
    %1576 = vdwg.mxu0
    %1577 = vrot.lane.b32.xlu0 %v136, 56
    %v1578 = vpop.permute.xlu0 %1577
    %v1580 = vsel %vm36, %v1475, 0
    %v1583 = vsel %vm557, %v1578, 0
    %1585 = vmatprep.subr.bf16.mxu0 0
    %1586 = vmatpush1.bf16.msra.mxu0 %v1583
    %1587 = vmatprep.subr.bf16.mxu0 0
    %1588 = vmatpush1.bf16.msra.mxu0 0
    %1589 = vmatprep.subr.bf16.mxu0 0
    %1590 = vmatpush1.bf16.msra.mxu0 0
    %1591 = vmatprep.subr.bf16.mxu0 0
    %1592 = vmatpush1.bf16.msra.mxu0 0
    %1593 = vmatprep.subr.bf16.mxu0 0
    %1594 = vmatpush1.bf16.msra.mxu0 0
    %1595 = vmatprep.subr.bf16.mxu0 0
    %1596 = vmatpush1.bf16.msra.mxu0 0
    %1597 = vmatprep.subr.bf16.mxu0 0
    %1598 = vmatpush1.bf16.msra.mxu0 0
    %1599 = vmatprep.subr.bf16.mxu0 0
    %1600 = vmatpush1.bf16.msra.mxu0 0
    %1601 = vmatprep.subr.bf16.mxu0 0
    %1602 = vmatpush1.bf16.msra.mxu0 0
    %1603 = vmatprep.subr.bf16.mxu0 0
    %1604 = vmatpush1.bf16.msra.mxu0 0
    %1605 = vmatprep.subr.bf16.mxu0 0
    %1606 = vmatpush1.bf16.msra.mxu0 0
    %1607 = vmatprep.subr.bf16.mxu0 0
    %1608 = vmatpush1.bf16.msra.mxu0 0
    %1609 = vmatprep.subr.bf16.mxu0 0
    %1610 = vmatpush1.bf16.msra.mxu0 0
    %1611 = vmatprep.subr.bf16.mxu0 0
    %1612 = vmatpush1.bf16.msra.mxu0 0
    %1613 = vmatprep.subr.bf16.mxu0 0
    %1614 = vmatpush1.bf16.msra.mxu0 0
    %1615 = vmatprep.subr.bf16.mxu0 0
    %1616 = vmatpush1.bf16.msra.mxu0 0
    %1617 = vmatprep.mubr.bf16.mxu0 0
    %1618 = vmatmul.mubr.bf16.gmra.mrb[0].mxu0 %v1580
    %v1619 = vpop.f32.mrb[0].mxu0
    %v1620 = vadd.f32 0.0, %v1619
    %v1621 = vpop.f32.mrb[0].mxu0
    %v1622 = vpop.f32.mrb[0].mxu0
    %v1623 = vpop.f32.mrb[0].mxu0
    %1624 = vdwg.mxu0
    %1625 = vrot.lane.b32.xlu0 %v187, 56
    %v1626 = vpop.permute.xlu0 %1625
    %v1628 = vsel %vm36, %v1476, 0
    %v1631 = vsel %vm557, %v1626, 0
    %1633 = vmatprep.subr.bf16.mxu0 0
    %1634 = vmatpush1.bf16.msra.mxu0 %v1631
    %1635 = vmatprep.subr.bf16.mxu0 0
    %1636 = vmatpush1.bf16.msra.mxu0 0
    %1637 = vmatprep.subr.bf16.mxu0 0
    %1638 = vmatpush1.bf16.msra.mxu0 0
    %1639 = vmatprep.subr.bf16.mxu0 0
    %1640 = vmatpush1.bf16.msra.mxu0 0
    %1641 = vmatprep.subr.bf16.mxu0 0
    %1642 = vmatpush1.bf16.msra.mxu0 0
    %1643 = vmatprep.subr.bf16.mxu0 0
    %1644 = vmatpush1.bf16.msra.mxu0 0
    %1645 = vmatprep.subr.bf16.mxu0 0
    %1646 = vmatpush1.bf16.msra.mxu0 0
    %1647 = vmatprep.subr.bf16.mxu0 0
    %1648 = vmatpush1.bf16.msra.mxu0 0
    %1649 = vmatprep.subr.bf16.mxu0 0
    %1650 = vmatpush1.bf16.msra.mxu0 0
    %1651 = vmatprep.subr.bf16.mxu0 0
    %1652 = vmatpush1.bf16.msra.mxu0 0
    %1653 = vmatprep.subr.bf16.mxu0 0
    %1654 = vmatpush1.bf16.msra.mxu0 0
    %1655 = vmatprep.subr.bf16.mxu0 0
    %1656 = vmatpush1.bf16.msra.mxu0 0
    %1657 = vmatprep.subr.bf16.mxu0 0
    %1658 = vmatpush1.bf16.msra.mxu0 0
    %1659 = vmatprep.subr.bf16.mxu0 0
    %1660 = vmatpush1.bf16.msra.mxu0 0
    %1661 = vmatprep.subr.bf16.mxu0 0
    %1662 = vmatpush1.bf16.msra.mxu0 0
    %1663 = vmatprep.subr.bf16.mxu0 0
    %1664 = vmatpush1.bf16.msra.mxu0 0
    %1665 = vmatprep.mubr.bf16.mxu0 0
    %1666 = vmatmul.mubr.bf16.gmra.mrb[0].mxu0 %v1628
    %v1667 = vpop.f32.mrb[0].mxu0
    %v1668 = vadd.f32 0.0, %v1667
    %v1669 = vpop.f32.mrb[0].mxu0
    %v1670 = vpop.f32.mrb[0].mxu0
    %v1671 = vpop.f32.mrb[0].mxu0
    %1672 = vdwg.mxu0
    %1673 = vrot.lane.b32.xlu0 %v238, 56
    %v1674 = vpop.permute.xlu0 %1673
    %v1676 = vsel %vm36, %v1477, 0
    %v1679 = vsel %vm557, %v1674, 0
    %1681 = vmatprep.subr.bf16.mxu0 0
    %1682 = vmatpush1.bf16.msra.mxu0 %v1679
    %1683 = vmatprep.subr.bf16.mxu0 0
    %1684 = vmatpush1.bf16.msra.mxu0 0
    %1685 = vmatprep.subr.bf16.mxu0 0
    %1686 = vmatpush1.bf16.msra.mxu0 0
    %1687 = vmatprep.subr.bf16.mxu0 0
    %1688 = vmatpush1.bf16.msra.mxu0 0
    %1689 = vmatprep.subr.bf16.mxu0 0
    %1690 = vmatpush1.bf16.msra.mxu0 0
    %1691 = vmatprep.subr.bf16.mxu0 0
    %1692 = vmatpush1.bf16.msra.mxu0 0
    %1693 = vmatprep.subr.bf16.mxu0 0
    %1694 = vmatpush1.bf16.msra.mxu0 0
    %1695 = vmatprep.subr.bf16.mxu0 0
    %1696 = vmatpush1.bf16.msra.mxu0 0
    %1697 = vmatprep.subr.bf16.mxu0 0
    %1698 = vmatpush1.bf16.msra.mxu0 0
    %1699 = vmatprep.subr.bf16.mxu0 0
    %1700 = vmatpush1.bf16.msra.mxu0 0
    %1701 = vmatprep.subr.bf16.mxu0 0
    %1702 = vmatpush1.bf16.msra.mxu0 0
    %1703 = vmatprep.subr.bf16.mxu0 0
    %1704 = vmatpush1.bf16.msra.mxu0 0
    %1705 = vmatprep.subr.bf16.mxu0 0
    %1706 = vmatpush1.bf16.msra.mxu0 0
    %1707 = vmatprep.subr.bf16.mxu0 0
    %1708 = vmatpush1.bf16.msra.mxu0 0
    %1709 = vmatprep.subr.bf16.mxu0 0
    %1710 = vmatpush1.bf16.msra.mxu0 0
    %1711 = vmatprep.subr.bf16.mxu0 0
    %1712 = vmatpush1.bf16.msra.mxu0 0
    %1713 = vmatprep.mubr.bf16.mxu0 0
    %1714 = vmatmul.mubr.bf16.gmra.mrb[0].mxu0 %v1676
    %v1715 = vpop.f32.mrb[0].mxu0
    %v1716 = vadd.f32 0.0, %v1715
    %v1717 = vpop.f32.mrb[0].mxu0
    %v1718 = vpop.f32.mrb[0].mxu0
    %v1719 = vpop.f32.mrb[0].mxu0
    %1720 = vdwg.mxu0
    %1721 = vrot.lane.b32.xlu0 %v289, 56
    %v1722 = vpop.permute.xlu0 %1721
    %v1724 = vsel %vm36, %v1478, 0
    %v1727 = vsel %vm557, %v1722, 0
    %1729 = vmatprep.subr.bf16.mxu0 0
    %1730 = vmatpush1.bf16.msra.mxu0 %v1727
    %1731 = vmatprep.subr.bf16.mxu0 0
    %1732 = vmatpush1.bf16.msra.mxu0 0
    %1733 = vmatprep.subr.bf16.mxu0 0
    %1734 = vmatpush1.bf16.msra.mxu0 0
    %1735 = vmatprep.subr.bf16.mxu0 0
    %1736 = vmatpush1.bf16.msra.mxu0 0
    %1737 = vmatprep.subr.bf16.mxu0 0
    %1738 = vmatpush1.bf16.msra.mxu0 0
    %1739 = vmatprep.subr.bf16.mxu0 0
    %1740 = vmatpush1.bf16.msra.mxu0 0
    %1741 = vmatprep.subr.bf16.mxu0 0
    %1742 = vmatpush1.bf16.msra.mxu0 0
    %1743 = vmatprep.subr.bf16.mxu0 0
    %1744 = vmatpush1.bf16.msra.mxu0 0
    %1745 = vmatprep.subr.bf16.mxu0 0
    %1746 = vmatpush1.bf16.msra.mxu0 0
    %1747 = vmatprep.subr.bf16.mxu0 0
    %1748 = vmatpush1.bf16.msra.mxu0 0
    %1749 = vmatprep.subr.bf16.mxu0 0
    %1750 = vmatpush1.bf16.msra.mxu0 0
    %1751 = vmatprep.subr.bf16.mxu0 0
    %1752 = vmatpush1.bf16.msra.mxu0 0
    %1753 = vmatprep.subr.bf16.mxu0 0
    %1754 = vmatpush1.bf16.msra.mxu0 0
    %1755 = vmatprep.subr.bf16.mxu0 0
    %1756 = vmatpush1.bf16.msra.mxu0 0
    %1757 = vmatprep.subr.bf16.mxu0 0
    %1758 = vmatpush1.bf16.msra.mxu0 0
    %1759 = vmatprep.subr.bf16.mxu0 0
    %1760 = vmatpush1.bf16.msra.mxu0 0
    %1761 = vmatprep.mubr.bf16.mxu0 0
    %1762 = vmatmul.mubr.bf16.gmra.mrb[0].mxu0 %v1724
    %v1763 = vpop.f32.mrb[0].mxu0
    %v1764 = vadd.f32 0.0, %v1763
    %v1765 = vpop.f32.mrb[0].mxu0
    %v1766 = vpop.f32.mrb[0].mxu0
    %v1767 = vpop.f32.mrb[0].mxu0
    %1768 = vdwg.mxu0
    %1769 = vrot.lane.b32.xlu0 %v340, 56
    %v1770 = vpop.permute.xlu0 %1769
    %v1772 = vsel %vm36, %v1479, 0
    %v1775 = vsel %vm557, %v1770, 0
    %1777 = vmatprep.subr.bf16.mxu0 0
    %1778 = vmatpush1.bf16.msra.mxu0 %v1775
    %1779 = vmatprep.subr.bf16.mxu0 0
    %1780 = vmatpush1.bf16.msra.mxu0 0
    %1781 = vmatprep.subr.bf16.mxu0 0
    %1782 = vmatpush1.bf16.msra.mxu0 0
    %1783 = vmatprep.subr.bf16.mxu0 0
    %1784 = vmatpush1.bf16.msra.mxu0 0
    %1785 = vmatprep.subr.bf16.mxu0 0
    %1786 = vmatpush1.bf16.msra.mxu0 0
    %1787 = vmatprep.subr.bf16.mxu0 0
    %1788 = vmatpush1.bf16.msra.mxu0 0
    %1789 = vmatprep.subr.bf16.mxu0 0
    %1790 = vmatpush1.bf16.msra.mxu0 0
    %1791 = vmatprep.subr.bf16.mxu0 0
    %1792 = vmatpush1.bf16.msra.mxu0 0
    %1793 = vmatprep.subr.bf16.mxu0 0
    %1794 = vmatpush1.bf16.msra.mxu0 0
    %1795 = vmatprep.subr.bf16.mxu0 0
    %1796 = vmatpush1.bf16.msra.mxu0 0
    %1797 = vmatprep.subr.bf16.mxu0 0
    %1798 = vmatpush1.bf16.msra.mxu0 0
    %1799 = vmatprep.subr.bf16.mxu0 0
    %1800 = vmatpush1.bf16.msra.mxu0 0
    %1801 = vmatprep.subr.bf16.mxu0 0
    %1802 = vmatpush1.bf16.msra.mxu0 0
    %1803 = vmatprep.subr.bf16.mxu0 0
    %1804 = vmatpush1.bf16.msra.mxu0 0
    %1805 = vmatprep.subr.bf16.mxu0 0
    %1806 = vmatpush1.bf16.msra.mxu0 0
    %1807 = vmatprep.subr.bf16.mxu0 0
    %1808 = vmatpush1.bf16.msra.mxu0 0
    %1809 = vmatprep.mubr.bf16.mxu0 0
    %1810 = vmatmul.mubr.bf16.gmra.mrb[0].mxu0 %v1772
    %v1811 = vpop.f32.mrb[0].mxu0
    %v1812 = vadd.f32 0.0, %v1811
    %v1813 = vpop.f32.mrb[0].mxu0
    %v1814 = vpop.f32.mrb[0].mxu0
    %v1815 = vpop.f32.mrb[0].mxu0
    %1816 = vdwg.mxu0
    %1817 = vrot.lane.b32.xlu0 %v391, 56
    %v1818 = vpop.permute.xlu0 %1817
    %v1820 = vsel %vm36, %v1480, 0
    %v1823 = vsel %vm557, %v1818, 0
    %1825 = vmatprep.subr.bf16.mxu0 0
    %1826 = vmatpush1.bf16.msra.mxu0 %v1823
    %1827 = vmatprep.subr.bf16.mxu0 0
    %1828 = vmatpush1.bf16.msra.mxu0 0
    %1829 = vmatprep.subr.bf16.mxu0 0
    %1830 = vmatpush1.bf16.msra.mxu0 0
    %1831 = vmatprep.subr.bf16.mxu0 0
    %1832 = vmatpush1.bf16.msra.mxu0 0
    %1833 = vmatprep.subr.bf16.mxu0 0
    %1834 = vmatpush1.bf16.msra.mxu0 0
    %1835 = vmatprep.subr.bf16.mxu0 0
    %1836 = vmatpush1.bf16.msra.mxu0 0
    %1837 = vmatprep.subr.bf16.mxu0 0
    %1838 = vmatpush1.bf16.msra.mxu0 0
    %1839 = vmatprep.subr.bf16.mxu0 0
    %1840 = vmatpush1.bf16.msra.mxu0 0
    %1841 = vmatprep.subr.bf16.mxu0 0
    %1842 = vmatpush1.bf16.msra.mxu0 0
    %1843 = vmatprep.subr.bf16.mxu0 0
    %1844 = vmatpush1.bf16.msra.mxu0 0
    %1845 = vmatprep.subr.bf16.mxu0 0
    %1846 = vmatpush1.bf16.msra.mxu0 0
    %1847 = vmatprep.subr.bf16.mxu0 0
    %1848 = vmatpush1.bf16.msra.mxu0 0
    %1849 = vmatprep.subr.bf16.mxu0 0
    %1850 = vmatpush1.bf16.msra.mxu0 0
    %1851 = vmatprep.subr.bf16.mxu0 0
    %1852 = vmatpush1.bf16.msra.mxu0 0
    %1853 = vmatprep.subr.bf16.mxu0 0
    %1854 = vmatpush1.bf16.msra.mxu0 0
    %1855 = vmatprep.subr.bf16.mxu0 0
    %1856 = vmatpush1.bf16.msra.mxu0 0
    %1857 = vmatprep.mubr.bf16.mxu0 0
    %1858 = vmatmul.mubr.bf16.gmra.mrb[0].mxu0 %v1820
    %v1859 = vpop.f32.mrb[0].mxu0
    %v1860 = vadd.f32 0.0, %v1859
    %v1861 = vpop.f32.mrb[0].mxu0
    %v1862 = vpop.f32.mrb[0].mxu0
    %v1863 = vpop.f32.mrb[0].mxu0
    %1864 = vdwg.mxu0
    %1865 = vrot.lane.b32.xlu0 %v33, 112
    %v1866 = vpop.permute.xlu0 %1865
    %1867 = vrot.lane.b32.xlu0 %v33, 80
    %v1868 = vpop.permute.xlu0 %1867
    %v1870 = vsel %vm36, %v1866, 0
    %v1873 = vsel %vm36, %v1868, 0
    %1875 = vmatprep.subr.bf16.mxu0 0
    %1876 = vmatpush1.bf16.xpose.msra.mxu0 %v1873
    %1877 = vmatprep.subr.bf16.mxu0 0
    %1878 = vmatpush1.bf16.xpose.msra.mxu0 0
    %1879 = vmatprep.subr.bf16.mxu0 0
    %1880 = vmatpush1.bf16.xpose.msra.mxu0 0
    %1881 = vmatprep.subr.bf16.mxu0 0
    %1882 = vmatpush1.bf16.xpose.msra.mxu0 0
    %1883 = vmatprep.subr.bf16.mxu0 0
    %1884 = vmatpush1.bf16.xpose.msra.mxu0 0
    %1885 = vmatprep.subr.bf16.mxu0 0
    %1886 = vmatpush1.bf16.xpose.msra.mxu0 0
    %1887 = vmatprep.subr.bf16.mxu0 0
    %1888 = vmatpush1.bf16.xpose.msra.mxu0 0
    %1889 = vmatprep.subr.bf16.mxu0 0
    %1890 = vmatpush1.bf16.xpose.msra.mxu0 0
    %1891 = vmatprep.subr.bf16.mxu0 0
    %1892 = vmatpush1.bf16.xpose.msra.mxu0 0
    %1893 = vmatprep.subr.bf16.mxu0 0
    %1894 = vmatpush1.bf16.xpose.msra.mxu0 0
    %1895 = vmatprep.subr.bf16.mxu0 0
    %1896 = vmatpush1.bf16.xpose.msra.mxu0 0
    %1897 = vmatprep.subr.bf16.mxu0 0
    %1898 = vmatpush1.bf16.xpose.msra.mxu0 0
    %1899 = vmatprep.subr.bf16.mxu0 0
    %1900 = vmatpush1.bf16.xpose.msra.mxu0 0
    %1901 = vmatprep.subr.bf16.mxu0 0
    %1902 = vmatpush1.bf16.xpose.msra.mxu0 0
    %1903 = vmatprep.subr.bf16.mxu0 0
    %1904 = vmatpush1.bf16.xpose.msra.mxu0 0
    %1905 = vmatprep.subr.bf16.mxu0 0
    %1906 = vmatpush1.bf16.xpose.msra.mxu0 0
    %1907 = vmatprep.mubr.bf16.mxu0 0
    %1908 = vmatmul.mubr.bf16.gmra.mrb[0].mxu0 %v1870
    %v1909 = vpop.f32.mrb[0].mxu0
    %v1910 = vadd.f32 0.0, %v1909
    %v1911 = vpop.f32.mrb[0].mxu0
    %v1912 = vpop.f32.mrb[0].mxu0
    %v1913 = vpop.f32.mrb[0].mxu0
    %1914 = vdwg.mxu0
    %1915 = vrot.lane.b32.xlu0 %v85, 112
    %v1916 = vpop.permute.xlu0 %1915
    %1917 = vrot.lane.b32.xlu0 %v85, 80
    %v1918 = vpop.permute.xlu0 %1917
    %v1920 = vsel %vm36, %v1916, 0
    %v1923 = vsel %vm36, %v1918, 0
    %1925 = vmatprep.subr.bf16.mxu0 0
    %1926 = vmatpush1.bf16.xpose.msra.mxu0 %v1923
    %1927 = vmatprep.subr.bf16.mxu0 0
    %1928 = vmatpush1.bf16.xpose.msra.mxu0 0
    %1929 = vmatprep.subr.bf16.mxu0 0
    %1930 = vmatpush1.bf16.xpose.msra.mxu0 0
    %1931 = vmatprep.subr.bf16.mxu0 0
    %1932 = vmatpush1.bf16.xpose.msra.mxu0 0
    %1933 = vmatprep.subr.bf16.mxu0 0
    %1934 = vmatpush1.bf16.xpose.msra.mxu0 0
    %1935 = vmatprep.subr.bf16.mxu0 0
    %1936 = vmatpush1.bf16.xpose.msra.mxu0 0
    %1937 = vmatprep.subr.bf16.mxu0 0
    %1938 = vmatpush1.bf16.xpose.msra.mxu0 0
    %1939 = vmatprep.subr.bf16.mxu0 0
    %1940 = vmatpush1.bf16.xpose.msra.mxu0 0
    %1941 = vmatprep.subr.bf16.mxu0 0
    %1942 = vmatpush1.bf16.xpose.msra.mxu0 0
    %1943 = vmatprep.subr.bf16.mxu0 0
    %1944 = vmatpush1.bf16.xpose.msra.mxu0 0
    %1945 = vmatprep.subr.bf16.mxu0 0
    %1946 = vmatpush1.bf16.xpose.msra.mxu0 0
    %1947 = vmatprep.subr.bf16.mxu0 0
    %1948 = vmatpush1.bf16.xpose.msra.mxu0 0
    %1949 = vmatprep.subr.bf16.mxu0 0
    %1950 = vmatpush1.bf16.xpose.msra.mxu0 0
    %1951 = vmatprep.subr.bf16.mxu0 0
    %1952 = vmatpush1.bf16.xpose.msra.mxu0 0
    %1953 = vmatprep.subr.bf16.mxu0 0
    %1954 = vmatpush1.bf16.xpose.msra.mxu0 0
    %1955 = vmatprep.subr.bf16.mxu0 0
    %1956 = vmatpush1.bf16.xpose.msra.mxu0 0
    %1957 = vmatprep.mubr.bf16.mxu0 0
    %1958 = vmatmul.mubr.bf16.gmra.mrb[0].mxu0 %v1920
    %v1959 = vpop.f32.mrb[0].mxu0
    %v1960 = vadd.f32 0.0, %v1959
    %v1961 = vpop.f32.mrb[0].mxu0
    %v1962 = vpop.f32.mrb[0].mxu0
    %v1963 = vpop.f32.mrb[0].mxu0
    %1964 = vdwg.mxu0
    %1965 = vrot.lane.b32.xlu0 %v136, 112
    %v1966 = vpop.permute.xlu0 %1965
    %1967 = vrot.lane.b32.xlu0 %v136, 80
    %v1968 = vpop.permute.xlu0 %1967
    %v1970 = vsel %vm36, %v1966, 0
    %v1973 = vsel %vm36, %v1968, 0
    %1975 = vmatprep.subr.bf16.mxu0 0
    %1976 = vmatpush1.bf16.xpose.msra.mxu0 %v1973
    %1977 = vmatprep.subr.bf16.mxu0 0
    %1978 = vmatpush1.bf16.xpose.msra.mxu0 0
    %1979 = vmatprep.subr.bf16.mxu0 0
    %1980 = vmatpush1.bf16.xpose.msra.mxu0 0
    %1981 = vmatprep.subr.bf16.mxu0 0
    %1982 = vmatpush1.bf16.xpose.msra.mxu0 0
    %1983 = vmatprep.subr.bf16.mxu0 0
    %1984 = vmatpush1.bf16.xpose.msra.mxu0 0
    %1985 = vmatprep.subr.bf16.mxu0 0
    %1986 = vmatpush1.bf16.xpose.msra.mxu0 0
    %1987 = vmatprep.subr.bf16.mxu0 0
    %1988 = vmatpush1.bf16.xpose.msra.mxu0 0
    %1989 = vmatprep.subr.bf16.mxu0 0
    %1990 = vmatpush1.bf16.xpose.msra.mxu0 0
    %1991 = vmatprep.subr.bf16.mxu0 0
    %1992 = vmatpush1.bf16.xpose.msra.mxu0 0
    %1993 = vmatprep.subr.bf16.mxu0 0
    %1994 = vmatpush1.bf16.xpose.msra.mxu0 0
    %1995 = vmatprep.subr.bf16.mxu0 0
    %1996 = vmatpush1.bf16.xpose.msra.mxu0 0
    %1997 = vmatprep.subr.bf16.mxu0 0
    %1998 = vmatpush1.bf16.xpose.msra.mxu0 0
    %1999 = vmatprep.subr.bf16.mxu0 0
    %2000 = vmatpush1.bf16.xpose.msra.mxu0 0
    %2001 = vmatprep.subr.bf16.mxu0 0
    %2002 = vmatpush1.bf16.xpose.msra.mxu0 0
    %2003 = vmatprep.subr.bf16.mxu0 0
    %2004 = vmatpush1.bf16.xpose.msra.mxu0 0
    %2005 = vmatprep.subr.bf16.mxu0 0
    %2006 = vmatpush1.bf16.xpose.msra.mxu0 0
    %2007 = vmatprep.mubr.bf16.mxu0 0
    %2008 = vmatmul.mubr.bf16.gmra.mrb[0].mxu0 %v1970
    %v2009 = vpop.f32.mrb[0].mxu0
    %v2010 = vadd.f32 0.0, %v2009
    %v2011 = vpop.f32.mrb[0].mxu0
    %v2012 = vpop.f32.mrb[0].mxu0
    %v2013 = vpop.f32.mrb[0].mxu0
    %2014 = vdwg.mxu0
    %2015 = vrot.lane.b32.xlu0 %v187, 112
    %v2016 = vpop.permute.xlu0 %2015
    %2017 = vrot.lane.b32.xlu0 %v187, 80
    %v2018 = vpop.permute.xlu0 %2017
    %v2020 = vsel %vm36, %v2016, 0
    %v2023 = vsel %vm36, %v2018, 0
    %2025 = vmatprep.subr.bf16.mxu0 0
    %2026 = vmatpush1.bf16.xpose.msra.mxu0 %v2023
    %2027 = vmatprep.subr.bf16.mxu0 0
    %2028 = vmatpush1.bf16.xpose.msra.mxu0 0
    %2029 = vmatprep.subr.bf16.mxu0 0
    %2030 = vmatpush1.bf16.xpose.msra.mxu0 0
    %2031 = vmatprep.subr.bf16.mxu0 0
    %2032 = vmatpush1.bf16.xpose.msra.mxu0 0
    %2033 = vmatprep.subr.bf16.mxu0 0
    %2034 = vmatpush1.bf16.xpose.msra.mxu0 0
    %2035 = vmatprep.subr.bf16.mxu0 0
    %2036 = vmatpush1.bf16.xpose.msra.mxu0 0
    %2037 = vmatprep.subr.bf16.mxu0 0
    %2038 = vmatpush1.bf16.xpose.msra.mxu0 0
    %2039 = vmatprep.subr.bf16.mxu0 0
    %2040 = vmatpush1.bf16.xpose.msra.mxu0 0
    %2041 = vmatprep.subr.bf16.mxu0 0
    %2042 = vmatpush1.bf16.xpose.msra.mxu0 0
    %2043 = vmatprep.subr.bf16.mxu0 0
    %2044 = vmatpush1.bf16.xpose.msra.mxu0 0
    %2045 = vmatprep.subr.bf16.mxu0 0
    %2046 = vmatpush1.bf16.xpose.msra.mxu0 0
    %2047 = vmatprep.subr.bf16.mxu0 0
    %2048 = vmatpush1.bf16.xpose.msra.mxu0 0
    %2049 = vmatprep.subr.bf16.mxu0 0
    %2050 = vmatpush1.bf16.xpose.msra.mxu0 0
    %2051 = vmatprep.subr.bf16.mxu0 0
    %2052 = vmatpush1.bf16.xpose.msra.mxu0 0
    %2053 = vmatprep.subr.bf16.mxu0 0
    %2054 = vmatpush1.bf16.xpose.msra.mxu0 0
    %2055 = vmatprep.subr.bf16.mxu0 0
    %2056 = vmatpush1.bf16.xpose.msra.mxu0 0
    %2057 = vmatprep.mubr.bf16.mxu0 0
    %2058 = vmatmul.mubr.bf16.gmra.mrb[0].mxu0 %v2020
    %v2059 = vpop.f32.mrb[0].mxu0
    %v2060 = vadd.f32 0.0, %v2059
    %v2061 = vpop.f32.mrb[0].mxu0
    %v2062 = vpop.f32.mrb[0].mxu0
    %v2063 = vpop.f32.mrb[0].mxu0
    %2064 = vdwg.mxu0
    %2065 = vrot.lane.b32.xlu0 %v238, 112
    %v2066 = vpop.permute.xlu0 %2065
    %2067 = vrot.lane.b32.xlu0 %v238, 80
    %v2068 = vpop.permute.xlu0 %2067
    %v2070 = vsel %vm36, %v2066, 0
    %v2073 = vsel %vm36, %v2068, 0
    %2075 = vmatprep.subr.bf16.mxu0 0
    %2076 = vmatpush1.bf16.xpose.msra.mxu0 %v2073
    %2077 = vmatprep.subr.bf16.mxu0 0
    %2078 = vmatpush1.bf16.xpose.msra.mxu0 0
    %2079 = vmatprep.subr.bf16.mxu0 0
    %2080 = vmatpush1.bf16.xpose.msra.mxu0 0
    %2081 = vmatprep.subr.bf16.mxu0 0
    %2082 = vmatpush1.bf16.xpose.msra.mxu0 0
    %2083 = vmatprep.subr.bf16.mxu0 0
    %2084 = vmatpush1.bf16.xpose.msra.mxu0 0
    %2085 = vmatprep.subr.bf16.mxu0 0
    %2086 = vmatpush1.bf16.xpose.msra.mxu0 0
    %2087 = vmatprep.subr.bf16.mxu0 0
    %2088 = vmatpush1.bf16.xpose.msra.mxu0 0
    %2089 = vmatprep.subr.bf16.mxu0 0
    %2090 = vmatpush1.bf16.xpose.msra.mxu0 0
    %2091 = vmatprep.subr.bf16.mxu0 0
    %2092 = vmatpush1.bf16.xpose.msra.mxu0 0
    %2093 = vmatprep.subr.bf16.mxu0 0
    %2094 = vmatpush1.bf16.xpose.msra.mxu0 0
    %2095 = vmatprep.subr.bf16.mxu0 0
    %2096 = vmatpush1.bf16.xpose.msra.mxu0 0
    %2097 = vmatprep.subr.bf16.mxu0 0
    %2098 = vmatpush1.bf16.xpose.msra.mxu0 0
    %2099 = vmatprep.subr.bf16.mxu0 0
    %2100 = vmatpush1.bf16.xpose.msra.mxu0 0
    %2101 = vmatprep.subr.bf16.mxu0 0
    %2102 = vmatpush1.bf16.xpose.msra.mxu0 0
    %2103 = vmatprep.subr.bf16.mxu0 0
    %2104 = vmatpush1.bf16.xpose.msra.mxu0 0
    %2105 = vmatprep.subr.bf16.mxu0 0
    %2106 = vmatpush1.bf16.xpose.msra.mxu0 0
    %2107 = vmatprep.mubr.bf16.mxu0 0
    %2108 = vmatmul.mubr.bf16.gmra.mrb[0].mxu0 %v2070
    %v2109 = vpop.f32.mrb[0].mxu0
    %v2110 = vadd.f32 0.0, %v2109
    %v2111 = vpop.f32.mrb[0].mxu0
    %v2112 = vpop.f32.mrb[0].mxu0
    %v2113 = vpop.f32.mrb[0].mxu0
    %2114 = vdwg.mxu0
    %2115 = vrot.lane.b32.xlu0 %v289, 112
    %v2116 = vpop.permute.xlu0 %2115
    %2117 = vrot.lane.b32.xlu0 %v289, 80
    %v2118 = vpop.permute.xlu0 %2117
    %v2120 = vsel %vm36, %v2116, 0
    %v2123 = vsel %vm36, %v2118, 0
    %2125 = vmatprep.subr.bf16.mxu0 0
    %2126 = vmatpush1.bf16.xpose.msra.mxu0 %v2123
    %2127 = vmatprep.subr.bf16.mxu0 0
    %2128 = vmatpush1.bf16.xpose.msra.mxu0 0
    %2129 = vmatprep.subr.bf16.mxu0 0
    %2130 = vmatpush1.bf16.xpose.msra.mxu0 0
    %2131 = vmatprep.subr.bf16.mxu0 0
    %2132 = vmatpush1.bf16.xpose.msra.mxu0 0
    %2133 = vmatprep.subr.bf16.mxu0 0
    %2134 = vmatpush1.bf16.xpose.msra.mxu0 0
    %2135 = vmatprep.subr.bf16.mxu0 0
    %2136 = vmatpush1.bf16.xpose.msra.mxu0 0
    %2137 = vmatprep.subr.bf16.mxu0 0
    %2138 = vmatpush1.bf16.xpose.msra.mxu0 0
    %2139 = vmatprep.subr.bf16.mxu0 0
    %2140 = vmatpush1.bf16.xpose.msra.mxu0 0
    %2141 = vmatprep.subr.bf16.mxu0 0
    %2142 = vmatpush1.bf16.xpose.msra.mxu0 0
    %2143 = vmatprep.subr.bf16.mxu0 0
    %2144 = vmatpush1.bf16.xpose.msra.mxu0 0
    %2145 = vmatprep.subr.bf16.mxu0 0
    %2146 = vmatpush1.bf16.xpose.msra.mxu0 0
    %2147 = vmatprep.subr.bf16.mxu0 0
    %2148 = vmatpush1.bf16.xpose.msra.mxu0 0
    %2149 = vmatprep.subr.bf16.mxu0 0
    %2150 = vmatpush1.bf16.xpose.msra.mxu0 0
    %2151 = vmatprep.subr.bf16.mxu0 0
    %2152 = vmatpush1.bf16.xpose.msra.mxu0 0
    %2153 = vmatprep.subr.bf16.mxu0 0
    %2154 = vmatpush1.bf16.xpose.msra.mxu0 0
    %2155 = vmatprep.subr.bf16.mxu0 0
    %2156 = vmatpush1.bf16.xpose.msra.mxu0 0
    %2157 = vmatprep.mubr.bf16.mxu0 0
    %2158 = vmatmul.mubr.bf16.gmra.mrb[0].mxu0 %v2120
    %v2159 = vpop.f32.mrb[0].mxu0
    %v2160 = vadd.f32 0.0, %v2159
    %v2161 = vpop.f32.mrb[0].mxu0
    %v2162 = vpop.f32.mrb[0].mxu0
    %v2163 = vpop.f32.mrb[0].mxu0
    %2164 = vdwg.mxu0
    %2165 = vrot.lane.b32.xlu0 %v340, 112
    %v2166 = vpop.permute.xlu0 %2165
    %2167 = vrot.lane.b32.xlu0 %v340, 80
    %v2168 = vpop.permute.xlu0 %2167
    %v2170 = vsel %vm36, %v2166, 0
    %v2173 = vsel %vm36, %v2168, 0
    %2175 = vmatprep.subr.bf16.mxu0 0
    %2176 = vmatpush1.bf16.xpose.msra.mxu0 %v2173
    %2177 = vmatprep.subr.bf16.mxu0 0
    %2178 = vmatpush1.bf16.xpose.msra.mxu0 0
    %2179 = vmatprep.subr.bf16.mxu0 0
    %2180 = vmatpush1.bf16.xpose.msra.mxu0 0
    %2181 = vmatprep.subr.bf16.mxu0 0
    %2182 = vmatpush1.bf16.xpose.msra.mxu0 0
    %2183 = vmatprep.subr.bf16.mxu0 0
    %2184 = vmatpush1.bf16.xpose.msra.mxu0 0
    %2185 = vmatprep.subr.bf16.mxu0 0
    %2186 = vmatpush1.bf16.xpose.msra.mxu0 0
    %2187 = vmatprep.subr.bf16.mxu0 0
    %2188 = vmatpush1.bf16.xpose.msra.mxu0 0
    %2189 = vmatprep.subr.bf16.mxu0 0
    %2190 = vmatpush1.bf16.xpose.msra.mxu0 0
    %2191 = vmatprep.subr.bf16.mxu0 0
    %2192 = vmatpush1.bf16.xpose.msra.mxu0 0
    %2193 = vmatprep.subr.bf16.mxu0 0
    %2194 = vmatpush1.bf16.xpose.msra.mxu0 0
    %2195 = vmatprep.subr.bf16.mxu0 0
    %2196 = vmatpush1.bf16.xpose.msra.mxu0 0
    %2197 = vmatprep.subr.bf16.mxu0 0
    %2198 = vmatpush1.bf16.xpose.msra.mxu0 0
    %2199 = vmatprep.subr.bf16.mxu0 0
    %2200 = vmatpush1.bf16.xpose.msra.mxu0 0
    %2201 = vmatprep.subr.bf16.mxu0 0
    %2202 = vmatpush1.bf16.xpose.msra.mxu0 0
    %2203 = vmatprep.subr.bf16.mxu0 0
    %2204 = vmatpush1.bf16.xpose.msra.mxu0 0
    %2205 = vmatprep.subr.bf16.mxu0 0
    %2206 = vmatpush1.bf16.xpose.msra.mxu0 0
    %2207 = vmatprep.mubr.bf16.mxu0 0
    %2208 = vmatmul.mubr.bf16.gmra.mrb[0].mxu0 %v2170
    %v2209 = vpop.f32.mrb[0].mxu0
    %v2210 = vadd.f32 0.0, %v2209
    %v2211 = vpop.f32.mrb[0].mxu0
    %v2212 = vpop.f32.mrb[0].mxu0
    %v2213 = vpop.f32.mrb[0].mxu0
    %2214 = vdwg.mxu0
    %2215 = vrot.lane.b32.xlu0 %v391, 112
    %v2216 = vpop.permute.xlu0 %2215
    %2217 = vrot.lane.b32.xlu0 %v391, 80
    %v2218 = vpop.permute.xlu0 %2217
    %v2220 = vsel %vm36, %v2216, 0
    %v2223 = vsel %vm36, %v2218, 0
    %2225 = vmatprep.subr.bf16.mxu0 0
    %2226 = vmatpush1.bf16.xpose.msra.mxu0 %v2223
    %2227 = vmatprep.subr.bf16.mxu0 0
    %2228 = vmatpush1.bf16.xpose.msra.mxu0 0
    %2229 = vmatprep.subr.bf16.mxu0 0
    %2230 = vmatpush1.bf16.xpose.msra.mxu0 0
    %2231 = vmatprep.subr.bf16.mxu0 0
    %2232 = vmatpush1.bf16.xpose.msra.mxu0 0
    %2233 = vmatprep.subr.bf16.mxu0 0
    %2234 = vmatpush1.bf16.xpose.msra.mxu0 0
    %2235 = vmatprep.subr.bf16.mxu0 0
    %2236 = vmatpush1.bf16.xpose.msra.mxu0 0
    %2237 = vmatprep.subr.bf16.mxu0 0
    %2238 = vmatpush1.bf16.xpose.msra.mxu0 0
    %2239 = vmatprep.subr.bf16.mxu0 0
    %2240 = vmatpush1.bf16.xpose.msra.mxu0 0
    %2241 = vmatprep.subr.bf16.mxu0 0
    %2242 = vmatpush1.bf16.xpose.msra.mxu0 0
    %2243 = vmatprep.subr.bf16.mxu0 0
    %2244 = vmatpush1.bf16.xpose.msra.mxu0 0
    %2245 = vmatprep.subr.bf16.mxu0 0
    %2246 = vmatpush1.bf16.xpose.msra.mxu0 0
    %2247 = vmatprep.subr.bf16.mxu0 0
    %2248 = vmatpush1.bf16.xpose.msra.mxu0 0
    %2249 = vmatprep.subr.bf16.mxu0 0
    %2250 = vmatpush1.bf16.xpose.msra.mxu0 0
    %2251 = vmatprep.subr.bf16.mxu0 0
    %2252 = vmatpush1.bf16.xpose.msra.mxu0 0
    %2253 = vmatprep.subr.bf16.mxu0 0
    %2254 = vmatpush1.bf16.xpose.msra.mxu0 0
    %2255 = vmatprep.subr.bf16.mxu0 0
    %2256 = vmatpush1.bf16.xpose.msra.mxu0 0
    %2257 = vmatprep.mubr.bf16.mxu0 0
    %2258 = vmatmul.mubr.bf16.gmra.mrb[0].mxu0 %v2220
    %v2259 = vpop.f32.mrb[0].mxu0
    %v2260 = vadd.f32 0.0, %v2259
    %v2261 = vpop.f32.mrb[0].mxu0
    %v2262 = vpop.f32.mrb[0].mxu0
    %v2263 = vpop.f32.mrb[0].mxu0
    %2264 = vdwg.mxu0
    %v2265 = vmul.f32 %v1910, 0.35355338
    %v2266 = vmul.f32 %v1960, 0.35355338
    %v2267 = vmul.f32 %v2010, 0.35355338
    %v2268 = vmul.f32 %v2060, 0.35355338
    %v2269 = vmul.f32 %v2110, 0.35355338
    %v2270 = vmul.f32 %v2160, 0.35355338
    %v2271 = vmul.f32 %v2210, 0.35355338
    %v2272 = vmul.f32 %v2260, 0.35355338
    %2273 = vrot.lane.b32.xlu0 %v23, 112
    %v2274 = vpop.permute.xlu0 %2273
    %2275 = vrot.lane.b32.xlu0 %v24, 112
    %v2276 = vpop.permute.xlu0 %2275
    %2277 = vrot.lane.b32.xlu0 %v25, 112
    %v2278 = vpop.permute.xlu0 %2277
    %2279 = vrot.lane.b32.xlu0 %v26, 112
    %v2280 = vpop.permute.xlu0 %2279
    %2281 = vrot.lane.b32.xlu0 %v27, 112
    %v2282 = vpop.permute.xlu0 %2281
    %2283 = vrot.lane.b32.xlu0 %v28, 112
    %v2284 = vpop.permute.xlu0 %2283
    %2285 = vrot.lane.b32.xlu0 %v29, 112
    %v2286 = vpop.permute.xlu0 %2285
    %2287 = vrot.lane.b32.xlu0 %v30, 112
    %v2288 = vpop.permute.xlu0 %2287
    %v2297 = vadd.f32 %v2265, %v2274
    %v2298 = vadd.f32 %v2266, %v2276
    %v2299 = vadd.f32 %v2267, %v2278
    %v2300 = vadd.f32 %v2268, %v2280
    %v2301 = vadd.f32 %v2269, %v2282
    %v2302 = vadd.f32 %v2270, %v2284
    %v2303 = vadd.f32 %v2271, %v2286
    %v2304 = vadd.f32 %v2272, %v2288
    %v2305 = vsel %vm36, %v2297, -inf
    %2306 = vmax.xlane.f32.xlu0 %v2305
    %v2307 = vpop.xlane.xlu0 %2306
    %v2308 = vsel %vm36, %v2298, -inf
    %2309 = vmax.xlane.f32.xlu0 %v2308
    %v2310 = vpop.xlane.xlu0 %2309
    %v2311 = vsel %vm36, %v2299, -inf
    %2312 = vmax.xlane.f32.xlu0 %v2311
    %v2313 = vpop.xlane.xlu0 %2312
    %v2314 = vsel %vm36, %v2300, -inf
    %2315 = vmax.xlane.f32.xlu0 %v2314
    %v2316 = vpop.xlane.xlu0 %2315
    %v2317 = vsel %vm36, %v2301, -inf
    %2318 = vmax.xlane.f32.xlu0 %v2317
    %v2319 = vpop.xlane.xlu0 %2318
    %v2320 = vsel %vm36, %v2302, -inf
    %2321 = vmax.xlane.f32.xlu0 %v2320
    %v2322 = vpop.xlane.xlu0 %2321
    %v2323 = vsel %vm36, %v2303, -inf
    %2324 = vmax.xlane.f32.xlu0 %v2323
    %v2325 = vpop.xlane.xlu0 %2324
    %v2326 = vsel %vm36, %v2304, -inf
    %2327 = vmax.xlane.f32.xlu0 %v2326
    %v2328 = vpop.xlane.xlu0 %2327
    %v2329 = vsub.f32 %v2297, %v2307
    %v2330 = vsub.f32 %v2298, %v2310
    %v2331 = vsub.f32 %v2299, %v2313
    %v2332 = vsub.f32 %v2300, %v2316
    %v2333 = vsub.f32 %v2301, %v2319
    %v2334 = vsub.f32 %v2302, %v2322
    %v2335 = vsub.f32 %v2303, %v2325
    %v2336 = vsub.f32 %v2304, %v2328
    %v2337 = vmul.f32 %v2329, 1.442695
    %v2338 = vpow.pop %v2337
    %v2339 = vmul.f32 %v2330, 1.442695
    %v2340 = vpow.pop %v2339
    %v2341 = vmul.f32 %v2331, 1.442695
    %v2342 = vpow.pop %v2341
    %v2343 = vmul.f32 %v2332, 1.442695
    %v2344 = vpow.pop %v2343
    %v2345 = vmul.f32 %v2333, 1.442695
    %v2346 = vpow.pop %v2345
    %v2347 = vmul.f32 %v2334, 1.442695
    %v2348 = vpow.pop %v2347
    %v2349 = vmul.f32 %v2335, 1.442695
    %v2350 = vpow.pop %v2349
    %v2351 = vmul.f32 %v2336, 1.442695
    %v2352 = vpow.pop %v2351
    %v2353 = vsel %vm36, %v2338, 0.0
    %2354 = vadd.xlane.f32.xlu0 %v2353
    %v2355 = vpop.xlane.xlu0 %2354
    %v2356 = vsel %vm36, %v2340, 0.0
    %2357 = vadd.xlane.f32.xlu0 %v2356
    %v2358 = vpop.xlane.xlu0 %2357
    %v2359 = vsel %vm36, %v2342, 0.0
    %2360 = vadd.xlane.f32.xlu0 %v2359
    %v2361 = vpop.xlane.xlu0 %2360
    %v2362 = vsel %vm36, %v2344, 0.0
    %2363 = vadd.xlane.f32.xlu0 %v2362
    %v2364 = vpop.xlane.xlu0 %2363
    %v2365 = vsel %vm36, %v2346, 0.0
    %2366 = vadd.xlane.f32.xlu0 %v2365
    %v2367 = vpop.xlane.xlu0 %2366
    %v2368 = vsel %vm36, %v2348, 0.0
    %2369 = vadd.xlane.f32.xlu0 %v2368
    %v2370 = vpop.xlane.xlu0 %2369
    %v2371 = vsel %vm36, %v2350, 0.0
    %2372 = vadd.xlane.f32.xlu0 %v2371
    %v2373 = vpop.xlane.xlu0 %2372
    %v2374 = vsel %vm36, %v2352, 0.0
    %2375 = vadd.xlane.f32.xlu0 %v2374
    %v2376 = vpop.xlane.xlu0 %2375
    %v2377 = vrcp.pop %v2355
    %v2378 = vrcp.pop %v2358
    %v2379 = vrcp.pop %v2361
    %v2380 = vrcp.pop %v2364
    %v2381 = vrcp.pop %v2367
    %v2382 = vrcp.pop %v2370
    %v2383 = vrcp.pop %v2373
    %v2384 = vrcp.pop %v2376
    %v2385 = vmul.f32 %v2338, %v2377
    %v2386 = vmul.f32 %v2340, %v2378
    %v2387 = vmul.f32 %v2342, %v2379
    %v2388 = vmul.f32 %v2344, %v2380
    %v2389 = vmul.f32 %v2346, %v2381
    %v2390 = vmul.f32 %v2348, %v2382
    %v2391 = vmul.f32 %v2350, %v2383
    %v2392 = vmul.f32 %v2352, %v2384
    %v2393 = vpack.c.bf16 %v2385, %v2385
    %v2394 = vpack.c.bf16 %v2386, %v2386
    %v2395 = vpack.c.bf16 %v2387, %v2387
    %v2396 = vpack.c.bf16 %v2388, %v2388
    %v2397 = vpack.c.bf16 %v2389, %v2389
    %v2398 = vpack.c.bf16 %v2390, %v2390
    %v2399 = vpack.c.bf16 %v2391, %v2391
    %v2400 = vpack.c.bf16 %v2392, %v2392
    %2401 = vrot.lane.b32.xlu0 %v33, 48
    %v2402 = vpop.permute.xlu0 %2401
    %v2404 = vsel %vm36, %v2393, 0
    %v2407 = vsel %vm557, %v2402, 0
    %2409 = vmatprep.subr.bf16.mxu0 0
    %2410 = vmatpush1.bf16.msra.mxu0 %v2407
    %2411 = vmatprep.subr.bf16.mxu0 0
    %2412 = vmatpush1.bf16.msra.mxu0 0
    %2413 = vmatprep.subr.bf16.mxu0 0
    %2414 = vmatpush1.bf16.msra.mxu0 0
    %2415 = vmatprep.subr.bf16.mxu0 0
    %2416 = vmatpush1.bf16.msra.mxu0 0
    %2417 = vmatprep.subr.bf16.mxu0 0
    %2418 = vmatpush1.bf16.msra.mxu0 0
    %2419 = vmatprep.subr.bf16.mxu0 0
    %2420 = vmatpush1.bf16.msra.mxu0 0
    %2421 = vmatprep.subr.bf16.mxu0 0
    %2422 = vmatpush1.bf16.msra.mxu0 0
    %2423 = vmatprep.subr.bf16.mxu0 0
    %2424 = vmatpush1.bf16.msra.mxu0 0
    %2425 = vmatprep.subr.bf16.mxu0 0
    %2426 = vmatpush1.bf16.msra.mxu0 0
    %2427 = vmatprep.subr.bf16.mxu0 0
    %2428 = vmatpush1.bf16.msra.mxu0 0
    %2429 = vmatprep.subr.bf16.mxu0 0
    %2430 = vmatpush1.bf16.msra.mxu0 0
    %2431 = vmatprep.subr.bf16.mxu0 0
    %2432 = vmatpush1.bf16.msra.mxu0 0
    %2433 = vmatprep.subr.bf16.mxu0 0
    %2434 = vmatpush1.bf16.msra.mxu0 0
    %2435 = vmatprep.subr.bf16.mxu0 0
    %2436 = vmatpush1.bf16.msra.mxu0 0
    %2437 = vmatprep.subr.bf16.mxu0 0
    %2438 = vmatpush1.bf16.msra.mxu0 0
    %2439 = vmatprep.subr.bf16.mxu0 0
    %2440 = vmatpush1.bf16.msra.mxu0 0
    %2441 = vmatprep.mubr.bf16.mxu0 0
    %2442 = vmatmul.mubr.bf16.gmra.mrb[0].mxu0 %v2404
    %v2443 = vpop.f32.mrb[0].mxu0
    %v2444 = vadd.f32 0.0, %v2443
    %v2445 = vpop.f32.mrb[0].mxu0
    %v2446 = vpop.f32.mrb[0].mxu0
    %v2447 = vpop.f32.mrb[0].mxu0
    %2448 = vdwg.mxu0
    %2449 = vrot.lane.b32.xlu0 %v85, 48
    %v2450 = vpop.permute.xlu0 %2449
    %v2452 = vsel %vm36, %v2394, 0
    %v2455 = vsel %vm557, %v2450, 0
    %2457 = vmatprep.subr.bf16.mxu0 0
    %2458 = vmatpush1.bf16.msra.mxu0 %v2455
    %2459 = vmatprep.subr.bf16.mxu0 0
    %2460 = vmatpush1.bf16.msra.mxu0 0
    %2461 = vmatprep.subr.bf16.mxu0 0
    %2462 = vmatpush1.bf16.msra.mxu0 0
    %2463 = vmatprep.subr.bf16.mxu0 0
    %2464 = vmatpush1.bf16.msra.mxu0 0
    %2465 = vmatprep.subr.bf16.mxu0 0
    %2466 = vmatpush1.bf16.msra.mxu0 0
    %2467 = vmatprep.subr.bf16.mxu0 0
    %2468 = vmatpush1.bf16.msra.mxu0 0
    %2469 = vmatprep.subr.bf16.mxu0 0
    %2470 = vmatpush1.bf16.msra.mxu0 0
    %2471 = vmatprep.subr.bf16.mxu0 0
    %2472 = vmatpush1.bf16.msra.mxu0 0
    %2473 = vmatprep.subr.bf16.mxu0 0
    %2474 = vmatpush1.bf16.msra.mxu0 0
    %2475 = vmatprep.subr.bf16.mxu0 0
    %2476 = vmatpush1.bf16.msra.mxu0 0
    %2477 = vmatprep.subr.bf16.mxu0 0
    %2478 = vmatpush1.bf16.msra.mxu0 0
    %2479 = vmatprep.subr.bf16.mxu0 0
    %2480 = vmatpush1.bf16.msra.mxu0 0
    %2481 = vmatprep.subr.bf16.mxu0 0
    %2482 = vmatpush1.bf16.msra.mxu0 0
    %2483 = vmatprep.subr.bf16.mxu0 0
    %2484 = vmatpush1.bf16.msra.mxu0 0
    %2485 = vmatprep.subr.bf16.mxu0 0
    %2486 = vmatpush1.bf16.msra.mxu0 0
    %2487 = vmatprep.subr.bf16.mxu0 0
    %2488 = vmatpush1.bf16.msra.mxu0 0
    %2489 = vmatprep.mubr.bf16.mxu0 0
    %2490 = vmatmul.mubr.bf16.gmra.mrb[0].mxu0 %v2452
    %v2491 = vpop.f32.mrb[0].mxu0
    %v2492 = vadd.f32 0.0, %v2491
    %v2493 = vpop.f32.mrb[0].mxu0
    %v2494 = vpop.f32.mrb[0].mxu0
    %v2495 = vpop.f32.mrb[0].mxu0
    %2496 = vdwg.mxu0
    %2497 = vrot.lane.b32.xlu0 %v136, 48
    %v2498 = vpop.permute.xlu0 %2497
    %v2500 = vsel %vm36, %v2395, 0
    %v2503 = vsel %vm557, %v2498, 0
    %2505 = vmatprep.subr.bf16.mxu0 0
    %2506 = vmatpush1.bf16.msra.mxu0 %v2503
    %2507 = vmatprep.subr.bf16.mxu0 0
    %2508 = vmatpush1.bf16.msra.mxu0 0
    %2509 = vmatprep.subr.bf16.mxu0 0
    %2510 = vmatpush1.bf16.msra.mxu0 0
    %2511 = vmatprep.subr.bf16.mxu0 0
    %2512 = vmatpush1.bf16.msra.mxu0 0
    %2513 = vmatprep.subr.bf16.mxu0 0
    %2514 = vmatpush1.bf16.msra.mxu0 0
    %2515 = vmatprep.subr.bf16.mxu0 0
    %2516 = vmatpush1.bf16.msra.mxu0 0
    %2517 = vmatprep.subr.bf16.mxu0 0
    %2518 = vmatpush1.bf16.msra.mxu0 0
    %2519 = vmatprep.subr.bf16.mxu0 0
    %2520 = vmatpush1.bf16.msra.mxu0 0
    %2521 = vmatprep.subr.bf16.mxu0 0
    %2522 = vmatpush1.bf16.msra.mxu0 0
    %2523 = vmatprep.subr.bf16.mxu0 0
    %2524 = vmatpush1.bf16.msra.mxu0 0
    %2525 = vmatprep.subr.bf16.mxu0 0
    %2526 = vmatpush1.bf16.msra.mxu0 0
    %2527 = vmatprep.subr.bf16.mxu0 0
    %2528 = vmatpush1.bf16.msra.mxu0 0
    %2529 = vmatprep.subr.bf16.mxu0 0
    %2530 = vmatpush1.bf16.msra.mxu0 0
    %2531 = vmatprep.subr.bf16.mxu0 0
    %2532 = vmatpush1.bf16.msra.mxu0 0
    %2533 = vmatprep.subr.bf16.mxu0 0
    %2534 = vmatpush1.bf16.msra.mxu0 0
    %2535 = vmatprep.subr.bf16.mxu0 0
    %2536 = vmatpush1.bf16.msra.mxu0 0
    %2537 = vmatprep.mubr.bf16.mxu0 0
    %2538 = vmatmul.mubr.bf16.gmra.mrb[0].mxu0 %v2500
    %v2539 = vpop.f32.mrb[0].mxu0
    %v2540 = vadd.f32 0.0, %v2539
    %v2541 = vpop.f32.mrb[0].mxu0
    %v2542 = vpop.f32.mrb[0].mxu0
    %v2543 = vpop.f32.mrb[0].mxu0
    %2544 = vdwg.mxu0
    %2545 = vrot.lane.b32.xlu0 %v187, 48
    %v2546 = vpop.permute.xlu0 %2545
    %v2548 = vsel %vm36, %v2396, 0
    %v2551 = vsel %vm557, %v2546, 0
    %2553 = vmatprep.subr.bf16.mxu0 0
    %2554 = vmatpush1.bf16.msra.mxu0 %v2551
    %2555 = vmatprep.subr.bf16.mxu0 0
    %2556 = vmatpush1.bf16.msra.mxu0 0
    %2557 = vmatprep.subr.bf16.mxu0 0
    %2558 = vmatpush1.bf16.msra.mxu0 0
    %2559 = vmatprep.subr.bf16.mxu0 0
    %2560 = vmatpush1.bf16.msra.mxu0 0
    %2561 = vmatprep.subr.bf16.mxu0 0
    %2562 = vmatpush1.bf16.msra.mxu0 0
    %2563 = vmatprep.subr.bf16.mxu0 0
    %2564 = vmatpush1.bf16.msra.mxu0 0
    %2565 = vmatprep.subr.bf16.mxu0 0
    %2566 = vmatpush1.bf16.msra.mxu0 0
    %2567 = vmatprep.subr.bf16.mxu0 0
    %2568 = vmatpush1.bf16.msra.mxu0 0
    %2569 = vmatprep.subr.bf16.mxu0 0
    %2570 = vmatpush1.bf16.msra.mxu0 0
    %2571 = vmatprep.subr.bf16.mxu0 0
    %2572 = vmatpush1.bf16.msra.mxu0 0
    %2573 = vmatprep.subr.bf16.mxu0 0
    %2574 = vmatpush1.bf16.msra.mxu0 0
    %2575 = vmatprep.subr.bf16.mxu0 0
    %2576 = vmatpush1.bf16.msra.mxu0 0
    %2577 = vmatprep.subr.bf16.mxu0 0
    %2578 = vmatpush1.bf16.msra.mxu0 0
    %2579 = vmatprep.subr.bf16.mxu0 0
    %2580 = vmatpush1.bf16.msra.mxu0 0
    %2581 = vmatprep.subr.bf16.mxu0 0
    %2582 = vmatpush1.bf16.msra.mxu0 0
    %2583 = vmatprep.subr.bf16.mxu0 0
    %2584 = vmatpush1.bf16.msra.mxu0 0
    %2585 = vmatprep.mubr.bf16.mxu0 0
    %2586 = vmatmul.mubr.bf16.gmra.mrb[0].mxu0 %v2548
    %v2587 = vpop.f32.mrb[0].mxu0
    %v2588 = vadd.f32 0.0, %v2587
    %v2589 = vpop.f32.mrb[0].mxu0
    %v2590 = vpop.f32.mrb[0].mxu0
    %v2591 = vpop.f32.mrb[0].mxu0
    %2592 = vdwg.mxu0
    %2593 = vrot.lane.b32.xlu0 %v238, 48
    %v2594 = vpop.permute.xlu0 %2593
    %v2596 = vsel %vm36, %v2397, 0
    %v2599 = vsel %vm557, %v2594, 0
    %2601 = vmatprep.subr.bf16.mxu0 0
    %2602 = vmatpush1.bf16.msra.mxu0 %v2599
    %2603 = vmatprep.subr.bf16.mxu0 0
    %2604 = vmatpush1.bf16.msra.mxu0 0
    %2605 = vmatprep.subr.bf16.mxu0 0
    %2606 = vmatpush1.bf16.msra.mxu0 0
    %2607 = vmatprep.subr.bf16.mxu0 0
    %2608 = vmatpush1.bf16.msra.mxu0 0
    %2609 = vmatprep.subr.bf16.mxu0 0
    %2610 = vmatpush1.bf16.msra.mxu0 0
    %2611 = vmatprep.subr.bf16.mxu0 0
    %2612 = vmatpush1.bf16.msra.mxu0 0
    %2613 = vmatprep.subr.bf16.mxu0 0
    %2614 = vmatpush1.bf16.msra.mxu0 0
    %2615 = vmatprep.subr.bf16.mxu0 0
    %2616 = vmatpush1.bf16.msra.mxu0 0
    %2617 = vmatprep.subr.bf16.mxu0 0
    %2618 = vmatpush1.bf16.msra.mxu0 0
    %2619 = vmatprep.subr.bf16.mxu0 0
    %2620 = vmatpush1.bf16.msra.mxu0 0
    %2621 = vmatprep.subr.bf16.mxu0 0
    %2622 = vmatpush1.bf16.msra.mxu0 0
    %2623 = vmatprep.subr.bf16.mxu0 0
    %2624 = vmatpush1.bf16.msra.mxu0 0
    %2625 = vmatprep.subr.bf16.mxu0 0
    %2626 = vmatpush1.bf16.msra.mxu0 0
    %2627 = vmatprep.subr.bf16.mxu0 0
    %2628 = vmatpush1.bf16.msra.mxu0 0
    %2629 = vmatprep.subr.bf16.mxu0 0
    %2630 = vmatpush1.bf16.msra.mxu0 0
    %2631 = vmatprep.subr.bf16.mxu0 0
    %2632 = vmatpush1.bf16.msra.mxu0 0
    %2633 = vmatprep.mubr.bf16.mxu0 0
    %2634 = vmatmul.mubr.bf16.gmra.mrb[0].mxu0 %v2596
    %v2635 = vpop.f32.mrb[0].mxu0
    %v2636 = vadd.f32 0.0, %v2635
    %v2637 = vpop.f32.mrb[0].mxu0
    %v2638 = vpop.f32.mrb[0].mxu0
    %v2639 = vpop.f32.mrb[0].mxu0
    %2640 = vdwg.mxu0
    %2641 = vrot.lane.b32.xlu0 %v289, 48
    %v2642 = vpop.permute.xlu0 %2641
    %v2644 = vsel %vm36, %v2398, 0
    %v2647 = vsel %vm557, %v2642, 0
    %2649 = vmatprep.subr.bf16.mxu0 0
    %2650 = vmatpush1.bf16.msra.mxu0 %v2647
    %2651 = vmatprep.subr.bf16.mxu0 0
    %2652 = vmatpush1.bf16.msra.mxu0 0
    %2653 = vmatprep.subr.bf16.mxu0 0
    %2654 = vmatpush1.bf16.msra.mxu0 0
    %2655 = vmatprep.subr.bf16.mxu0 0
    %2656 = vmatpush1.bf16.msra.mxu0 0
    %2657 = vmatprep.subr.bf16.mxu0 0
    %2658 = vmatpush1.bf16.msra.mxu0 0
    %2659 = vmatprep.subr.bf16.mxu0 0
    %2660 = vmatpush1.bf16.msra.mxu0 0
    %2661 = vmatprep.subr.bf16.mxu0 0
    %2662 = vmatpush1.bf16.msra.mxu0 0
    %2663 = vmatprep.subr.bf16.mxu0 0
    %2664 = vmatpush1.bf16.msra.mxu0 0
    %2665 = vmatprep.subr.bf16.mxu0 0
    %2666 = vmatpush1.bf16.msra.mxu0 0
    %2667 = vmatprep.subr.bf16.mxu0 0
    %2668 = vmatpush1.bf16.msra.mxu0 0
    %2669 = vmatprep.subr.bf16.mxu0 0
    %2670 = vmatpush1.bf16.msra.mxu0 0
    %2671 = vmatprep.subr.bf16.mxu0 0
    %2672 = vmatpush1.bf16.msra.mxu0 0
    %2673 = vmatprep.subr.bf16.mxu0 0
    %2674 = vmatpush1.bf16.msra.mxu0 0
    %2675 = vmatprep.subr.bf16.mxu0 0
    %2676 = vmatpush1.bf16.msra.mxu0 0
    %2677 = vmatprep.subr.bf16.mxu0 0
    %2678 = vmatpush1.bf16.msra.mxu0 0
    %2679 = vmatprep.subr.bf16.mxu0 0
    %2680 = vmatpush1.bf16.msra.mxu0 0
    %2681 = vmatprep.mubr.bf16.mxu0 0
    %2682 = vmatmul.mubr.bf16.gmra.mrb[0].mxu0 %v2644
    %v2683 = vpop.f32.mrb[0].mxu0
    %v2684 = vadd.f32 0.0, %v2683
    %v2685 = vpop.f32.mrb[0].mxu0
    %v2686 = vpop.f32.mrb[0].mxu0
    %v2687 = vpop.f32.mrb[0].mxu0
    %2688 = vdwg.mxu0
    %2689 = vrot.lane.b32.xlu0 %v340, 48
    %v2690 = vpop.permute.xlu0 %2689
    %v2692 = vsel %vm36, %v2399, 0
    %v2695 = vsel %vm557, %v2690, 0
    %2697 = vmatprep.subr.bf16.mxu0 0
    %2698 = vmatpush1.bf16.msra.mxu0 %v2695
    %2699 = vmatprep.subr.bf16.mxu0 0
    %2700 = vmatpush1.bf16.msra.mxu0 0
    %2701 = vmatprep.subr.bf16.mxu0 0
    %2702 = vmatpush1.bf16.msra.mxu0 0
    %2703 = vmatprep.subr.bf16.mxu0 0
    %2704 = vmatpush1.bf16.msra.mxu0 0
    %2705 = vmatprep.subr.bf16.mxu0 0
    %2706 = vmatpush1.bf16.msra.mxu0 0
    %2707 = vmatprep.subr.bf16.mxu0 0
    %2708 = vmatpush1.bf16.msra.mxu0 0
    %2709 = vmatprep.subr.bf16.mxu0 0
    %2710 = vmatpush1.bf16.msra.mxu0 0
    %2711 = vmatprep.subr.bf16.mxu0 0
    %2712 = vmatpush1.bf16.msra.mxu0 0
    %2713 = vmatprep.subr.bf16.mxu0 0
    %2714 = vmatpush1.bf16.msra.mxu0 0
    %2715 = vmatprep.subr.bf16.mxu0 0
    %2716 = vmatpush1.bf16.msra.mxu0 0
    %2717 = vmatprep.subr.bf16.mxu0 0
    %2718 = vmatpush1.bf16.msra.mxu0 0
    %2719 = vmatprep.subr.bf16.mxu0 0
    %2720 = vmatpush1.bf16.msra.mxu0 0
    %2721 = vmatprep.subr.bf16.mxu0 0
    %2722 = vmatpush1.bf16.msra.mxu0 0
    %2723 = vmatprep.subr.bf16.mxu0 0
    %2724 = vmatpush1.bf16.msra.mxu0 0
    %2725 = vmatprep.subr.bf16.mxu0 0
    %2726 = vmatpush1.bf16.msra.mxu0 0
    %2727 = vmatprep.subr.bf16.mxu0 0
    %2728 = vmatpush1.bf16.msra.mxu0 0
    %2729 = vmatprep.mubr.bf16.mxu0 0
    %2730 = vmatmul.mubr.bf16.gmra.mrb[0].mxu0 %v2692
    %v2731 = vpop.f32.mrb[0].mxu0
    %v2732 = vadd.f32 0.0, %v2731
    %v2733 = vpop.f32.mrb[0].mxu0
    %v2734 = vpop.f32.mrb[0].mxu0
    %v2735 = vpop.f32.mrb[0].mxu0
    %2736 = vdwg.mxu0
    %2737 = vrot.lane.b32.xlu0 %v391, 48
    %v2738 = vpop.permute.xlu0 %2737
    %v2740 = vsel %vm36, %v2400, 0
    %v2743 = vsel %vm557, %v2738, 0
    %2745 = vmatprep.subr.bf16.mxu0 0
    %2746 = vmatpush1.bf16.msra.mxu0 %v2743
    %2747 = vmatprep.subr.bf16.mxu0 0
    %2748 = vmatpush1.bf16.msra.mxu0 0
    %2749 = vmatprep.subr.bf16.mxu0 0
    %2750 = vmatpush1.bf16.msra.mxu0 0
    %2751 = vmatprep.subr.bf16.mxu0 0
    %2752 = vmatpush1.bf16.msra.mxu0 0
    %2753 = vmatprep.subr.bf16.mxu0 0
    %2754 = vmatpush1.bf16.msra.mxu0 0
    %2755 = vmatprep.subr.bf16.mxu0 0
    %2756 = vmatpush1.bf16.msra.mxu0 0
    %2757 = vmatprep.subr.bf16.mxu0 0
    %2758 = vmatpush1.bf16.msra.mxu0 0
    %2759 = vmatprep.subr.bf16.mxu0 0
    %2760 = vmatpush1.bf16.msra.mxu0 0
    %2761 = vmatprep.subr.bf16.mxu0 0
    %2762 = vmatpush1.bf16.msra.mxu0 0
    %2763 = vmatprep.subr.bf16.mxu0 0
    %2764 = vmatpush1.bf16.msra.mxu0 0
    %2765 = vmatprep.subr.bf16.mxu0 0
    %2766 = vmatpush1.bf16.msra.mxu0 0
    %2767 = vmatprep.subr.bf16.mxu0 0
    %2768 = vmatpush1.bf16.msra.mxu0 0
    %2769 = vmatprep.subr.bf16.mxu0 0
    %2770 = vmatpush1.bf16.msra.mxu0 0
    %2771 = vmatprep.subr.bf16.mxu0 0
    %2772 = vmatpush1.bf16.msra.mxu0 0
    %2773 = vmatprep.subr.bf16.mxu0 0
    %2774 = vmatpush1.bf16.msra.mxu0 0
    %2775 = vmatprep.subr.bf16.mxu0 0
    %2776 = vmatpush1.bf16.msra.mxu0 0
    %2777 = vmatprep.mubr.bf16.mxu0 0
    %2778 = vmatmul.mubr.bf16.gmra.mrb[0].mxu0 %v2740
    %v2779 = vpop.f32.mrb[0].mxu0
    %v2780 = vadd.f32 0.0, %v2779
    %v2781 = vpop.f32.mrb[0].mxu0
    %v2782 = vpop.f32.mrb[0].mxu0
    %v2783 = vpop.f32.mrb[0].mxu0
    %2784 = vdwg.mxu0
    %2785 = vrot.lane.b32.xlu0 %v33, 104
    %v2786 = vpop.permute.xlu0 %2785
    %2787 = vrot.lane.b32.xlu0 %v33, 72
    %v2788 = vpop.permute.xlu0 %2787
    %v2790 = vsel %vm36, %v2786, 0
    %v2793 = vsel %vm36, %v2788, 0
    %2795 = vmatprep.subr.bf16.mxu0 0
    %2796 = vmatpush1.bf16.xpose.msra.mxu0 %v2793
    %2797 = vmatprep.subr.bf16.mxu0 0
    %2798 = vmatpush1.bf16.xpose.msra.mxu0 0
    %2799 = vmatprep.subr.bf16.mxu0 0
    %2800 = vmatpush1.bf16.xpose.msra.mxu0 0
    %2801 = vmatprep.subr.bf16.mxu0 0
    %2802 = vmatpush1.bf16.xpose.msra.mxu0 0
    %2803 = vmatprep.subr.bf16.mxu0 0
    %2804 = vmatpush1.bf16.xpose.msra.mxu0 0
    %2805 = vmatprep.subr.bf16.mxu0 0
    %2806 = vmatpush1.bf16.xpose.msra.mxu0 0
    %2807 = vmatprep.subr.bf16.mxu0 0
    %2808 = vmatpush1.bf16.xpose.msra.mxu0 0
    %2809 = vmatprep.subr.bf16.mxu0 0
    %2810 = vmatpush1.bf16.xpose.msra.mxu0 0
    %2811 = vmatprep.subr.bf16.mxu0 0
    %2812 = vmatpush1.bf16.xpose.msra.mxu0 0
    %2813 = vmatprep.subr.bf16.mxu0 0
    %2814 = vmatpush1.bf16.xpose.msra.mxu0 0
    %2815 = vmatprep.subr.bf16.mxu0 0
    %2816 = vmatpush1.bf16.xpose.msra.mxu0 0
    %2817 = vmatprep.subr.bf16.mxu0 0
    %2818 = vmatpush1.bf16.xpose.msra.mxu0 0
    %2819 = vmatprep.subr.bf16.mxu0 0
    %2820 = vmatpush1.bf16.xpose.msra.mxu0 0
    %2821 = vmatprep.subr.bf16.mxu0 0
    %2822 = vmatpush1.bf16.xpose.msra.mxu0 0
    %2823 = vmatprep.subr.bf16.mxu0 0
    %2824 = vmatpush1.bf16.xpose.msra.mxu0 0
    %2825 = vmatprep.subr.bf16.mxu0 0
    %2826 = vmatpush1.bf16.xpose.msra.mxu0 0
    %2827 = vmatprep.mubr.bf16.mxu0 0
    %2828 = vmatmul.mubr.bf16.gmra.mrb[0].mxu0 %v2790
    %v2829 = vpop.f32.mrb[0].mxu0
    %v2830 = vadd.f32 0.0, %v2829
    %v2831 = vpop.f32.mrb[0].mxu0
    %v2832 = vpop.f32.mrb[0].mxu0
    %v2833 = vpop.f32.mrb[0].mxu0
    %2834 = vdwg.mxu0
    %2835 = vrot.lane.b32.xlu0 %v85, 104
    %v2836 = vpop.permute.xlu0 %2835
    %2837 = vrot.lane.b32.xlu0 %v85, 72
    %v2838 = vpop.permute.xlu0 %2837
    %v2840 = vsel %vm36, %v2836, 0
    %v2843 = vsel %vm36, %v2838, 0
    %2845 = vmatprep.subr.bf16.mxu0 0
    %2846 = vmatpush1.bf16.xpose.msra.mxu0 %v2843
    %2847 = vmatprep.subr.bf16.mxu0 0
    %2848 = vmatpush1.bf16.xpose.msra.mxu0 0
    %2849 = vmatprep.subr.bf16.mxu0 0
    %2850 = vmatpush1.bf16.xpose.msra.mxu0 0
    %2851 = vmatprep.subr.bf16.mxu0 0
    %2852 = vmatpush1.bf16.xpose.msra.mxu0 0
    %2853 = vmatprep.subr.bf16.mxu0 0
    %2854 = vmatpush1.bf16.xpose.msra.mxu0 0
    %2855 = vmatprep.subr.bf16.mxu0 0
    %2856 = vmatpush1.bf16.xpose.msra.mxu0 0
    %2857 = vmatprep.subr.bf16.mxu0 0
    %2858 = vmatpush1.bf16.xpose.msra.mxu0 0
    %2859 = vmatprep.subr.bf16.mxu0 0
    %2860 = vmatpush1.bf16.xpose.msra.mxu0 0
    %2861 = vmatprep.subr.bf16.mxu0 0
    %2862 = vmatpush1.bf16.xpose.msra.mxu0 0
    %2863 = vmatprep.subr.bf16.mxu0 0
    %2864 = vmatpush1.bf16.xpose.msra.mxu0 0
    %2865 = vmatprep.subr.bf16.mxu0 0
    %2866 = vmatpush1.bf16.xpose.msra.mxu0 0
    %2867 = vmatprep.subr.bf16.mxu0 0
    %2868 = vmatpush1.bf16.xpose.msra.mxu0 0
    %2869 = vmatprep.subr.bf16.mxu0 0
    %2870 = vmatpush1.bf16.xpose.msra.mxu0 0
    %2871 = vmatprep.subr.bf16.mxu0 0
    %2872 = vmatpush1.bf16.xpose.msra.mxu0 0
    %2873 = vmatprep.subr.bf16.mxu0 0
    %2874 = vmatpush1.bf16.xpose.msra.mxu0 0
    %2875 = vmatprep.subr.bf16.mxu0 0
    %2876 = vmatpush1.bf16.xpose.msra.mxu0 0
    %2877 = vmatprep.mubr.bf16.mxu0 0
    %2878 = vmatmul.mubr.bf16.gmra.mrb[0].mxu0 %v2840
    %v2879 = vpop.f32.mrb[0].mxu0
    %v2880 = vadd.f32 0.0, %v2879
    %v2881 = vpop.f32.mrb[0].mxu0
    %v2882 = vpop.f32.mrb[0].mxu0
    %v2883 = vpop.f32.mrb[0].mxu0
    %2884 = vdwg.mxu0
    %2885 = vrot.lane.b32.xlu0 %v136, 104
    %v2886 = vpop.permute.xlu0 %2885
    %2887 = vrot.lane.b32.xlu0 %v136, 72
    %v2888 = vpop.permute.xlu0 %2887
    %v2890 = vsel %vm36, %v2886, 0
    %v2893 = vsel %vm36, %v2888, 0
    %2895 = vmatprep.subr.bf16.mxu0 0
    %2896 = vmatpush1.bf16.xpose.msra.mxu0 %v2893
    %2897 = vmatprep.subr.bf16.mxu0 0
    %2898 = vmatpush1.bf16.xpose.msra.mxu0 0
    %2899 = vmatprep.subr.bf16.mxu0 0
    %2900 = vmatpush1.bf16.xpose.msra.mxu0 0
    %2901 = vmatprep.subr.bf16.mxu0 0
    %2902 = vmatpush1.bf16.xpose.msra.mxu0 0
    %2903 = vmatprep.subr.bf16.mxu0 0
    %2904 = vmatpush1.bf16.xpose.msra.mxu0 0
    %2905 = vmatprep.subr.bf16.mxu0 0
    %2906 = vmatpush1.bf16.xpose.msra.mxu0 0
    %2907 = vmatprep.subr.bf16.mxu0 0
    %2908 = vmatpush1.bf16.xpose.msra.mxu0 0
    %2909 = vmatprep.subr.bf16.mxu0 0
    %2910 = vmatpush1.bf16.xpose.msra.mxu0 0
    %2911 = vmatprep.subr.bf16.mxu0 0
    %2912 = vmatpush1.bf16.xpose.msra.mxu0 0
    %2913 = vmatprep.subr.bf16.mxu0 0
    %2914 = vmatpush1.bf16.xpose.msra.mxu0 0
    %2915 = vmatprep.subr.bf16.mxu0 0
    %2916 = vmatpush1.bf16.xpose.msra.mxu0 0
    %2917 = vmatprep.subr.bf16.mxu0 0
    %2918 = vmatpush1.bf16.xpose.msra.mxu0 0
    %2919 = vmatprep.subr.bf16.mxu0 0
    %2920 = vmatpush1.bf16.xpose.msra.mxu0 0
    %2921 = vmatprep.subr.bf16.mxu0 0
    %2922 = vmatpush1.bf16.xpose.msra.mxu0 0
    %2923 = vmatprep.subr.bf16.mxu0 0
    %2924 = vmatpush1.bf16.xpose.msra.mxu0 0
    %2925 = vmatprep.subr.bf16.mxu0 0
    %2926 = vmatpush1.bf16.xpose.msra.mxu0 0
    %2927 = vmatprep.mubr.bf16.mxu0 0
    %2928 = vmatmul.mubr.bf16.gmra.mrb[0].mxu0 %v2890
    %v2929 = vpop.f32.mrb[0].mxu0
    %v2930 = vadd.f32 0.0, %v2929
    %v2931 = vpop.f32.mrb[0].mxu0
    %v2932 = vpop.f32.mrb[0].mxu0
    %v2933 = vpop.f32.mrb[0].mxu0
    %2934 = vdwg.mxu0
    %2935 = vrot.lane.b32.xlu0 %v187, 104
    %v2936 = vpop.permute.xlu0 %2935
    %2937 = vrot.lane.b32.xlu0 %v187, 72
    %v2938 = vpop.permute.xlu0 %2937
    %v2940 = vsel %vm36, %v2936, 0
    %v2943 = vsel %vm36, %v2938, 0
    %2945 = vmatprep.subr.bf16.mxu0 0
    %2946 = vmatpush1.bf16.xpose.msra.mxu0 %v2943
    %2947 = vmatprep.subr.bf16.mxu0 0
    %2948 = vmatpush1.bf16.xpose.msra.mxu0 0
    %2949 = vmatprep.subr.bf16.mxu0 0
    %2950 = vmatpush1.bf16.xpose.msra.mxu0 0
    %2951 = vmatprep.subr.bf16.mxu0 0
    %2952 = vmatpush1.bf16.xpose.msra.mxu0 0
    %2953 = vmatprep.subr.bf16.mxu0 0
    %2954 = vmatpush1.bf16.xpose.msra.mxu0 0
    %2955 = vmatprep.subr.bf16.mxu0 0
    %2956 = vmatpush1.bf16.xpose.msra.mxu0 0
    %2957 = vmatprep.subr.bf16.mxu0 0
    %2958 = vmatpush1.bf16.xpose.msra.mxu0 0
    %2959 = vmatprep.subr.bf16.mxu0 0
    %2960 = vmatpush1.bf16.xpose.msra.mxu0 0
    %2961 = vmatprep.subr.bf16.mxu0 0
    %2962 = vmatpush1.bf16.xpose.msra.mxu0 0
    %2963 = vmatprep.subr.bf16.mxu0 0
    %2964 = vmatpush1.bf16.xpose.msra.mxu0 0
    %2965 = vmatprep.subr.bf16.mxu0 0
    %2966 = vmatpush1.bf16.xpose.msra.mxu0 0
    %2967 = vmatprep.subr.bf16.mxu0 0
    %2968 = vmatpush1.bf16.xpose.msra.mxu0 0
    %2969 = vmatprep.subr.bf16.mxu0 0
    %2970 = vmatpush1.bf16.xpose.msra.mxu0 0
    %2971 = vmatprep.subr.bf16.mxu0 0
    %2972 = vmatpush1.bf16.xpose.msra.mxu0 0
    %2973 = vmatprep.subr.bf16.mxu0 0
    %2974 = vmatpush1.bf16.xpose.msra.mxu0 0
    %2975 = vmatprep.subr.bf16.mxu0 0
    %2976 = vmatpush1.bf16.xpose.msra.mxu0 0
    %2977 = vmatprep.mubr.bf16.mxu0 0
    %2978 = vmatmul.mubr.bf16.gmra.mrb[0].mxu0 %v2940
    %v2979 = vpop.f32.mrb[0].mxu0
    %v2980 = vadd.f32 0.0, %v2979
    %v2981 = vpop.f32.mrb[0].mxu0
    %v2982 = vpop.f32.mrb[0].mxu0
    %v2983 = vpop.f32.mrb[0].mxu0
    %2984 = vdwg.mxu0
    %2985 = vrot.lane.b32.xlu0 %v238, 104
    %v2986 = vpop.permute.xlu0 %2985
    %2987 = vrot.lane.b32.xlu0 %v238, 72
    %v2988 = vpop.permute.xlu0 %2987
    %v2990 = vsel %vm36, %v2986, 0
    %v2993 = vsel %vm36, %v2988, 0
    %2995 = vmatprep.subr.bf16.mxu0 0
    %2996 = vmatpush1.bf16.xpose.msra.mxu0 %v2993
    %2997 = vmatprep.subr.bf16.mxu0 0
    %2998 = vmatpush1.bf16.xpose.msra.mxu0 0
    %2999 = vmatprep.subr.bf16.mxu0 0
    %3000 = vmatpush1.bf16.xpose.msra.mxu0 0
    %3001 = vmatprep.subr.bf16.mxu0 0
    %3002 = vmatpush1.bf16.xpose.msra.mxu0 0
    %3003 = vmatprep.subr.bf16.mxu0 0
    %3004 = vmatpush1.bf16.xpose.msra.mxu0 0
    %3005 = vmatprep.subr.bf16.mxu0 0
    %3006 = vmatpush1.bf16.xpose.msra.mxu0 0
    %3007 = vmatprep.subr.bf16.mxu0 0
    %3008 = vmatpush1.bf16.xpose.msra.mxu0 0
    %3009 = vmatprep.subr.bf16.mxu0 0
    %3010 = vmatpush1.bf16.xpose.msra.mxu0 0
    %3011 = vmatprep.subr.bf16.mxu0 0
    %3012 = vmatpush1.bf16.xpose.msra.mxu0 0
    %3013 = vmatprep.subr.bf16.mxu0 0
    %3014 = vmatpush1.bf16.xpose.msra.mxu0 0
    %3015 = vmatprep.subr.bf16.mxu0 0
    %3016 = vmatpush1.bf16.xpose.msra.mxu0 0
    %3017 = vmatprep.subr.bf16.mxu0 0
    %3018 = vmatpush1.bf16.xpose.msra.mxu0 0
    %3019 = vmatprep.subr.bf16.mxu0 0
    %3020 = vmatpush1.bf16.xpose.msra.mxu0 0
    %3021 = vmatprep.subr.bf16.mxu0 0
    %3022 = vmatpush1.bf16.xpose.msra.mxu0 0
    %3023 = vmatprep.subr.bf16.mxu0 0
    %3024 = vmatpush1.bf16.xpose.msra.mxu0 0
    %3025 = vmatprep.subr.bf16.mxu0 0
    %3026 = vmatpush1.bf16.xpose.msra.mxu0 0
    %3027 = vmatprep.mubr.bf16.mxu0 0
    %3028 = vmatmul.mubr.bf16.gmra.mrb[0].mxu0 %v2990
    %v3029 = vpop.f32.mrb[0].mxu0
    %v3030 = vadd.f32 0.0, %v3029
    %v3031 = vpop.f32.mrb[0].mxu0
    %v3032 = vpop.f32.mrb[0].mxu0
    %v3033 = vpop.f32.mrb[0].mxu0
    %3034 = vdwg.mxu0
    %3035 = vrot.lane.b32.xlu0 %v289, 104
    %v3036 = vpop.permute.xlu0 %3035
    %3037 = vrot.lane.b32.xlu0 %v289, 72
    %v3038 = vpop.permute.xlu0 %3037
    %v3040 = vsel %vm36, %v3036, 0
    %v3043 = vsel %vm36, %v3038, 0
    %3045 = vmatprep.subr.bf16.mxu0 0
    %3046 = vmatpush1.bf16.xpose.msra.mxu0 %v3043
    %3047 = vmatprep.subr.bf16.mxu0 0
    %3048 = vmatpush1.bf16.xpose.msra.mxu0 0
    %3049 = vmatprep.subr.bf16.mxu0 0
    %3050 = vmatpush1.bf16.xpose.msra.mxu0 0
    %3051 = vmatprep.subr.bf16.mxu0 0
    %3052 = vmatpush1.bf16.xpose.msra.mxu0 0
    %3053 = vmatprep.subr.bf16.mxu0 0
    %3054 = vmatpush1.bf16.xpose.msra.mxu0 0
    %3055 = vmatprep.subr.bf16.mxu0 0
    %3056 = vmatpush1.bf16.xpose.msra.mxu0 0
    %3057 = vmatprep.subr.bf16.mxu0 0
    %3058 = vmatpush1.bf16.xpose.msra.mxu0 0
    %3059 = vmatprep.subr.bf16.mxu0 0
    %3060 = vmatpush1.bf16.xpose.msra.mxu0 0
    %3061 = vmatprep.subr.bf16.mxu0 0
    %3062 = vmatpush1.bf16.xpose.msra.mxu0 0
    %3063 = vmatprep.subr.bf16.mxu0 0
    %3064 = vmatpush1.bf16.xpose.msra.mxu0 0
    %3065 = vmatprep.subr.bf16.mxu0 0
    %3066 = vmatpush1.bf16.xpose.msra.mxu0 0
    %3067 = vmatprep.subr.bf16.mxu0 0
    %3068 = vmatpush1.bf16.xpose.msra.mxu0 0
    %3069 = vmatprep.subr.bf16.mxu0 0
    %3070 = vmatpush1.bf16.xpose.msra.mxu0 0
    %3071 = vmatprep.subr.bf16.mxu0 0
    %3072 = vmatpush1.bf16.xpose.msra.mxu0 0
    %3073 = vmatprep.subr.bf16.mxu0 0
    %3074 = vmatpush1.bf16.xpose.msra.mxu0 0
    %3075 = vmatprep.subr.bf16.mxu0 0
    %3076 = vmatpush1.bf16.xpose.msra.mxu0 0
    %3077 = vmatprep.mubr.bf16.mxu0 0
    %3078 = vmatmul.mubr.bf16.gmra.mrb[0].mxu0 %v3040
    %v3079 = vpop.f32.mrb[0].mxu0
    %v3080 = vadd.f32 0.0, %v3079
    %v3081 = vpop.f32.mrb[0].mxu0
    %v3082 = vpop.f32.mrb[0].mxu0
    %v3083 = vpop.f32.mrb[0].mxu0
    %3084 = vdwg.mxu0
    %3085 = vrot.lane.b32.xlu0 %v340, 104
    %v3086 = vpop.permute.xlu0 %3085
    %3087 = vrot.lane.b32.xlu0 %v340, 72
    %v3088 = vpop.permute.xlu0 %3087
    %v3090 = vsel %vm36, %v3086, 0
    %v3093 = vsel %vm36, %v3088, 0
    %3095 = vmatprep.subr.bf16.mxu0 0
    %3096 = vmatpush1.bf16.xpose.msra.mxu0 %v3093
    %3097 = vmatprep.subr.bf16.mxu0 0
    %3098 = vmatpush1.bf16.xpose.msra.mxu0 0
    %3099 = vmatprep.subr.bf16.mxu0 0
    %3100 = vmatpush1.bf16.xpose.msra.mxu0 0
    %3101 = vmatprep.subr.bf16.mxu0 0
    %3102 = vmatpush1.bf16.xpose.msra.mxu0 0
    %3103 = vmatprep.subr.bf16.mxu0 0
    %3104 = vmatpush1.bf16.xpose.msra.mxu0 0
    %3105 = vmatprep.subr.bf16.mxu0 0
    %3106 = vmatpush1.bf16.xpose.msra.mxu0 0
    %3107 = vmatprep.subr.bf16.mxu0 0
    %3108 = vmatpush1.bf16.xpose.msra.mxu0 0
    %3109 = vmatprep.subr.bf16.mxu0 0
    %3110 = vmatpush1.bf16.xpose.msra.mxu0 0
    %3111 = vmatprep.subr.bf16.mxu0 0
    %3112 = vmatpush1.bf16.xpose.msra.mxu0 0
    %3113 = vmatprep.subr.bf16.mxu0 0
    %3114 = vmatpush1.bf16.xpose.msra.mxu0 0
    %3115 = vmatprep.subr.bf16.mxu0 0
    %3116 = vmatpush1.bf16.xpose.msra.mxu0 0
    %3117 = vmatprep.subr.bf16.mxu0 0
    %3118 = vmatpush1.bf16.xpose.msra.mxu0 0
    %3119 = vmatprep.subr.bf16.mxu0 0
    %3120 = vmatpush1.bf16.xpose.msra.mxu0 0
    %3121 = vmatprep.subr.bf16.mxu0 0
    %3122 = vmatpush1.bf16.xpose.msra.mxu0 0
    %3123 = vmatprep.subr.bf16.mxu0 0
    %3124 = vmatpush1.bf16.xpose.msra.mxu0 0
    %3125 = vmatprep.subr.bf16.mxu0 0
    %3126 = vmatpush1.bf16.xpose.msra.mxu0 0
    %3127 = vmatprep.mubr.bf16.mxu0 0
    %3128 = vmatmul.mubr.bf16.gmra.mrb[0].mxu0 %v3090
    %v3129 = vpop.f32.mrb[0].mxu0
    %v3130 = vadd.f32 0.0, %v3129
    %v3131 = vpop.f32.mrb[0].mxu0
    %v3132 = vpop.f32.mrb[0].mxu0
    %v3133 = vpop.f32.mrb[0].mxu0
    %3134 = vdwg.mxu0
    %3135 = vrot.lane.b32.xlu0 %v391, 104
    %v3136 = vpop.permute.xlu0 %3135
    %3137 = vrot.lane.b32.xlu0 %v391, 72
    %v3138 = vpop.permute.xlu0 %3137
    %v3140 = vsel %vm36, %v3136, 0
    %v3143 = vsel %vm36, %v3138, 0
    %3145 = vmatprep.subr.bf16.mxu0 0
    %3146 = vmatpush1.bf16.xpose.msra.mxu0 %v3143
    %3147 = vmatprep.subr.bf16.mxu0 0
    %3148 = vmatpush1.bf16.xpose.msra.mxu0 0
    %3149 = vmatprep.subr.bf16.mxu0 0
    %3150 = vmatpush1.bf16.xpose.msra.mxu0 0
    %3151 = vmatprep.subr.bf16.mxu0 0
    %3152 = vmatpush1.bf16.xpose.msra.mxu0 0
    %3153 = vmatprep.subr.bf16.mxu0 0
    %3154 = vmatpush1.bf16.xpose.msra.mxu0 0
    %3155 = vmatprep.subr.bf16.mxu0 0
    %3156 = vmatpush1.bf16.xpose.msra.mxu0 0
    %3157 = vmatprep.subr.bf16.mxu0 0
    %3158 = vmatpush1.bf16.xpose.msra.mxu0 0
    %3159 = vmatprep.subr.bf16.mxu0 0
    %3160 = vmatpush1.bf16.xpose.msra.mxu0 0
    %3161 = vmatprep.subr.bf16.mxu0 0
    %3162 = vmatpush1.bf16.xpose.msra.mxu0 0
    %3163 = vmatprep.subr.bf16.mxu0 0
    %3164 = vmatpush1.bf16.xpose.msra.mxu0 0
    %3165 = vmatprep.subr.bf16.mxu0 0
    %3166 = vmatpush1.bf16.xpose.msra.mxu0 0
    %3167 = vmatprep.subr.bf16.mxu0 0
    %3168 = vmatpush1.bf16.xpose.msra.mxu0 0
    %3169 = vmatprep.subr.bf16.mxu0 0
    %3170 = vmatpush1.bf16.xpose.msra.mxu0 0
    %3171 = vmatprep.subr.bf16.mxu0 0
    %3172 = vmatpush1.bf16.xpose.msra.mxu0 0
    %3173 = vmatprep.subr.bf16.mxu0 0
    %3174 = vmatpush1.bf16.xpose.msra.mxu0 0
    %3175 = vmatprep.subr.bf16.mxu0 0
    %3176 = vmatpush1.bf16.xpose.msra.mxu0 0
    %3177 = vmatprep.mubr.bf16.mxu0 0
    %3178 = vmatmul.mubr.bf16.gmra.mrb[0].mxu0 %v3140
    %v3179 = vpop.f32.mrb[0].mxu0
    %v3180 = vadd.f32 0.0, %v3179
    %v3181 = vpop.f32.mrb[0].mxu0
    %v3182 = vpop.f32.mrb[0].mxu0
    %v3183 = vpop.f32.mrb[0].mxu0
    %3184 = vdwg.mxu0
    %v3185 = vmul.f32 %v2830, 0.35355338
    %v3186 = vmul.f32 %v2880, 0.35355338
    %v3187 = vmul.f32 %v2930, 0.35355338
    %v3188 = vmul.f32 %v2980, 0.35355338
    %v3189 = vmul.f32 %v3030, 0.35355338
    %v3190 = vmul.f32 %v3080, 0.35355338
    %v3191 = vmul.f32 %v3130, 0.35355338
    %v3192 = vmul.f32 %v3180, 0.35355338
    %3193 = vrot.lane.b32.xlu0 %v23, 104
    %v3194 = vpop.permute.xlu0 %3193
    %3195 = vrot.lane.b32.xlu0 %v24, 104
    %v3196 = vpop.permute.xlu0 %3195
    %3197 = vrot.lane.b32.xlu0 %v25, 104
    %v3198 = vpop.permute.xlu0 %3197
    %3199 = vrot.lane.b32.xlu0 %v26, 104
    %v3200 = vpop.permute.xlu0 %3199
    %3201 = vrot.lane.b32.xlu0 %v27, 104
    %v3202 = vpop.permute.xlu0 %3201
    %3203 = vrot.lane.b32.xlu0 %v28, 104
    %v3204 = vpop.permute.xlu0 %3203
    %3205 = vrot.lane.b32.xlu0 %v29, 104
    %v3206 = vpop.permute.xlu0 %3205
    %3207 = vrot.lane.b32.xlu0 %v30, 104
    %v3208 = vpop.permute.xlu0 %3207
    %v3217 = vadd.f32 %v3185, %v3194
    %v3218 = vadd.f32 %v3186, %v3196
    %v3219 = vadd.f32 %v3187, %v3198
    %v3220 = vadd.f32 %v3188, %v3200
    %v3221 = vadd.f32 %v3189, %v3202
    %v3222 = vadd.f32 %v3190, %v3204
    %v3223 = vadd.f32 %v3191, %v3206
    %v3224 = vadd.f32 %v3192, %v3208
    %v3225 = vsel %vm36, %v3217, -inf
    %3226 = vmax.xlane.f32.xlu0 %v3225
    %v3227 = vpop.xlane.xlu0 %3226
    %v3228 = vsel %vm36, %v3218, -inf
    %3229 = vmax.xlane.f32.xlu0 %v3228
    %v3230 = vpop.xlane.xlu0 %3229
    %v3231 = vsel %vm36, %v3219, -inf
    %3232 = vmax.xlane.f32.xlu0 %v3231
    %v3233 = vpop.xlane.xlu0 %3232
    %v3234 = vsel %vm36, %v3220, -inf
    %3235 = vmax.xlane.f32.xlu0 %v3234
    %v3236 = vpop.xlane.xlu0 %3235
    %v3237 = vsel %vm36, %v3221, -inf
    %3238 = vmax.xlane.f32.xlu0 %v3237
    %v3239 = vpop.xlane.xlu0 %3238
    %v3240 = vsel %vm36, %v3222, -inf
    %3241 = vmax.xlane.f32.xlu0 %v3240
    %v3242 = vpop.xlane.xlu0 %3241
    %v3243 = vsel %vm36, %v3223, -inf
    %3244 = vmax.xlane.f32.xlu0 %v3243
    %v3245 = vpop.xlane.xlu0 %3244
    %v3246 = vsel %vm36, %v3224, -inf
    %3247 = vmax.xlane.f32.xlu0 %v3246
    %v3248 = vpop.xlane.xlu0 %3247
    %v3249 = vsub.f32 %v3217, %v3227
    %v3250 = vsub.f32 %v3218, %v3230
    %v3251 = vsub.f32 %v3219, %v3233
    %v3252 = vsub.f32 %v3220, %v3236
    %v3253 = vsub.f32 %v3221, %v3239
    %v3254 = vsub.f32 %v3222, %v3242
    %v3255 = vsub.f32 %v3223, %v3245
    %v3256 = vsub.f32 %v3224, %v3248
    %v3257 = vmul.f32 %v3249, 1.442695
    %v3258 = vpow.pop %v3257
    %v3259 = vmul.f32 %v3250, 1.442695
    %v3260 = vpow.pop %v3259
    %v3261 = vmul.f32 %v3251, 1.442695
    %v3262 = vpow.pop %v3261
    %v3263 = vmul.f32 %v3252, 1.442695
    %v3264 = vpow.pop %v3263
    %v3265 = vmul.f32 %v3253, 1.442695
    %v3266 = vpow.pop %v3265
    %v3267 = vmul.f32 %v3254, 1.442695
    %v3268 = vpow.pop %v3267
    %v3269 = vmul.f32 %v3255, 1.442695
    %v3270 = vpow.pop %v3269
    %v3271 = vmul.f32 %v3256, 1.442695
    %v3272 = vpow.pop %v3271
    %v3273 = vsel %vm36, %v3258, 0.0
    %3274 = vadd.xlane.f32.xlu0 %v3273
    %v3275 = vpop.xlane.xlu0 %3274
    %v3276 = vsel %vm36, %v3260, 0.0
    %3277 = vadd.xlane.f32.xlu0 %v3276
    %v3278 = vpop.xlane.xlu0 %3277
    %v3279 = vsel %vm36, %v3262, 0.0
    %3280 = vadd.xlane.f32.xlu0 %v3279
    %v3281 = vpop.xlane.xlu0 %3280
    %v3282 = vsel %vm36, %v3264, 0.0
    %3283 = vadd.xlane.f32.xlu0 %v3282
    %v3284 = vpop.xlane.xlu0 %3283
    %v3285 = vsel %vm36, %v3266, 0.0
    %3286 = vadd.xlane.f32.xlu0 %v3285
    %v3287 = vpop.xlane.xlu0 %3286
    %v3288 = vsel %vm36, %v3268, 0.0
    %3289 = vadd.xlane.f32.xlu0 %v3288
    %v3290 = vpop.xlane.xlu0 %3289
    %v3291 = vsel %vm36, %v3270, 0.0
    %3292 = vadd.xlane.f32.xlu0 %v3291
    %v3293 = vpop.xlane.xlu0 %3292
    %v3294 = vsel %vm36, %v3272, 0.0
    %3295 = vadd.xlane.f32.xlu0 %v3294
    %v3296 = vpop.xlane.xlu0 %3295
    %v3297 = vrcp.pop %v3275
    %v3298 = vrcp.pop %v3278
    %v3299 = vrcp.pop %v3281
    %v3300 = vrcp.pop %v3284
    %v3301 = vrcp.pop %v3287
    %v3302 = vrcp.pop %v3290
    %v3303 = vrcp.pop %v3293
    %v3304 = vrcp.pop %v3296
    %v3305 = vmul.f32 %v3258, %v3297
    %v3306 = vmul.f32 %v3260, %v3298
    %v3307 = vmul.f32 %v3262, %v3299
    %v3308 = vmul.f32 %v3264, %v3300
    %v3309 = vmul.f32 %v3266, %v3301
    %v3310 = vmul.f32 %v3268, %v3302
    %v3311 = vmul.f32 %v3270, %v3303
    %v3312 = vmul.f32 %v3272, %v3304
    %v3313 = vpack.c.bf16 %v3305, %v3305
    %v3314 = vpack.c.bf16 %v3306, %v3306
    %v3315 = vpack.c.bf16 %v3307, %v3307
    %v3316 = vpack.c.bf16 %v3308, %v3308
    %v3317 = vpack.c.bf16 %v3309, %v3309
    %v3318 = vpack.c.bf16 %v3310, %v3310
    %v3319 = vpack.c.bf16 %v3311, %v3311
    %v3320 = vpack.c.bf16 %v3312, %v3312
    %3321 = vrot.lane.b32.xlu0 %v33, 40
    %v3322 = vpop.permute.xlu0 %3321
    %v3324 = vsel %vm36, %v3313, 0
    %v3327 = vsel %vm557, %v3322, 0
    %3329 = vmatprep.subr.bf16.mxu0 0
    %3330 = vmatpush1.bf16.msra.mxu0 %v3327
    %3331 = vmatprep.subr.bf16.mxu0 0
    %3332 = vmatpush1.bf16.msra.mxu0 0
    %3333 = vmatprep.subr.bf16.mxu0 0
    %3334 = vmatpush1.bf16.msra.mxu0 0
    %3335 = vmatprep.subr.bf16.mxu0 0
    %3336 = vmatpush1.bf16.msra.mxu0 0
    %3337 = vmatprep.subr.bf16.mxu0 0
    %3338 = vmatpush1.bf16.msra.mxu0 0
    %3339 = vmatprep.subr.bf16.mxu0 0
    %3340 = vmatpush1.bf16.msra.mxu0 0
    %3341 = vmatprep.subr.bf16.mxu0 0
    %3342 = vmatpush1.bf16.msra.mxu0 0
    %3343 = vmatprep.subr.bf16.mxu0 0
    %3344 = vmatpush1.bf16.msra.mxu0 0
    %3345 = vmatprep.subr.bf16.mxu0 0
    %3346 = vmatpush1.bf16.msra.mxu0 0
    %3347 = vmatprep.subr.bf16.mxu0 0
    %3348 = vmatpush1.bf16.msra.mxu0 0
    %3349 = vmatprep.subr.bf16.mxu0 0
    %3350 = vmatpush1.bf16.msra.mxu0 0
    %3351 = vmatprep.subr.bf16.mxu0 0
    %3352 = vmatpush1.bf16.msra.mxu0 0
    %3353 = vmatprep.subr.bf16.mxu0 0
    %3354 = vmatpush1.bf16.msra.mxu0 0
    %3355 = vmatprep.subr.bf16.mxu0 0
    %3356 = vmatpush1.bf16.msra.mxu0 0
    %3357 = vmatprep.subr.bf16.mxu0 0
    %3358 = vmatpush1.bf16.msra.mxu0 0
    %3359 = vmatprep.subr.bf16.mxu0 0
    %3360 = vmatpush1.bf16.msra.mxu0 0
    %3361 = vmatprep.mubr.bf16.mxu0 0
    %3362 = vmatmul.mubr.bf16.gmra.mrb[0].mxu0 %v3324
    %v3363 = vpop.f32.mrb[0].mxu0
    %v3364 = vadd.f32 0.0, %v3363
    %v3365 = vpop.f32.mrb[0].mxu0
    %v3366 = vpop.f32.mrb[0].mxu0
    %v3367 = vpop.f32.mrb[0].mxu0
    %3368 = vdwg.mxu0
    %3369 = vrot.lane.b32.xlu0 %v85, 40
    %v3370 = vpop.permute.xlu0 %3369
    %v3372 = vsel %vm36, %v3314, 0
    %v3375 = vsel %vm557, %v3370, 0
    %3377 = vmatprep.subr.bf16.mxu0 0
    %3378 = vmatpush1.bf16.msra.mxu0 %v3375
    %3379 = vmatprep.subr.bf16.mxu0 0
    %3380 = vmatpush1.bf16.msra.mxu0 0
    %3381 = vmatprep.subr.bf16.mxu0 0
    %3382 = vmatpush1.bf16.msra.mxu0 0
    %3383 = vmatprep.subr.bf16.mxu0 0
    %3384 = vmatpush1.bf16.msra.mxu0 0
    %3385 = vmatprep.subr.bf16.mxu0 0
    %3386 = vmatpush1.bf16.msra.mxu0 0
    %3387 = vmatprep.subr.bf16.mxu0 0
    %3388 = vmatpush1.bf16.msra.mxu0 0
    %3389 = vmatprep.subr.bf16.mxu0 0
    %3390 = vmatpush1.bf16.msra.mxu0 0
    %3391 = vmatprep.subr.bf16.mxu0 0
    %3392 = vmatpush1.bf16.msra.mxu0 0
    %3393 = vmatprep.subr.bf16.mxu0 0
    %3394 = vmatpush1.bf16.msra.mxu0 0
    %3395 = vmatprep.subr.bf16.mxu0 0
    %3396 = vmatpush1.bf16.msra.mxu0 0
    %3397 = vmatprep.subr.bf16.mxu0 0
    %3398 = vmatpush1.bf16.msra.mxu0 0
    %3399 = vmatprep.subr.bf16.mxu0 0
    %3400 = vmatpush1.bf16.msra.mxu0 0
    %3401 = vmatprep.subr.bf16.mxu0 0
    %3402 = vmatpush1.bf16.msra.mxu0 0
    %3403 = vmatprep.subr.bf16.mxu0 0
    %3404 = vmatpush1.bf16.msra.mxu0 0
    %3405 = vmatprep.subr.bf16.mxu0 0
    %3406 = vmatpush1.bf16.msra.mxu0 0
    %3407 = vmatprep.subr.bf16.mxu0 0
    %3408 = vmatpush1.bf16.msra.mxu0 0
    %3409 = vmatprep.mubr.bf16.mxu0 0
    %3410 = vmatmul.mubr.bf16.gmra.mrb[0].mxu0 %v3372
    %v3411 = vpop.f32.mrb[0].mxu0
    %v3412 = vadd.f32 0.0, %v3411
    %v3413 = vpop.f32.mrb[0].mxu0
    %v3414 = vpop.f32.mrb[0].mxu0
    %v3415 = vpop.f32.mrb[0].mxu0
    %3416 = vdwg.mxu0
    %3417 = vrot.lane.b32.xlu0 %v136, 40
    %v3418 = vpop.permute.xlu0 %3417
    %v3420 = vsel %vm36, %v3315, 0
    %v3423 = vsel %vm557, %v3418, 0
    %3425 = vmatprep.subr.bf16.mxu0 0
    %3426 = vmatpush1.bf16.msra.mxu0 %v3423
    %3427 = vmatprep.subr.bf16.mxu0 0
    %3428 = vmatpush1.bf16.msra.mxu0 0
    %3429 = vmatprep.subr.bf16.mxu0 0
    %3430 = vmatpush1.bf16.msra.mxu0 0
    %3431 = vmatprep.subr.bf16.mxu0 0
    %3432 = vmatpush1.bf16.msra.mxu0 0
    %3433 = vmatprep.subr.bf16.mxu0 0
    %3434 = vmatpush1.bf16.msra.mxu0 0
    %3435 = vmatprep.subr.bf16.mxu0 0
    %3436 = vmatpush1.bf16.msra.mxu0 0
    %3437 = vmatprep.subr.bf16.mxu0 0
    %3438 = vmatpush1.bf16.msra.mxu0 0
    %3439 = vmatprep.subr.bf16.mxu0 0
    %3440 = vmatpush1.bf16.msra.mxu0 0
    %3441 = vmatprep.subr.bf16.mxu0 0
    %3442 = vmatpush1.bf16.msra.mxu0 0
    %3443 = vmatprep.subr.bf16.mxu0 0
    %3444 = vmatpush1.bf16.msra.mxu0 0
    %3445 = vmatprep.subr.bf16.mxu0 0
    %3446 = vmatpush1.bf16.msra.mxu0 0
    %3447 = vmatprep.subr.bf16.mxu0 0
    %3448 = vmatpush1.bf16.msra.mxu0 0
    %3449 = vmatprep.subr.bf16.mxu0 0
    %3450 = vmatpush1.bf16.msra.mxu0 0
    %3451 = vmatprep.subr.bf16.mxu0 0
    %3452 = vmatpush1.bf16.msra.mxu0 0
    %3453 = vmatprep.subr.bf16.mxu0 0
    %3454 = vmatpush1.bf16.msra.mxu0 0
    %3455 = vmatprep.subr.bf16.mxu0 0
    %3456 = vmatpush1.bf16.msra.mxu0 0
    %3457 = vmatprep.mubr.bf16.mxu0 0
    %3458 = vmatmul.mubr.bf16.gmra.mrb[0].mxu0 %v3420
    %v3459 = vpop.f32.mrb[0].mxu0
    %v3460 = vadd.f32 0.0, %v3459
    %v3461 = vpop.f32.mrb[0].mxu0
    %v3462 = vpop.f32.mrb[0].mxu0
    %v3463 = vpop.f32.mrb[0].mxu0
    %3464 = vdwg.mxu0
    %3465 = vrot.lane.b32.xlu0 %v187, 40
    %v3466 = vpop.permute.xlu0 %3465
    %v3468 = vsel %vm36, %v3316, 0
    %v3471 = vsel %vm557, %v3466, 0
    %3473 = vmatprep.subr.bf16.mxu0 0
    %3474 = vmatpush1.bf16.msra.mxu0 %v3471
    %3475 = vmatprep.subr.bf16.mxu0 0
    %3476 = vmatpush1.bf16.msra.mxu0 0
    %3477 = vmatprep.subr.bf16.mxu0 0
    %3478 = vmatpush1.bf16.msra.mxu0 0
    %3479 = vmatprep.subr.bf16.mxu0 0
    %3480 = vmatpush1.bf16.msra.mxu0 0
    %3481 = vmatprep.subr.bf16.mxu0 0
    %3482 = vmatpush1.bf16.msra.mxu0 0
    %3483 = vmatprep.subr.bf16.mxu0 0
    %3484 = vmatpush1.bf16.msra.mxu0 0
    %3485 = vmatprep.subr.bf16.mxu0 0
    %3486 = vmatpush1.bf16.msra.mxu0 0
    %3487 = vmatprep.subr.bf16.mxu0 0
    %3488 = vmatpush1.bf16.msra.mxu0 0
    %3489 = vmatprep.subr.bf16.mxu0 0
    %3490 = vmatpush1.bf16.msra.mxu0 0
    %3491 = vmatprep.subr.bf16.mxu0 0
    %3492 = vmatpush1.bf16.msra.mxu0 0
    %3493 = vmatprep.subr.bf16.mxu0 0
    %3494 = vmatpush1.bf16.msra.mxu0 0
    %3495 = vmatprep.subr.bf16.mxu0 0
    %3496 = vmatpush1.bf16.msra.mxu0 0
    %3497 = vmatprep.subr.bf16.mxu0 0
    %3498 = vmatpush1.bf16.msra.mxu0 0
    %3499 = vmatprep.subr.bf16.mxu0 0
    %3500 = vmatpush1.bf16.msra.mxu0 0
    %3501 = vmatprep.subr.bf16.mxu0 0
    %3502 = vmatpush1.bf16.msra.mxu0 0
    %3503 = vmatprep.subr.bf16.mxu0 0
    %3504 = vmatpush1.bf16.msra.mxu0 0
    %3505 = vmatprep.mubr.bf16.mxu0 0
    %3506 = vmatmul.mubr.bf16.gmra.mrb[0].mxu0 %v3468
    %v3507 = vpop.f32.mrb[0].mxu0
    %v3508 = vadd.f32 0.0, %v3507
    %v3509 = vpop.f32.mrb[0].mxu0
    %v3510 = vpop.f32.mrb[0].mxu0
    %v3511 = vpop.f32.mrb[0].mxu0
    %3512 = vdwg.mxu0
    %3513 = vrot.lane.b32.xlu0 %v238, 40
    %v3514 = vpop.permute.xlu0 %3513
    %v3516 = vsel %vm36, %v3317, 0
    %v3519 = vsel %vm557, %v3514, 0
    %3521 = vmatprep.subr.bf16.mxu0 0
    %3522 = vmatpush1.bf16.msra.mxu0 %v3519
    %3523 = vmatprep.subr.bf16.mxu0 0
    %3524 = vmatpush1.bf16.msra.mxu0 0
    %3525 = vmatprep.subr.bf16.mxu0 0
    %3526 = vmatpush1.bf16.msra.mxu0 0
    %3527 = vmatprep.subr.bf16.mxu0 0
    %3528 = vmatpush1.bf16.msra.mxu0 0
    %3529 = vmatprep.subr.bf16.mxu0 0
    %3530 = vmatpush1.bf16.msra.mxu0 0
    %3531 = vmatprep.subr.bf16.mxu0 0
    %3532 = vmatpush1.bf16.msra.mxu0 0
    %3533 = vmatprep.subr.bf16.mxu0 0
    %3534 = vmatpush1.bf16.msra.mxu0 0
    %3535 = vmatprep.subr.bf16.mxu0 0
    %3536 = vmatpush1.bf16.msra.mxu0 0
    %3537 = vmatprep.subr.bf16.mxu0 0
    %3538 = vmatpush1.bf16.msra.mxu0 0
    %3539 = vmatprep.subr.bf16.mxu0 0
    %3540 = vmatpush1.bf16.msra.mxu0 0
    %3541 = vmatprep.subr.bf16.mxu0 0
    %3542 = vmatpush1.bf16.msra.mxu0 0
    %3543 = vmatprep.subr.bf16.mxu0 0
    %3544 = vmatpush1.bf16.msra.mxu0 0
    %3545 = vmatprep.subr.bf16.mxu0 0
    %3546 = vmatpush1.bf16.msra.mxu0 0
    %3547 = vmatprep.subr.bf16.mxu0 0
    %3548 = vmatpush1.bf16.msra.mxu0 0
    %3549 = vmatprep.subr.bf16.mxu0 0
    %3550 = vmatpush1.bf16.msra.mxu0 0
    %3551 = vmatprep.subr.bf16.mxu0 0
    %3552 = vmatpush1.bf16.msra.mxu0 0
    %3553 = vmatprep.mubr.bf16.mxu0 0
    %3554 = vmatmul.mubr.bf16.gmra.mrb[0].mxu0 %v3516
    %v3555 = vpop.f32.mrb[0].mxu0
    %v3556 = vadd.f32 0.0, %v3555
    %v3557 = vpop.f32.mrb[0].mxu0
    %v3558 = vpop.f32.mrb[0].mxu0
    %v3559 = vpop.f32.mrb[0].mxu0
    %3560 = vdwg.mxu0
    %3561 = vrot.lane.b32.xlu0 %v289, 40
    %v3562 = vpop.permute.xlu0 %3561
    %v3564 = vsel %vm36, %v3318, 0
    %v3567 = vsel %vm557, %v3562, 0
    %3569 = vmatprep.subr.bf16.mxu0 0
    %3570 = vmatpush1.bf16.msra.mxu0 %v3567
    %3571 = vmatprep.subr.bf16.mxu0 0
    %3572 = vmatpush1.bf16.msra.mxu0 0
    %3573 = vmatprep.subr.bf16.mxu0 0
    %3574 = vmatpush1.bf16.msra.mxu0 0
    %3575 = vmatprep.subr.bf16.mxu0 0
    %3576 = vmatpush1.bf16.msra.mxu0 0
    %3577 = vmatprep.subr.bf16.mxu0 0
    %3578 = vmatpush1.bf16.msra.mxu0 0
    %3579 = vmatprep.subr.bf16.mxu0 0
    %3580 = vmatpush1.bf16.msra.mxu0 0
    %3581 = vmatprep.subr.bf16.mxu0 0
    %3582 = vmatpush1.bf16.msra.mxu0 0
    %3583 = vmatprep.subr.bf16.mxu0 0
    %3584 = vmatpush1.bf16.msra.mxu0 0
    %3585 = vmatprep.subr.bf16.mxu0 0
    %3586 = vmatpush1.bf16.msra.mxu0 0
    %3587 = vmatprep.subr.bf16.mxu0 0
    %3588 = vmatpush1.bf16.msra.mxu0 0
    %3589 = vmatprep.subr.bf16.mxu0 0
    %3590 = vmatpush1.bf16.msra.mxu0 0
    %3591 = vmatprep.subr.bf16.mxu0 0
    %3592 = vmatpush1.bf16.msra.mxu0 0
    %3593 = vmatprep.subr.bf16.mxu0 0
    %3594 = vmatpush1.bf16.msra.mxu0 0
    %3595 = vmatprep.subr.bf16.mxu0 0
    %3596 = vmatpush1.bf16.msra.mxu0 0
    %3597 = vmatprep.subr.bf16.mxu0 0
    %3598 = vmatpush1.bf16.msra.mxu0 0
    %3599 = vmatprep.subr.bf16.mxu0 0
    %3600 = vmatpush1.bf16.msra.mxu0 0
    %3601 = vmatprep.mubr.bf16.mxu0 0
    %3602 = vmatmul.mubr.bf16.gmra.mrb[0].mxu0 %v3564
    %v3603 = vpop.f32.mrb[0].mxu0
    %v3604 = vadd.f32 0.0, %v3603
    %v3605 = vpop.f32.mrb[0].mxu0
    %v3606 = vpop.f32.mrb[0].mxu0
    %v3607 = vpop.f32.mrb[0].mxu0
    %3608 = vdwg.mxu0
    %3609 = vrot.lane.b32.xlu0 %v340, 40
    %v3610 = vpop.permute.xlu0 %3609
    %v3612 = vsel %vm36, %v3319, 0
    %v3615 = vsel %vm557, %v3610, 0
    %3617 = vmatprep.subr.bf16.mxu0 0
    %3618 = vmatpush1.bf16.msra.mxu0 %v3615
    %3619 = vmatprep.subr.bf16.mxu0 0
    %3620 = vmatpush1.bf16.msra.mxu0 0
    %3621 = vmatprep.subr.bf16.mxu0 0
    %3622 = vmatpush1.bf16.msra.mxu0 0
    %3623 = vmatprep.subr.bf16.mxu0 0
    %3624 = vmatpush1.bf16.msra.mxu0 0
    %3625 = vmatprep.subr.bf16.mxu0 0
    %3626 = vmatpush1.bf16.msra.mxu0 0
    %3627 = vmatprep.subr.bf16.mxu0 0
    %3628 = vmatpush1.bf16.msra.mxu0 0
    %3629 = vmatprep.subr.bf16.mxu0 0
    %3630 = vmatpush1.bf16.msra.mxu0 0
    %3631 = vmatprep.subr.bf16.mxu0 0
    %3632 = vmatpush1.bf16.msra.mxu0 0
    %3633 = vmatprep.subr.bf16.mxu0 0
    %3634 = vmatpush1.bf16.msra.mxu0 0
    %3635 = vmatprep.subr.bf16.mxu0 0
    %3636 = vmatpush1.bf16.msra.mxu0 0
    %3637 = vmatprep.subr.bf16.mxu0 0
    %3638 = vmatpush1.bf16.msra.mxu0 0
    %3639 = vmatprep.subr.bf16.mxu0 0
    %3640 = vmatpush1.bf16.msra.mxu0 0
    %3641 = vmatprep.subr.bf16.mxu0 0
    %3642 = vmatpush1.bf16.msra.mxu0 0
    %3643 = vmatprep.subr.bf16.mxu0 0
    %3644 = vmatpush1.bf16.msra.mxu0 0
    %3645 = vmatprep.subr.bf16.mxu0 0
    %3646 = vmatpush1.bf16.msra.mxu0 0
    %3647 = vmatprep.subr.bf16.mxu0 0
    %3648 = vmatpush1.bf16.msra.mxu0 0
    %3649 = vmatprep.mubr.bf16.mxu0 0
    %3650 = vmatmul.mubr.bf16.gmra.mrb[0].mxu0 %v3612
    %v3651 = vpop.f32.mrb[0].mxu0
    %v3652 = vadd.f32 0.0, %v3651
    %v3653 = vpop.f32.mrb[0].mxu0
    %v3654 = vpop.f32.mrb[0].mxu0
    %v3655 = vpop.f32.mrb[0].mxu0
    %3656 = vdwg.mxu0
    %3657 = vrot.lane.b32.xlu0 %v391, 40
    %v3658 = vpop.permute.xlu0 %3657
    %v3660 = vsel %vm36, %v3320, 0
    %v3663 = vsel %vm557, %v3658, 0
    %3665 = vmatprep.subr.bf16.mxu0 0
    %3666 = vmatpush1.bf16.msra.mxu0 %v3663
    %3667 = vmatprep.subr.bf16.mxu0 0
    %3668 = vmatpush1.bf16.msra.mxu0 0
    %3669 = vmatprep.subr.bf16.mxu0 0
    %3670 = vmatpush1.bf16.msra.mxu0 0
    %3671 = vmatprep.subr.bf16.mxu0 0
    %3672 = vmatpush1.bf16.msra.mxu0 0
    %3673 = vmatprep.subr.bf16.mxu0 0
    %3674 = vmatpush1.bf16.msra.mxu0 0
    %3675 = vmatprep.subr.bf16.mxu0 0
    %3676 = vmatpush1.bf16.msra.mxu0 0
    %3677 = vmatprep.subr.bf16.mxu0 0
    %3678 = vmatpush1.bf16.msra.mxu0 0
    %3679 = vmatprep.subr.bf16.mxu0 0
    %3680 = vmatpush1.bf16.msra.mxu0 0
    %3681 = vmatprep.subr.bf16.mxu0 0
    %3682 = vmatpush1.bf16.msra.mxu0 0
    %3683 = vmatprep.subr.bf16.mxu0 0
    %3684 = vmatpush1.bf16.msra.mxu0 0
    %3685 = vmatprep.subr.bf16.mxu0 0
    %3686 = vmatpush1.bf16.msra.mxu0 0
    %3687 = vmatprep.subr.bf16.mxu0 0
    %3688 = vmatpush1.bf16.msra.mxu0 0
    %3689 = vmatprep.subr.bf16.mxu0 0
    %3690 = vmatpush1.bf16.msra.mxu0 0
    %3691 = vmatprep.subr.bf16.mxu0 0
    %3692 = vmatpush1.bf16.msra.mxu0 0
    %3693 = vmatprep.subr.bf16.mxu0 0
    %3694 = vmatpush1.bf16.msra.mxu0 0
    %3695 = vmatprep.subr.bf16.mxu0 0
    %3696 = vmatpush1.bf16.msra.mxu0 0
    %3697 = vmatprep.mubr.bf16.mxu0 0
    %3698 = vmatmul.mubr.bf16.gmra.mrb[0].mxu0 %v3660
    %v3699 = vpop.f32.mrb[0].mxu0
    %v3700 = vadd.f32 0.0, %v3699
    %v3701 = vpop.f32.mrb[0].mxu0
    %v3702 = vpop.f32.mrb[0].mxu0
    %v3703 = vpop.f32.mrb[0].mxu0
    %3704 = vdwg.mxu0
    %3713 = vrot.lane.b32.xlu0 %v1524, 8
    %v3714 = vpop.permute.xlu0 %3713
    %3715 = vrot.lane.b32.xlu0 %v1572, 8
    %v3716 = vpop.permute.xlu0 %3715
    %3717 = vrot.lane.b32.xlu0 %v1620, 8
    %v3718 = vpop.permute.xlu0 %3717
    %3719 = vrot.lane.b32.xlu0 %v1668, 8
    %v3720 = vpop.permute.xlu0 %3719
    %3721 = vrot.lane.b32.xlu0 %v1716, 8
    %v3722 = vpop.permute.xlu0 %3721
    %3723 = vrot.lane.b32.xlu0 %v1764, 8
    %v3724 = vpop.permute.xlu0 %3723
    %3725 = vrot.lane.b32.xlu0 %v1812, 8
    %v3726 = vpop.permute.xlu0 %3725
    %3727 = vrot.lane.b32.xlu0 %v1860, 8
    %v3728 = vpop.permute.xlu0 %3727
    %3745 = vrot.lane.b32.xlu0 %v2444, 16
    %v3746 = vpop.permute.xlu0 %3745
    %3747 = vrot.lane.b32.xlu0 %v2492, 16
    %v3748 = vpop.permute.xlu0 %3747
    %3749 = vrot.lane.b32.xlu0 %v2540, 16
    %v3750 = vpop.permute.xlu0 %3749
    %3751 = vrot.lane.b32.xlu0 %v2588, 16
    %v3752 = vpop.permute.xlu0 %3751
    %3753 = vrot.lane.b32.xlu0 %v2636, 16
    %v3754 = vpop.permute.xlu0 %3753
    %3755 = vrot.lane.b32.xlu0 %v2684, 16
    %v3756 = vpop.permute.xlu0 %3755
    %3757 = vrot.lane.b32.xlu0 %v2732, 16
    %v3758 = vpop.permute.xlu0 %3757
    %3759 = vrot.lane.b32.xlu0 %v2780, 16
    %v3760 = vpop.permute.xlu0 %3759
    %3777 = vrot.lane.b32.xlu0 %v3364, 24
    %v3778 = vpop.permute.xlu0 %3777
    %3779 = vrot.lane.b32.xlu0 %v3412, 24
    %v3780 = vpop.permute.xlu0 %3779
    %3781 = vrot.lane.b32.xlu0 %v3460, 24
    %v3782 = vpop.permute.xlu0 %3781
    %3783 = vrot.lane.b32.xlu0 %v3508, 24
    %v3784 = vpop.permute.xlu0 %3783
    %3785 = vrot.lane.b32.xlu0 %v3556, 24
    %v3786 = vpop.permute.xlu0 %3785
    %3787 = vrot.lane.b32.xlu0 %v3604, 24
    %v3788 = vpop.permute.xlu0 %3787
    %3789 = vrot.lane.b32.xlu0 %v3652, 24
    %v3790 = vpop.permute.xlu0 %3789
    %3791 = vrot.lane.b32.xlu0 %v3700, 24
    %v3792 = vpop.permute.xlu0 %3791
    %v3801 = vsel %vm36, %v596, %v3714
    %v3802 = vsel %vm36, %v644, %v3716
    %v3803 = vsel %vm36, %v692, %v3718
    %v3804 = vsel %vm36, %v740, %v3720
    %v3805 = vsel %vm36, %v788, %v3722
    %v3806 = vsel %vm36, %v836, %v3724
    %v3807 = vsel %vm36, %v884, %v3726
    %v3808 = vsel %vm36, %v932, %v3728
    %vm3809 = vcmask 130048
    %v3810 = vsel %vm3809, %v3801, %v3746
    %v3811 = vsel %vm3809, %v3802, %v3748
    %v3812 = vsel %vm3809, %v3803, %v3750
    %v3813 = vsel %vm3809, %v3804, %v3752
    %v3814 = vsel %vm3809, %v3805, %v3754
    %v3815 = vsel %vm3809, %v3806, %v3756
    %v3816 = vsel %vm3809, %v3807, %v3758
    %v3817 = vsel %vm3809, %v3808, %v3760
    %vm3818 = vcmask 195584
    %v3819 = vsel %vm3818, %v3810, %v3778
    %v3820 = vsel %vm3818, %v3811, %v3780
    %v3821 = vsel %vm3818, %v3812, %v3782
    %v3822 = vsel %vm3818, %v3813, %v3784
    %v3823 = vsel %vm3818, %v3814, %v3786
    %v3824 = vsel %vm3818, %v3815, %v3788
    %v3825 = vsel %vm3818, %v3816, %v3790
    %v3826 = vsel %vm3818, %v3817, %v3792
    %v3827 = vpack.c.bf16 %v3819, %v3819
    %v3828 = vpack.c.bf16 %v3820, %v3820
    %v3829 = vpack.c.bf16 %v3821, %v3821
    %v3830 = vpack.c.bf16 %v3822, %v3822
    %v3831 = vpack.c.bf16 %v3823, %v3823
    %v3832 = vpack.c.bf16 %v3824, %v3824
    %v3833 = vpack.c.bf16 %v3825, %v3825
    %v3834 = vpack.c.bf16 %v3826, %v3826
    %vm3835 = vcmask 257024
    %3836 = vst.msk [vmem:[%s2] sm:$0xf] %vm3835, %v3827
    %3837 = vst.msk [vmem:[%s2 + $0x4] sm:$0xf] %vm3835, %v3828
    %3838 = vst.msk [vmem:[%s2 + $0x8] sm:$0xf] %vm3835, %v3829
    %3839 = vst.msk [vmem:[%s2 + $0xc] sm:$0xf] %vm3835, %v3830
    %3840 = vst.msk [vmem:[%s2 + $0x10] sm:$0xf] %vm3835, %v3831
    %3841 = vst.msk [vmem:[%s2 + $0x14] sm:$0xf] %vm3835, %v3832
    %3842 = vst.msk [vmem:[%s2 + $0x18] sm:$0xf] %vm3835, %v3833
    %3843 = vst.msk [vmem:[%s2 + $0x1c] sm:$0xf] %vm3835, %v3834
    %3852 = vrot.lane.b32.xlu0 %v1377, 8
    %v3853 = vpop.permute.xlu0 %3852
    %3854 = vrot.lane.b32.xlu0 %v1378, 8
    %v3855 = vpop.permute.xlu0 %3854
    %3856 = vrot.lane.b32.xlu0 %v1379, 8
    %v3857 = vpop.permute.xlu0 %3856
    %3858 = vrot.lane.b32.xlu0 %v1380, 8
    %v3859 = vpop.permute.xlu0 %3858
    %3860 = vrot.lane.b32.xlu0 %v1381, 8
    %v3861 = vpop.permute.xlu0 %3860
    %3862 = vrot.lane.b32.xlu0 %v1382, 8
    %v3863 = vpop.permute.xlu0 %3862
    %3864 = vrot.lane.b32.xlu0 %v1383, 8
    %v3865 = vpop.permute.xlu0 %3864
    %3866 = vrot.lane.b32.xlu0 %v1384, 8
    %v3867 = vpop.permute.xlu0 %3866
    %3884 = vrot.lane.b32.xlu0 %v2297, 16
    %v3885 = vpop.permute.xlu0 %3884
    %3886 = vrot.lane.b32.xlu0 %v2298, 16
    %v3887 = vpop.permute.xlu0 %3886
    %3888 = vrot.lane.b32.xlu0 %v2299, 16
    %v3889 = vpop.permute.xlu0 %3888
    %3890 = vrot.lane.b32.xlu0 %v2300, 16
    %v3891 = vpop.permute.xlu0 %3890
    %3892 = vrot.lane.b32.xlu0 %v2301, 16
    %v3893 = vpop.permute.xlu0 %3892
    %3894 = vrot.lane.b32.xlu0 %v2302, 16
    %v3895 = vpop.permute.xlu0 %3894
    %3896 = vrot.lane.b32.xlu0 %v2303, 16
    %v3897 = vpop.permute.xlu0 %3896
    %3898 = vrot.lane.b32.xlu0 %v2304, 16
    %v3899 = vpop.permute.xlu0 %3898
    %3916 = vrot.lane.b32.xlu0 %v3217, 24
    %v3917 = vpop.permute.xlu0 %3916
    %3918 = vrot.lane.b32.xlu0 %v3218, 24
    %v3919 = vpop.permute.xlu0 %3918
    %3920 = vrot.lane.b32.xlu0 %v3219, 24
    %v3921 = vpop.permute.xlu0 %3920
    %3922 = vrot.lane.b32.xlu0 %v3220, 24
    %v3923 = vpop.permute.xlu0 %3922
    %3924 = vrot.lane.b32.xlu0 %v3221, 24
    %v3925 = vpop.permute.xlu0 %3924
    %3926 = vrot.lane.b32.xlu0 %v3222, 24
    %v3927 = vpop.permute.xlu0 %3926
    %3928 = vrot.lane.b32.xlu0 %v3223, 24
    %v3929 = vpop.permute.xlu0 %3928
    %3930 = vrot.lane.b32.xlu0 %v3224, 24
    %v3931 = vpop.permute.xlu0 %3930
    %v3940 = vsel %vm36, %v448, %v3853
    %v3941 = vsel %vm36, %v449, %v3855
    %v3942 = vsel %vm36, %v450, %v3857
    %v3943 = vsel %vm36, %v451, %v3859
    %v3944 = vsel %vm36, %v452, %v3861
    %v3945 = vsel %vm36, %v453, %v3863
    %v3946 = vsel %vm36, %v454, %v3865
    %v3947 = vsel %vm36, %v455, %v3867
    %v3948 = vsel %vm3809, %v3940, %v3885
    %v3949 = vsel %vm3809, %v3941, %v3887
    %v3950 = vsel %vm3809, %v3942, %v3889
    %v3951 = vsel %vm3809, %v3943, %v3891
    %v3952 = vsel %vm3809, %v3944, %v3893
    %v3953 = vsel %vm3809, %v3945, %v3895
    %v3954 = vsel %vm3809, %v3946, %v3897
    %v3955 = vsel %vm3809, %v3947, %v3899
    %v3956 = vsel %vm3818, %v3948, %v3917
    %v3957 = vsel %vm3818, %v3949, %v3919
    %v3958 = vsel %vm3818, %v3950, %v3921
    %v3959 = vsel %vm3818, %v3951, %v3923
    %v3960 = vsel %vm3818, %v3952, %v3925
    %v3961 = vsel %vm3818, %v3953, %v3927
    %v3962 = vsel %vm3818, %v3954, %v3929
    %v3963 = vsel %vm3818, %v3955, %v3931
    %vm3964 = vcmask 261120
    %3965 = vst.msk [vmem:[#allocation2] sm:$0xff] %vm3964, %v3956
    %3966 = vst.msk [vmem:[#allocation2 + $0x8] sm:$0xff] %vm3964, %v3957
    %3967 = vst.msk [vmem:[#allocation2 + $0x10] sm:$0xff] %vm3964, %v3958
    %3968 = vst.msk [vmem:[#allocation2 + $0x18] sm:$0xff] %vm3964, %v3959
    %3969 = vst.msk [vmem:[#allocation2 + $0x20] sm:$0xff] %vm3964, %v3960
    %3970 = vst.msk [vmem:[#allocation2 + $0x28] sm:$0xff] %vm3964, %v3961
    %3971 = vst.msk [vmem:[#allocation2 + $0x30] sm:$0xff] %vm3964, %v3962
    %3972 = vst.msk [vmem:[#allocation2 + $0x38] sm:$0xff] %vm3964, %v3963
    // Predicated region
    $region10: #{_lambda_.31} parent=1 // pred_check
      _
    $region11: #{_lambda_.31} parent=1 // pred_check_branch
      %3974 = sbr.rel (0) target = $region13
    $region12: #{_lambda_.31} parent=1 // pred_region
      _
    $region13: #{_lambda_.31} parent=1 // pred_fallthru
      _
    // Predicated region
    $region14: #{_lambda_.31} parent=1 // pred_check
      _
    $region15: #{_lambda_.31} parent=1 // pred_check_branch
      %3976 = sbr.rel (0) target = $region17
    $region16: #{_lambda_.31} parent=1 // pred_region
      %s3978 = ssub.s32 1024, 1024
      %3979 = vsyncadd [#allocation3], %s3978
      %s3980 = sshll.u32 [#allocation2], 4
      %s3981 = int_to_ptr.vmem [resolvable:$true] %s3980
      %3986 = dma.vmem_to_hbm [thread:$0]  %s3981, 1024, %s3, [#allocation3], 128, 128, 8
    $region17: #{_lambda_.31} parent=1 // pred_fallthru
      _
    // Predicated region
    $region18: #{_lambda_.31} parent=1 // pred_check
      _
    $region19: #{_lambda_.31} parent=1 // pred_check_branch
      %3988 = sbr.rel (0) target = $region21
    $region20: #{_lambda_.31} parent=1 // pred_region
      _
    $region21: #{_lambda_.31} parent=1 // pred_fallthru
      _
    // Predicated region
    $region22: #{_lambda_.31} parent=1 // pred_check
      _
    $region23: #{_lambda_.31} parent=1 // pred_check_branch
      %3990 = sbr.rel (0) target = $region25
    $region24: #{_lambda_.31} parent=1 // pred_region
      %3991 = dma.done [#allocation3], 1024
    $region25: #{_lambda_.31} parent=1 // pred_fallthru
      _
    %3992 = vsyncpa [#allocation3], 1

</llo_original>
